<compile_context>
chip_gen: v7x
topology: tpu7x:2x2x1
jax: 0.10.0
libtpu: 0.0.40
codegen_flags: <defaults>
</compile_context>

<pallas_src>
import functools
import math

import jax
import jax.numpy as jnp
from jax.experimental import pallas as pl
from jax.experimental.pallas import tpu as pltpu

F32 = jnp.float32
MATMUL_DTYPE = jnp.bfloat16      # MXU operand dtype (accumulation is always f32)
VMEM = pltpu.MemorySpace.VMEM
NEG_INF = -1e9
LN_EPS = 1e-6


def _vmem_specs(n):
    return [pl.BlockSpec(memory_space=VMEM) for _ in range(n)]


# ------------------------------ in-kernel helpers ------------------------------

def _dot2(x, w):
    """(M, K) @ (K, N): bf16 operands at the MXU, f32 accumulation."""
    return jnp.dot(x.astype(MATMUL_DTYPE), w.astype(MATMUL_DTYPE),
                   preferred_element_type=jnp.float32)


def _bdot(x, w):
    """Batched (B, 1, K) @ (K, N).  Only used for the length-1 diagram stream /
    SimCLR head, where flattening would require (B,1,K)<->(B,K) relayouts; the
    broadcast-weight cost is negligible at L==1."""
    b = x.shape[0]
    wb = jnp.broadcast_to(w.astype(MATMUL_DTYPE), (b,) + w.shape)
    return jnp.einsum('bij,bjk->bik', x.astype(MATMUL_DTYPE), wb,
                      preferred_element_type=jnp.float32)


def _softmax_last(x):
    m = jnp.max(x, axis=-1, keepdims=True)
    e = jnp.exp(x - m)
    return e * pl.reciprocal(jnp.sum(e, axis=-1, keepdims=True), approx=True)


def _layernorm(x, g, b):
    """MCAN LayerNorm: a_2 * (x - mean) / (std + eps) + b_2, std unbiased (d-1)."""
    d = x.shape[-1]
    mean = jnp.mean(x, axis=-1, keepdims=True)
    c = x - mean
    var = jnp.sum(c * c, axis=-1, keepdims=True) * (1.0 / (d - 1))
    return g * c / (jnp.sqrt(var) + LN_EPS) + b


def _heads_ctx(q, k, v, key_abs, nh, dh):
    """Multi-head attention context (heads lane-concatenated, no output proj).

    q: (B, Lq, H) *pre-scaled* query, k/v: (B, Lk, H),
    key_abs: (B, Lq or 1, Lk) f32 per-key abs-sum; 0.0 marks a padded key.
    Returns the concatenated per-head context (B, Lq, H) in f32; the caller
    applies one full-width output projection.
    """
    parts = []
    for h in range(nh):
        sl = slice(h * dh, (h + 1) * dh)
        s = jnp.einsum('bqd,bkd->bqk',
                       q[..., sl].astype(MATMUL_DTYPE),
                       k[..., sl].astype(MATMUL_DTYPE),
                       preferred_element_type=jnp.float32)
        s = jnp.where(key_abs == 0.0, NEG_INF, s)
        p = _softmax_last(s)
        parts.append(jnp.einsum('bqk,bkd->bqd',
                                p.astype(MATMUL_DTYPE),
                                v[..., sl].astype(MATMUL_DTYPE),
                                preferred_element_type=jnp.float32))
    return jnp.concatenate(parts, axis=-1)


# ------------------------------ the fused kernel ------------------------------

def _net_kernel(*refs, bsz, seq, nl, nh, dh, hs, glimpses):
    (que, dia, opt,
     fcq_w, fcq_b, sw1, sb1, sw2, sb2, fcd_w, fcd_b,
     e_qkv_w, e_qkv_b, e_o_w, e_o_b, e_ln1_g, e_ln1_b,
     e_f1_w, e_f1_b, e_f2_w, e_f2_b, e_ln2_g, e_ln2_b,
     d_v1_w, d_v1_b, d_o1_w, d_o1_b, d_ln1_g, d_ln1_b,
     d_q2_w, d_q2_b, d_kv2_w, d_kv2_b, d_o2_w, d_o2_b, d_ln2_g, d_ln2_b,
     d_f1_w, d_f1_b, d_f2_w, d_f2_b, d_ln3_g, d_ln3_b,
     al_w1, al_b1, al_w2, al_b2, al_wm, al_bm,
     ad_wm, ad_bm, pn_g, pn_b, cls_wf, cls_wo, cls_b,
     out_ref) = refs

    scale = 1.0 / math.sqrt(dh)

    # ---------------- input projections ----------------
    xf = _dot2(que[...], fcq_w[...]) + fcq_b[...]                    # (B*L, H) lang stream
    hsim = jnp.maximum(_bdot(dia[...], sw1[...]) + sb1[...], 0.0)    # SimCLR head
    zsim = _bdot(hsim, sw2[...]) + sb2[...]
    y = _bdot(zsim, fcd_w[...]) + fcd_b[...]                         # (B, 1, H) dia stream

    # ---------------- padding masks (from projected features, as in the reference) ----------------
    x0 = xf.reshape(bsz, seq, hs)
    absx = jnp.abs(x0)
    col_abs = jnp.sum(absx, axis=-1, keepdims=True)                  # (B, L, 1): AttFlat mask carrier
    # Per-key abs-sum replicated over query rows, built with a ones-matmul so the
    # (sublane -> lane) layout change needs no in-kernel transpose.
    key_abs = jnp.einsum('bqh,bkh->bqk', jnp.ones_like(absx), absx,
                         preferred_element_type=jnp.float32)         # (B, L, L)
    key_abs_row = key_abs[:, :1, :]                                  # (B, 1, L) for cross-attention
    # The diagram mask has no effect on the output (its only consumers reduce to
    # length-1 softmaxes, which are identically 1), so it is never materialized.

    # ---------------- encoder: SA blocks over the language stream ----------------
    for l in range(nl):
        qkv = _dot2(xf, e_qkv_w[l]) + e_qkv_b[l]                     # fused Q/K/V, (B*L, 3H)
        q = (qkv[:, :hs] * scale).reshape(bsz, seq, hs)              # scale folded in once
        k = qkv[:, hs:2 * hs].reshape(bsz, seq, hs)
        v = qkv[:, 2 * hs:].reshape(bsz, seq, hs)
        ctx = _heads_ctx(q, k, v, key_abs, nh, dh)                   # (B, L, H)
        att = _dot2(ctx.reshape(bsz * seq, hs), e_o_w[l]) + e_o_b[l]
        xf = _layernorm(xf + att, e_ln1_g[l], e_ln1_b[l])
        ff = _dot2(jnp.maximum(_dot2(xf, e_f1_w[l]) + e_f1_b[l], 0.0),
                   e_f2_w[l]) + e_f2_b[l]
        xf = _layernorm(xf + ff, e_ln2_g[l], e_ln2_b[l])

    # ---------------- decoder: SGA blocks over the (length-1) diagram stream ----------------
    for l in range(nl):
        # (1) self-attention over one token: softmax == 1  =>  context == V
        v1 = _bdot(y, d_v1_w[l]) + d_v1_b[l]
        sa = _bdot(v1, d_o1_w[l]) + d_o1_b[l]
        y = _layernorm(y + sa, d_ln1_g[l], d_ln1_b[l])
        # (2) cross-attention: diagram query attends over the encoded language
        q2 = (_bdot(y, d_q2_w[l]) + d_q2_b[l]) * scale               # (B, 1, H)
        kv2 = _dot2(xf, d_kv2_w[l]) + d_kv2_b[l]                     # fused K/V, (B*L, 2H)
        k2 = kv2[:, :hs].reshape(bsz, seq, hs)
        v2 = kv2[:, hs:].reshape(bsz, seq, hs)
        ctx = _heads_ctx(q2, k2, v2, key_abs_row, nh, dh)            # (B, 1, H)
        ca = _bdot(ctx, d_o2_w[l]) + d_o2_b[l]
        y = _layernorm(y + ca, d_ln2_g[l], d_ln2_b[l])
        # (3) FFN
        ff = _bdot(jnp.maximum(_bdot(y, d_f1_w[l]) + d_f1_b[l], 0.0),
                   d_f2_w[l]) + d_f2_b[l]
        y = _layernorm(y + ff, d_ln3_g[l], d_ln3_b[l])

    # ---------------- AttFlat (language): masked softmax over tokens + glimpse merge ----------------
    hm = jnp.maximum(_dot2(xf, al_w1[...]) + al_b1[...], 0.0)        # (B*L, FM)
    a = (_dot2(hm, al_w2[...]) + al_b2[...]).reshape(bsz, seq, glimpses)
    a = jnp.where(col_abs == 0.0, NEG_INF, a)
    m = jnp.max(a, axis=1, keepdims=True)
    e = jnp.exp(a - m)
    a = e * pl.reciprocal(jnp.sum(e, axis=1, keepdims=True), approx=True)
    xe = xf.reshape(bsz, seq, hs)
    lang = jnp.zeros((bsz, al_wm.shape[-1]), jnp.float32)
    for g in range(glimpses):
        pooled = jnp.sum(a[:, :, g:g + 1] * xe, axis=1)              # (B, H)
        lang = lang + _dot2(pooled, al_wm[g])
    lang = lang + al_bm[...]

    # ---------------- AttFlat (diagram): length-1 softmax == 1  =>  merge(y) only ----------------
    y2 = jnp.sum(y, axis=1)                                          # (B, H)
    dflat = jnp.zeros_like(lang)
    for g in range(glimpses):
        dflat = dflat + _dot2(y2, ad_wm[g])
    dflat = dflat + ad_bm[...]

    # ---------------- proj_norm + classifier ----------------
    fusion = _layernorm(lang + dflat, pn_g[...], pn_b[...])          # (B, FO)
    # classifier: out[b, o] = fusion[b].w_f + opt_emb[b, o].w_o + bias
    # (== Linear(FO+768, 1) over cat(tiled fusion, opt_emb), without the tiled
    #  (B, opt_num, FO+768) tensor or a width-1 matmul)
    sf = jnp.sum(fusion * cls_wf[...], axis=-1, keepdims=True)       # (B, 1)
    so = jnp.sum(opt[...] * cls_wo[...], axis=-1)                    # (B, opt_num), lane-dense reduce
    out_ref[...] = so + sf + cls_b[...]


# ------------------------------------ forward ------------------------------------

def net_forward(params, que_emb, dia_f, opt_emb, dia_matrix, dia_node_emb, cfg):
    # dia_matrix / dia_node_emb are accepted (as in the reference) but unused.
    del dia_matrix, dia_node_emb
    B, L, QE = que_emb.shape
    H = cfg['hidden_size']
    NH, DH, NL = cfg['multi_head'], cfg['hidden_size_head'], cfg['layer']
    G, OPT = cfg['flat_glimpses'], cfg['opt_num']

    enc, dec = params['enc'], params['dec']
    afl, afd = params['attflat_lang'], params['attflat_dia']
    inputs = [
        que_emb.reshape(B * L, QE),
        dia_f.reshape(B, 1, dia_f.shape[-1]),
        jnp.squeeze(opt_emb, axis=2),                    # (B, opt_num, 768), lane-dense
        params['fc_q_w'], params['fc_q_b'],
        params['sim_w1'], params['sim_b1'], params['sim_w2'], params['sim_b2'],
        params['fc_d_w'], params['fc_d_b'],
        enc['qkv_w'], enc['qkv_b'], enc['o_w'], enc['o_b'], enc['ln1_g'], enc['ln1_b'],
        enc['f1_w'], enc['f1_b'], enc['f2_w'], enc['f2_b'], enc['ln2_g'], enc['ln2_b'],
        dec['v1_w'], dec['v1_b'], dec['o1_w'], dec['o1_b'], dec['ln1_g'], dec['ln1_b'],
        dec['q2_w'], dec['q2_b'], dec['kv2_w'], dec['kv2_b'], dec['o2_w'], dec['o2_b'],
        dec['ln2_g'], dec['ln2_b'],
        dec['f1_w'], dec['f1_b'], dec['f2_w'], dec['f2_b'], dec['ln3_g'], dec['ln3_b'],
        afl['w1'], afl['b1'], afl['w2'], afl['b2'], afl['wm'], afl['bm'],
        afd['wm'], afd['bm'],
        params['proj_norm_g'], params['proj_norm_b'],
        params['cls_w_fusion'], params['cls_w_opt'], params['cls_b'],
    ]
    kern = functools.partial(_net_kernel, bsz=B, seq=L, nl=NL, nh=NH, dh=DH,
                             hs=H, glimpses=G)
    return pl.pallas_call(
        kern,
        out_shape=jax.ShapeDtypeStruct((B, OPT), F32),
        in_specs=_vmem_specs(len(inputs)),
        out_specs=pl.BlockSpec(memory_space=VMEM),
    )(*inputs)                                             # (B, opt_num)


# ------------------------------- parameter init -------------------------------
# Weight layout notes (vs. a torch state_dict):
#   * nn.Linear weights are stored transposed as (in, out): y = x @ w + b.
#   * Per-layer tensors are stacked along a leading `layer` axis.
#   * Encoder Q/K/V and decoder cross-attention K/V are concatenated on the
#     output dim; the decoder self-attention keeps only its V projection (Q/K
#     are mathematically dead on a length-1 stream).
#   * Matmul weights are stored in bf16 (MXU operands); biases / LayerNorm in f32.
#   * The classifier Linear(FO+768, 1) is split into cls_w_fusion (1, FO) and
#     cls_w_opt (1, 768).
#   * attflat_dia's attention MLP (w1/b1/w2/b2) is kept for structural parity but
#     unused: a length-1 softmax is identically 1.

def init_params(cfg, key):
    keys = iter(jax.random.split(key, 64))

    def w(*shape, scale=0.02):          # matmul weight -> bf16
        return (scale * jax.random.normal(next(keys), shape)).astype(MATMUL_DTYPE)

    def wf(*shape, scale=0.02):         # element-wise weight -> f32
        return (scale * jax.random.normal(next(keys), shape)).astype(F32)

    def zeros(*shape):
        return jnp.zeros(shape, F32)

    def ones(*shape):
        return jnp.ones(shape, F32)

    H, FF, NL = cfg['hidden_size'], cfg['ff_size'], cfg['layer']
    FM, G, FO = cfg['flat_mlp_size'], cfg['flat_glimpses'], cfg['flat_out_size']
    DIN, DFS, QE = cfg['dia_in_size'], cfg['dia_feat_size'], cfg['que_emb_size']

    enc = dict(
        qkv_w=w(NL, H, 3 * H), qkv_b=zeros(NL, 3 * H),
        o_w=w(NL, H, H), o_b=zeros(NL, H),
        ln1_g=ones(NL, H), ln1_b=zeros(NL, H),
        f1_w=w(NL, H, FF), f1_b=zeros(NL, FF),
        f2_w=w(NL, FF, H), f2_b=zeros(NL, H),
        ln2_g=ones(NL, H), ln2_b=zeros(NL, H))
    dec = dict(
        v1_w=w(NL, H, H), v1_b=zeros(NL, H),
        o1_w=w(NL, H, H), o1_b=zeros(NL, H),
        ln1_g=ones(NL, H), ln1_b=zeros(NL, H),
        q2_w=w(NL, H, H), q2_b=zeros(NL, H),
        kv2_w=w(NL, H, 2 * H), kv2_b=zeros(NL, 2 * H),
        o2_w=w(NL, H, H), o2_b=zeros(NL, H),
        ln2_g=ones(NL, H), ln2_b=zeros(NL, H),
        f1_w=w(NL, H, FF), f1_b=zeros(NL, FF),
        f2_w=w(NL, FF, H), f2_b=zeros(NL, H),
        ln3_g=ones(NL, H), ln3_b=zeros(NL, H))

    def attflat():
        return dict(w1=w(H, FM), b1=zeros(1, FM),
                    w2=w(FM, G), b2=zeros(1, G),
                    wm=w(G, H, FO), bm=zeros(1, FO))

    return dict(
        fc_q_w=w(QE, H), fc_q_b=zeros(1, H),
        sim_w1=w(DIN, DIN), sim_b1=zeros(1, DIN),
        sim_w2=w(DIN, DFS), sim_b2=zeros(1, DFS),
        fc_d_w=w(DFS, H), fc_d_b=zeros(1, H),
        enc=enc, dec=dec,
        attflat_lang=attflat(), attflat_dia=attflat(),
        proj_norm_g=ones(1, FO), proj_norm_b=zeros(1, FO),
        cls_w_fusion=wf(1, FO), cls_w_opt=wf(1, QE), cls_b=zeros(1, 1))


# ------------------------------------- main -------------------------------------

if __name__ == "__main__":
    cfg = dict(hidden_size=32, multi_head=4, hidden_size_head=8, ff_size=64,
               layer=2, flat_mlp_size=64, flat_glimpses=1, flat_out_size=64,
               dia_in_size=64, dia_feat_size=64, opt_num=4, que_emb_size=768)

    key = jax.random.PRNGKey(0)
    kp, kq, kd, ko, km, kn = jax.random.split(key, 6)
    params = init_params(cfg, kp)

    B, L = 2, 8
    que_emb = jax.random.normal(kq, (B, L, cfg['que_emb_size']), F32)
    dia_f = jax.random.normal(kd, (B, cfg['dia_in_size']), F32)
    opt_emb = jax.random.normal(ko, (B, cfg['opt_num'], 1, cfg['que_emb_size']), F32)
    dia_matrix = jax.random.normal(km, (B, 5, 5), F32)       # unused by forward()
    dia_node_emb = jax.random.normal(kn, (B, 5, 768), F32)   # unused by forward()

    fwd = jax.jit(functools.partial(net_forward, cfg=cfg))
    out = fwd(params, que_emb, dia_f, opt_emb, dia_matrix, dia_node_emb)
    jax.block_until_ready(out)
    assert out.shape == (B, cfg['opt_num']) and out.dtype == jnp.float32
    print("KERNEL_OK")
</pallas_src>

<mosaic_0001>
module attributes {stable_mosaic.version = 11 : i64} {
  func.func @_net_kernel(%arg0: memref<16x768xf32, #tpu.memory_space<vmem>>, %arg1: memref<2x1x64xf32, #tpu.memory_space<vmem>>, %arg2: memref<2x4x768xf32, #tpu.memory_space<vmem>>, %arg3: memref<768x32xbf16, #tpu.memory_space<vmem>>, %arg4: memref<1x32xf32, #tpu.memory_space<vmem>>, %arg5: memref<64x64xbf16, #tpu.memory_space<vmem>>, %arg6: memref<1x64xf32, #tpu.memory_space<vmem>>, %arg7: memref<64x64xbf16, #tpu.memory_space<vmem>>, %arg8: memref<1x64xf32, #tpu.memory_space<vmem>>, %arg9: memref<64x32xbf16, #tpu.memory_space<vmem>>, %arg10: memref<1x32xf32, #tpu.memory_space<vmem>>, %arg11: memref<2x32x96xbf16, #tpu.memory_space<vmem>>, %arg12: memref<2x96xf32, #tpu.memory_space<vmem>>, %arg13: memref<2x32x32xbf16, #tpu.memory_space<vmem>>, %arg14: memref<2x32xf32, #tpu.memory_space<vmem>>, %arg15: memref<2x32xf32, #tpu.memory_space<vmem>>, %arg16: memref<2x32xf32, #tpu.memory_space<vmem>>, %arg17: memref<2x32x64xbf16, #tpu.memory_space<vmem>>, %arg18: memref<2x64xf32, #tpu.memory_space<vmem>>, %arg19: memref<2x64x32xbf16, #tpu.memory_space<vmem>>, %arg20: memref<2x32xf32, #tpu.memory_space<vmem>>, %arg21: memref<2x32xf32, #tpu.memory_space<vmem>>, %arg22: memref<2x32xf32, #tpu.memory_space<vmem>>, %arg23: memref<2x32x32xbf16, #tpu.memory_space<vmem>>, %arg24: memref<2x32xf32, #tpu.memory_space<vmem>>, %arg25: memref<2x32x32xbf16, #tpu.memory_space<vmem>>, %arg26: memref<2x32xf32, #tpu.memory_space<vmem>>, %arg27: memref<2x32xf32, #tpu.memory_space<vmem>>, %arg28: memref<2x32xf32, #tpu.memory_space<vmem>>, %arg29: memref<2x32x32xbf16, #tpu.memory_space<vmem>>, %arg30: memref<2x32xf32, #tpu.memory_space<vmem>>, %arg31: memref<2x32x64xbf16, #tpu.memory_space<vmem>>, %arg32: memref<2x64xf32, #tpu.memory_space<vmem>>, %arg33: memref<2x32x32xbf16, #tpu.memory_space<vmem>>, %arg34: memref<2x32xf32, #tpu.memory_space<vmem>>, %arg35: memref<2x32xf32, #tpu.memory_space<vmem>>, %arg36: memref<2x32xf32, #tpu.memory_space<vmem>>, %arg37: memref<2x32x64xbf16, #tpu.memory_space<vmem>>, %arg38: memref<2x64xf32, #tpu.memory_space<vmem>>, %arg39: memref<2x64x32xbf16, #tpu.memory_space<vmem>>, %arg40: memref<2x32xf32, #tpu.memory_space<vmem>>, %arg41: memref<2x32xf32, #tpu.memory_space<vmem>>, %arg42: memref<2x32xf32, #tpu.memory_space<vmem>>, %arg43: memref<32x64xbf16, #tpu.memory_space<vmem>>, %arg44: memref<1x64xf32, #tpu.memory_space<vmem>>, %arg45: memref<64x1xbf16, #tpu.memory_space<vmem>>, %arg46: memref<1x1xf32, #tpu.memory_space<vmem>>, %arg47: memref<1x32x64xbf16, #tpu.memory_space<vmem>>, %arg48: memref<1x64xf32, #tpu.memory_space<vmem>>, %arg49: memref<1x32x64xbf16, #tpu.memory_space<vmem>>, %arg50: memref<1x64xf32, #tpu.memory_space<vmem>>, %arg51: memref<1x64xf32, #tpu.memory_space<vmem>>, %arg52: memref<1x64xf32, #tpu.memory_space<vmem>>, %arg53: memref<1x64xf32, #tpu.memory_space<vmem>>, %arg54: memref<1x768xf32, #tpu.memory_space<vmem>>, %arg55: memref<1x1xf32, #tpu.memory_space<vmem>>, %arg56: memref<2x4xf32, #tpu.memory_space<vmem>>) attributes {dimension_semantics = [], scalar_prefetch = 0 : i64, scratch_operands = 0 : i64, tpu.core_type = #tpu.core_type<tc>} {
    %c0 = arith.constant 0 : index
    %c0_0 = arith.constant 0 : index
    %0 = vector.load %arg0[%c0, %c0_0] : memref<16x768xf32, #tpu.memory_space<vmem>>, vector<16x768xf32>
    %c0_1 = arith.constant 0 : index
    %c0_2 = arith.constant 0 : index
    %1 = vector.load %arg3[%c0_1, %c0_2] : memref<768x32xbf16, #tpu.memory_space<vmem>>, vector<768x32xbf16>
    %2 = arith.truncf %0 : vector<16x768xf32> to vector<16x768xbf16>
    %cst = arith.constant dense<0.000000e+00> : vector<16x32xf32>
    %3 = tpu.matmul %2, %1, %cst {dimension_numbers = #tpu.dot_dimension_numbers<[1], [0], [0], [1], [0, 0, 1, 1], [], []>} : vector<16x768xbf16>, vector<768x32xbf16>, vector<16x32xf32> -> vector<16x32xf32>
    %c0_3 = arith.constant 0 : index
    %c0_4 = arith.constant 0 : index
    %4 = vector.load %arg4[%c0_3, %c0_4] : memref<1x32xf32, #tpu.memory_space<vmem>>, vector<1x32xf32>
    %5 = vector.broadcast %4 : vector<1x32xf32> to vector<16x32xf32>
    %6 = arith.addf %3, %5 : vector<16x32xf32>
    %c0_5 = arith.constant 0 : index
    %c0_6 = arith.constant 0 : index
    %c0_7 = arith.constant 0 : index
    %7 = vector.load %arg1[%c0_5, %c0_6, %c0_7] : memref<2x1x64xf32, #tpu.memory_space<vmem>>, vector<2x1x64xf32>
    %c0_8 = arith.constant 0 : index
    %c0_9 = arith.constant 0 : index
    %8 = vector.load %arg5[%c0_8, %c0_9] : memref<64x64xbf16, #tpu.memory_space<vmem>>, vector<64x64xbf16>
    %9 = vector.shape_cast %8 : vector<64x64xbf16> to vector<1x64x64xbf16>
    %10 = vector.broadcast %9 : vector<1x64x64xbf16> to vector<2x64x64xbf16>
    %11 = arith.truncf %7 : vector<2x1x64xf32> to vector<2x1x64xbf16>
    "tpu.trace_start"() <{level = 10 : i32, message = "bij,bjk->bik"}> : () -> ()
    %cst_10 = arith.constant dense<0.000000e+00> : vector<2x1x64xf32>
    %12 = tpu.matmul %11, %10, %cst_10 {dimension_numbers = #tpu.dot_dimension_numbers<[2], [1], [1], [2], [0, 0, 0, 1, 1, 2], [0], [0]>} : vector<2x1x64xbf16>, vector<2x64x64xbf16>, vector<2x1x64xf32> -> vector<2x1x64xf32>
    "tpu.trace_stop"() : () -> ()
    %c0_11 = arith.constant 0 : index
    %c0_12 = arith.constant 0 : index
    %13 = vector.load %arg6[%c0_11, %c0_12] : memref<1x64xf32, #tpu.memory_space<vmem>>, vector<1x64xf32>
    %14 = vector.shape_cast %13 : vector<1x64xf32> to vector<1x1x64xf32>
    %15 = vector.broadcast %14 : vector<1x1x64xf32> to vector<2x1x64xf32>
    %16 = arith.addf %12, %15 : vector<2x1x64xf32>
    %cst_13 = arith.constant 0.000000e+00 : f32
    %17 = vector.broadcast %cst_13 : f32 to vector<2x1x64xf32>
    %18 = arith.maximumf %16, %17 : vector<2x1x64xf32>
    %c0_14 = arith.constant 0 : index
    %c0_15 = arith.constant 0 : index
    %19 = vector.load %arg7[%c0_14, %c0_15] : memref<64x64xbf16, #tpu.memory_space<vmem>>, vector<64x64xbf16>
    %20 = vector.shape_cast %19 : vector<64x64xbf16> to vector<1x64x64xbf16>
    %21 = vector.broadcast %20 : vector<1x64x64xbf16> to vector<2x64x64xbf16>
    %22 = arith.truncf %18 : vector<2x1x64xf32> to vector<2x1x64xbf16>
    "tpu.trace_start"() <{level = 10 : i32, message = "bij,bjk->bik"}> : () -> ()
    %cst_16 = arith.constant dense<0.000000e+00> : vector<2x1x64xf32>
    %23 = tpu.matmul %22, %21, %cst_16 {dimension_numbers = #tpu.dot_dimension_numbers<[2], [1], [1], [2], [0, 0, 0, 1, 1, 2], [0], [0]>} : vector<2x1x64xbf16>, vector<2x64x64xbf16>, vector<2x1x64xf32> -> vector<2x1x64xf32>
    "tpu.trace_stop"() : () -> ()
    %c0_17 = arith.constant 0 : index
    %c0_18 = arith.constant 0 : index
    %24 = vector.load %arg8[%c0_17, %c0_18] : memref<1x64xf32, #tpu.memory_space<vmem>>, vector<1x64xf32>
    %25 = vector.shape_cast %24 : vector<1x64xf32> to vector<1x1x64xf32>
    %26 = vector.broadcast %25 : vector<1x1x64xf32> to vector<2x1x64xf32>
    %27 = arith.addf %23, %26 : vector<2x1x64xf32>
    %c0_19 = arith.constant 0 : index
    %c0_20 = arith.constant 0 : index
    %28 = vector.load %arg9[%c0_19, %c0_20] : memref<64x32xbf16, #tpu.memory_space<vmem>>, vector<64x32xbf16>
    %29 = vector.shape_cast %28 : vector<64x32xbf16> to vector<1x64x32xbf16>
    %30 = vector.broadcast %29 : vector<1x64x32xbf16> to vector<2x64x32xbf16>
    %31 = arith.truncf %27 : vector<2x1x64xf32> to vector<2x1x64xbf16>
    "tpu.trace_start"() <{level = 10 : i32, message = "bij,bjk->bik"}> : () -> ()
    %cst_21 = arith.constant dense<0.000000e+00> : vector<2x1x32xf32>
    %32 = tpu.matmul %31, %30, %cst_21 {dimension_numbers = #tpu.dot_dimension_numbers<[2], [1], [1], [2], [0, 0, 0, 1, 1, 2], [0], [0]>} : vector<2x1x64xbf16>, vector<2x64x32xbf16>, vector<2x1x32xf32> -> vector<2x1x32xf32>
    "tpu.trace_stop"() : () -> ()
    %c0_22 = arith.constant 0 : index
    %c0_23 = arith.constant 0 : index
    %33 = vector.load %arg10[%c0_22, %c0_23] : memref<1x32xf32, #tpu.memory_space<vmem>>, vector<1x32xf32>
    %34 = vector.shape_cast %33 : vector<1x32xf32> to vector<1x1x32xf32>
    %35 = vector.broadcast %34 : vector<1x1x32xf32> to vector<2x1x32xf32>
    %36 = arith.addf %32, %35 : vector<2x1x32xf32>
    %37 = vector.shape_cast %6 : vector<16x32xf32> to vector<2x8x32xf32>
    %38 = math.absf %37 : vector<2x8x32xf32>
    %cst_24 = arith.constant dense<0.000000e+00> : vector<2x8xf32>
    %39 = vector.multi_reduction <add>, %38, %cst_24 [2] : vector<2x8x32xf32> to vector<2x8xf32>
    %40 = vector.shape_cast %39 : vector<2x8xf32> to vector<2x8x1xf32>
    %cst_25 = arith.constant 1.000000e+00 : f32
    %41 = vector.broadcast %cst_25 : f32 to vector<2x8x32xf32>
    "tpu.trace_start"() <{level = 10 : i32, message = "bqh,bkh->bqk"}> : () -> ()
    %cst_26 = arith.constant dense<0.000000e+00> : vector<2x8x8xf32>
    %42 = tpu.matmul %41, %38, %cst_26 {dimension_numbers = #tpu.dot_dimension_numbers<[2], [2], [1], [1], [0, 0, 0, 1, 1, 1], [0], [0]>} : vector<2x8x32xf32>, vector<2x8x32xf32>, vector<2x8x8xf32> -> vector<2x8x8xf32>
    "tpu.trace_stop"() : () -> ()
    %43 = vector.extract_strided_slice %42 {offsets = [0, 0, 0], sizes = [2, 1, 8], strides = [1, 1, 1]} : vector<2x8x8xf32> to vector<2x1x8xf32>
    %c0_27 = arith.constant 0 : index
    %c0_28 = arith.constant 0 : index
    %c0_29 = arith.constant 0 : index
    %44 = vector.load %arg11[%c0_27, %c0_28, %c0_29] : memref<2x32x96xbf16, #tpu.memory_space<vmem>>, vector<1x32x96xbf16>
    %45 = vector.shape_cast %44 : vector<1x32x96xbf16> to vector<32x96xbf16>
    %46 = arith.truncf %6 : vector<16x32xf32> to vector<16x32xbf16>
    %cst_30 = arith.constant dense<0.000000e+00> : vector<16x96xf32>
    %47 = tpu.matmul %46, %45, %cst_30 {dimension_numbers = #tpu.dot_dimension_numbers<[1], [0], [0], [1], [0, 0, 1, 1], [], []>} : vector<16x32xbf16>, vector<32x96xbf16>, vector<16x96xf32> -> vector<16x96xf32>
    %c0_31 = arith.constant 0 : index
    %c0_32 = arith.constant 0 : index
    %48 = vector.load %arg12[%c0_31, %c0_32] : memref<2x96xf32, #tpu.memory_space<vmem>>, vector<1x96xf32>
    %49 = vector.shape_cast %48 : vector<1x96xf32> to vector<96xf32>
    %50 = vector.shape_cast %49 : vector<96xf32> to vector<1x96xf32>
    %51 = vector.broadcast %50 : vector<1x96xf32> to vector<16x96xf32>
    %52 = arith.addf %47, %51 : vector<16x96xf32>
    %53 = vector.extract_strided_slice %52 {offsets = [0, 0], sizes = [16, 32], strides = [1, 1]} : vector<16x96xf32> to vector<16x32xf32>
    %cst_33 = arith.constant 0.353553385 : f32
    %54 = vector.broadcast %cst_33 : f32 to vector<16x32xf32>
    %55 = arith.mulf %53, %54 : vector<16x32xf32>
    %56 = vector.shape_cast %55 : vector<16x32xf32> to vector<2x8x32xf32>
    %57 = vector.extract_strided_slice %52 {offsets = [0, 32], sizes = [16, 32], strides = [1, 1]} : vector<16x96xf32> to vector<16x32xf32>
    %58 = vector.shape_cast %57 : vector<16x32xf32> to vector<2x8x32xf32>
    %59 = vector.extract_strided_slice %52 {offsets = [0, 64], sizes = [16, 32], strides = [1, 1]} : vector<16x96xf32> to vector<16x32xf32>
    %60 = vector.shape_cast %59 : vector<16x32xf32> to vector<2x8x32xf32>
    %61 = vector.extract_strided_slice %56 {offsets = [0, 0, 0], sizes = [2, 8, 8], strides = [1, 1, 1]} : vector<2x8x32xf32> to vector<2x8x8xf32>
    %62 = arith.truncf %61 : vector<2x8x8xf32> to vector<2x8x8xbf16>
    %63 = vector.extract_strided_slice %58 {offsets = [0, 0, 0], sizes = [2, 8, 8], strides = [1, 1, 1]} : vector<2x8x32xf32> to vector<2x8x8xf32>
    %64 = arith.truncf %63 : vector<2x8x8xf32> to vector<2x8x8xbf16>
    "tpu.trace_start"() <{level = 10 : i32, message = "bqd,bkd->bqk"}> : () -> ()
    %cst_34 = arith.constant dense<0.000000e+00> : vector<2x8x8xf32>
    %65 = tpu.matmul %62, %64, %cst_34 {dimension_numbers = #tpu.dot_dimension_numbers<[2], [2], [1], [1], [0, 0, 0, 1, 1, 1], [0], [0]>} : vector<2x8x8xbf16>, vector<2x8x8xbf16>, vector<2x8x8xf32> -> vector<2x8x8xf32>
    %cst_35 = arith.constant 0.000000e+00 : f32
    "tpu.trace_stop"() : () -> ()
    %66 = vector.broadcast %cst_35 : f32 to vector<2x8x8xf32>
    %67 = arith.cmpf oeq, %42, %66 : vector<2x8x8xf32>
    %cst_36 = arith.constant -1.000000e+09 : f32
    %68 = vector.broadcast %cst_36 : f32 to vector<2x8x8xf32>
    %69 = arith.select %67, %68, %65 : vector<2x8x8xi1>, vector<2x8x8xf32>
    %cst_37 = arith.constant dense<0xFF800000> : vector<2x8xf32>
    %70 = vector.multi_reduction <maximumf>, %69, %cst_37 [2] : vector<2x8x8xf32> to vector<2x8xf32>
    %71 = vector.shape_cast %70 : vector<2x8xf32> to vector<2x8x1xf32>
    %72 = vector.broadcast %71 : vector<2x8x1xf32> to vector<2x8x8xf32>
    %73 = arith.subf %69, %72 : vector<2x8x8xf32>
    %74 = math.exp %73 : vector<2x8x8xf32>
    %cst_38 = arith.constant dense<0.000000e+00> : vector<2x8xf32>
    %75 = vector.multi_reduction <add>, %74, %cst_38 [2] : vector<2x8x8xf32> to vector<2x8xf32>
    %76 = vector.shape_cast %75 : vector<2x8xf32> to vector<2x8x1xf32>
    %77 = tpu.reciprocal %76 {approx = true} : vector<2x8x1xf32> -> vector<2x8x1xf32>
    %78 = vector.broadcast %77 : vector<2x8x1xf32> to vector<2x8x8xf32>
    %79 = arith.mulf %74, %78 : vector<2x8x8xf32>
    %80 = arith.truncf %79 : vector<2x8x8xf32> to vector<2x8x8xbf16>
    %81 = vector.extract_strided_slice %60 {offsets = [0, 0, 0], sizes = [2, 8, 8], strides = [1, 1, 1]} : vector<2x8x32xf32> to vector<2x8x8xf32>
    %82 = arith.truncf %81 : vector<2x8x8xf32> to vector<2x8x8xbf16>
    "tpu.trace_start"() <{level = 10 : i32, message = "bqk,bkd->bqd"}> : () -> ()
    %cst_39 = arith.constant dense<0.000000e+00> : vector<2x8x8xf32>
    %83 = tpu.matmul %80, %82, %cst_39 {dimension_numbers = #tpu.dot_dimension_numbers<[2], [1], [1], [2], [0, 0, 0, 1, 1, 2], [0], [0]>} : vector<2x8x8xbf16>, vector<2x8x8xbf16>, vector<2x8x8xf32> -> vector<2x8x8xf32>
    "tpu.trace_stop"() : () -> ()
    %84 = vector.extract_strided_slice %56 {offsets = [0, 0, 8], sizes = [2, 8, 8], strides = [1, 1, 1]} : vector<2x8x32xf32> to vector<2x8x8xf32>
    %85 = arith.truncf %84 : vector<2x8x8xf32> to vector<2x8x8xbf16>
    %86 = vector.extract_strided_slice %58 {offsets = [0, 0, 8], sizes = [2, 8, 8], strides = [1, 1, 1]} : vector<2x8x32xf32> to vector<2x8x8xf32>
    %87 = arith.truncf %86 : vector<2x8x8xf32> to vector<2x8x8xbf16>
    "tpu.trace_start"() <{level = 10 : i32, message = "bqd,bkd->bqk"}> : () -> ()
    %cst_40 = arith.constant dense<0.000000e+00> : vector<2x8x8xf32>
    %88 = tpu.matmul %85, %87, %cst_40 {dimension_numbers = #tpu.dot_dimension_numbers<[2], [2], [1], [1], [0, 0, 0, 1, 1, 1], [0], [0]>} : vector<2x8x8xbf16>, vector<2x8x8xbf16>, vector<2x8x8xf32> -> vector<2x8x8xf32>
    %cst_41 = arith.constant 0.000000e+00 : f32
    "tpu.trace_stop"() : () -> ()
    %89 = vector.broadcast %cst_41 : f32 to vector<2x8x8xf32>
    %90 = arith.cmpf oeq, %42, %89 : vector<2x8x8xf32>
    %cst_42 = arith.constant -1.000000e+09 : f32
    %91 = vector.broadcast %cst_42 : f32 to vector<2x8x8xf32>
    %92 = arith.select %90, %91, %88 : vector<2x8x8xi1>, vector<2x8x8xf32>
    %cst_43 = arith.constant dense<0xFF800000> : vector<2x8xf32>
    %93 = vector.multi_reduction <maximumf>, %92, %cst_43 [2] : vector<2x8x8xf32> to vector<2x8xf32>
    %94 = vector.shape_cast %93 : vector<2x8xf32> to vector<2x8x1xf32>
    %95 = vector.broadcast %94 : vector<2x8x1xf32> to vector<2x8x8xf32>
    %96 = arith.subf %92, %95 : vector<2x8x8xf32>
    %97 = math.exp %96 : vector<2x8x8xf32>
    %cst_44 = arith.constant dense<0.000000e+00> : vector<2x8xf32>
    %98 = vector.multi_reduction <add>, %97, %cst_44 [2] : vector<2x8x8xf32> to vector<2x8xf32>
    %99 = vector.shape_cast %98 : vector<2x8xf32> to vector<2x8x1xf32>
    %100 = tpu.reciprocal %99 {approx = true} : vector<2x8x1xf32> -> vector<2x8x1xf32>
    %101 = vector.broadcast %100 : vector<2x8x1xf32> to vector<2x8x8xf32>
    %102 = arith.mulf %97, %101 : vector<2x8x8xf32>
    %103 = arith.truncf %102 : vector<2x8x8xf32> to vector<2x8x8xbf16>
    %104 = vector.extract_strided_slice %60 {offsets = [0, 0, 8], sizes = [2, 8, 8], strides = [1, 1, 1]} : vector<2x8x32xf32> to vector<2x8x8xf32>
    %105 = arith.truncf %104 : vector<2x8x8xf32> to vector<2x8x8xbf16>
    "tpu.trace_start"() <{level = 10 : i32, message = "bqk,bkd->bqd"}> : () -> ()
    %cst_45 = arith.constant dense<0.000000e+00> : vector<2x8x8xf32>
    %106 = tpu.matmul %103, %105, %cst_45 {dimension_numbers = #tpu.dot_dimension_numbers<[2], [1], [1], [2], [0, 0, 0, 1, 1, 2], [0], [0]>} : vector<2x8x8xbf16>, vector<2x8x8xbf16>, vector<2x8x8xf32> -> vector<2x8x8xf32>
    "tpu.trace_stop"() : () -> ()
    %107 = vector.extract_strided_slice %56 {offsets = [0, 0, 16], sizes = [2, 8, 8], strides = [1, 1, 1]} : vector<2x8x32xf32> to vector<2x8x8xf32>
    %108 = arith.truncf %107 : vector<2x8x8xf32> to vector<2x8x8xbf16>
    %109 = vector.extract_strided_slice %58 {offsets = [0, 0, 16], sizes = [2, 8, 8], strides = [1, 1, 1]} : vector<2x8x32xf32> to vector<2x8x8xf32>
    %110 = arith.truncf %109 : vector<2x8x8xf32> to vector<2x8x8xbf16>
    "tpu.trace_start"() <{level = 10 : i32, message = "bqd,bkd->bqk"}> : () -> ()
    %cst_46 = arith.constant dense<0.000000e+00> : vector<2x8x8xf32>
    %111 = tpu.matmul %108, %110, %cst_46 {dimension_numbers = #tpu.dot_dimension_numbers<[2], [2], [1], [1], [0, 0, 0, 1, 1, 1], [0], [0]>} : vector<2x8x8xbf16>, vector<2x8x8xbf16>, vector<2x8x8xf32> -> vector<2x8x8xf32>
    %cst_47 = arith.constant 0.000000e+00 : f32
    "tpu.trace_stop"() : () -> ()
    %112 = vector.broadcast %cst_47 : f32 to vector<2x8x8xf32>
    %113 = arith.cmpf oeq, %42, %112 : vector<2x8x8xf32>
    %cst_48 = arith.constant -1.000000e+09 : f32
    %114 = vector.broadcast %cst_48 : f32 to vector<2x8x8xf32>
    %115 = arith.select %113, %114, %111 : vector<2x8x8xi1>, vector<2x8x8xf32>
    %cst_49 = arith.constant dense<0xFF800000> : vector<2x8xf32>
    %116 = vector.multi_reduction <maximumf>, %115, %cst_49 [2] : vector<2x8x8xf32> to vector<2x8xf32>
    %117 = vector.shape_cast %116 : vector<2x8xf32> to vector<2x8x1xf32>
    %118 = vector.broadcast %117 : vector<2x8x1xf32> to vector<2x8x8xf32>
    %119 = arith.subf %115, %118 : vector<2x8x8xf32>
    %120 = math.exp %119 : vector<2x8x8xf32>
    %cst_50 = arith.constant dense<0.000000e+00> : vector<2x8xf32>
    %121 = vector.multi_reduction <add>, %120, %cst_50 [2] : vector<2x8x8xf32> to vector<2x8xf32>
    %122 = vector.shape_cast %121 : vector<2x8xf32> to vector<2x8x1xf32>
    %123 = tpu.reciprocal %122 {approx = true} : vector<2x8x1xf32> -> vector<2x8x1xf32>
    %124 = vector.broadcast %123 : vector<2x8x1xf32> to vector<2x8x8xf32>
    %125 = arith.mulf %120, %124 : vector<2x8x8xf32>
    %126 = arith.truncf %125 : vector<2x8x8xf32> to vector<2x8x8xbf16>
    %127 = vector.extract_strided_slice %60 {offsets = [0, 0, 16], sizes = [2, 8, 8], strides = [1, 1, 1]} : vector<2x8x32xf32> to vector<2x8x8xf32>
    %128 = arith.truncf %127 : vector<2x8x8xf32> to vector<2x8x8xbf16>
    "tpu.trace_start"() <{level = 10 : i32, message = "bqk,bkd->bqd"}> : () -> ()
    %cst_51 = arith.constant dense<0.000000e+00> : vector<2x8x8xf32>
    %129 = tpu.matmul %126, %128, %cst_51 {dimension_numbers = #tpu.dot_dimension_numbers<[2], [1], [1], [2], [0, 0, 0, 1, 1, 2], [0], [0]>} : vector<2x8x8xbf16>, vector<2x8x8xbf16>, vector<2x8x8xf32> -> vector<2x8x8xf32>
    "tpu.trace_stop"() : () -> ()
    %130 = vector.extract_strided_slice %56 {offsets = [0, 0, 24], sizes = [2, 8, 8], strides = [1, 1, 1]} : vector<2x8x32xf32> to vector<2x8x8xf32>
    %131 = arith.truncf %130 : vector<2x8x8xf32> to vector<2x8x8xbf16>
    %132 = vector.extract_strided_slice %58 {offsets = [0, 0, 24], sizes = [2, 8, 8], strides = [1, 1, 1]} : vector<2x8x32xf32> to vector<2x8x8xf32>
    %133 = arith.truncf %132 : vector<2x8x8xf32> to vector<2x8x8xbf16>
    "tpu.trace_start"() <{level = 10 : i32, message = "bqd,bkd->bqk"}> : () -> ()
    %cst_52 = arith.constant dense<0.000000e+00> : vector<2x8x8xf32>
    %134 = tpu.matmul %131, %133, %cst_52 {dimension_numbers = #tpu.dot_dimension_numbers<[2], [2], [1], [1], [0, 0, 0, 1, 1, 1], [0], [0]>} : vector<2x8x8xbf16>, vector<2x8x8xbf16>, vector<2x8x8xf32> -> vector<2x8x8xf32>
    %cst_53 = arith.constant 0.000000e+00 : f32
    "tpu.trace_stop"() : () -> ()
    %135 = vector.broadcast %cst_53 : f32 to vector<2x8x8xf32>
    %136 = arith.cmpf oeq, %42, %135 : vector<2x8x8xf32>
    %cst_54 = arith.constant -1.000000e+09 : f32
    %137 = vector.broadcast %cst_54 : f32 to vector<2x8x8xf32>
    %138 = arith.select %136, %137, %134 : vector<2x8x8xi1>, vector<2x8x8xf32>
    %cst_55 = arith.constant dense<0xFF800000> : vector<2x8xf32>
    %139 = vector.multi_reduction <maximumf>, %138, %cst_55 [2] : vector<2x8x8xf32> to vector<2x8xf32>
    %140 = vector.shape_cast %139 : vector<2x8xf32> to vector<2x8x1xf32>
    %141 = vector.broadcast %140 : vector<2x8x1xf32> to vector<2x8x8xf32>
    %142 = arith.subf %138, %141 : vector<2x8x8xf32>
    %143 = math.exp %142 : vector<2x8x8xf32>
    %cst_56 = arith.constant dense<0.000000e+00> : vector<2x8xf32>
    %144 = vector.multi_reduction <add>, %143, %cst_56 [2] : vector<2x8x8xf32> to vector<2x8xf32>
    %145 = vector.shape_cast %144 : vector<2x8xf32> to vector<2x8x1xf32>
    %146 = tpu.reciprocal %145 {approx = true} : vector<2x8x1xf32> -> vector<2x8x1xf32>
    %147 = vector.broadcast %146 : vector<2x8x1xf32> to vector<2x8x8xf32>
    %148 = arith.mulf %143, %147 : vector<2x8x8xf32>
    %149 = arith.truncf %148 : vector<2x8x8xf32> to vector<2x8x8xbf16>
    %150 = vector.extract_strided_slice %60 {offsets = [0, 0, 24], sizes = [2, 8, 8], strides = [1, 1, 1]} : vector<2x8x32xf32> to vector<2x8x8xf32>
    %151 = arith.truncf %150 : vector<2x8x8xf32> to vector<2x8x8xbf16>
    "tpu.trace_start"() <{level = 10 : i32, message = "bqk,bkd->bqd"}> : () -> ()
    %cst_57 = arith.constant dense<0.000000e+00> : vector<2x8x8xf32>
    %152 = tpu.matmul %149, %151, %cst_57 {dimension_numbers = #tpu.dot_dimension_numbers<[2], [1], [1], [2], [0, 0, 0, 1, 1, 2], [0], [0]>} : vector<2x8x8xbf16>, vector<2x8x8xbf16>, vector<2x8x8xf32> -> vector<2x8x8xf32>
    "tpu.trace_stop"() : () -> ()
    %153 = tpu.concatenate %83, %106, %129, %152 in 2 : vector<2x8x8xf32>, vector<2x8x8xf32>, vector<2x8x8xf32>, vector<2x8x8xf32> -> vector<2x8x32xf32>
    %154 = vector.shape_cast %153 : vector<2x8x32xf32> to vector<16x32xf32>
    %c0_58 = arith.constant 0 : index
    %c0_59 = arith.constant 0 : index
    %c0_60 = arith.constant 0 : index
    %155 = vector.load %arg13[%c0_58, %c0_59, %c0_60] : memref<2x32x32xbf16, #tpu.memory_space<vmem>>, vector<1x32x32xbf16>
    %156 = vector.shape_cast %155 : vector<1x32x32xbf16> to vector<32x32xbf16>
    %157 = arith.truncf %154 : vector<16x32xf32> to vector<16x32xbf16>
    %cst_61 = arith.constant dense<0.000000e+00> : vector<16x32xf32>
    %158 = tpu.matmul %157, %156, %cst_61 {dimension_numbers = #tpu.dot_dimension_numbers<[1], [0], [0], [1], [0, 0, 1, 1], [], []>} : vector<16x32xbf16>, vector<32x32xbf16>, vector<16x32xf32> -> vector<16x32xf32>
    %c0_62 = arith.constant 0 : index
    %c0_63 = arith.constant 0 : index
    %159 = vector.load %arg14[%c0_62, %c0_63] : memref<2x32xf32, #tpu.memory_space<vmem>>, vector<1x32xf32>
    %160 = vector.shape_cast %159 : vector<1x32xf32> to vector<32xf32>
    %161 = vector.shape_cast %160 : vector<32xf32> to vector<1x32xf32>
    %162 = vector.broadcast %161 : vector<1x32xf32> to vector<16x32xf32>
    %163 = arith.addf %158, %162 : vector<16x32xf32>
    %164 = arith.addf %6, %163 : vector<16x32xf32>
    %c0_64 = arith.constant 0 : index
    %c0_65 = arith.constant 0 : index
    %165 = vector.load %arg15[%c0_64, %c0_65] : memref<2x32xf32, #tpu.memory_space<vmem>>, vector<1x32xf32>
    %166 = vector.shape_cast %165 : vector<1x32xf32> to vector<32xf32>
    %c0_66 = arith.constant 0 : index
    %c0_67 = arith.constant 0 : index
    %167 = vector.load %arg16[%c0_66, %c0_67] : memref<2x32xf32, #tpu.memory_space<vmem>>, vector<1x32xf32>
    %168 = vector.shape_cast %167 : vector<1x32xf32> to vector<32xf32>
    %cst_68 = arith.constant dense<0.000000e+00> : vector<16xf32>
    %169 = vector.multi_reduction <add>, %164, %cst_68 [1] : vector<16x32xf32> to vector<16xf32>
    %170 = vector.shape_cast %169 : vector<16xf32> to vector<16x1xf32>
    %cst_69 = arith.constant 3.200000e+01 : f32
    %171 = vector.broadcast %cst_69 : f32 to vector<16x1xf32>
    %172 = arith.divf %170, %171 : vector<16x1xf32>
    %173 = vector.broadcast %172 : vector<16x1xf32> to vector<16x32xf32>
    %174 = arith.subf %164, %173 : vector<16x32xf32>
    %175 = arith.mulf %174, %174 : vector<16x32xf32>
    %cst_70 = arith.constant dense<0.000000e+00> : vector<16xf32>
    %176 = vector.multi_reduction <add>, %175, %cst_70 [1] : vector<16x32xf32> to vector<16xf32>
    %177 = vector.shape_cast %176 : vector<16xf32> to vector<16x1xf32>
    %cst_71 = arith.constant 0.0322580636 : f32
    %178 = vector.broadcast %cst_71 : f32 to vector<16x1xf32>
    %179 = arith.mulf %177, %178 : vector<16x1xf32>
    %180 = vector.shape_cast %166 : vector<32xf32> to vector<1x32xf32>
    %181 = vector.broadcast %180 : vector<1x32xf32> to vector<16x32xf32>
    %182 = arith.mulf %181, %174 : vector<16x32xf32>
    %183 = math.sqrt %179 : vector<16x1xf32>
    %cst_72 = arith.constant 9.99999997E-7 : f32
    %184 = vector.broadcast %cst_72 : f32 to vector<16x1xf32>
    %185 = arith.addf %183, %184 : vector<16x1xf32>
    %186 = vector.broadcast %185 : vector<16x1xf32> to vector<16x32xf32>
    %187 = arith.divf %182, %186 : vector<16x32xf32>
    %188 = vector.shape_cast %168 : vector<32xf32> to vector<1x32xf32>
    %189 = vector.broadcast %188 : vector<1x32xf32> to vector<16x32xf32>
    %190 = arith.addf %187, %189 : vector<16x32xf32>
    %c0_73 = arith.constant 0 : index
    %c0_74 = arith.constant 0 : index
    %c0_75 = arith.constant 0 : index
    %191 = vector.load %arg17[%c0_73, %c0_74, %c0_75] : memref<2x32x64xbf16, #tpu.memory_space<vmem>>, vector<1x32x64xbf16>
    %192 = vector.shape_cast %191 : vector<1x32x64xbf16> to vector<32x64xbf16>
    %193 = arith.truncf %190 : vector<16x32xf32> to vector<16x32xbf16>
    %cst_76 = arith.constant dense<0.000000e+00> : vector<16x64xf32>
    %194 = tpu.matmul %193, %192, %cst_76 {dimension_numbers = #tpu.dot_dimension_numbers<[1], [0], [0], [1], [0, 0, 1, 1], [], []>} : vector<16x32xbf16>, vector<32x64xbf16>, vector<16x64xf32> -> vector<16x64xf32>
    %c0_77 = arith.constant 0 : index
    %c0_78 = arith.constant 0 : index
    %195 = vector.load %arg18[%c0_77, %c0_78] : memref<2x64xf32, #tpu.memory_space<vmem>>, vector<1x64xf32>
    %196 = vector.shape_cast %195 : vector<1x64xf32> to vector<64xf32>
    %197 = vector.shape_cast %196 : vector<64xf32> to vector<1x64xf32>
    %198 = vector.broadcast %197 : vector<1x64xf32> to vector<16x64xf32>
    %199 = arith.addf %194, %198 : vector<16x64xf32>
    %cst_79 = arith.constant 0.000000e+00 : f32
    %200 = vector.broadcast %cst_79 : f32 to vector<16x64xf32>
    %201 = arith.maximumf %199, %200 : vector<16x64xf32>
    %c0_80 = arith.constant 0 : index
    %c0_81 = arith.constant 0 : index
    %c0_82 = arith.constant 0 : index
    %202 = vector.load %arg19[%c0_80, %c0_81, %c0_82] : memref<2x64x32xbf16, #tpu.memory_space<vmem>>, vector<1x64x32xbf16>
    %203 = vector.shape_cast %202 : vector<1x64x32xbf16> to vector<64x32xbf16>
    %204 = arith.truncf %201 : vector<16x64xf32> to vector<16x64xbf16>
    %cst_83 = arith.constant dense<0.000000e+00> : vector<16x32xf32>
    %205 = tpu.matmul %204, %203, %cst_83 {dimension_numbers = #tpu.dot_dimension_numbers<[1], [0], [0], [1], [0, 0, 1, 1], [], []>} : vector<16x64xbf16>, vector<64x32xbf16>, vector<16x32xf32> -> vector<16x32xf32>
    %c0_84 = arith.constant 0 : index
    %c0_85 = arith.constant 0 : index
    %206 = vector.load %arg20[%c0_84, %c0_85] : memref<2x32xf32, #tpu.memory_space<vmem>>, vector<1x32xf32>
    %207 = vector.shape_cast %206 : vector<1x32xf32> to vector<32xf32>
    %208 = vector.shape_cast %207 : vector<32xf32> to vector<1x32xf32>
    %209 = vector.broadcast %208 : vector<1x32xf32> to vector<16x32xf32>
    %210 = arith.addf %205, %209 : vector<16x32xf32>
    %211 = arith.addf %190, %210 : vector<16x32xf32>
    %c0_86 = arith.constant 0 : index
    %c0_87 = arith.constant 0 : index
    %212 = vector.load %arg21[%c0_86, %c0_87] : memref<2x32xf32, #tpu.memory_space<vmem>>, vector<1x32xf32>
    %213 = vector.shape_cast %212 : vector<1x32xf32> to vector<32xf32>
    %c0_88 = arith.constant 0 : index
    %c0_89 = arith.constant 0 : index
    %214 = vector.load %arg22[%c0_88, %c0_89] : memref<2x32xf32, #tpu.memory_space<vmem>>, vector<1x32xf32>
    %215 = vector.shape_cast %214 : vector<1x32xf32> to vector<32xf32>
    %cst_90 = arith.constant dense<0.000000e+00> : vector<16xf32>
    %216 = vector.multi_reduction <add>, %211, %cst_90 [1] : vector<16x32xf32> to vector<16xf32>
    %217 = vector.shape_cast %216 : vector<16xf32> to vector<16x1xf32>
    %cst_91 = arith.constant 3.200000e+01 : f32
    %218 = vector.broadcast %cst_91 : f32 to vector<16x1xf32>
    %219 = arith.divf %217, %218 : vector<16x1xf32>
    %220 = vector.broadcast %219 : vector<16x1xf32> to vector<16x32xf32>
    %221 = arith.subf %211, %220 : vector<16x32xf32>
    %222 = arith.mulf %221, %221 : vector<16x32xf32>
    %cst_92 = arith.constant dense<0.000000e+00> : vector<16xf32>
    %223 = vector.multi_reduction <add>, %222, %cst_92 [1] : vector<16x32xf32> to vector<16xf32>
    %224 = vector.shape_cast %223 : vector<16xf32> to vector<16x1xf32>
    %cst_93 = arith.constant 0.0322580636 : f32
    %225 = vector.broadcast %cst_93 : f32 to vector<16x1xf32>
    %226 = arith.mulf %224, %225 : vector<16x1xf32>
    %227 = vector.shape_cast %213 : vector<32xf32> to vector<1x32xf32>
    %228 = vector.broadcast %227 : vector<1x32xf32> to vector<16x32xf32>
    %229 = arith.mulf %228, %221 : vector<16x32xf32>
    %230 = math.sqrt %226 : vector<16x1xf32>
    %cst_94 = arith.constant 9.99999997E-7 : f32
    %231 = vector.broadcast %cst_94 : f32 to vector<16x1xf32>
    %232 = arith.addf %230, %231 : vector<16x1xf32>
    %233 = vector.broadcast %232 : vector<16x1xf32> to vector<16x32xf32>
    %234 = arith.divf %229, %233 : vector<16x32xf32>
    %235 = vector.shape_cast %215 : vector<32xf32> to vector<1x32xf32>
    %236 = vector.broadcast %235 : vector<1x32xf32> to vector<16x32xf32>
    %237 = arith.addf %234, %236 : vector<16x32xf32>
    %c1 = arith.constant 1 : index
    %c0_95 = arith.constant 0 : index
    %c0_96 = arith.constant 0 : index
    %238 = vector.load %arg11[%c1, %c0_95, %c0_96] : memref<2x32x96xbf16, #tpu.memory_space<vmem>>, vector<1x32x96xbf16>
    %239 = vector.shape_cast %238 : vector<1x32x96xbf16> to vector<32x96xbf16>
    %240 = arith.truncf %237 : vector<16x32xf32> to vector<16x32xbf16>
    %cst_97 = arith.constant dense<0.000000e+00> : vector<16x96xf32>
    %241 = tpu.matmul %240, %239, %cst_97 {dimension_numbers = #tpu.dot_dimension_numbers<[1], [0], [0], [1], [0, 0, 1, 1], [], []>} : vector<16x32xbf16>, vector<32x96xbf16>, vector<16x96xf32> -> vector<16x96xf32>
    %c1_98 = arith.constant 1 : index
    %c0_99 = arith.constant 0 : index
    %242 = vector.load %arg12[%c1_98, %c0_99] : memref<2x96xf32, #tpu.memory_space<vmem>>, vector<1x96xf32>
    %243 = vector.shape_cast %242 : vector<1x96xf32> to vector<96xf32>
    %244 = vector.shape_cast %243 : vector<96xf32> to vector<1x96xf32>
    %245 = vector.broadcast %244 : vector<1x96xf32> to vector<16x96xf32>
    %246 = arith.addf %241, %245 : vector<16x96xf32>
    %247 = vector.extract_strided_slice %246 {offsets = [0, 0], sizes = [16, 32], strides = [1, 1]} : vector<16x96xf32> to vector<16x32xf32>
    %cst_100 = arith.constant 0.353553385 : f32
    %248 = vector.broadcast %cst_100 : f32 to vector<16x32xf32>
    %249 = arith.mulf %247, %248 : vector<16x32xf32>
    %250 = vector.shape_cast %249 : vector<16x32xf32> to vector<2x8x32xf32>
    %251 = vector.extract_strided_slice %246 {offsets = [0, 32], sizes = [16, 32], strides = [1, 1]} : vector<16x96xf32> to vector<16x32xf32>
    %252 = vector.shape_cast %251 : vector<16x32xf32> to vector<2x8x32xf32>
    %253 = vector.extract_strided_slice %246 {offsets = [0, 64], sizes = [16, 32], strides = [1, 1]} : vector<16x96xf32> to vector<16x32xf32>
    %254 = vector.shape_cast %253 : vector<16x32xf32> to vector<2x8x32xf32>
    %255 = vector.extract_strided_slice %250 {offsets = [0, 0, 0], sizes = [2, 8, 8], strides = [1, 1, 1]} : vector<2x8x32xf32> to vector<2x8x8xf32>
    %256 = arith.truncf %255 : vector<2x8x8xf32> to vector<2x8x8xbf16>
    %257 = vector.extract_strided_slice %252 {offsets = [0, 0, 0], sizes = [2, 8, 8], strides = [1, 1, 1]} : vector<2x8x32xf32> to vector<2x8x8xf32>
    %258 = arith.truncf %257 : vector<2x8x8xf32> to vector<2x8x8xbf16>
    "tpu.trace_start"() <{level = 10 : i32, message = "bqd,bkd->bqk"}> : () -> ()
    %cst_101 = arith.constant dense<0.000000e+00> : vector<2x8x8xf32>
    %259 = tpu.matmul %256, %258, %cst_101 {dimension_numbers = #tpu.dot_dimension_numbers<[2], [2], [1], [1], [0, 0, 0, 1, 1, 1], [0], [0]>} : vector<2x8x8xbf16>, vector<2x8x8xbf16>, vector<2x8x8xf32> -> vector<2x8x8xf32>
    %cst_102 = arith.constant 0.000000e+00 : f32
    "tpu.trace_stop"() : () -> ()
    %260 = vector.broadcast %cst_102 : f32 to vector<2x8x8xf32>
    %261 = arith.cmpf oeq, %42, %260 : vector<2x8x8xf32>
    %cst_103 = arith.constant -1.000000e+09 : f32
    %262 = vector.broadcast %cst_103 : f32 to vector<2x8x8xf32>
    %263 = arith.select %261, %262, %259 : vector<2x8x8xi1>, vector<2x8x8xf32>
    %cst_104 = arith.constant dense<0xFF800000> : vector<2x8xf32>
    %264 = vector.multi_reduction <maximumf>, %263, %cst_104 [2] : vector<2x8x8xf32> to vector<2x8xf32>
    %265 = vector.shape_cast %264 : vector<2x8xf32> to vector<2x8x1xf32>
    %266 = vector.broadcast %265 : vector<2x8x1xf32> to vector<2x8x8xf32>
    %267 = arith.subf %263, %266 : vector<2x8x8xf32>
    %268 = math.exp %267 : vector<2x8x8xf32>
    %cst_105 = arith.constant dense<0.000000e+00> : vector<2x8xf32>
    %269 = vector.multi_reduction <add>, %268, %cst_105 [2] : vector<2x8x8xf32> to vector<2x8xf32>
    %270 = vector.shape_cast %269 : vector<2x8xf32> to vector<2x8x1xf32>
    %271 = tpu.reciprocal %270 {approx = true} : vector<2x8x1xf32> -> vector<2x8x1xf32>
    %272 = vector.broadcast %271 : vector<2x8x1xf32> to vector<2x8x8xf32>
    %273 = arith.mulf %268, %272 : vector<2x8x8xf32>
    %274 = arith.truncf %273 : vector<2x8x8xf32> to vector<2x8x8xbf16>
    %275 = vector.extract_strided_slice %254 {offsets = [0, 0, 0], sizes = [2, 8, 8], strides = [1, 1, 1]} : vector<2x8x32xf32> to vector<2x8x8xf32>
    %276 = arith.truncf %275 : vector<2x8x8xf32> to vector<2x8x8xbf16>
    "tpu.trace_start"() <{level = 10 : i32, message = "bqk,bkd->bqd"}> : () -> ()
    %cst_106 = arith.constant dense<0.000000e+00> : vector<2x8x8xf32>
    %277 = tpu.matmul %274, %276, %cst_106 {dimension_numbers = #tpu.dot_dimension_numbers<[2], [1], [1], [2], [0, 0, 0, 1, 1, 2], [0], [0]>} : vector<2x8x8xbf16>, vector<2x8x8xbf16>, vector<2x8x8xf32> -> vector<2x8x8xf32>
    "tpu.trace_stop"() : () -> ()
    %278 = vector.extract_strided_slice %250 {offsets = [0, 0, 8], sizes = [2, 8, 8], strides = [1, 1, 1]} : vector<2x8x32xf32> to vector<2x8x8xf32>
    %279 = arith.truncf %278 : vector<2x8x8xf32> to vector<2x8x8xbf16>
    %280 = vector.extract_strided_slice %252 {offsets = [0, 0, 8], sizes = [2, 8, 8], strides = [1, 1, 1]} : vector<2x8x32xf32> to vector<2x8x8xf32>
    %281 = arith.truncf %280 : vector<2x8x8xf32> to vector<2x8x8xbf16>
    "tpu.trace_start"() <{level = 10 : i32, message = "bqd,bkd->bqk"}> : () -> ()
    %cst_107 = arith.constant dense<0.000000e+00> : vector<2x8x8xf32>
    %282 = tpu.matmul %279, %281, %cst_107 {dimension_numbers = #tpu.dot_dimension_numbers<[2], [2], [1], [1], [0, 0, 0, 1, 1, 1], [0], [0]>} : vector<2x8x8xbf16>, vector<2x8x8xbf16>, vector<2x8x8xf32> -> vector<2x8x8xf32>
    %cst_108 = arith.constant 0.000000e+00 : f32
    "tpu.trace_stop"() : () -> ()
    %283 = vector.broadcast %cst_108 : f32 to vector<2x8x8xf32>
    %284 = arith.cmpf oeq, %42, %283 : vector<2x8x8xf32>
    %cst_109 = arith.constant -1.000000e+09 : f32
    %285 = vector.broadcast %cst_109 : f32 to vector<2x8x8xf32>
    %286 = arith.select %284, %285, %282 : vector<2x8x8xi1>, vector<2x8x8xf32>
    %cst_110 = arith.constant dense<0xFF800000> : vector<2x8xf32>
    %287 = vector.multi_reduction <maximumf>, %286, %cst_110 [2] : vector<2x8x8xf32> to vector<2x8xf32>
    %288 = vector.shape_cast %287 : vector<2x8xf32> to vector<2x8x1xf32>
    %289 = vector.broadcast %288 : vector<2x8x1xf32> to vector<2x8x8xf32>
    %290 = arith.subf %286, %289 : vector<2x8x8xf32>
    %291 = math.exp %290 : vector<2x8x8xf32>
    %cst_111 = arith.constant dense<0.000000e+00> : vector<2x8xf32>
    %292 = vector.multi_reduction <add>, %291, %cst_111 [2] : vector<2x8x8xf32> to vector<2x8xf32>
    %293 = vector.shape_cast %292 : vector<2x8xf32> to vector<2x8x1xf32>
    %294 = tpu.reciprocal %293 {approx = true} : vector<2x8x1xf32> -> vector<2x8x1xf32>
    %295 = vector.broadcast %294 : vector<2x8x1xf32> to vector<2x8x8xf32>
    %296 = arith.mulf %291, %295 : vector<2x8x8xf32>
    %297 = arith.truncf %296 : vector<2x8x8xf32> to vector<2x8x8xbf16>
    %298 = vector.extract_strided_slice %254 {offsets = [0, 0, 8], sizes = [2, 8, 8], strides = [1, 1, 1]} : vector<2x8x32xf32> to vector<2x8x8xf32>
    %299 = arith.truncf %298 : vector<2x8x8xf32> to vector<2x8x8xbf16>
    "tpu.trace_start"() <{level = 10 : i32, message = "bqk,bkd->bqd"}> : () -> ()
    %cst_112 = arith.constant dense<0.000000e+00> : vector<2x8x8xf32>
    %300 = tpu.matmul %297, %299, %cst_112 {dimension_numbers = #tpu.dot_dimension_numbers<[2], [1], [1], [2], [0, 0, 0, 1, 1, 2], [0], [0]>} : vector<2x8x8xbf16>, vector<2x8x8xbf16>, vector<2x8x8xf32> -> vector<2x8x8xf32>
    "tpu.trace_stop"() : () -> ()
    %301 = vector.extract_strided_slice %250 {offsets = [0, 0, 16], sizes = [2, 8, 8], strides = [1, 1, 1]} : vector<2x8x32xf32> to vector<2x8x8xf32>
    %302 = arith.truncf %301 : vector<2x8x8xf32> to vector<2x8x8xbf16>
    %303 = vector.extract_strided_slice %252 {offsets = [0, 0, 16], sizes = [2, 8, 8], strides = [1, 1, 1]} : vector<2x8x32xf32> to vector<2x8x8xf32>
    %304 = arith.truncf %303 : vector<2x8x8xf32> to vector<2x8x8xbf16>
    "tpu.trace_start"() <{level = 10 : i32, message = "bqd,bkd->bqk"}> : () -> ()
    %cst_113 = arith.constant dense<0.000000e+00> : vector<2x8x8xf32>
    %305 = tpu.matmul %302, %304, %cst_113 {dimension_numbers = #tpu.dot_dimension_numbers<[2], [2], [1], [1], [0, 0, 0, 1, 1, 1], [0], [0]>} : vector<2x8x8xbf16>, vector<2x8x8xbf16>, vector<2x8x8xf32> -> vector<2x8x8xf32>
    %cst_114 = arith.constant 0.000000e+00 : f32
    "tpu.trace_stop"() : () -> ()
    %306 = vector.broadcast %cst_114 : f32 to vector<2x8x8xf32>
    %307 = arith.cmpf oeq, %42, %306 : vector<2x8x8xf32>
    %cst_115 = arith.constant -1.000000e+09 : f32
    %308 = vector.broadcast %cst_115 : f32 to vector<2x8x8xf32>
    %309 = arith.select %307, %308, %305 : vector<2x8x8xi1>, vector<2x8x8xf32>
    %cst_116 = arith.constant dense<0xFF800000> : vector<2x8xf32>
    %310 = vector.multi_reduction <maximumf>, %309, %cst_116 [2] : vector<2x8x8xf32> to vector<2x8xf32>
    %311 = vector.shape_cast %310 : vector<2x8xf32> to vector<2x8x1xf32>
    %312 = vector.broadcast %311 : vector<2x8x1xf32> to vector<2x8x8xf32>
    %313 = arith.subf %309, %312 : vector<2x8x8xf32>
    %314 = math.exp %313 : vector<2x8x8xf32>
    %cst_117 = arith.constant dense<0.000000e+00> : vector<2x8xf32>
    %315 = vector.multi_reduction <add>, %314, %cst_117 [2] : vector<2x8x8xf32> to vector<2x8xf32>
    %316 = vector.shape_cast %315 : vector<2x8xf32> to vector<2x8x1xf32>
    %317 = tpu.reciprocal %316 {approx = true} : vector<2x8x1xf32> -> vector<2x8x1xf32>
    %318 = vector.broadcast %317 : vector<2x8x1xf32> to vector<2x8x8xf32>
    %319 = arith.mulf %314, %318 : vector<2x8x8xf32>
    %320 = arith.truncf %319 : vector<2x8x8xf32> to vector<2x8x8xbf16>
    %321 = vector.extract_strided_slice %254 {offsets = [0, 0, 16], sizes = [2, 8, 8], strides = [1, 1, 1]} : vector<2x8x32xf32> to vector<2x8x8xf32>
    %322 = arith.truncf %321 : vector<2x8x8xf32> to vector<2x8x8xbf16>
    "tpu.trace_start"() <{level = 10 : i32, message = "bqk,bkd->bqd"}> : () -> ()
    %cst_118 = arith.constant dense<0.000000e+00> : vector<2x8x8xf32>
    %323 = tpu.matmul %320, %322, %cst_118 {dimension_numbers = #tpu.dot_dimension_numbers<[2], [1], [1], [2], [0, 0, 0, 1, 1, 2], [0], [0]>} : vector<2x8x8xbf16>, vector<2x8x8xbf16>, vector<2x8x8xf32> -> vector<2x8x8xf32>
    "tpu.trace_stop"() : () -> ()
    %324 = vector.extract_strided_slice %250 {offsets = [0, 0, 24], sizes = [2, 8, 8], strides = [1, 1, 1]} : vector<2x8x32xf32> to vector<2x8x8xf32>
    %325 = arith.truncf %324 : vector<2x8x8xf32> to vector<2x8x8xbf16>
    %326 = vector.extract_strided_slice %252 {offsets = [0, 0, 24], sizes = [2, 8, 8], strides = [1, 1, 1]} : vector<2x8x32xf32> to vector<2x8x8xf32>
    %327 = arith.truncf %326 : vector<2x8x8xf32> to vector<2x8x8xbf16>
    "tpu.trace_start"() <{level = 10 : i32, message = "bqd,bkd->bqk"}> : () -> ()
    %cst_119 = arith.constant dense<0.000000e+00> : vector<2x8x8xf32>
    %328 = tpu.matmul %325, %327, %cst_119 {dimension_numbers = #tpu.dot_dimension_numbers<[2], [2], [1], [1], [0, 0, 0, 1, 1, 1], [0], [0]>} : vector<2x8x8xbf16>, vector<2x8x8xbf16>, vector<2x8x8xf32> -> vector<2x8x8xf32>
    %cst_120 = arith.constant 0.000000e+00 : f32
    "tpu.trace_stop"() : () -> ()
    %329 = vector.broadcast %cst_120 : f32 to vector<2x8x8xf32>
    %330 = arith.cmpf oeq, %42, %329 : vector<2x8x8xf32>
    %cst_121 = arith.constant -1.000000e+09 : f32
    %331 = vector.broadcast %cst_121 : f32 to vector<2x8x8xf32>
    %332 = arith.select %330, %331, %328 : vector<2x8x8xi1>, vector<2x8x8xf32>
    %cst_122 = arith.constant dense<0xFF800000> : vector<2x8xf32>
    %333 = vector.multi_reduction <maximumf>, %332, %cst_122 [2] : vector<2x8x8xf32> to vector<2x8xf32>
    %334 = vector.shape_cast %333 : vector<2x8xf32> to vector<2x8x1xf32>
    %335 = vector.broadcast %334 : vector<2x8x1xf32> to vector<2x8x8xf32>
    %336 = arith.subf %332, %335 : vector<2x8x8xf32>
    %337 = math.exp %336 : vector<2x8x8xf32>
    %cst_123 = arith.constant dense<0.000000e+00> : vector<2x8xf32>
    %338 = vector.multi_reduction <add>, %337, %cst_123 [2] : vector<2x8x8xf32> to vector<2x8xf32>
    %339 = vector.shape_cast %338 : vector<2x8xf32> to vector<2x8x1xf32>
    %340 = tpu.reciprocal %339 {approx = true} : vector<2x8x1xf32> -> vector<2x8x1xf32>
    %341 = vector.broadcast %340 : vector<2x8x1xf32> to vector<2x8x8xf32>
    %342 = arith.mulf %337, %341 : vector<2x8x8xf32>
    %343 = arith.truncf %342 : vector<2x8x8xf32> to vector<2x8x8xbf16>
    %344 = vector.extract_strided_slice %254 {offsets = [0, 0, 24], sizes = [2, 8, 8], strides = [1, 1, 1]} : vector<2x8x32xf32> to vector<2x8x8xf32>
    %345 = arith.truncf %344 : vector<2x8x8xf32> to vector<2x8x8xbf16>
    "tpu.trace_start"() <{level = 10 : i32, message = "bqk,bkd->bqd"}> : () -> ()
    %cst_124 = arith.constant dense<0.000000e+00> : vector<2x8x8xf32>
    %346 = tpu.matmul %343, %345, %cst_124 {dimension_numbers = #tpu.dot_dimension_numbers<[2], [1], [1], [2], [0, 0, 0, 1, 1, 2], [0], [0]>} : vector<2x8x8xbf16>, vector<2x8x8xbf16>, vector<2x8x8xf32> -> vector<2x8x8xf32>
    "tpu.trace_stop"() : () -> ()
    %347 = tpu.concatenate %277, %300, %323, %346 in 2 : vector<2x8x8xf32>, vector<2x8x8xf32>, vector<2x8x8xf32>, vector<2x8x8xf32> -> vector<2x8x32xf32>
    %348 = vector.shape_cast %347 : vector<2x8x32xf32> to vector<16x32xf32>
    %c1_125 = arith.constant 1 : index
    %c0_126 = arith.constant 0 : index
    %c0_127 = arith.constant 0 : index
    %349 = vector.load %arg13[%c1_125, %c0_126, %c0_127] : memref<2x32x32xbf16, #tpu.memory_space<vmem>>, vector<1x32x32xbf16>
    %350 = vector.shape_cast %349 : vector<1x32x32xbf16> to vector<32x32xbf16>
    %351 = arith.truncf %348 : vector<16x32xf32> to vector<16x32xbf16>
    %cst_128 = arith.constant dense<0.000000e+00> : vector<16x32xf32>
    %352 = tpu.matmul %351, %350, %cst_128 {dimension_numbers = #tpu.dot_dimension_numbers<[1], [0], [0], [1], [0, 0, 1, 1], [], []>} : vector<16x32xbf16>, vector<32x32xbf16>, vector<16x32xf32> -> vector<16x32xf32>
    %c1_129 = arith.constant 1 : index
    %c0_130 = arith.constant 0 : index
    %353 = vector.load %arg14[%c1_129, %c0_130] : memref<2x32xf32, #tpu.memory_space<vmem>>, vector<1x32xf32>
    %354 = vector.shape_cast %353 : vector<1x32xf32> to vector<32xf32>
    %355 = vector.shape_cast %354 : vector<32xf32> to vector<1x32xf32>
    %356 = vector.broadcast %355 : vector<1x32xf32> to vector<16x32xf32>
    %357 = arith.addf %352, %356 : vector<16x32xf32>
    %358 = arith.addf %237, %357 : vector<16x32xf32>
    %c1_131 = arith.constant 1 : index
    %c0_132 = arith.constant 0 : index
    %359 = vector.load %arg15[%c1_131, %c0_132] : memref<2x32xf32, #tpu.memory_space<vmem>>, vector<1x32xf32>
    %360 = vector.shape_cast %359 : vector<1x32xf32> to vector<32xf32>
    %c1_133 = arith.constant 1 : index
    %c0_134 = arith.constant 0 : index
    %361 = vector.load %arg16[%c1_133, %c0_134] : memref<2x32xf32, #tpu.memory_space<vmem>>, vector<1x32xf32>
    %362 = vector.shape_cast %361 : vector<1x32xf32> to vector<32xf32>
    %cst_135 = arith.constant dense<0.000000e+00> : vector<16xf32>
    %363 = vector.multi_reduction <add>, %358, %cst_135 [1] : vector<16x32xf32> to vector<16xf32>
    %364 = vector.shape_cast %363 : vector<16xf32> to vector<16x1xf32>
    %cst_136 = arith.constant 3.200000e+01 : f32
    %365 = vector.broadcast %cst_136 : f32 to vector<16x1xf32>
    %366 = arith.divf %364, %365 : vector<16x1xf32>
    %367 = vector.broadcast %366 : vector<16x1xf32> to vector<16x32xf32>
    %368 = arith.subf %358, %367 : vector<16x32xf32>
    %369 = arith.mulf %368, %368 : vector<16x32xf32>
    %cst_137 = arith.constant dense<0.000000e+00> : vector<16xf32>
    %370 = vector.multi_reduction <add>, %369, %cst_137 [1] : vector<16x32xf32> to vector<16xf32>
    %371 = vector.shape_cast %370 : vector<16xf32> to vector<16x1xf32>
    %cst_138 = arith.constant 0.0322580636 : f32
    %372 = vector.broadcast %cst_138 : f32 to vector<16x1xf32>
    %373 = arith.mulf %371, %372 : vector<16x1xf32>
    %374 = vector.shape_cast %360 : vector<32xf32> to vector<1x32xf32>
    %375 = vector.broadcast %374 : vector<1x32xf32> to vector<16x32xf32>
    %376 = arith.mulf %375, %368 : vector<16x32xf32>
    %377 = math.sqrt %373 : vector<16x1xf32>
    %cst_139 = arith.constant 9.99999997E-7 : f32
    %378 = vector.broadcast %cst_139 : f32 to vector<16x1xf32>
    %379 = arith.addf %377, %378 : vector<16x1xf32>
    %380 = vector.broadcast %379 : vector<16x1xf32> to vector<16x32xf32>
    %381 = arith.divf %376, %380 : vector<16x32xf32>
    %382 = vector.shape_cast %362 : vector<32xf32> to vector<1x32xf32>
    %383 = vector.broadcast %382 : vector<1x32xf32> to vector<16x32xf32>
    %384 = arith.addf %381, %383 : vector<16x32xf32>
    %c1_140 = arith.constant 1 : index
    %c0_141 = arith.constant 0 : index
    %c0_142 = arith.constant 0 : index
    %385 = vector.load %arg17[%c1_140, %c0_141, %c0_142] : memref<2x32x64xbf16, #tpu.memory_space<vmem>>, vector<1x32x64xbf16>
    %386 = vector.shape_cast %385 : vector<1x32x64xbf16> to vector<32x64xbf16>
    %387 = arith.truncf %384 : vector<16x32xf32> to vector<16x32xbf16>
    %cst_143 = arith.constant dense<0.000000e+00> : vector<16x64xf32>
    %388 = tpu.matmul %387, %386, %cst_143 {dimension_numbers = #tpu.dot_dimension_numbers<[1], [0], [0], [1], [0, 0, 1, 1], [], []>} : vector<16x32xbf16>, vector<32x64xbf16>, vector<16x64xf32> -> vector<16x64xf32>
    %c1_144 = arith.constant 1 : index
    %c0_145 = arith.constant 0 : index
    %389 = vector.load %arg18[%c1_144, %c0_145] : memref<2x64xf32, #tpu.memory_space<vmem>>, vector<1x64xf32>
    %390 = vector.shape_cast %389 : vector<1x64xf32> to vector<64xf32>
    %391 = vector.shape_cast %390 : vector<64xf32> to vector<1x64xf32>
    %392 = vector.broadcast %391 : vector<1x64xf32> to vector<16x64xf32>
    %393 = arith.addf %388, %392 : vector<16x64xf32>
    %cst_146 = arith.constant 0.000000e+00 : f32
    %394 = vector.broadcast %cst_146 : f32 to vector<16x64xf32>
    %395 = arith.maximumf %393, %394 : vector<16x64xf32>
    %c1_147 = arith.constant 1 : index
    %c0_148 = arith.constant 0 : index
    %c0_149 = arith.constant 0 : index
    %396 = vector.load %arg19[%c1_147, %c0_148, %c0_149] : memref<2x64x32xbf16, #tpu.memory_space<vmem>>, vector<1x64x32xbf16>
    %397 = vector.shape_cast %396 : vector<1x64x32xbf16> to vector<64x32xbf16>
    %398 = arith.truncf %395 : vector<16x64xf32> to vector<16x64xbf16>
    %cst_150 = arith.constant dense<0.000000e+00> : vector<16x32xf32>
    %399 = tpu.matmul %398, %397, %cst_150 {dimension_numbers = #tpu.dot_dimension_numbers<[1], [0], [0], [1], [0, 0, 1, 1], [], []>} : vector<16x64xbf16>, vector<64x32xbf16>, vector<16x32xf32> -> vector<16x32xf32>
    %c1_151 = arith.constant 1 : index
    %c0_152 = arith.constant 0 : index
    %400 = vector.load %arg20[%c1_151, %c0_152] : memref<2x32xf32, #tpu.memory_space<vmem>>, vector<1x32xf32>
    %401 = vector.shape_cast %400 : vector<1x32xf32> to vector<32xf32>
    %402 = vector.shape_cast %401 : vector<32xf32> to vector<1x32xf32>
    %403 = vector.broadcast %402 : vector<1x32xf32> to vector<16x32xf32>
    %404 = arith.addf %399, %403 : vector<16x32xf32>
    %405 = arith.addf %384, %404 : vector<16x32xf32>
    %c1_153 = arith.constant 1 : index
    %c0_154 = arith.constant 0 : index
    %406 = vector.load %arg21[%c1_153, %c0_154] : memref<2x32xf32, #tpu.memory_space<vmem>>, vector<1x32xf32>
    %407 = vector.shape_cast %406 : vector<1x32xf32> to vector<32xf32>
    %c1_155 = arith.constant 1 : index
    %c0_156 = arith.constant 0 : index
    %408 = vector.load %arg22[%c1_155, %c0_156] : memref<2x32xf32, #tpu.memory_space<vmem>>, vector<1x32xf32>
    %409 = vector.shape_cast %408 : vector<1x32xf32> to vector<32xf32>
    %cst_157 = arith.constant dense<0.000000e+00> : vector<16xf32>
    %410 = vector.multi_reduction <add>, %405, %cst_157 [1] : vector<16x32xf32> to vector<16xf32>
    %411 = vector.shape_cast %410 : vector<16xf32> to vector<16x1xf32>
    %cst_158 = arith.constant 3.200000e+01 : f32
    %412 = vector.broadcast %cst_158 : f32 to vector<16x1xf32>
    %413 = arith.divf %411, %412 : vector<16x1xf32>
    %414 = vector.broadcast %413 : vector<16x1xf32> to vector<16x32xf32>
    %415 = arith.subf %405, %414 : vector<16x32xf32>
    %416 = arith.mulf %415, %415 : vector<16x32xf32>
    %cst_159 = arith.constant dense<0.000000e+00> : vector<16xf32>
    %417 = vector.multi_reduction <add>, %416, %cst_159 [1] : vector<16x32xf32> to vector<16xf32>
    %418 = vector.shape_cast %417 : vector<16xf32> to vector<16x1xf32>
    %cst_160 = arith.constant 0.0322580636 : f32
    %419 = vector.broadcast %cst_160 : f32 to vector<16x1xf32>
    %420 = arith.mulf %418, %419 : vector<16x1xf32>
    %421 = vector.shape_cast %407 : vector<32xf32> to vector<1x32xf32>
    %422 = vector.broadcast %421 : vector<1x32xf32> to vector<16x32xf32>
    %423 = arith.mulf %422, %415 : vector<16x32xf32>
    %424 = math.sqrt %420 : vector<16x1xf32>
    %cst_161 = arith.constant 9.99999997E-7 : f32
    %425 = vector.broadcast %cst_161 : f32 to vector<16x1xf32>
    %426 = arith.addf %424, %425 : vector<16x1xf32>
    %427 = vector.broadcast %426 : vector<16x1xf32> to vector<16x32xf32>
    %428 = arith.divf %423, %427 : vector<16x32xf32>
    %429 = vector.shape_cast %409 : vector<32xf32> to vector<1x32xf32>
    %430 = vector.broadcast %429 : vector<1x32xf32> to vector<16x32xf32>
    %431 = arith.addf %428, %430 : vector<16x32xf32>
    %c0_162 = arith.constant 0 : index
    %c0_163 = arith.constant 0 : index
    %c0_164 = arith.constant 0 : index
    %432 = vector.load %arg23[%c0_162, %c0_163, %c0_164] : memref<2x32x32xbf16, #tpu.memory_space<vmem>>, vector<1x32x32xbf16>
    %433 = vector.shape_cast %432 : vector<1x32x32xbf16> to vector<32x32xbf16>
    %434 = vector.shape_cast %433 : vector<32x32xbf16> to vector<1x32x32xbf16>
    %435 = vector.broadcast %434 : vector<1x32x32xbf16> to vector<2x32x32xbf16>
    %436 = arith.truncf %36 : vector<2x1x32xf32> to vector<2x1x32xbf16>
    "tpu.trace_start"() <{level = 10 : i32, message = "bij,bjk->bik"}> : () -> ()
    %cst_165 = arith.constant dense<0.000000e+00> : vector<2x1x32xf32>
    %437 = tpu.matmul %436, %435, %cst_165 {dimension_numbers = #tpu.dot_dimension_numbers<[2], [1], [1], [2], [0, 0, 0, 1, 1, 2], [0], [0]>} : vector<2x1x32xbf16>, vector<2x32x32xbf16>, vector<2x1x32xf32> -> vector<2x1x32xf32>
    "tpu.trace_stop"() : () -> ()
    %c0_166 = arith.constant 0 : index
    %c0_167 = arith.constant 0 : index
    %438 = vector.load %arg24[%c0_166, %c0_167] : memref<2x32xf32, #tpu.memory_space<vmem>>, vector<1x32xf32>
    %439 = vector.shape_cast %438 : vector<1x32xf32> to vector<32xf32>
    %440 = vector.shape_cast %439 : vector<32xf32> to vector<1x1x32xf32>
    %441 = vector.broadcast %440 : vector<1x1x32xf32> to vector<2x1x32xf32>
    %442 = arith.addf %437, %441 : vector<2x1x32xf32>
    %c0_168 = arith.constant 0 : index
    %c0_169 = arith.constant 0 : index
    %c0_170 = arith.constant 0 : index
    %443 = vector.load %arg25[%c0_168, %c0_169, %c0_170] : memref<2x32x32xbf16, #tpu.memory_space<vmem>>, vector<1x32x32xbf16>
    %444 = vector.shape_cast %443 : vector<1x32x32xbf16> to vector<32x32xbf16>
    %445 = vector.shape_cast %444 : vector<32x32xbf16> to vector<1x32x32xbf16>
    %446 = vector.broadcast %445 : vector<1x32x32xbf16> to vector<2x32x32xbf16>
    %447 = arith.truncf %442 : vector<2x1x32xf32> to vector<2x1x32xbf16>
    "tpu.trace_start"() <{level = 10 : i32, message = "bij,bjk->bik"}> : () -> ()
    %cst_171 = arith.constant dense<0.000000e+00> : vector<2x1x32xf32>
    %448 = tpu.matmul %447, %446, %cst_171 {dimension_numbers = #tpu.dot_dimension_numbers<[2], [1], [1], [2], [0, 0, 0, 1, 1, 2], [0], [0]>} : vector<2x1x32xbf16>, vector<2x32x32xbf16>, vector<2x1x32xf32> -> vector<2x1x32xf32>
    "tpu.trace_stop"() : () -> ()
    %c0_172 = arith.constant 0 : index
    %c0_173 = arith.constant 0 : index
    %449 = vector.load %arg26[%c0_172, %c0_173] : memref<2x32xf32, #tpu.memory_space<vmem>>, vector<1x32xf32>
    %450 = vector.shape_cast %449 : vector<1x32xf32> to vector<32xf32>
    %451 = vector.shape_cast %450 : vector<32xf32> to vector<1x1x32xf32>
    %452 = vector.broadcast %451 : vector<1x1x32xf32> to vector<2x1x32xf32>
    %453 = arith.addf %448, %452 : vector<2x1x32xf32>
    %454 = arith.addf %36, %453 : vector<2x1x32xf32>
    %c0_174 = arith.constant 0 : index
    %c0_175 = arith.constant 0 : index
    %455 = vector.load %arg27[%c0_174, %c0_175] : memref<2x32xf32, #tpu.memory_space<vmem>>, vector<1x32xf32>
    %456 = vector.shape_cast %455 : vector<1x32xf32> to vector<32xf32>
    %c0_176 = arith.constant 0 : index
    %c0_177 = arith.constant 0 : index
    %457 = vector.load %arg28[%c0_176, %c0_177] : memref<2x32xf32, #tpu.memory_space<vmem>>, vector<1x32xf32>
    %458 = vector.shape_cast %457 : vector<1x32xf32> to vector<32xf32>
    %cst_178 = arith.constant dense<0.000000e+00> : vector<2x1xf32>
    %459 = vector.multi_reduction <add>, %454, %cst_178 [2] : vector<2x1x32xf32> to vector<2x1xf32>
    %460 = vector.shape_cast %459 : vector<2x1xf32> to vector<2x1x1xf32>
    %cst_179 = arith.constant 3.200000e+01 : f32
    %461 = vector.broadcast %cst_179 : f32 to vector<2x1x1xf32>
    %462 = arith.divf %460, %461 : vector<2x1x1xf32>
    %463 = vector.broadcast %462 : vector<2x1x1xf32> to vector<2x1x32xf32>
    %464 = arith.subf %454, %463 : vector<2x1x32xf32>
    %465 = arith.mulf %464, %464 : vector<2x1x32xf32>
    %cst_180 = arith.constant dense<0.000000e+00> : vector<2x1xf32>
    %466 = vector.multi_reduction <add>, %465, %cst_180 [2] : vector<2x1x32xf32> to vector<2x1xf32>
    %467 = vector.shape_cast %466 : vector<2x1xf32> to vector<2x1x1xf32>
    %cst_181 = arith.constant 0.0322580636 : f32
    %468 = vector.broadcast %cst_181 : f32 to vector<2x1x1xf32>
    %469 = arith.mulf %467, %468 : vector<2x1x1xf32>
    %470 = vector.shape_cast %456 : vector<32xf32> to vector<1x1x32xf32>
    %471 = vector.broadcast %470 : vector<1x1x32xf32> to vector<2x1x32xf32>
    %472 = arith.mulf %471, %464 : vector<2x1x32xf32>
    %473 = math.sqrt %469 : vector<2x1x1xf32>
    %cst_182 = arith.constant 9.99999997E-7 : f32
    %474 = vector.broadcast %cst_182 : f32 to vector<2x1x1xf32>
    %475 = arith.addf %473, %474 : vector<2x1x1xf32>
    %476 = vector.broadcast %475 : vector<2x1x1xf32> to vector<2x1x32xf32>
    %477 = arith.divf %472, %476 : vector<2x1x32xf32>
    %478 = vector.shape_cast %458 : vector<32xf32> to vector<1x1x32xf32>
    %479 = vector.broadcast %478 : vector<1x1x32xf32> to vector<2x1x32xf32>
    %480 = arith.addf %477, %479 : vector<2x1x32xf32>
    %c0_183 = arith.constant 0 : index
    %c0_184 = arith.constant 0 : index
    %c0_185 = arith.constant 0 : index
    %481 = vector.load %arg29[%c0_183, %c0_184, %c0_185] : memref<2x32x32xbf16, #tpu.memory_space<vmem>>, vector<1x32x32xbf16>
    %482 = vector.shape_cast %481 : vector<1x32x32xbf16> to vector<32x32xbf16>
    %483 = vector.shape_cast %482 : vector<32x32xbf16> to vector<1x32x32xbf16>
    %484 = vector.broadcast %483 : vector<1x32x32xbf16> to vector<2x32x32xbf16>
    %485 = arith.truncf %480 : vector<2x1x32xf32> to vector<2x1x32xbf16>
    "tpu.trace_start"() <{level = 10 : i32, message = "bij,bjk->bik"}> : () -> ()
    %cst_186 = arith.constant dense<0.000000e+00> : vector<2x1x32xf32>
    %486 = tpu.matmul %485, %484, %cst_186 {dimension_numbers = #tpu.dot_dimension_numbers<[2], [1], [1], [2], [0, 0, 0, 1, 1, 2], [0], [0]>} : vector<2x1x32xbf16>, vector<2x32x32xbf16>, vector<2x1x32xf32> -> vector<2x1x32xf32>
    "tpu.trace_stop"() : () -> ()
    %c0_187 = arith.constant 0 : index
    %c0_188 = arith.constant 0 : index
    %487 = vector.load %arg30[%c0_187, %c0_188] : memref<2x32xf32, #tpu.memory_space<vmem>>, vector<1x32xf32>
    %488 = vector.shape_cast %487 : vector<1x32xf32> to vector<32xf32>
    %489 = vector.shape_cast %488 : vector<32xf32> to vector<1x1x32xf32>
    %490 = vector.broadcast %489 : vector<1x1x32xf32> to vector<2x1x32xf32>
    %491 = arith.addf %486, %490 : vector<2x1x32xf32>
    %cst_189 = arith.constant 0.353553385 : f32
    %492 = vector.broadcast %cst_189 : f32 to vector<2x1x32xf32>
    %493 = arith.mulf %491, %492 : vector<2x1x32xf32>
    %c0_190 = arith.constant 0 : index
    %c0_191 = arith.constant 0 : index
    %c0_192 = arith.constant 0 : index
    %494 = vector.load %arg31[%c0_190, %c0_191, %c0_192] : memref<2x32x64xbf16, #tpu.memory_space<vmem>>, vector<1x32x64xbf16>
    %495 = vector.shape_cast %494 : vector<1x32x64xbf16> to vector<32x64xbf16>
    %496 = arith.truncf %431 : vector<16x32xf32> to vector<16x32xbf16>
    %cst_193 = arith.constant dense<0.000000e+00> : vector<16x64xf32>
    %497 = tpu.matmul %496, %495, %cst_193 {dimension_numbers = #tpu.dot_dimension_numbers<[1], [0], [0], [1], [0, 0, 1, 1], [], []>} : vector<16x32xbf16>, vector<32x64xbf16>, vector<16x64xf32> -> vector<16x64xf32>
    %c0_194 = arith.constant 0 : index
    %c0_195 = arith.constant 0 : index
    %498 = vector.load %arg32[%c0_194, %c0_195] : memref<2x64xf32, #tpu.memory_space<vmem>>, vector<1x64xf32>
    %499 = vector.shape_cast %498 : vector<1x64xf32> to vector<64xf32>
    %500 = vector.shape_cast %499 : vector<64xf32> to vector<1x64xf32>
    %501 = vector.broadcast %500 : vector<1x64xf32> to vector<16x64xf32>
    %502 = arith.addf %497, %501 : vector<16x64xf32>
    %503 = vector.extract_strided_slice %502 {offsets = [0, 0], sizes = [16, 32], strides = [1, 1]} : vector<16x64xf32> to vector<16x32xf32>
    %504 = vector.shape_cast %503 : vector<16x32xf32> to vector<2x8x32xf32>
    %505 = vector.extract_strided_slice %502 {offsets = [0, 32], sizes = [16, 32], strides = [1, 1]} : vector<16x64xf32> to vector<16x32xf32>
    %506 = vector.shape_cast %505 : vector<16x32xf32> to vector<2x8x32xf32>
    %507 = vector.extract_strided_slice %493 {offsets = [0, 0, 0], sizes = [2, 1, 8], strides = [1, 1, 1]} : vector<2x1x32xf32> to vector<2x1x8xf32>
    %508 = arith.truncf %507 : vector<2x1x8xf32> to vector<2x1x8xbf16>
    %509 = vector.extract_strided_slice %504 {offsets = [0, 0, 0], sizes = [2, 8, 8], strides = [1, 1, 1]} : vector<2x8x32xf32> to vector<2x8x8xf32>
    %510 = arith.truncf %509 : vector<2x8x8xf32> to vector<2x8x8xbf16>
    "tpu.trace_start"() <{level = 10 : i32, message = "bqd,bkd->bqk"}> : () -> ()
    %cst_196 = arith.constant dense<0.000000e+00> : vector<2x1x8xf32>
    %511 = tpu.matmul %508, %510, %cst_196 {dimension_numbers = #tpu.dot_dimension_numbers<[2], [2], [1], [1], [0, 0, 0, 1, 1, 1], [0], [0]>} : vector<2x1x8xbf16>, vector<2x8x8xbf16>, vector<2x1x8xf32> -> vector<2x1x8xf32>
    %cst_197 = arith.constant 0.000000e+00 : f32
    "tpu.trace_stop"() : () -> ()
    %512 = vector.broadcast %cst_197 : f32 to vector<2x1x8xf32>
    %513 = arith.cmpf oeq, %43, %512 : vector<2x1x8xf32>
    %cst_198 = arith.constant -1.000000e+09 : f32
    %514 = vector.broadcast %cst_198 : f32 to vector<2x1x8xf32>
    %515 = arith.select %513, %514, %511 : vector<2x1x8xi1>, vector<2x1x8xf32>
    %cst_199 = arith.constant dense<0xFF800000> : vector<2x1xf32>
    %516 = vector.multi_reduction <maximumf>, %515, %cst_199 [2] : vector<2x1x8xf32> to vector<2x1xf32>
    %517 = vector.shape_cast %516 : vector<2x1xf32> to vector<2x1x1xf32>
    %518 = vector.broadcast %517 : vector<2x1x1xf32> to vector<2x1x8xf32>
    %519 = arith.subf %515, %518 : vector<2x1x8xf32>
    %520 = math.exp %519 : vector<2x1x8xf32>
    %cst_200 = arith.constant dense<0.000000e+00> : vector<2x1xf32>
    %521 = vector.multi_reduction <add>, %520, %cst_200 [2] : vector<2x1x8xf32> to vector<2x1xf32>
    %522 = vector.shape_cast %521 : vector<2x1xf32> to vector<2x1x1xf32>
    %523 = tpu.reciprocal %522 {approx = true} : vector<2x1x1xf32> -> vector<2x1x1xf32>
    %524 = vector.broadcast %523 : vector<2x1x1xf32> to vector<2x1x8xf32>
    %525 = arith.mulf %520, %524 : vector<2x1x8xf32>
    %526 = arith.truncf %525 : vector<2x1x8xf32> to vector<2x1x8xbf16>
    %527 = vector.extract_strided_slice %506 {offsets = [0, 0, 0], sizes = [2, 8, 8], strides = [1, 1, 1]} : vector<2x8x32xf32> to vector<2x8x8xf32>
    %528 = arith.truncf %527 : vector<2x8x8xf32> to vector<2x8x8xbf16>
    "tpu.trace_start"() <{level = 10 : i32, message = "bqk,bkd->bqd"}> : () -> ()
    %cst_201 = arith.constant dense<0.000000e+00> : vector<2x1x8xf32>
    %529 = tpu.matmul %526, %528, %cst_201 {dimension_numbers = #tpu.dot_dimension_numbers<[2], [1], [1], [2], [0, 0, 0, 1, 1, 2], [0], [0]>} : vector<2x1x8xbf16>, vector<2x8x8xbf16>, vector<2x1x8xf32> -> vector<2x1x8xf32>
    "tpu.trace_stop"() : () -> ()
    %530 = vector.extract_strided_slice %493 {offsets = [0, 0, 8], sizes = [2, 1, 8], strides = [1, 1, 1]} : vector<2x1x32xf32> to vector<2x1x8xf32>
    %531 = arith.truncf %530 : vector<2x1x8xf32> to vector<2x1x8xbf16>
    %532 = vector.extract_strided_slice %504 {offsets = [0, 0, 8], sizes = [2, 8, 8], strides = [1, 1, 1]} : vector<2x8x32xf32> to vector<2x8x8xf32>
    %533 = arith.truncf %532 : vector<2x8x8xf32> to vector<2x8x8xbf16>
    "tpu.trace_start"() <{level = 10 : i32, message = "bqd,bkd->bqk"}> : () -> ()
    %cst_202 = arith.constant dense<0.000000e+00> : vector<2x1x8xf32>
    %534 = tpu.matmul %531, %533, %cst_202 {dimension_numbers = #tpu.dot_dimension_numbers<[2], [2], [1], [1], [0, 0, 0, 1, 1, 1], [0], [0]>} : vector<2x1x8xbf16>, vector<2x8x8xbf16>, vector<2x1x8xf32> -> vector<2x1x8xf32>
    %cst_203 = arith.constant 0.000000e+00 : f32
    "tpu.trace_stop"() : () -> ()
    %535 = vector.broadcast %cst_203 : f32 to vector<2x1x8xf32>
    %536 = arith.cmpf oeq, %43, %535 : vector<2x1x8xf32>
    %cst_204 = arith.constant -1.000000e+09 : f32
    %537 = vector.broadcast %cst_204 : f32 to vector<2x1x8xf32>
    %538 = arith.select %536, %537, %534 : vector<2x1x8xi1>, vector<2x1x8xf32>
    %cst_205 = arith.constant dense<0xFF800000> : vector<2x1xf32>
    %539 = vector.multi_reduction <maximumf>, %538, %cst_205 [2] : vector<2x1x8xf32> to vector<2x1xf32>
    %540 = vector.shape_cast %539 : vector<2x1xf32> to vector<2x1x1xf32>
    %541 = vector.broadcast %540 : vector<2x1x1xf32> to vector<2x1x8xf32>
    %542 = arith.subf %538, %541 : vector<2x1x8xf32>
    %543 = math.exp %542 : vector<2x1x8xf32>
    %cst_206 = arith.constant dense<0.000000e+00> : vector<2x1xf32>
    %544 = vector.multi_reduction <add>, %543, %cst_206 [2] : vector<2x1x8xf32> to vector<2x1xf32>
    %545 = vector.shape_cast %544 : vector<2x1xf32> to vector<2x1x1xf32>
    %546 = tpu.reciprocal %545 {approx = true} : vector<2x1x1xf32> -> vector<2x1x1xf32>
    %547 = vector.broadcast %546 : vector<2x1x1xf32> to vector<2x1x8xf32>
    %548 = arith.mulf %543, %547 : vector<2x1x8xf32>
    %549 = arith.truncf %548 : vector<2x1x8xf32> to vector<2x1x8xbf16>
    %550 = vector.extract_strided_slice %506 {offsets = [0, 0, 8], sizes = [2, 8, 8], strides = [1, 1, 1]} : vector<2x8x32xf32> to vector<2x8x8xf32>
    %551 = arith.truncf %550 : vector<2x8x8xf32> to vector<2x8x8xbf16>
    "tpu.trace_start"() <{level = 10 : i32, message = "bqk,bkd->bqd"}> : () -> ()
    %cst_207 = arith.constant dense<0.000000e+00> : vector<2x1x8xf32>
    %552 = tpu.matmul %549, %551, %cst_207 {dimension_numbers = #tpu.dot_dimension_numbers<[2], [1], [1], [2], [0, 0, 0, 1, 1, 2], [0], [0]>} : vector<2x1x8xbf16>, vector<2x8x8xbf16>, vector<2x1x8xf32> -> vector<2x1x8xf32>
    "tpu.trace_stop"() : () -> ()
    %553 = vector.extract_strided_slice %493 {offsets = [0, 0, 16], sizes = [2, 1, 8], strides = [1, 1, 1]} : vector<2x1x32xf32> to vector<2x1x8xf32>
    %554 = arith.truncf %553 : vector<2x1x8xf32> to vector<2x1x8xbf16>
    %555 = vector.extract_strided_slice %504 {offsets = [0, 0, 16], sizes = [2, 8, 8], strides = [1, 1, 1]} : vector<2x8x32xf32> to vector<2x8x8xf32>
    %556 = arith.truncf %555 : vector<2x8x8xf32> to vector<2x8x8xbf16>
    "tpu.trace_start"() <{level = 10 : i32, message = "bqd,bkd->bqk"}> : () -> ()
    %cst_208 = arith.constant dense<0.000000e+00> : vector<2x1x8xf32>
    %557 = tpu.matmul %554, %556, %cst_208 {dimension_numbers = #tpu.dot_dimension_numbers<[2], [2], [1], [1], [0, 0, 0, 1, 1, 1], [0], [0]>} : vector<2x1x8xbf16>, vector<2x8x8xbf16>, vector<2x1x8xf32> -> vector<2x1x8xf32>
    %cst_209 = arith.constant 0.000000e+00 : f32
    "tpu.trace_stop"() : () -> ()
    %558 = vector.broadcast %cst_209 : f32 to vector<2x1x8xf32>
    %559 = arith.cmpf oeq, %43, %558 : vector<2x1x8xf32>
    %cst_210 = arith.constant -1.000000e+09 : f32
    %560 = vector.broadcast %cst_210 : f32 to vector<2x1x8xf32>
    %561 = arith.select %559, %560, %557 : vector<2x1x8xi1>, vector<2x1x8xf32>
    %cst_211 = arith.constant dense<0xFF800000> : vector<2x1xf32>
    %562 = vector.multi_reduction <maximumf>, %561, %cst_211 [2] : vector<2x1x8xf32> to vector<2x1xf32>
    %563 = vector.shape_cast %562 : vector<2x1xf32> to vector<2x1x1xf32>
    %564 = vector.broadcast %563 : vector<2x1x1xf32> to vector<2x1x8xf32>
    %565 = arith.subf %561, %564 : vector<2x1x8xf32>
    %566 = math.exp %565 : vector<2x1x8xf32>
    %cst_212 = arith.constant dense<0.000000e+00> : vector<2x1xf32>
    %567 = vector.multi_reduction <add>, %566, %cst_212 [2] : vector<2x1x8xf32> to vector<2x1xf32>
    %568 = vector.shape_cast %567 : vector<2x1xf32> to vector<2x1x1xf32>
    %569 = tpu.reciprocal %568 {approx = true} : vector<2x1x1xf32> -> vector<2x1x1xf32>
    %570 = vector.broadcast %569 : vector<2x1x1xf32> to vector<2x1x8xf32>
    %571 = arith.mulf %566, %570 : vector<2x1x8xf32>
    %572 = arith.truncf %571 : vector<2x1x8xf32> to vector<2x1x8xbf16>
    %573 = vector.extract_strided_slice %506 {offsets = [0, 0, 16], sizes = [2, 8, 8], strides = [1, 1, 1]} : vector<2x8x32xf32> to vector<2x8x8xf32>
    %574 = arith.truncf %573 : vector<2x8x8xf32> to vector<2x8x8xbf16>
    "tpu.trace_start"() <{level = 10 : i32, message = "bqk,bkd->bqd"}> : () -> ()
    %cst_213 = arith.constant dense<0.000000e+00> : vector<2x1x8xf32>
    %575 = tpu.matmul %572, %574, %cst_213 {dimension_numbers = #tpu.dot_dimension_numbers<[2], [1], [1], [2], [0, 0, 0, 1, 1, 2], [0], [0]>} : vector<2x1x8xbf16>, vector<2x8x8xbf16>, vector<2x1x8xf32> -> vector<2x1x8xf32>
    "tpu.trace_stop"() : () -> ()
    %576 = vector.extract_strided_slice %493 {offsets = [0, 0, 24], sizes = [2, 1, 8], strides = [1, 1, 1]} : vector<2x1x32xf32> to vector<2x1x8xf32>
    %577 = arith.truncf %576 : vector<2x1x8xf32> to vector<2x1x8xbf16>
    %578 = vector.extract_strided_slice %504 {offsets = [0, 0, 24], sizes = [2, 8, 8], strides = [1, 1, 1]} : vector<2x8x32xf32> to vector<2x8x8xf32>
    %579 = arith.truncf %578 : vector<2x8x8xf32> to vector<2x8x8xbf16>
    "tpu.trace_start"() <{level = 10 : i32, message = "bqd,bkd->bqk"}> : () -> ()
    %cst_214 = arith.constant dense<0.000000e+00> : vector<2x1x8xf32>
    %580 = tpu.matmul %577, %579, %cst_214 {dimension_numbers = #tpu.dot_dimension_numbers<[2], [2], [1], [1], [0, 0, 0, 1, 1, 1], [0], [0]>} : vector<2x1x8xbf16>, vector<2x8x8xbf16>, vector<2x1x8xf32> -> vector<2x1x8xf32>
    %cst_215 = arith.constant 0.000000e+00 : f32
    "tpu.trace_stop"() : () -> ()
    %581 = vector.broadcast %cst_215 : f32 to vector<2x1x8xf32>
    %582 = arith.cmpf oeq, %43, %581 : vector<2x1x8xf32>
    %cst_216 = arith.constant -1.000000e+09 : f32
    %583 = vector.broadcast %cst_216 : f32 to vector<2x1x8xf32>
    %584 = arith.select %582, %583, %580 : vector<2x1x8xi1>, vector<2x1x8xf32>
    %cst_217 = arith.constant dense<0xFF800000> : vector<2x1xf32>
    %585 = vector.multi_reduction <maximumf>, %584, %cst_217 [2] : vector<2x1x8xf32> to vector<2x1xf32>
    %586 = vector.shape_cast %585 : vector<2x1xf32> to vector<2x1x1xf32>
    %587 = vector.broadcast %586 : vector<2x1x1xf32> to vector<2x1x8xf32>
    %588 = arith.subf %584, %587 : vector<2x1x8xf32>
    %589 = math.exp %588 : vector<2x1x8xf32>
    %cst_218 = arith.constant dense<0.000000e+00> : vector<2x1xf32>
    %590 = vector.multi_reduction <add>, %589, %cst_218 [2] : vector<2x1x8xf32> to vector<2x1xf32>
    %591 = vector.shape_cast %590 : vector<2x1xf32> to vector<2x1x1xf32>
    %592 = tpu.reciprocal %591 {approx = true} : vector<2x1x1xf32> -> vector<2x1x1xf32>
    %593 = vector.broadcast %592 : vector<2x1x1xf32> to vector<2x1x8xf32>
    %594 = arith.mulf %589, %593 : vector<2x1x8xf32>
    %595 = arith.truncf %594 : vector<2x1x8xf32> to vector<2x1x8xbf16>
    %596 = vector.extract_strided_slice %506 {offsets = [0, 0, 24], sizes = [2, 8, 8], strides = [1, 1, 1]} : vector<2x8x32xf32> to vector<2x8x8xf32>
    %597 = arith.truncf %596 : vector<2x8x8xf32> to vector<2x8x8xbf16>
    "tpu.trace_start"() <{level = 10 : i32, message = "bqk,bkd->bqd"}> : () -> ()
    %cst_219 = arith.constant dense<0.000000e+00> : vector<2x1x8xf32>
    %598 = tpu.matmul %595, %597, %cst_219 {dimension_numbers = #tpu.dot_dimension_numbers<[2], [1], [1], [2], [0, 0, 0, 1, 1, 2], [0], [0]>} : vector<2x1x8xbf16>, vector<2x8x8xbf16>, vector<2x1x8xf32> -> vector<2x1x8xf32>
    "tpu.trace_stop"() : () -> ()
    %599 = tpu.concatenate %529, %552, %575, %598 in 2 : vector<2x1x8xf32>, vector<2x1x8xf32>, vector<2x1x8xf32>, vector<2x1x8xf32> -> vector<2x1x32xf32>
    %c0_220 = arith.constant 0 : index
    %c0_221 = arith.constant 0 : index
    %c0_222 = arith.constant 0 : index
    %600 = vector.load %arg33[%c0_220, %c0_221, %c0_222] : memref<2x32x32xbf16, #tpu.memory_space<vmem>>, vector<1x32x32xbf16>
    %601 = vector.shape_cast %600 : vector<1x32x32xbf16> to vector<32x32xbf16>
    %602 = vector.shape_cast %601 : vector<32x32xbf16> to vector<1x32x32xbf16>
    %603 = vector.broadcast %602 : vector<1x32x32xbf16> to vector<2x32x32xbf16>
    %604 = arith.truncf %599 : vector<2x1x32xf32> to vector<2x1x32xbf16>
    "tpu.trace_start"() <{level = 10 : i32, message = "bij,bjk->bik"}> : () -> ()
    %cst_223 = arith.constant dense<0.000000e+00> : vector<2x1x32xf32>
    %605 = tpu.matmul %604, %603, %cst_223 {dimension_numbers = #tpu.dot_dimension_numbers<[2], [1], [1], [2], [0, 0, 0, 1, 1, 2], [0], [0]>} : vector<2x1x32xbf16>, vector<2x32x32xbf16>, vector<2x1x32xf32> -> vector<2x1x32xf32>
    "tpu.trace_stop"() : () -> ()
    %c0_224 = arith.constant 0 : index
    %c0_225 = arith.constant 0 : index
    %606 = vector.load %arg34[%c0_224, %c0_225] : memref<2x32xf32, #tpu.memory_space<vmem>>, vector<1x32xf32>
    %607 = vector.shape_cast %606 : vector<1x32xf32> to vector<32xf32>
    %608 = vector.shape_cast %607 : vector<32xf32> to vector<1x1x32xf32>
    %609 = vector.broadcast %608 : vector<1x1x32xf32> to vector<2x1x32xf32>
    %610 = arith.addf %605, %609 : vector<2x1x32xf32>
    %611 = arith.addf %480, %610 : vector<2x1x32xf32>
    %c0_226 = arith.constant 0 : index
    %c0_227 = arith.constant 0 : index
    %612 = vector.load %arg35[%c0_226, %c0_227] : memref<2x32xf32, #tpu.memory_space<vmem>>, vector<1x32xf32>
    %613 = vector.shape_cast %612 : vector<1x32xf32> to vector<32xf32>
    %c0_228 = arith.constant 0 : index
    %c0_229 = arith.constant 0 : index
    %614 = vector.load %arg36[%c0_228, %c0_229] : memref<2x32xf32, #tpu.memory_space<vmem>>, vector<1x32xf32>
    %615 = vector.shape_cast %614 : vector<1x32xf32> to vector<32xf32>
    %cst_230 = arith.constant dense<0.000000e+00> : vector<2x1xf32>
    %616 = vector.multi_reduction <add>, %611, %cst_230 [2] : vector<2x1x32xf32> to vector<2x1xf32>
    %617 = vector.shape_cast %616 : vector<2x1xf32> to vector<2x1x1xf32>
    %cst_231 = arith.constant 3.200000e+01 : f32
    %618 = vector.broadcast %cst_231 : f32 to vector<2x1x1xf32>
    %619 = arith.divf %617, %618 : vector<2x1x1xf32>
    %620 = vector.broadcast %619 : vector<2x1x1xf32> to vector<2x1x32xf32>
    %621 = arith.subf %611, %620 : vector<2x1x32xf32>
    %622 = arith.mulf %621, %621 : vector<2x1x32xf32>
    %cst_232 = arith.constant dense<0.000000e+00> : vector<2x1xf32>
    %623 = vector.multi_reduction <add>, %622, %cst_232 [2] : vector<2x1x32xf32> to vector<2x1xf32>
    %624 = vector.shape_cast %623 : vector<2x1xf32> to vector<2x1x1xf32>
    %cst_233 = arith.constant 0.0322580636 : f32
    %625 = vector.broadcast %cst_233 : f32 to vector<2x1x1xf32>
    %626 = arith.mulf %624, %625 : vector<2x1x1xf32>
    %627 = vector.shape_cast %613 : vector<32xf32> to vector<1x1x32xf32>
    %628 = vector.broadcast %627 : vector<1x1x32xf32> to vector<2x1x32xf32>
    %629 = arith.mulf %628, %621 : vector<2x1x32xf32>
    %630 = math.sqrt %626 : vector<2x1x1xf32>
    %cst_234 = arith.constant 9.99999997E-7 : f32
    %631 = vector.broadcast %cst_234 : f32 to vector<2x1x1xf32>
    %632 = arith.addf %630, %631 : vector<2x1x1xf32>
    %633 = vector.broadcast %632 : vector<2x1x1xf32> to vector<2x1x32xf32>
    %634 = arith.divf %629, %633 : vector<2x1x32xf32>
    %635 = vector.shape_cast %615 : vector<32xf32> to vector<1x1x32xf32>
    %636 = vector.broadcast %635 : vector<1x1x32xf32> to vector<2x1x32xf32>
    %637 = arith.addf %634, %636 : vector<2x1x32xf32>
    %c0_235 = arith.constant 0 : index
    %c0_236 = arith.constant 0 : index
    %c0_237 = arith.constant 0 : index
    %638 = vector.load %arg37[%c0_235, %c0_236, %c0_237] : memref<2x32x64xbf16, #tpu.memory_space<vmem>>, vector<1x32x64xbf16>
    %639 = vector.shape_cast %638 : vector<1x32x64xbf16> to vector<32x64xbf16>
    %640 = vector.shape_cast %639 : vector<32x64xbf16> to vector<1x32x64xbf16>
    %641 = vector.broadcast %640 : vector<1x32x64xbf16> to vector<2x32x64xbf16>
    %642 = arith.truncf %637 : vector<2x1x32xf32> to vector<2x1x32xbf16>
    "tpu.trace_start"() <{level = 10 : i32, message = "bij,bjk->bik"}> : () -> ()
    %cst_238 = arith.constant dense<0.000000e+00> : vector<2x1x64xf32>
    %643 = tpu.matmul %642, %641, %cst_238 {dimension_numbers = #tpu.dot_dimension_numbers<[2], [1], [1], [2], [0, 0, 0, 1, 1, 2], [0], [0]>} : vector<2x1x32xbf16>, vector<2x32x64xbf16>, vector<2x1x64xf32> -> vector<2x1x64xf32>
    "tpu.trace_stop"() : () -> ()
    %c0_239 = arith.constant 0 : index
    %c0_240 = arith.constant 0 : index
    %644 = vector.load %arg38[%c0_239, %c0_240] : memref<2x64xf32, #tpu.memory_space<vmem>>, vector<1x64xf32>
    %645 = vector.shape_cast %644 : vector<1x64xf32> to vector<64xf32>
    %646 = vector.shape_cast %645 : vector<64xf32> to vector<1x1x64xf32>
    %647 = vector.broadcast %646 : vector<1x1x64xf32> to vector<2x1x64xf32>
    %648 = arith.addf %643, %647 : vector<2x1x64xf32>
    %cst_241 = arith.constant 0.000000e+00 : f32
    %649 = vector.broadcast %cst_241 : f32 to vector<2x1x64xf32>
    %650 = arith.maximumf %648, %649 : vector<2x1x64xf32>
    %c0_242 = arith.constant 0 : index
    %c0_243 = arith.constant 0 : index
    %c0_244 = arith.constant 0 : index
    %651 = vector.load %arg39[%c0_242, %c0_243, %c0_244] : memref<2x64x32xbf16, #tpu.memory_space<vmem>>, vector<1x64x32xbf16>
    %652 = vector.shape_cast %651 : vector<1x64x32xbf16> to vector<64x32xbf16>
    %653 = vector.shape_cast %652 : vector<64x32xbf16> to vector<1x64x32xbf16>
    %654 = vector.broadcast %653 : vector<1x64x32xbf16> to vector<2x64x32xbf16>
    %655 = arith.truncf %650 : vector<2x1x64xf32> to vector<2x1x64xbf16>
    "tpu.trace_start"() <{level = 10 : i32, message = "bij,bjk->bik"}> : () -> ()
    %cst_245 = arith.constant dense<0.000000e+00> : vector<2x1x32xf32>
    %656 = tpu.matmul %655, %654, %cst_245 {dimension_numbers = #tpu.dot_dimension_numbers<[2], [1], [1], [2], [0, 0, 0, 1, 1, 2], [0], [0]>} : vector<2x1x64xbf16>, vector<2x64x32xbf16>, vector<2x1x32xf32> -> vector<2x1x32xf32>
    "tpu.trace_stop"() : () -> ()
    %c0_246 = arith.constant 0 : index
    %c0_247 = arith.constant 0 : index
    %657 = vector.load %arg40[%c0_246, %c0_247] : memref<2x32xf32, #tpu.memory_space<vmem>>, vector<1x32xf32>
    %658 = vector.shape_cast %657 : vector<1x32xf32> to vector<32xf32>
    %659 = vector.shape_cast %658 : vector<32xf32> to vector<1x1x32xf32>
    %660 = vector.broadcast %659 : vector<1x1x32xf32> to vector<2x1x32xf32>
    %661 = arith.addf %656, %660 : vector<2x1x32xf32>
    %662 = arith.addf %637, %661 : vector<2x1x32xf32>
    %c0_248 = arith.constant 0 : index
    %c0_249 = arith.constant 0 : index
    %663 = vector.load %arg41[%c0_248, %c0_249] : memref<2x32xf32, #tpu.memory_space<vmem>>, vector<1x32xf32>
    %664 = vector.shape_cast %663 : vector<1x32xf32> to vector<32xf32>
    %c0_250 = arith.constant 0 : index
    %c0_251 = arith.constant 0 : index
    %665 = vector.load %arg42[%c0_250, %c0_251] : memref<2x32xf32, #tpu.memory_space<vmem>>, vector<1x32xf32>
    %666 = vector.shape_cast %665 : vector<1x32xf32> to vector<32xf32>
    %cst_252 = arith.constant dense<0.000000e+00> : vector<2x1xf32>
    %667 = vector.multi_reduction <add>, %662, %cst_252 [2] : vector<2x1x32xf32> to vector<2x1xf32>
    %668 = vector.shape_cast %667 : vector<2x1xf32> to vector<2x1x1xf32>
    %cst_253 = arith.constant 3.200000e+01 : f32
    %669 = vector.broadcast %cst_253 : f32 to vector<2x1x1xf32>
    %670 = arith.divf %668, %669 : vector<2x1x1xf32>
    %671 = vector.broadcast %670 : vector<2x1x1xf32> to vector<2x1x32xf32>
    %672 = arith.subf %662, %671 : vector<2x1x32xf32>
    %673 = arith.mulf %672, %672 : vector<2x1x32xf32>
    %cst_254 = arith.constant dense<0.000000e+00> : vector<2x1xf32>
    %674 = vector.multi_reduction <add>, %673, %cst_254 [2] : vector<2x1x32xf32> to vector<2x1xf32>
    %675 = vector.shape_cast %674 : vector<2x1xf32> to vector<2x1x1xf32>
    %cst_255 = arith.constant 0.0322580636 : f32
    %676 = vector.broadcast %cst_255 : f32 to vector<2x1x1xf32>
    %677 = arith.mulf %675, %676 : vector<2x1x1xf32>
    %678 = vector.shape_cast %664 : vector<32xf32> to vector<1x1x32xf32>
    %679 = vector.broadcast %678 : vector<1x1x32xf32> to vector<2x1x32xf32>
    %680 = arith.mulf %679, %672 : vector<2x1x32xf32>
    %681 = math.sqrt %677 : vector<2x1x1xf32>
    %cst_256 = arith.constant 9.99999997E-7 : f32
    %682 = vector.broadcast %cst_256 : f32 to vector<2x1x1xf32>
    %683 = arith.addf %681, %682 : vector<2x1x1xf32>
    %684 = vector.broadcast %683 : vector<2x1x1xf32> to vector<2x1x32xf32>
    %685 = arith.divf %680, %684 : vector<2x1x32xf32>
    %686 = vector.shape_cast %666 : vector<32xf32> to vector<1x1x32xf32>
    %687 = vector.broadcast %686 : vector<1x1x32xf32> to vector<2x1x32xf32>
    %688 = arith.addf %685, %687 : vector<2x1x32xf32>
    %c1_257 = arith.constant 1 : index
    %c0_258 = arith.constant 0 : index
    %c0_259 = arith.constant 0 : index
    %689 = vector.load %arg23[%c1_257, %c0_258, %c0_259] : memref<2x32x32xbf16, #tpu.memory_space<vmem>>, vector<1x32x32xbf16>
    %690 = vector.shape_cast %689 : vector<1x32x32xbf16> to vector<32x32xbf16>
    %691 = vector.shape_cast %690 : vector<32x32xbf16> to vector<1x32x32xbf16>
    %692 = vector.broadcast %691 : vector<1x32x32xbf16> to vector<2x32x32xbf16>
    %693 = arith.truncf %688 : vector<2x1x32xf32> to vector<2x1x32xbf16>
    "tpu.trace_start"() <{level = 10 : i32, message = "bij,bjk->bik"}> : () -> ()
    %cst_260 = arith.constant dense<0.000000e+00> : vector<2x1x32xf32>
    %694 = tpu.matmul %693, %692, %cst_260 {dimension_numbers = #tpu.dot_dimension_numbers<[2], [1], [1], [2], [0, 0, 0, 1, 1, 2], [0], [0]>} : vector<2x1x32xbf16>, vector<2x32x32xbf16>, vector<2x1x32xf32> -> vector<2x1x32xf32>
    "tpu.trace_stop"() : () -> ()
    %c1_261 = arith.constant 1 : index
    %c0_262 = arith.constant 0 : index
    %695 = vector.load %arg24[%c1_261, %c0_262] : memref<2x32xf32, #tpu.memory_space<vmem>>, vector<1x32xf32>
    %696 = vector.shape_cast %695 : vector<1x32xf32> to vector<32xf32>
    %697 = vector.shape_cast %696 : vector<32xf32> to vector<1x1x32xf32>
    %698 = vector.broadcast %697 : vector<1x1x32xf32> to vector<2x1x32xf32>
    %699 = arith.addf %694, %698 : vector<2x1x32xf32>
    %c1_263 = arith.constant 1 : index
    %c0_264 = arith.constant 0 : index
    %c0_265 = arith.constant 0 : index
    %700 = vector.load %arg25[%c1_263, %c0_264, %c0_265] : memref<2x32x32xbf16, #tpu.memory_space<vmem>>, vector<1x32x32xbf16>
    %701 = vector.shape_cast %700 : vector<1x32x32xbf16> to vector<32x32xbf16>
    %702 = vector.shape_cast %701 : vector<32x32xbf16> to vector<1x32x32xbf16>
    %703 = vector.broadcast %702 : vector<1x32x32xbf16> to vector<2x32x32xbf16>
    %704 = arith.truncf %699 : vector<2x1x32xf32> to vector<2x1x32xbf16>
    "tpu.trace_start"() <{level = 10 : i32, message = "bij,bjk->bik"}> : () -> ()
    %cst_266 = arith.constant dense<0.000000e+00> : vector<2x1x32xf32>
    %705 = tpu.matmul %704, %703, %cst_266 {dimension_numbers = #tpu.dot_dimension_numbers<[2], [1], [1], [2], [0, 0, 0, 1, 1, 2], [0], [0]>} : vector<2x1x32xbf16>, vector<2x32x32xbf16>, vector<2x1x32xf32> -> vector<2x1x32xf32>
    "tpu.trace_stop"() : () -> ()
    %c1_267 = arith.constant 1 : index
    %c0_268 = arith.constant 0 : index
    %706 = vector.load %arg26[%c1_267, %c0_268] : memref<2x32xf32, #tpu.memory_space<vmem>>, vector<1x32xf32>
    %707 = vector.shape_cast %706 : vector<1x32xf32> to vector<32xf32>
    %708 = vector.shape_cast %707 : vector<32xf32> to vector<1x1x32xf32>
    %709 = vector.broadcast %708 : vector<1x1x32xf32> to vector<2x1x32xf32>
    %710 = arith.addf %705, %709 : vector<2x1x32xf32>
    %711 = arith.addf %688, %710 : vector<2x1x32xf32>
    %c1_269 = arith.constant 1 : index
    %c0_270 = arith.constant 0 : index
    %712 = vector.load %arg27[%c1_269, %c0_270] : memref<2x32xf32, #tpu.memory_space<vmem>>, vector<1x32xf32>
    %713 = vector.shape_cast %712 : vector<1x32xf32> to vector<32xf32>
    %c1_271 = arith.constant 1 : index
    %c0_272 = arith.constant 0 : index
    %714 = vector.load %arg28[%c1_271, %c0_272] : memref<2x32xf32, #tpu.memory_space<vmem>>, vector<1x32xf32>
    %715 = vector.shape_cast %714 : vector<1x32xf32> to vector<32xf32>
    %cst_273 = arith.constant dense<0.000000e+00> : vector<2x1xf32>
    %716 = vector.multi_reduction <add>, %711, %cst_273 [2] : vector<2x1x32xf32> to vector<2x1xf32>
    %717 = vector.shape_cast %716 : vector<2x1xf32> to vector<2x1x1xf32>
    %cst_274 = arith.constant 3.200000e+01 : f32
    %718 = vector.broadcast %cst_274 : f32 to vector<2x1x1xf32>
    %719 = arith.divf %717, %718 : vector<2x1x1xf32>
    %720 = vector.broadcast %719 : vector<2x1x1xf32> to vector<2x1x32xf32>
    %721 = arith.subf %711, %720 : vector<2x1x32xf32>
    %722 = arith.mulf %721, %721 : vector<2x1x32xf32>
    %cst_275 = arith.constant dense<0.000000e+00> : vector<2x1xf32>
    %723 = vector.multi_reduction <add>, %722, %cst_275 [2] : vector<2x1x32xf32> to vector<2x1xf32>
    %724 = vector.shape_cast %723 : vector<2x1xf32> to vector<2x1x1xf32>
    %cst_276 = arith.constant 0.0322580636 : f32
    %725 = vector.broadcast %cst_276 : f32 to vector<2x1x1xf32>
    %726 = arith.mulf %724, %725 : vector<2x1x1xf32>
    %727 = vector.shape_cast %713 : vector<32xf32> to vector<1x1x32xf32>
    %728 = vector.broadcast %727 : vector<1x1x32xf32> to vector<2x1x32xf32>
    %729 = arith.mulf %728, %721 : vector<2x1x32xf32>
    %730 = math.sqrt %726 : vector<2x1x1xf32>
    %cst_277 = arith.constant 9.99999997E-7 : f32
    %731 = vector.broadcast %cst_277 : f32 to vector<2x1x1xf32>
    %732 = arith.addf %730, %731 : vector<2x1x1xf32>
    %733 = vector.broadcast %732 : vector<2x1x1xf32> to vector<2x1x32xf32>
    %734 = arith.divf %729, %733 : vector<2x1x32xf32>
    %735 = vector.shape_cast %715 : vector<32xf32> to vector<1x1x32xf32>
    %736 = vector.broadcast %735 : vector<1x1x32xf32> to vector<2x1x32xf32>
    %737 = arith.addf %734, %736 : vector<2x1x32xf32>
    %c1_278 = arith.constant 1 : index
    %c0_279 = arith.constant 0 : index
    %c0_280 = arith.constant 0 : index
    %738 = vector.load %arg29[%c1_278, %c0_279, %c0_280] : memref<2x32x32xbf16, #tpu.memory_space<vmem>>, vector<1x32x32xbf16>
    %739 = vector.shape_cast %738 : vector<1x32x32xbf16> to vector<32x32xbf16>
    %740 = vector.shape_cast %739 : vector<32x32xbf16> to vector<1x32x32xbf16>
    %741 = vector.broadcast %740 : vector<1x32x32xbf16> to vector<2x32x32xbf16>
    %742 = arith.truncf %737 : vector<2x1x32xf32> to vector<2x1x32xbf16>
    "tpu.trace_start"() <{level = 10 : i32, message = "bij,bjk->bik"}> : () -> ()
    %cst_281 = arith.constant dense<0.000000e+00> : vector<2x1x32xf32>
    %743 = tpu.matmul %742, %741, %cst_281 {dimension_numbers = #tpu.dot_dimension_numbers<[2], [1], [1], [2], [0, 0, 0, 1, 1, 2], [0], [0]>} : vector<2x1x32xbf16>, vector<2x32x32xbf16>, vector<2x1x32xf32> -> vector<2x1x32xf32>
    "tpu.trace_stop"() : () -> ()
    %c1_282 = arith.constant 1 : index
    %c0_283 = arith.constant 0 : index
    %744 = vector.load %arg30[%c1_282, %c0_283] : memref<2x32xf32, #tpu.memory_space<vmem>>, vector<1x32xf32>
    %745 = vector.shape_cast %744 : vector<1x32xf32> to vector<32xf32>
    %746 = vector.shape_cast %745 : vector<32xf32> to vector<1x1x32xf32>
    %747 = vector.broadcast %746 : vector<1x1x32xf32> to vector<2x1x32xf32>
    %748 = arith.addf %743, %747 : vector<2x1x32xf32>
    %cst_284 = arith.constant 0.353553385 : f32
    %749 = vector.broadcast %cst_284 : f32 to vector<2x1x32xf32>
    %750 = arith.mulf %748, %749 : vector<2x1x32xf32>
    %c1_285 = arith.constant 1 : index
    %c0_286 = arith.constant 0 : index
    %c0_287 = arith.constant 0 : index
    %751 = vector.load %arg31[%c1_285, %c0_286, %c0_287] : memref<2x32x64xbf16, #tpu.memory_space<vmem>>, vector<1x32x64xbf16>
    %752 = vector.shape_cast %751 : vector<1x32x64xbf16> to vector<32x64xbf16>
    %753 = arith.truncf %431 : vector<16x32xf32> to vector<16x32xbf16>
    %cst_288 = arith.constant dense<0.000000e+00> : vector<16x64xf32>
    %754 = tpu.matmul %753, %752, %cst_288 {dimension_numbers = #tpu.dot_dimension_numbers<[1], [0], [0], [1], [0, 0, 1, 1], [], []>} : vector<16x32xbf16>, vector<32x64xbf16>, vector<16x64xf32> -> vector<16x64xf32>
    %c1_289 = arith.constant 1 : index
    %c0_290 = arith.constant 0 : index
    %755 = vector.load %arg32[%c1_289, %c0_290] : memref<2x64xf32, #tpu.memory_space<vmem>>, vector<1x64xf32>
    %756 = vector.shape_cast %755 : vector<1x64xf32> to vector<64xf32>
    %757 = vector.shape_cast %756 : vector<64xf32> to vector<1x64xf32>
    %758 = vector.broadcast %757 : vector<1x64xf32> to vector<16x64xf32>
    %759 = arith.addf %754, %758 : vector<16x64xf32>
    %760 = vector.extract_strided_slice %759 {offsets = [0, 0], sizes = [16, 32], strides = [1, 1]} : vector<16x64xf32> to vector<16x32xf32>
    %761 = vector.shape_cast %760 : vector<16x32xf32> to vector<2x8x32xf32>
    %762 = vector.extract_strided_slice %759 {offsets = [0, 32], sizes = [16, 32], strides = [1, 1]} : vector<16x64xf32> to vector<16x32xf32>
    %763 = vector.shape_cast %762 : vector<16x32xf32> to vector<2x8x32xf32>
    %764 = vector.extract_strided_slice %750 {offsets = [0, 0, 0], sizes = [2, 1, 8], strides = [1, 1, 1]} : vector<2x1x32xf32> to vector<2x1x8xf32>
    %765 = arith.truncf %764 : vector<2x1x8xf32> to vector<2x1x8xbf16>
    %766 = vector.extract_strided_slice %761 {offsets = [0, 0, 0], sizes = [2, 8, 8], strides = [1, 1, 1]} : vector<2x8x32xf32> to vector<2x8x8xf32>
    %767 = arith.truncf %766 : vector<2x8x8xf32> to vector<2x8x8xbf16>
    "tpu.trace_start"() <{level = 10 : i32, message = "bqd,bkd->bqk"}> : () -> ()
    %cst_291 = arith.constant dense<0.000000e+00> : vector<2x1x8xf32>
    %768 = tpu.matmul %765, %767, %cst_291 {dimension_numbers = #tpu.dot_dimension_numbers<[2], [2], [1], [1], [0, 0, 0, 1, 1, 1], [0], [0]>} : vector<2x1x8xbf16>, vector<2x8x8xbf16>, vector<2x1x8xf32> -> vector<2x1x8xf32>
    %cst_292 = arith.constant 0.000000e+00 : f32
    "tpu.trace_stop"() : () -> ()
    %769 = vector.broadcast %cst_292 : f32 to vector<2x1x8xf32>
    %770 = arith.cmpf oeq, %43, %769 : vector<2x1x8xf32>
    %cst_293 = arith.constant -1.000000e+09 : f32
    %771 = vector.broadcast %cst_293 : f32 to vector<2x1x8xf32>
    %772 = arith.select %770, %771, %768 : vector<2x1x8xi1>, vector<2x1x8xf32>
    %cst_294 = arith.constant dense<0xFF800000> : vector<2x1xf32>
    %773 = vector.multi_reduction <maximumf>, %772, %cst_294 [2] : vector<2x1x8xf32> to vector<2x1xf32>
    %774 = vector.shape_cast %773 : vector<2x1xf32> to vector<2x1x1xf32>
    %775 = vector.broadcast %774 : vector<2x1x1xf32> to vector<2x1x8xf32>
    %776 = arith.subf %772, %775 : vector<2x1x8xf32>
    %777 = math.exp %776 : vector<2x1x8xf32>
    %cst_295 = arith.constant dense<0.000000e+00> : vector<2x1xf32>
    %778 = vector.multi_reduction <add>, %777, %cst_295 [2] : vector<2x1x8xf32> to vector<2x1xf32>
    %779 = vector.shape_cast %778 : vector<2x1xf32> to vector<2x1x1xf32>
    %780 = tpu.reciprocal %779 {approx = true} : vector<2x1x1xf32> -> vector<2x1x1xf32>
    %781 = vector.broadcast %780 : vector<2x1x1xf32> to vector<2x1x8xf32>
    %782 = arith.mulf %777, %781 : vector<2x1x8xf32>
    %783 = arith.truncf %782 : vector<2x1x8xf32> to vector<2x1x8xbf16>
    %784 = vector.extract_strided_slice %763 {offsets = [0, 0, 0], sizes = [2, 8, 8], strides = [1, 1, 1]} : vector<2x8x32xf32> to vector<2x8x8xf32>
    %785 = arith.truncf %784 : vector<2x8x8xf32> to vector<2x8x8xbf16>
    "tpu.trace_start"() <{level = 10 : i32, message = "bqk,bkd->bqd"}> : () -> ()
    %cst_296 = arith.constant dense<0.000000e+00> : vector<2x1x8xf32>
    %786 = tpu.matmul %783, %785, %cst_296 {dimension_numbers = #tpu.dot_dimension_numbers<[2], [1], [1], [2], [0, 0, 0, 1, 1, 2], [0], [0]>} : vector<2x1x8xbf16>, vector<2x8x8xbf16>, vector<2x1x8xf32> -> vector<2x1x8xf32>
    "tpu.trace_stop"() : () -> ()
    %787 = vector.extract_strided_slice %750 {offsets = [0, 0, 8], sizes = [2, 1, 8], strides = [1, 1, 1]} : vector<2x1x32xf32> to vector<2x1x8xf32>
    %788 = arith.truncf %787 : vector<2x1x8xf32> to vector<2x1x8xbf16>
    %789 = vector.extract_strided_slice %761 {offsets = [0, 0, 8], sizes = [2, 8, 8], strides = [1, 1, 1]} : vector<2x8x32xf32> to vector<2x8x8xf32>
    %790 = arith.truncf %789 : vector<2x8x8xf32> to vector<2x8x8xbf16>
    "tpu.trace_start"() <{level = 10 : i32, message = "bqd,bkd->bqk"}> : () -> ()
    %cst_297 = arith.constant dense<0.000000e+00> : vector<2x1x8xf32>
    %791 = tpu.matmul %788, %790, %cst_297 {dimension_numbers = #tpu.dot_dimension_numbers<[2], [2], [1], [1], [0, 0, 0, 1, 1, 1], [0], [0]>} : vector<2x1x8xbf16>, vector<2x8x8xbf16>, vector<2x1x8xf32> -> vector<2x1x8xf32>
    %cst_298 = arith.constant 0.000000e+00 : f32
    "tpu.trace_stop"() : () -> ()
    %792 = vector.broadcast %cst_298 : f32 to vector<2x1x8xf32>
    %793 = arith.cmpf oeq, %43, %792 : vector<2x1x8xf32>
    %cst_299 = arith.constant -1.000000e+09 : f32
    %794 = vector.broadcast %cst_299 : f32 to vector<2x1x8xf32>
    %795 = arith.select %793, %794, %791 : vector<2x1x8xi1>, vector<2x1x8xf32>
    %cst_300 = arith.constant dense<0xFF800000> : vector<2x1xf32>
    %796 = vector.multi_reduction <maximumf>, %795, %cst_300 [2] : vector<2x1x8xf32> to vector<2x1xf32>
    %797 = vector.shape_cast %796 : vector<2x1xf32> to vector<2x1x1xf32>
    %798 = vector.broadcast %797 : vector<2x1x1xf32> to vector<2x1x8xf32>
    %799 = arith.subf %795, %798 : vector<2x1x8xf32>
    %800 = math.exp %799 : vector<2x1x8xf32>
    %cst_301 = arith.constant dense<0.000000e+00> : vector<2x1xf32>
    %801 = vector.multi_reduction <add>, %800, %cst_301 [2] : vector<2x1x8xf32> to vector<2x1xf32>
    %802 = vector.shape_cast %801 : vector<2x1xf32> to vector<2x1x1xf32>
    %803 = tpu.reciprocal %802 {approx = true} : vector<2x1x1xf32> -> vector<2x1x1xf32>
    %804 = vector.broadcast %803 : vector<2x1x1xf32> to vector<2x1x8xf32>
    %805 = arith.mulf %800, %804 : vector<2x1x8xf32>
    %806 = arith.truncf %805 : vector<2x1x8xf32> to vector<2x1x8xbf16>
    %807 = vector.extract_strided_slice %763 {offsets = [0, 0, 8], sizes = [2, 8, 8], strides = [1, 1, 1]} : vector<2x8x32xf32> to vector<2x8x8xf32>
    %808 = arith.truncf %807 : vector<2x8x8xf32> to vector<2x8x8xbf16>
    "tpu.trace_start"() <{level = 10 : i32, message = "bqk,bkd->bqd"}> : () -> ()
    %cst_302 = arith.constant dense<0.000000e+00> : vector<2x1x8xf32>
    %809 = tpu.matmul %806, %808, %cst_302 {dimension_numbers = #tpu.dot_dimension_numbers<[2], [1], [1], [2], [0, 0, 0, 1, 1, 2], [0], [0]>} : vector<2x1x8xbf16>, vector<2x8x8xbf16>, vector<2x1x8xf32> -> vector<2x1x8xf32>
    "tpu.trace_stop"() : () -> ()
    %810 = vector.extract_strided_slice %750 {offsets = [0, 0, 16], sizes = [2, 1, 8], strides = [1, 1, 1]} : vector<2x1x32xf32> to vector<2x1x8xf32>
    %811 = arith.truncf %810 : vector<2x1x8xf32> to vector<2x1x8xbf16>
    %812 = vector.extract_strided_slice %761 {offsets = [0, 0, 16], sizes = [2, 8, 8], strides = [1, 1, 1]} : vector<2x8x32xf32> to vector<2x8x8xf32>
    %813 = arith.truncf %812 : vector<2x8x8xf32> to vector<2x8x8xbf16>
    "tpu.trace_start"() <{level = 10 : i32, message = "bqd,bkd->bqk"}> : () -> ()
    %cst_303 = arith.constant dense<0.000000e+00> : vector<2x1x8xf32>
    %814 = tpu.matmul %811, %813, %cst_303 {dimension_numbers = #tpu.dot_dimension_numbers<[2], [2], [1], [1], [0, 0, 0, 1, 1, 1], [0], [0]>} : vector<2x1x8xbf16>, vector<2x8x8xbf16>, vector<2x1x8xf32> -> vector<2x1x8xf32>
    %cst_304 = arith.constant 0.000000e+00 : f32
    "tpu.trace_stop"() : () -> ()
    %815 = vector.broadcast %cst_304 : f32 to vector<2x1x8xf32>
    %816 = arith.cmpf oeq, %43, %815 : vector<2x1x8xf32>
    %cst_305 = arith.constant -1.000000e+09 : f32
    %817 = vector.broadcast %cst_305 : f32 to vector<2x1x8xf32>
    %818 = arith.select %816, %817, %814 : vector<2x1x8xi1>, vector<2x1x8xf32>
    %cst_306 = arith.constant dense<0xFF800000> : vector<2x1xf32>
    %819 = vector.multi_reduction <maximumf>, %818, %cst_306 [2] : vector<2x1x8xf32> to vector<2x1xf32>
    %820 = vector.shape_cast %819 : vector<2x1xf32> to vector<2x1x1xf32>
    %821 = vector.broadcast %820 : vector<2x1x1xf32> to vector<2x1x8xf32>
    %822 = arith.subf %818, %821 : vector<2x1x8xf32>
    %823 = math.exp %822 : vector<2x1x8xf32>
    %cst_307 = arith.constant dense<0.000000e+00> : vector<2x1xf32>
    %824 = vector.multi_reduction <add>, %823, %cst_307 [2] : vector<2x1x8xf32> to vector<2x1xf32>
    %825 = vector.shape_cast %824 : vector<2x1xf32> to vector<2x1x1xf32>
    %826 = tpu.reciprocal %825 {approx = true} : vector<2x1x1xf32> -> vector<2x1x1xf32>
    %827 = vector.broadcast %826 : vector<2x1x1xf32> to vector<2x1x8xf32>
    %828 = arith.mulf %823, %827 : vector<2x1x8xf32>
    %829 = arith.truncf %828 : vector<2x1x8xf32> to vector<2x1x8xbf16>
    %830 = vector.extract_strided_slice %763 {offsets = [0, 0, 16], sizes = [2, 8, 8], strides = [1, 1, 1]} : vector<2x8x32xf32> to vector<2x8x8xf32>
    %831 = arith.truncf %830 : vector<2x8x8xf32> to vector<2x8x8xbf16>
    "tpu.trace_start"() <{level = 10 : i32, message = "bqk,bkd->bqd"}> : () -> ()
    %cst_308 = arith.constant dense<0.000000e+00> : vector<2x1x8xf32>
    %832 = tpu.matmul %829, %831, %cst_308 {dimension_numbers = #tpu.dot_dimension_numbers<[2], [1], [1], [2], [0, 0, 0, 1, 1, 2], [0], [0]>} : vector<2x1x8xbf16>, vector<2x8x8xbf16>, vector<2x1x8xf32> -> vector<2x1x8xf32>
    "tpu.trace_stop"() : () -> ()
    %833 = vector.extract_strided_slice %750 {offsets = [0, 0, 24], sizes = [2, 1, 8], strides = [1, 1, 1]} : vector<2x1x32xf32> to vector<2x1x8xf32>
    %834 = arith.truncf %833 : vector<2x1x8xf32> to vector<2x1x8xbf16>
    %835 = vector.extract_strided_slice %761 {offsets = [0, 0, 24], sizes = [2, 8, 8], strides = [1, 1, 1]} : vector<2x8x32xf32> to vector<2x8x8xf32>
    %836 = arith.truncf %835 : vector<2x8x8xf32> to vector<2x8x8xbf16>
    "tpu.trace_start"() <{level = 10 : i32, message = "bqd,bkd->bqk"}> : () -> ()
    %cst_309 = arith.constant dense<0.000000e+00> : vector<2x1x8xf32>
    %837 = tpu.matmul %834, %836, %cst_309 {dimension_numbers = #tpu.dot_dimension_numbers<[2], [2], [1], [1], [0, 0, 0, 1, 1, 1], [0], [0]>} : vector<2x1x8xbf16>, vector<2x8x8xbf16>, vector<2x1x8xf32> -> vector<2x1x8xf32>
    %cst_310 = arith.constant 0.000000e+00 : f32
    "tpu.trace_stop"() : () -> ()
    %838 = vector.broadcast %cst_310 : f32 to vector<2x1x8xf32>
    %839 = arith.cmpf oeq, %43, %838 : vector<2x1x8xf32>
    %cst_311 = arith.constant -1.000000e+09 : f32
    %840 = vector.broadcast %cst_311 : f32 to vector<2x1x8xf32>
    %841 = arith.select %839, %840, %837 : vector<2x1x8xi1>, vector<2x1x8xf32>
    %cst_312 = arith.constant dense<0xFF800000> : vector<2x1xf32>
    %842 = vector.multi_reduction <maximumf>, %841, %cst_312 [2] : vector<2x1x8xf32> to vector<2x1xf32>
    %843 = vector.shape_cast %842 : vector<2x1xf32> to vector<2x1x1xf32>
    %844 = vector.broadcast %843 : vector<2x1x1xf32> to vector<2x1x8xf32>
    %845 = arith.subf %841, %844 : vector<2x1x8xf32>
    %846 = math.exp %845 : vector<2x1x8xf32>
    %cst_313 = arith.constant dense<0.000000e+00> : vector<2x1xf32>
    %847 = vector.multi_reduction <add>, %846, %cst_313 [2] : vector<2x1x8xf32> to vector<2x1xf32>
    %848 = vector.shape_cast %847 : vector<2x1xf32> to vector<2x1x1xf32>
    %849 = tpu.reciprocal %848 {approx = true} : vector<2x1x1xf32> -> vector<2x1x1xf32>
    %850 = vector.broadcast %849 : vector<2x1x1xf32> to vector<2x1x8xf32>
    %851 = arith.mulf %846, %850 : vector<2x1x8xf32>
    %852 = arith.truncf %851 : vector<2x1x8xf32> to vector<2x1x8xbf16>
    %853 = vector.extract_strided_slice %763 {offsets = [0, 0, 24], sizes = [2, 8, 8], strides = [1, 1, 1]} : vector<2x8x32xf32> to vector<2x8x8xf32>
    %854 = arith.truncf %853 : vector<2x8x8xf32> to vector<2x8x8xbf16>
    "tpu.trace_start"() <{level = 10 : i32, message = "bqk,bkd->bqd"}> : () -> ()
    %cst_314 = arith.constant dense<0.000000e+00> : vector<2x1x8xf32>
    %855 = tpu.matmul %852, %854, %cst_314 {dimension_numbers = #tpu.dot_dimension_numbers<[2], [1], [1], [2], [0, 0, 0, 1, 1, 2], [0], [0]>} : vector<2x1x8xbf16>, vector<2x8x8xbf16>, vector<2x1x8xf32> -> vector<2x1x8xf32>
    "tpu.trace_stop"() : () -> ()
    %856 = tpu.concatenate %786, %809, %832, %855 in 2 : vector<2x1x8xf32>, vector<2x1x8xf32>, vector<2x1x8xf32>, vector<2x1x8xf32> -> vector<2x1x32xf32>
    %c1_315 = arith.constant 1 : index
    %c0_316 = arith.constant 0 : index
    %c0_317 = arith.constant 0 : index
    %857 = vector.load %arg33[%c1_315, %c0_316, %c0_317] : memref<2x32x32xbf16, #tpu.memory_space<vmem>>, vector<1x32x32xbf16>
    %858 = vector.shape_cast %857 : vector<1x32x32xbf16> to vector<32x32xbf16>
    %859 = vector.shape_cast %858 : vector<32x32xbf16> to vector<1x32x32xbf16>
    %860 = vector.broadcast %859 : vector<1x32x32xbf16> to vector<2x32x32xbf16>
    %861 = arith.truncf %856 : vector<2x1x32xf32> to vector<2x1x32xbf16>
    "tpu.trace_start"() <{level = 10 : i32, message = "bij,bjk->bik"}> : () -> ()
    %cst_318 = arith.constant dense<0.000000e+00> : vector<2x1x32xf32>
    %862 = tpu.matmul %861, %860, %cst_318 {dimension_numbers = #tpu.dot_dimension_numbers<[2], [1], [1], [2], [0, 0, 0, 1, 1, 2], [0], [0]>} : vector<2x1x32xbf16>, vector<2x32x32xbf16>, vector<2x1x32xf32> -> vector<2x1x32xf32>
    "tpu.trace_stop"() : () -> ()
    %c1_319 = arith.constant 1 : index
    %c0_320 = arith.constant 0 : index
    %863 = vector.load %arg34[%c1_319, %c0_320] : memref<2x32xf32, #tpu.memory_space<vmem>>, vector<1x32xf32>
    %864 = vector.shape_cast %863 : vector<1x32xf32> to vector<32xf32>
    %865 = vector.shape_cast %864 : vector<32xf32> to vector<1x1x32xf32>
    %866 = vector.broadcast %865 : vector<1x1x32xf32> to vector<2x1x32xf32>
    %867 = arith.addf %862, %866 : vector<2x1x32xf32>
    %868 = arith.addf %737, %867 : vector<2x1x32xf32>
    %c1_321 = arith.constant 1 : index
    %c0_322 = arith.constant 0 : index
    %869 = vector.load %arg35[%c1_321, %c0_322] : memref<2x32xf32, #tpu.memory_space<vmem>>, vector<1x32xf32>
    %870 = vector.shape_cast %869 : vector<1x32xf32> to vector<32xf32>
    %c1_323 = arith.constant 1 : index
    %c0_324 = arith.constant 0 : index
    %871 = vector.load %arg36[%c1_323, %c0_324] : memref<2x32xf32, #tpu.memory_space<vmem>>, vector<1x32xf32>
    %872 = vector.shape_cast %871 : vector<1x32xf32> to vector<32xf32>
    %cst_325 = arith.constant dense<0.000000e+00> : vector<2x1xf32>
    %873 = vector.multi_reduction <add>, %868, %cst_325 [2] : vector<2x1x32xf32> to vector<2x1xf32>
    %874 = vector.shape_cast %873 : vector<2x1xf32> to vector<2x1x1xf32>
    %cst_326 = arith.constant 3.200000e+01 : f32
    %875 = vector.broadcast %cst_326 : f32 to vector<2x1x1xf32>
    %876 = arith.divf %874, %875 : vector<2x1x1xf32>
    %877 = vector.broadcast %876 : vector<2x1x1xf32> to vector<2x1x32xf32>
    %878 = arith.subf %868, %877 : vector<2x1x32xf32>
    %879 = arith.mulf %878, %878 : vector<2x1x32xf32>
    %cst_327 = arith.constant dense<0.000000e+00> : vector<2x1xf32>
    %880 = vector.multi_reduction <add>, %879, %cst_327 [2] : vector<2x1x32xf32> to vector<2x1xf32>
    %881 = vector.shape_cast %880 : vector<2x1xf32> to vector<2x1x1xf32>
    %cst_328 = arith.constant 0.0322580636 : f32
    %882 = vector.broadcast %cst_328 : f32 to vector<2x1x1xf32>
    %883 = arith.mulf %881, %882 : vector<2x1x1xf32>
    %884 = vector.shape_cast %870 : vector<32xf32> to vector<1x1x32xf32>
    %885 = vector.broadcast %884 : vector<1x1x32xf32> to vector<2x1x32xf32>
    %886 = arith.mulf %885, %878 : vector<2x1x32xf32>
    %887 = math.sqrt %883 : vector<2x1x1xf32>
    %cst_329 = arith.constant 9.99999997E-7 : f32
    %888 = vector.broadcast %cst_329 : f32 to vector<2x1x1xf32>
    %889 = arith.addf %887, %888 : vector<2x1x1xf32>
    %890 = vector.broadcast %889 : vector<2x1x1xf32> to vector<2x1x32xf32>
    %891 = arith.divf %886, %890 : vector<2x1x32xf32>
    %892 = vector.shape_cast %872 : vector<32xf32> to vector<1x1x32xf32>
    %893 = vector.broadcast %892 : vector<1x1x32xf32> to vector<2x1x32xf32>
    %894 = arith.addf %891, %893 : vector<2x1x32xf32>
    %c1_330 = arith.constant 1 : index
    %c0_331 = arith.constant 0 : index
    %c0_332 = arith.constant 0 : index
    %895 = vector.load %arg37[%c1_330, %c0_331, %c0_332] : memref<2x32x64xbf16, #tpu.memory_space<vmem>>, vector<1x32x64xbf16>
    %896 = vector.shape_cast %895 : vector<1x32x64xbf16> to vector<32x64xbf16>
    %897 = vector.shape_cast %896 : vector<32x64xbf16> to vector<1x32x64xbf16>
    %898 = vector.broadcast %897 : vector<1x32x64xbf16> to vector<2x32x64xbf16>
    %899 = arith.truncf %894 : vector<2x1x32xf32> to vector<2x1x32xbf16>
    "tpu.trace_start"() <{level = 10 : i32, message = "bij,bjk->bik"}> : () -> ()
    %cst_333 = arith.constant dense<0.000000e+00> : vector<2x1x64xf32>
    %900 = tpu.matmul %899, %898, %cst_333 {dimension_numbers = #tpu.dot_dimension_numbers<[2], [1], [1], [2], [0, 0, 0, 1, 1, 2], [0], [0]>} : vector<2x1x32xbf16>, vector<2x32x64xbf16>, vector<2x1x64xf32> -> vector<2x1x64xf32>
    "tpu.trace_stop"() : () -> ()
    %c1_334 = arith.constant 1 : index
    %c0_335 = arith.constant 0 : index
    %901 = vector.load %arg38[%c1_334, %c0_335] : memref<2x64xf32, #tpu.memory_space<vmem>>, vector<1x64xf32>
    %902 = vector.shape_cast %901 : vector<1x64xf32> to vector<64xf32>
    %903 = vector.shape_cast %902 : vector<64xf32> to vector<1x1x64xf32>
    %904 = vector.broadcast %903 : vector<1x1x64xf32> to vector<2x1x64xf32>
    %905 = arith.addf %900, %904 : vector<2x1x64xf32>
    %cst_336 = arith.constant 0.000000e+00 : f32
    %906 = vector.broadcast %cst_336 : f32 to vector<2x1x64xf32>
    %907 = arith.maximumf %905, %906 : vector<2x1x64xf32>
    %c1_337 = arith.constant 1 : index
    %c0_338 = arith.constant 0 : index
    %c0_339 = arith.constant 0 : index
    %908 = vector.load %arg39[%c1_337, %c0_338, %c0_339] : memref<2x64x32xbf16, #tpu.memory_space<vmem>>, vector<1x64x32xbf16>
    %909 = vector.shape_cast %908 : vector<1x64x32xbf16> to vector<64x32xbf16>
    %910 = vector.shape_cast %909 : vector<64x32xbf16> to vector<1x64x32xbf16>
    %911 = vector.broadcast %910 : vector<1x64x32xbf16> to vector<2x64x32xbf16>
    %912 = arith.truncf %907 : vector<2x1x64xf32> to vector<2x1x64xbf16>
    "tpu.trace_start"() <{level = 10 : i32, message = "bij,bjk->bik"}> : () -> ()
    %cst_340 = arith.constant dense<0.000000e+00> : vector<2x1x32xf32>
    %913 = tpu.matmul %912, %911, %cst_340 {dimension_numbers = #tpu.dot_dimension_numbers<[2], [1], [1], [2], [0, 0, 0, 1, 1, 2], [0], [0]>} : vector<2x1x64xbf16>, vector<2x64x32xbf16>, vector<2x1x32xf32> -> vector<2x1x32xf32>
    "tpu.trace_stop"() : () -> ()
    %c1_341 = arith.constant 1 : index
    %c0_342 = arith.constant 0 : index
    %914 = vector.load %arg40[%c1_341, %c0_342] : memref<2x32xf32, #tpu.memory_space<vmem>>, vector<1x32xf32>
    %915 = vector.shape_cast %914 : vector<1x32xf32> to vector<32xf32>
    %916 = vector.shape_cast %915 : vector<32xf32> to vector<1x1x32xf32>
    %917 = vector.broadcast %916 : vector<1x1x32xf32> to vector<2x1x32xf32>
    %918 = arith.addf %913, %917 : vector<2x1x32xf32>
    %919 = arith.addf %894, %918 : vector<2x1x32xf32>
    %c1_343 = arith.constant 1 : index
    %c0_344 = arith.constant 0 : index
    %920 = vector.load %arg41[%c1_343, %c0_344] : memref<2x32xf32, #tpu.memory_space<vmem>>, vector<1x32xf32>
    %921 = vector.shape_cast %920 : vector<1x32xf32> to vector<32xf32>
    %c1_345 = arith.constant 1 : index
    %c0_346 = arith.constant 0 : index
    %922 = vector.load %arg42[%c1_345, %c0_346] : memref<2x32xf32, #tpu.memory_space<vmem>>, vector<1x32xf32>
    %923 = vector.shape_cast %922 : vector<1x32xf32> to vector<32xf32>
    %cst_347 = arith.constant dense<0.000000e+00> : vector<2x1xf32>
    %924 = vector.multi_reduction <add>, %919, %cst_347 [2] : vector<2x1x32xf32> to vector<2x1xf32>
    %925 = vector.shape_cast %924 : vector<2x1xf32> to vector<2x1x1xf32>
    %cst_348 = arith.constant 3.200000e+01 : f32
    %926 = vector.broadcast %cst_348 : f32 to vector<2x1x1xf32>
    %927 = arith.divf %925, %926 : vector<2x1x1xf32>
    %928 = vector.broadcast %927 : vector<2x1x1xf32> to vector<2x1x32xf32>
    %929 = arith.subf %919, %928 : vector<2x1x32xf32>
    %930 = arith.mulf %929, %929 : vector<2x1x32xf32>
    %cst_349 = arith.constant dense<0.000000e+00> : vector<2x1xf32>
    %931 = vector.multi_reduction <add>, %930, %cst_349 [2] : vector<2x1x32xf32> to vector<2x1xf32>
    %932 = vector.shape_cast %931 : vector<2x1xf32> to vector<2x1x1xf32>
    %cst_350 = arith.constant 0.0322580636 : f32
    %933 = vector.broadcast %cst_350 : f32 to vector<2x1x1xf32>
    %934 = arith.mulf %932, %933 : vector<2x1x1xf32>
    %935 = vector.shape_cast %921 : vector<32xf32> to vector<1x1x32xf32>
    %936 = vector.broadcast %935 : vector<1x1x32xf32> to vector<2x1x32xf32>
    %937 = arith.mulf %936, %929 : vector<2x1x32xf32>
    %938 = math.sqrt %934 : vector<2x1x1xf32>
    %cst_351 = arith.constant 9.99999997E-7 : f32
    %939 = vector.broadcast %cst_351 : f32 to vector<2x1x1xf32>
    %940 = arith.addf %938, %939 : vector<2x1x1xf32>
    %941 = vector.broadcast %940 : vector<2x1x1xf32> to vector<2x1x32xf32>
    %942 = arith.divf %937, %941 : vector<2x1x32xf32>
    %943 = vector.shape_cast %923 : vector<32xf32> to vector<1x1x32xf32>
    %944 = vector.broadcast %943 : vector<1x1x32xf32> to vector<2x1x32xf32>
    %945 = arith.addf %942, %944 : vector<2x1x32xf32>
    %c0_352 = arith.constant 0 : index
    %c0_353 = arith.constant 0 : index
    %946 = vector.load %arg43[%c0_352, %c0_353] : memref<32x64xbf16, #tpu.memory_space<vmem>>, vector<32x64xbf16>
    %947 = arith.truncf %431 : vector<16x32xf32> to vector<16x32xbf16>
    %cst_354 = arith.constant dense<0.000000e+00> : vector<16x64xf32>
    %948 = tpu.matmul %947, %946, %cst_354 {dimension_numbers = #tpu.dot_dimension_numbers<[1], [0], [0], [1], [0, 0, 1, 1], [], []>} : vector<16x32xbf16>, vector<32x64xbf16>, vector<16x64xf32> -> vector<16x64xf32>
    %c0_355 = arith.constant 0 : index
    %c0_356 = arith.constant 0 : index
    %949 = vector.load %arg44[%c0_355, %c0_356] : memref<1x64xf32, #tpu.memory_space<vmem>>, vector<1x64xf32>
    %950 = vector.broadcast %949 : vector<1x64xf32> to vector<16x64xf32>
    %951 = arith.addf %948, %950 : vector<16x64xf32>
    %cst_357 = arith.constant 0.000000e+00 : f32
    %952 = vector.broadcast %cst_357 : f32 to vector<16x64xf32>
    %953 = arith.maximumf %951, %952 : vector<16x64xf32>
    %c0_358 = arith.constant 0 : index
    %c0_359 = arith.constant 0 : index
    %954 = vector.load %arg45[%c0_358, %c0_359] : memref<64x1xbf16, #tpu.memory_space<vmem>>, vector<64x1xbf16>
    %955 = arith.truncf %953 : vector<16x64xf32> to vector<16x64xbf16>
    %cst_360 = arith.constant dense<0.000000e+00> : vector<16x1xf32>
    %956 = tpu.matmul %955, %954, %cst_360 {dimension_numbers = #tpu.dot_dimension_numbers<[1], [0], [0], [1], [0, 0, 1, 1], [], []>} : vector<16x64xbf16>, vector<64x1xbf16>, vector<16x1xf32> -> vector<16x1xf32>
    %c0_361 = arith.constant 0 : index
    %c0_362 = arith.constant 0 : index
    %957 = vector.load %arg46[%c0_361, %c0_362] : memref<1x1xf32, #tpu.memory_space<vmem>>, vector<1x1xf32>
    %958 = vector.broadcast %957 : vector<1x1xf32> to vector<16x1xf32>
    %959 = arith.addf %956, %958 : vector<16x1xf32>
    %960 = vector.shape_cast %959 : vector<16x1xf32> to vector<2x8x1xf32>
    %cst_363 = arith.constant 0.000000e+00 : f32
    %961 = vector.broadcast %cst_363 : f32 to vector<2x8x1xf32>
    %962 = arith.cmpf oeq, %40, %961 : vector<2x8x1xf32>
    %cst_364 = arith.constant -1.000000e+09 : f32
    %963 = vector.broadcast %cst_364 : f32 to vector<2x8x1xf32>
    %964 = arith.select %962, %963, %960 : vector<2x8x1xi1>, vector<2x8x1xf32>
    %cst_365 = arith.constant dense<0xFF800000> : vector<2x1xf32>
    %965 = vector.multi_reduction <maximumf>, %964, %cst_365 [1] : vector<2x8x1xf32> to vector<2x1xf32>
    %966 = vector.shape_cast %965 : vector<2x1xf32> to vector<2x1x1xf32>
    %967 = vector.broadcast %966 : vector<2x1x1xf32> to vector<2x8x1xf32>
    %968 = arith.subf %964, %967 : vector<2x8x1xf32>
    %969 = math.exp %968 : vector<2x8x1xf32>
    %cst_366 = arith.constant dense<0.000000e+00> : vector<2x1xf32>
    %970 = vector.multi_reduction <add>, %969, %cst_366 [1] : vector<2x8x1xf32> to vector<2x1xf32>
    %971 = vector.shape_cast %970 : vector<2x1xf32> to vector<2x1x1xf32>
    %972 = tpu.reciprocal %971 {approx = true} : vector<2x1x1xf32> -> vector<2x1x1xf32>
    %973 = vector.broadcast %972 : vector<2x1x1xf32> to vector<2x8x1xf32>
    %974 = arith.mulf %969, %973 : vector<2x8x1xf32>
    %975 = vector.shape_cast %431 : vector<16x32xf32> to vector<2x8x32xf32>
    %cst_367 = arith.constant 0.000000e+00 : f32
    %976 = vector.broadcast %cst_367 : f32 to vector<2x64xf32>
    %977 = vector.broadcast %974 : vector<2x8x1xf32> to vector<2x8x32xf32>
    %978 = arith.mulf %977, %975 : vector<2x8x32xf32>
    %cst_368 = arith.constant dense<0.000000e+00> : vector<2x32xf32>
    %979 = vector.multi_reduction <add>, %978, %cst_368 [1] : vector<2x8x32xf32> to vector<2x32xf32>
    %c0_369 = arith.constant 0 : index
    %c0_370 = arith.constant 0 : index
    %c0_371 = arith.constant 0 : index
    %980 = vector.load %arg47[%c0_369, %c0_370, %c0_371] : memref<1x32x64xbf16, #tpu.memory_space<vmem>>, vector<1x32x64xbf16>
    %981 = vector.shape_cast %980 : vector<1x32x64xbf16> to vector<32x64xbf16>
    %982 = arith.truncf %979 : vector<2x32xf32> to vector<2x32xbf16>
    %cst_372 = arith.constant dense<0.000000e+00> : vector<2x64xf32>
    %983 = tpu.matmul %982, %981, %cst_372 {dimension_numbers = #tpu.dot_dimension_numbers<[1], [0], [0], [1], [0, 0, 1, 1], [], []>} : vector<2x32xbf16>, vector<32x64xbf16>, vector<2x64xf32> -> vector<2x64xf32>
    %984 = arith.addf %976, %983 : vector<2x64xf32>
    %c0_373 = arith.constant 0 : index
    %c0_374 = arith.constant 0 : index
    %985 = vector.load %arg48[%c0_373, %c0_374] : memref<1x64xf32, #tpu.memory_space<vmem>>, vector<1x64xf32>
    %986 = vector.broadcast %985 : vector<1x64xf32> to vector<2x64xf32>
    %987 = arith.addf %984, %986 : vector<2x64xf32>
    %cst_375 = arith.constant dense<0.000000e+00> : vector<2x32xf32>
    %988 = vector.multi_reduction <add>, %945, %cst_375 [1] : vector<2x1x32xf32> to vector<2x32xf32>
    %cst_376 = arith.constant 0.000000e+00 : f32
    %989 = vector.broadcast %cst_376 : f32 to vector<2x64xf32>
    %c0_377 = arith.constant 0 : index
    %c0_378 = arith.constant 0 : index
    %c0_379 = arith.constant 0 : index
    %990 = vector.load %arg49[%c0_377, %c0_378, %c0_379] : memref<1x32x64xbf16, #tpu.memory_space<vmem>>, vector<1x32x64xbf16>
    %991 = vector.shape_cast %990 : vector<1x32x64xbf16> to vector<32x64xbf16>
    %992 = arith.truncf %988 : vector<2x32xf32> to vector<2x32xbf16>
    %cst_380 = arith.constant dense<0.000000e+00> : vector<2x64xf32>
    %993 = tpu.matmul %992, %991, %cst_380 {dimension_numbers = #tpu.dot_dimension_numbers<[1], [0], [0], [1], [0, 0, 1, 1], [], []>} : vector<2x32xbf16>, vector<32x64xbf16>, vector<2x64xf32> -> vector<2x64xf32>
    %994 = arith.addf %989, %993 : vector<2x64xf32>
    %c0_381 = arith.constant 0 : index
    %c0_382 = arith.constant 0 : index
    %995 = vector.load %arg50[%c0_381, %c0_382] : memref<1x64xf32, #tpu.memory_space<vmem>>, vector<1x64xf32>
    %996 = vector.broadcast %995 : vector<1x64xf32> to vector<2x64xf32>
    %997 = arith.addf %994, %996 : vector<2x64xf32>
    %998 = arith.addf %987, %997 : vector<2x64xf32>
    %c0_383 = arith.constant 0 : index
    %c0_384 = arith.constant 0 : index
    %999 = vector.load %arg51[%c0_383, %c0_384] : memref<1x64xf32, #tpu.memory_space<vmem>>, vector<1x64xf32>
    %c0_385 = arith.constant 0 : index
    %c0_386 = arith.constant 0 : index
    %1000 = vector.load %arg52[%c0_385, %c0_386] : memref<1x64xf32, #tpu.memory_space<vmem>>, vector<1x64xf32>
    %cst_387 = arith.constant dense<0.000000e+00> : vector<2xf32>
    %1001 = vector.multi_reduction <add>, %998, %cst_387 [1] : vector<2x64xf32> to vector<2xf32>
    %1002 = vector.shape_cast %1001 : vector<2xf32> to vector<2x1xf32>
    %cst_388 = arith.constant 6.400000e+01 : f32
    %1003 = vector.broadcast %cst_388 : f32 to vector<2x1xf32>
    %1004 = arith.divf %1002, %1003 : vector<2x1xf32>
    %1005 = vector.broadcast %1004 : vector<2x1xf32> to vector<2x64xf32>
    %1006 = arith.subf %998, %1005 : vector<2x64xf32>
    %1007 = arith.mulf %1006, %1006 : vector<2x64xf32>
    %cst_389 = arith.constant dense<0.000000e+00> : vector<2xf32>
    %1008 = vector.multi_reduction <add>, %1007, %cst_389 [1] : vector<2x64xf32> to vector<2xf32>
    %1009 = vector.shape_cast %1008 : vector<2xf32> to vector<2x1xf32>
    %cst_390 = arith.constant 0.0158730168 : f32
    %1010 = vector.broadcast %cst_390 : f32 to vector<2x1xf32>
    %1011 = arith.mulf %1009, %1010 : vector<2x1xf32>
    %1012 = vector.broadcast %999 : vector<1x64xf32> to vector<2x64xf32>
    %1013 = arith.mulf %1012, %1006 : vector<2x64xf32>
    %1014 = math.sqrt %1011 : vector<2x1xf32>
    %cst_391 = arith.constant 9.99999997E-7 : f32
    %1015 = vector.broadcast %cst_391 : f32 to vector<2x1xf32>
    %1016 = arith.addf %1014, %1015 : vector<2x1xf32>
    %1017 = vector.broadcast %1016 : vector<2x1xf32> to vector<2x64xf32>
    %1018 = arith.divf %1013, %1017 : vector<2x64xf32>
    %1019 = vector.broadcast %1000 : vector<1x64xf32> to vector<2x64xf32>
    %1020 = arith.addf %1018, %1019 : vector<2x64xf32>
    %c0_392 = arith.constant 0 : index
    %c0_393 = arith.constant 0 : index
    %1021 = vector.load %arg53[%c0_392, %c0_393] : memref<1x64xf32, #tpu.memory_space<vmem>>, vector<1x64xf32>
    %1022 = vector.broadcast %1021 : vector<1x64xf32> to vector<2x64xf32>
    %1023 = arith.mulf %1020, %1022 : vector<2x64xf32>
    %cst_394 = arith.constant dense<0.000000e+00> : vector<2xf32>
    %1024 = vector.multi_reduction <add>, %1023, %cst_394 [1] : vector<2x64xf32> to vector<2xf32>
    %1025 = vector.shape_cast %1024 : vector<2xf32> to vector<2x1xf32>
    %c0_395 = arith.constant 0 : index
    %c0_396 = arith.constant 0 : index
    %c0_397 = arith.constant 0 : index
    %1026 = vector.load %arg2[%c0_395, %c0_396, %c0_397] : memref<2x4x768xf32, #tpu.memory_space<vmem>>, vector<2x4x768xf32>
    %c0_398 = arith.constant 0 : index
    %c0_399 = arith.constant 0 : index
    %1027 = vector.load %arg54[%c0_398, %c0_399] : memref<1x768xf32, #tpu.memory_space<vmem>>, vector<1x768xf32>
    %1028 = vector.shape_cast %1027 : vector<1x768xf32> to vector<1x1x768xf32>
    %1029 = vector.broadcast %1028 : vector<1x1x768xf32> to vector<2x4x768xf32>
    %1030 = arith.mulf %1026, %1029 : vector<2x4x768xf32>
    %cst_400 = arith.constant dense<0.000000e+00> : vector<2x4xf32>
    %1031 = vector.multi_reduction <add>, %1030, %cst_400 [2] : vector<2x4x768xf32> to vector<2x4xf32>
    %1032 = vector.broadcast %1025 : vector<2x1xf32> to vector<2x4xf32>
    %1033 = arith.addf %1031, %1032 : vector<2x4xf32>
    %c0_401 = arith.constant 0 : index
    %c0_402 = arith.constant 0 : index
    %1034 = vector.load %arg55[%c0_401, %c0_402] : memref<1x1xf32, #tpu.memory_space<vmem>>, vector<1x1xf32>
    %1035 = vector.broadcast %1034 : vector<1x1xf32> to vector<2x4xf32>
    %1036 = arith.addf %1033, %1035 : vector<2x4xf32>
    %c0_403 = arith.constant 0 : index
    %c0_404 = arith.constant 0 : index
    %1037 = vector.load %arg56[%c0_403, %c0_404] : memref<2x4xf32, #tpu.memory_space<vmem>>, vector<2x4xf32>
    tpu.vector_store %arg56[%c0_403, %c0_404], %1036 {strides = array<i32>} : memref<2x4xf32, #tpu.memory_space<vmem>>, vector<2x4xf32>,
    return
  }
}

</mosaic_0001>

<llo_original>
// kernel: net_forward.1
$region0: #{net_forward.1}
  #allocation0 [shape = 'u32[]', space=smem, size = 0x4, offset = 0x4, fixed_abs, tag = 'smem constant byte address 0x4 - core index']
  #allocation1 [shape = 'u32[144,128]{1,0:T(1,128)}', space=vmem, size = 0x12000, scoped, tag = 'internal scratch']
  #allocation2 [shape = 'f32[1,1]{1,0:T(1,128)S(1)}', space=vmem, size = 0x200, scoped, tag = 'scoped memory for net_forward.1']
  #allocation3 [shape = 'f32[1,1]{1,0:T(1,128)S(1)}', space=vmem, size = 0x200, scoped, tag = 'scoped memory for net_forward.1']
  %s0 = inlined_call_operand.smem [shape: u32[57], index: -1, kind: input, shape index: {}]
  %s1 = sld [smem:[%s0]]
  %s2 = scalar_lea.smem %s0, 1
  %s3 = sld [smem:[%s2]]
  %s4 = scalar_lea.smem %s0, 2
  %s5 = sld [smem:[%s4]]
  %s6 = scalar_lea.smem %s0, 3
  %s7 = sld [smem:[%s6]]
  %s8 = scalar_lea.smem %s0, 4
  %s9 = sld [smem:[%s8]]
  %s10 = scalar_lea.smem %s0, 5
  %s11 = sld [smem:[%s10]]
  %s12 = scalar_lea.smem %s0, 6
  %s13 = sld [smem:[%s12]]
  %s14 = scalar_lea.smem %s0, 7
  %s15 = sld [smem:[%s14]]
  %s16 = scalar_lea.smem %s0, 8
  %s17 = sld [smem:[%s16]]
  %s18 = scalar_lea.smem %s0, 9
  %s19 = sld [smem:[%s18]]
  %s20 = scalar_lea.smem %s0, 10
  %s21 = sld [smem:[%s20]]
  %s22 = scalar_lea.smem %s0, 11
  %s23 = sld [smem:[%s22]]
  %s24 = scalar_lea.smem %s0, 12
  %s25 = sld [smem:[%s24]]
  %s26 = scalar_lea.smem %s0, 13
  %s27 = sld [smem:[%s26]]
  %s28 = scalar_lea.smem %s0, 14
  %s29 = sld [smem:[%s28]]
  %s30 = scalar_lea.smem %s0, 15
  %s31 = sld [smem:[%s30]]
  %s32 = scalar_lea.smem %s0, 16
  %s33 = sld [smem:[%s32]]
  %s34 = scalar_lea.smem %s0, 17
  %s35 = sld [smem:[%s34]]
  %s36 = scalar_lea.smem %s0, 18
  %s37 = sld [smem:[%s36]]
  %s38 = scalar_lea.smem %s0, 19
  %s39 = sld [smem:[%s38]]
  %s40 = scalar_lea.smem %s0, 20
  %s41 = sld [smem:[%s40]]
  %s42 = scalar_lea.smem %s0, 21
  %s43 = sld [smem:[%s42]]
  %s44 = scalar_lea.smem %s0, 22
  %s45 = sld [smem:[%s44]]
  %s46 = scalar_lea.smem %s0, 23
  %s47 = sld [smem:[%s46]]
  %s48 = scalar_lea.smem %s0, 24
  %s49 = sld [smem:[%s48]]
  %s50 = scalar_lea.smem %s0, 25
  %s51 = sld [smem:[%s50]]
  %s52 = scalar_lea.smem %s0, 26
  %s53 = sld [smem:[%s52]]
  %s54 = scalar_lea.smem %s0, 27
  %s55 = sld [smem:[%s54]]
  %s56 = scalar_lea.smem %s0, 28
  %s57 = sld [smem:[%s56]]
  %s58 = scalar_lea.smem %s0, 29
  %s59 = sld [smem:[%s58]]
  %s60 = scalar_lea.smem %s0, 30
  %s61 = sld [smem:[%s60]]
  %s62 = scalar_lea.smem %s0, 31
  %s63 = sld [smem:[%s62]]
  %s64 = scalar_lea.smem %s0, 32
  %s65 = sld [smem:[%s64]]
  %s66 = scalar_lea.smem %s0, 33
  %s67 = sld [smem:[%s66]]
  %s68 = scalar_lea.smem %s0, 34
  %s69 = sld [smem:[%s68]]
  %s70 = scalar_lea.smem %s0, 35
  %s71 = sld [smem:[%s70]]
  %s72 = scalar_lea.smem %s0, 36
  %s73 = sld [smem:[%s72]]
  %s74 = scalar_lea.smem %s0, 37
  %s75 = sld [smem:[%s74]]
  %s76 = scalar_lea.smem %s0, 38
  %s77 = sld [smem:[%s76]]
  %s78 = scalar_lea.smem %s0, 39
  %s79 = sld [smem:[%s78]]
  %s80 = scalar_lea.smem %s0, 40
  %s81 = sld [smem:[%s80]]
  %s82 = scalar_lea.smem %s0, 41
  %s83 = sld [smem:[%s82]]
  %s84 = scalar_lea.smem %s0, 42
  %s85 = sld [smem:[%s84]]
  %s86 = scalar_lea.smem %s0, 43
  %s87 = sld [smem:[%s86]]
  %s88 = scalar_lea.smem %s0, 44
  %s89 = sld [smem:[%s88]]
  %s90 = scalar_lea.smem %s0, 45
  %s91 = sld [smem:[%s90]]
  %s92 = scalar_lea.smem %s0, 46
  %s93 = sld [smem:[%s92]]
  %s94 = scalar_lea.smem %s0, 47
  %s95 = sld [smem:[%s94]]
  %s96 = scalar_lea.smem %s0, 48
  %s97 = sld [smem:[%s96]]
  %s98 = scalar_lea.smem %s0, 49
  %s99 = sld [smem:[%s98]]
  %s100 = scalar_lea.smem %s0, 50
  %s101 = sld [smem:[%s100]]
  %s102 = scalar_lea.smem %s0, 51
  %s103 = sld [smem:[%s102]]
  %s104 = scalar_lea.smem %s0, 52
  %s105 = sld [smem:[%s104]]
  %s106 = scalar_lea.smem %s0, 53
  %s107 = sld [smem:[%s106]]
  %s108 = scalar_lea.smem %s0, 54
  %s109 = sld [smem:[%s108]]
  %s110 = scalar_lea.smem %s0, 55
  %s111 = sld [smem:[%s110]]
  %s112 = scalar_lea.smem %s0, 56
  %s113 = sld [smem:[%s112]]
  %s114 = sld [smem:[#allocation0]]
  $region278: #{net_forward.1} parent=0
    _
  %s116 = ssub.s32 1, %s114
  %s117 = scalar_select 0, %s116, %s114
  %v118 = vstv %s93
  %119 = vst [vmem:[#allocation2] sm:$0x1] %v118
  %v120 = vstv %s111
  %121 = vst [vmem:[#allocation3] sm:$0x1] %v120
  $region1: #{net_forward.1} parent=0
    #allocation4 [shape = 'u8[512]{0}', space=vmem, size = 0x400, scoped, tag = 'input window, operand 4, single buffered']
    #allocation5 [shape = 's32[1]{0}', space=sflag, size = 0x4, scoped, tag = 'scoped memory for net_forward.1']
    #allocation6 [shape = 's32[1]{0}', space=sflag, size = 0x4, scoped, tag = 'scoped memory for net_forward.1']
    #allocation7 [shape = 'u8[512]{0}', space=vmem, size = 0x400, scoped, tag = 'input window, operand 6, single buffered']
    #allocation8 [shape = 's32[1]{0}', space=sflag, size = 0x4, scoped, tag = 'scoped memory for net_forward.1']
    #allocation9 [shape = 'u8[512]{0}', space=vmem, size = 0x400, scoped, tag = 'input window, operand 8, single buffered']
    #allocation10 [shape = 'u8[512]{0}', space=vmem, size = 0x400, scoped, tag = 'input window, operand 10, single buffered']
    #allocation11 [shape = 's32[1]{0}', space=sflag, size = 0x4, scoped, tag = 'scoped memory for net_forward.1']
    #allocation12 [shape = 'u8[1024]{0}', space=vmem, size = 0x400, scoped, tag = 'input window, operand 42, single buffered']
    #allocation13 [shape = 'u8[512]{0}', space=vmem, size = 0x400, scoped, tag = 'input window, operand 44, single buffered']
    #allocation14 [shape = 's32[1]{0}', space=sflag, size = 0x4, scoped, tag = 'scoped memory for net_forward.1']
    #allocation15 [shape = 'u8[512]{0}', space=vmem, size = 0x400, scoped, tag = 'input window, operand 48, single buffered']
    #allocation16 [shape = 'u8[512]{0}', space=vmem, size = 0x400, scoped, tag = 'input window, operand 50, single buffered']
    #allocation17 [shape = 's32[1]{0}', space=sflag, size = 0x4, scoped, tag = 'scoped memory for net_forward.1']
    #allocation18 [shape = 'u8[512]{0}', space=vmem, size = 0x400, scoped, tag = 'input window, operand 51, single buffered']
    #allocation19 [shape = 'u8[512]{0}', space=vmem, size = 0x400, scoped, tag = 'input window, operand 52, single buffered']
    #allocation20 [shape = 's32[1]{0}', space=sflag, size = 0x4, scoped, tag = 'scoped memory for net_forward.1']
    #allocation21 [shape = 'u8[512]{0}', space=vmem, size = 0x400, scoped, tag = 'input window, operand 53, single buffered']
    #allocation22 [shape = 'u8[1024]{0}', space=vmem, size = 0x400, scoped, tag = 'output window, operand 0, single buffered']
    %122 = vsyncpa [#allocation5], 0
    %123 = vsyncpa [#allocation8], 0
    %124 = vsyncpa [#allocation11], 0
    %125 = vsyncpa [#allocation14], 0
    %126 = vsyncpa [#allocation17], 0
    %127 = vsyncpa [#allocation20], 0
    %128 = vsyncpa [#allocation6], 0
    // Predicated region
    $region2: #{net_forward.1} parent=1 // pred_check
      _
    $region3: #{net_forward.1} parent=1 // pred_check_branch
      %130 = sbr.rel (0) target = $region5
    $region4: #{net_forward.1} parent=1 // pred_region
      _
    $region5: #{net_forward.1} parent=1 // pred_fallthru
      _
    // Predicated region
    $region6: #{net_forward.1} parent=1 // pred_check
      _
    $region7: #{net_forward.1} parent=1 // pred_check_branch
      %132 = sbr.rel (0) target = $region9
    $region8: #{net_forward.1} parent=1 // pred_region
      _
    $region9: #{net_forward.1} parent=1 // pred_fallthru
      _
    // Predicated region
    $region10: #{net_forward.1} parent=1 // pred_check
      _
    $region11: #{net_forward.1} parent=1 // pred_check_branch
      %134 = sbr.rel (0) target = $region13
    $region12: #{net_forward.1} parent=1 // pred_region
      _
    $region13: #{net_forward.1} parent=1 // pred_fallthru
      _
    // Predicated region
    $region14: #{net_forward.1} parent=1 // pred_check
      _
    $region15: #{net_forward.1} parent=1 // pred_check_branch
      %136 = sbr.rel (0) target = $region17
    $region16: #{net_forward.1} parent=1 // pred_region
      _
    $region17: #{net_forward.1} parent=1 // pred_fallthru
      _
    // Predicated region
    $region18: #{net_forward.1} parent=1 // pred_check
      _
    $region19: #{net_forward.1} parent=1 // pred_check_branch
      %138 = sbr.rel (0) target = $region21
    $region20: #{net_forward.1} parent=1 // pred_region
      %s140 = ssub.s32 16, 16
      %141 = vsyncadd [#allocation5], %s140
      %s143 = sshll.u32 [#allocation4], 4
      %s144 = int_to_ptr.vmem [resolvable:$true] %s143
      %146 = dma.hbm_to_vmem [thread:$0]  %s9, 16, %s144, [#allocation5]
    $region21: #{net_forward.1} parent=1 // pred_fallthru
      _
    // Predicated region
    $region22: #{net_forward.1} parent=1 // pred_check
      _
    $region23: #{net_forward.1} parent=1 // pred_check_branch
      %148 = sbr.rel (0) target = $region25
    $region24: #{net_forward.1} parent=1 // pred_region
      _
    $region25: #{net_forward.1} parent=1 // pred_fallthru
      _
    // Predicated region
    $region26: #{net_forward.1} parent=1 // pred_check
      _
    $region27: #{net_forward.1} parent=1 // pred_check_branch
      %150 = sbr.rel (0) target = $region29
    $region28: #{net_forward.1} parent=1 // pred_region
      %s152 = ssub.s32 16, 16
      %153 = vsyncadd [#allocation8], %s152
      %s155 = sshll.u32 [#allocation7], 4
      %s156 = int_to_ptr.vmem [resolvable:$true] %s155
      %158 = dma.hbm_to_vmem [thread:$0]  %s13, 16, %s156, [#allocation8]
    $region29: #{net_forward.1} parent=1 // pred_fallthru
      _
    // Predicated region
    $region30: #{net_forward.1} parent=1 // pred_check
      _
    $region31: #{net_forward.1} parent=1 // pred_check_branch
      %160 = sbr.rel (0) target = $region33
    $region32: #{net_forward.1} parent=1 // pred_region
      _
    $region33: #{net_forward.1} parent=1 // pred_fallthru
      _
    // Predicated region
    $region34: #{net_forward.1} parent=1 // pred_check
      _
    $region35: #{net_forward.1} parent=1 // pred_check_branch
      %162 = sbr.rel (0) target = $region37
    $region36: #{net_forward.1} parent=1 // pred_region
      %s164 = ssub.s32 16, 16
      %165 = vsyncadd [#allocation8], %s164
      %s167 = sshll.u32 [#allocation9], 4
      %s168 = int_to_ptr.vmem [resolvable:$true] %s167
      %170 = dma.hbm_to_vmem [thread:$0]  %s17, 16, %s168, [#allocation8]
    $region37: #{net_forward.1} parent=1 // pred_fallthru
      _
    // Predicated region
    $region38: #{net_forward.1} parent=1 // pred_check
      _
    $region39: #{net_forward.1} parent=1 // pred_check_branch
      %172 = sbr.rel (0) target = $region41
    $region40: #{net_forward.1} parent=1 // pred_region
      _
    $region41: #{net_forward.1} parent=1 // pred_fallthru
      _
    // Predicated region
    $region42: #{net_forward.1} parent=1 // pred_check
      _
    $region43: #{net_forward.1} parent=1 // pred_check_branch
      %174 = sbr.rel (0) target = $region45
    $region44: #{net_forward.1} parent=1 // pred_region
      %s176 = ssub.s32 16, 16
      %177 = vsyncadd [#allocation11], %s176
      %s179 = sshll.u32 [#allocation10], 4
      %s180 = int_to_ptr.vmem [resolvable:$true] %s179
      %182 = dma.hbm_to_vmem [thread:$0]  %s21, 16, %s180, [#allocation11]
    $region45: #{net_forward.1} parent=1 // pred_fallthru
      _
    // Predicated region
    $region46: #{net_forward.1} parent=1 // pred_check
      _
    $region47: #{net_forward.1} parent=1 // pred_check_branch
      %184 = sbr.rel (0) target = $region49
    $region48: #{net_forward.1} parent=1 // pred_region
      _
    $region49: #{net_forward.1} parent=1 // pred_fallthru
      _
    // Predicated region
    $region50: #{net_forward.1} parent=1 // pred_check
      _
    $region51: #{net_forward.1} parent=1 // pred_check_branch
      %186 = sbr.rel (0) target = $region53
    $region52: #{net_forward.1} parent=1 // pred_region
      _
    $region53: #{net_forward.1} parent=1 // pred_fallthru
      _
    // Predicated region
    $region54: #{net_forward.1} parent=1 // pred_check
      _
    $region55: #{net_forward.1} parent=1 // pred_check_branch
      %188 = sbr.rel (0) target = $region57
    $region56: #{net_forward.1} parent=1 // pred_region
      _
    $region57: #{net_forward.1} parent=1 // pred_fallthru
      _
    // Predicated region
    $region58: #{net_forward.1} parent=1 // pred_check
      _
    $region59: #{net_forward.1} parent=1 // pred_check_branch
      %190 = sbr.rel (0) target = $region61
    $region60: #{net_forward.1} parent=1 // pred_region
      _
    $region61: #{net_forward.1} parent=1 // pred_fallthru
      _
    // Predicated region
    $region62: #{net_forward.1} parent=1 // pred_check
      _
    $region63: #{net_forward.1} parent=1 // pred_check_branch
      %192 = sbr.rel (0) target = $region65
    $region64: #{net_forward.1} parent=1 // pred_region
      _
    $region65: #{net_forward.1} parent=1 // pred_fallthru
      _
    // Predicated region
    $region66: #{net_forward.1} parent=1 // pred_check
      _
    $region67: #{net_forward.1} parent=1 // pred_check_branch
      %194 = sbr.rel (0) target = $region69
    $region68: #{net_forward.1} parent=1 // pred_region
      _
    $region69: #{net_forward.1} parent=1 // pred_fallthru
      _
    // Predicated region
    $region70: #{net_forward.1} parent=1 // pred_check
      _
    $region71: #{net_forward.1} parent=1 // pred_check_branch
      %196 = sbr.rel (0) target = $region73
    $region72: #{net_forward.1} parent=1 // pred_region
      _
    $region73: #{net_forward.1} parent=1 // pred_fallthru
      _
    // Predicated region
    $region74: #{net_forward.1} parent=1 // pred_check
      _
    $region75: #{net_forward.1} parent=1 // pred_check_branch
      %198 = sbr.rel (0) target = $region77
    $region76: #{net_forward.1} parent=1 // pred_region
      _
    $region77: #{net_forward.1} parent=1 // pred_fallthru
      _
    // Predicated region
    $region78: #{net_forward.1} parent=1 // pred_check
      _
    $region79: #{net_forward.1} parent=1 // pred_check_branch
      %200 = sbr.rel (0) target = $region81
    $region80: #{net_forward.1} parent=1 // pred_region
      _
    $region81: #{net_forward.1} parent=1 // pred_fallthru
      _
    // Predicated region
    $region82: #{net_forward.1} parent=1 // pred_check
      _
    $region83: #{net_forward.1} parent=1 // pred_check_branch
      %202 = sbr.rel (0) target = $region85
    $region84: #{net_forward.1} parent=1 // pred_region
      _
    $region85: #{net_forward.1} parent=1 // pred_fallthru
      _
    // Predicated region
    $region86: #{net_forward.1} parent=1 // pred_check
      _
    $region87: #{net_forward.1} parent=1 // pred_check_branch
      %204 = sbr.rel (0) target = $region89
    $region88: #{net_forward.1} parent=1 // pred_region
      _
    $region89: #{net_forward.1} parent=1 // pred_fallthru
      _
    // Predicated region
    $region90: #{net_forward.1} parent=1 // pred_check
      _
    $region91: #{net_forward.1} parent=1 // pred_check_branch
      %206 = sbr.rel (0) target = $region93
    $region92: #{net_forward.1} parent=1 // pred_region
      _
    $region93: #{net_forward.1} parent=1 // pred_fallthru
      _
    // Predicated region
    $region94: #{net_forward.1} parent=1 // pred_check
      _
    $region95: #{net_forward.1} parent=1 // pred_check_branch
      %208 = sbr.rel (0) target = $region97
    $region96: #{net_forward.1} parent=1 // pred_region
      _
    $region97: #{net_forward.1} parent=1 // pred_fallthru
      _
    // Predicated region
    $region98: #{net_forward.1} parent=1 // pred_check
      _
    $region99: #{net_forward.1} parent=1 // pred_check_branch
      %210 = sbr.rel (0) target = $region101
    $region100: #{net_forward.1} parent=1 // pred_region
      _
    $region101: #{net_forward.1} parent=1 // pred_fallthru
      _
    // Predicated region
    $region102: #{net_forward.1} parent=1 // pred_check
      _
    $region103: #{net_forward.1} parent=1 // pred_check_branch
      %212 = sbr.rel (0) target = $region105
    $region104: #{net_forward.1} parent=1 // pred_region
      _
    $region105: #{net_forward.1} parent=1 // pred_fallthru
      _
    // Predicated region
    $region106: #{net_forward.1} parent=1 // pred_check
      _
    $region107: #{net_forward.1} parent=1 // pred_check_branch
      %214 = sbr.rel (0) target = $region109
    $region108: #{net_forward.1} parent=1 // pred_region
      _
    $region109: #{net_forward.1} parent=1 // pred_fallthru
      _
    // Predicated region
    $region110: #{net_forward.1} parent=1 // pred_check
      _
    $region111: #{net_forward.1} parent=1 // pred_check_branch
      %216 = sbr.rel (0) target = $region113
    $region112: #{net_forward.1} parent=1 // pred_region
      _
    $region113: #{net_forward.1} parent=1 // pred_fallthru
      _
    // Predicated region
    $region114: #{net_forward.1} parent=1 // pred_check
      _
    $region115: #{net_forward.1} parent=1 // pred_check_branch
      %218 = sbr.rel (0) target = $region117
    $region116: #{net_forward.1} parent=1 // pred_region
      _
    $region117: #{net_forward.1} parent=1 // pred_fallthru
      _
    // Predicated region
    $region118: #{net_forward.1} parent=1 // pred_check
      _
    $region119: #{net_forward.1} parent=1 // pred_check_branch
      %220 = sbr.rel (0) target = $region121
    $region120: #{net_forward.1} parent=1 // pred_region
      _
    $region121: #{net_forward.1} parent=1 // pred_fallthru
      _
    // Predicated region
    $region122: #{net_forward.1} parent=1 // pred_check
      _
    $region123: #{net_forward.1} parent=1 // pred_check_branch
      %222 = sbr.rel (0) target = $region125
    $region124: #{net_forward.1} parent=1 // pred_region
      _
    $region125: #{net_forward.1} parent=1 // pred_fallthru
      _
    // Predicated region
    $region126: #{net_forward.1} parent=1 // pred_check
      _
    $region127: #{net_forward.1} parent=1 // pred_check_branch
      %224 = sbr.rel (0) target = $region129
    $region128: #{net_forward.1} parent=1 // pred_region
      _
    $region129: #{net_forward.1} parent=1 // pred_fallthru
      _
    // Predicated region
    $region130: #{net_forward.1} parent=1 // pred_check
      _
    $region131: #{net_forward.1} parent=1 // pred_check_branch
      %226 = sbr.rel (0) target = $region133
    $region132: #{net_forward.1} parent=1 // pred_region
      _
    $region133: #{net_forward.1} parent=1 // pred_fallthru
      _
    // Predicated region
    $region134: #{net_forward.1} parent=1 // pred_check
      _
    $region135: #{net_forward.1} parent=1 // pred_check_branch
      %228 = sbr.rel (0) target = $region137
    $region136: #{net_forward.1} parent=1 // pred_region
      _
    $region137: #{net_forward.1} parent=1 // pred_fallthru
      _
    // Predicated region
    $region138: #{net_forward.1} parent=1 // pred_check
      _
    $region139: #{net_forward.1} parent=1 // pred_check_branch
      %230 = sbr.rel (0) target = $region141
    $region140: #{net_forward.1} parent=1 // pred_region
      _
    $region141: #{net_forward.1} parent=1 // pred_fallthru
      _
    // Predicated region
    $region142: #{net_forward.1} parent=1 // pred_check
      _
    $region143: #{net_forward.1} parent=1 // pred_check_branch
      %232 = sbr.rel (0) target = $region145
    $region144: #{net_forward.1} parent=1 // pred_region
      _
    $region145: #{net_forward.1} parent=1 // pred_fallthru
      _
    // Predicated region
    $region146: #{net_forward.1} parent=1 // pred_check
      _
    $region147: #{net_forward.1} parent=1 // pred_check_branch
      %234 = sbr.rel (0) target = $region149
    $region148: #{net_forward.1} parent=1 // pred_region
      _
    $region149: #{net_forward.1} parent=1 // pred_fallthru
      _
    // Predicated region
    $region150: #{net_forward.1} parent=1 // pred_check
      _
    $region151: #{net_forward.1} parent=1 // pred_check_branch
      %236 = sbr.rel (0) target = $region153
    $region152: #{net_forward.1} parent=1 // pred_region
      _
    $region153: #{net_forward.1} parent=1 // pred_fallthru
      _
    // Predicated region
    $region154: #{net_forward.1} parent=1 // pred_check
      _
    $region155: #{net_forward.1} parent=1 // pred_check_branch
      %238 = sbr.rel (0) target = $region157
    $region156: #{net_forward.1} parent=1 // pred_region
      _
    $region157: #{net_forward.1} parent=1 // pred_fallthru
      _
    // Predicated region
    $region158: #{net_forward.1} parent=1 // pred_check
      _
    $region159: #{net_forward.1} parent=1 // pred_check_branch
      %240 = sbr.rel (0) target = $region161
    $region160: #{net_forward.1} parent=1 // pred_region
      _
    $region161: #{net_forward.1} parent=1 // pred_fallthru
      _
    // Predicated region
    $region162: #{net_forward.1} parent=1 // pred_check
      _
    $region163: #{net_forward.1} parent=1 // pred_check_branch
      %242 = sbr.rel (0) target = $region165
    $region164: #{net_forward.1} parent=1 // pred_region
      _
    $region165: #{net_forward.1} parent=1 // pred_fallthru
      _
    // Predicated region
    $region166: #{net_forward.1} parent=1 // pred_check
      _
    $region167: #{net_forward.1} parent=1 // pred_check_branch
      %244 = sbr.rel (0) target = $region169
    $region168: #{net_forward.1} parent=1 // pred_region
      _
    $region169: #{net_forward.1} parent=1 // pred_fallthru
      _
    // Predicated region
    $region170: #{net_forward.1} parent=1 // pred_check
      _
    $region171: #{net_forward.1} parent=1 // pred_check_branch
      %246 = sbr.rel (0) target = $region173
    $region172: #{net_forward.1} parent=1 // pred_region
      %s248 = ssub.s32 32, 32
      %249 = vsyncadd [#allocation11], %s248
      %s251 = sshll.u32 [#allocation12], 4
      %s252 = int_to_ptr.vmem [resolvable:$true] %s251
      %254 = dma.hbm_to_vmem [thread:$0]  %s85, 32, %s252, [#allocation11]
    $region173: #{net_forward.1} parent=1 // pred_fallthru
      _
    // Predicated region
    $region174: #{net_forward.1} parent=1 // pred_check
      _
    $region175: #{net_forward.1} parent=1 // pred_check_branch
      %256 = sbr.rel (0) target = $region177
    $region176: #{net_forward.1} parent=1 // pred_region
      _
    $region177: #{net_forward.1} parent=1 // pred_fallthru
      _
    // Predicated region
    $region178: #{net_forward.1} parent=1 // pred_check
      _
    $region179: #{net_forward.1} parent=1 // pred_check_branch
      %258 = sbr.rel (0) target = $region181
    $region180: #{net_forward.1} parent=1 // pred_region
      %s260 = ssub.s32 16, 16
      %261 = vsyncadd [#allocation14], %s260
      %s263 = sshll.u32 [#allocation13], 4
      %s264 = int_to_ptr.vmem [resolvable:$true] %s263
      %266 = dma.hbm_to_vmem [thread:$0]  %s89, 16, %s264, [#allocation14]
    $region181: #{net_forward.1} parent=1 // pred_fallthru
      _
    // Predicated region
    $region182: #{net_forward.1} parent=1 // pred_check
      _
    $region183: #{net_forward.1} parent=1 // pred_check_branch
      %268 = sbr.rel (0) target = $region185
    $region184: #{net_forward.1} parent=1 // pred_region
      _
    $region185: #{net_forward.1} parent=1 // pred_fallthru
      _
    // Predicated region
    $region186: #{net_forward.1} parent=1 // pred_check
      _
    $region187: #{net_forward.1} parent=1 // pred_check_branch
      %270 = sbr.rel (0) target = $region189
    $region188: #{net_forward.1} parent=1 // pred_region
      _
    $region189: #{net_forward.1} parent=1 // pred_fallthru
      _
    // Predicated region
    $region190: #{net_forward.1} parent=1 // pred_check
      _
    $region191: #{net_forward.1} parent=1 // pred_check_branch
      %272 = sbr.rel (0) target = $region193
    $region192: #{net_forward.1} parent=1 // pred_region
      _
    $region193: #{net_forward.1} parent=1 // pred_fallthru
      _
    // Predicated region
    $region194: #{net_forward.1} parent=1 // pred_check
      _
    $region195: #{net_forward.1} parent=1 // pred_check_branch
      %274 = sbr.rel (0) target = $region197
    $region196: #{net_forward.1} parent=1 // pred_region
      %s276 = ssub.s32 16, 16
      %277 = vsyncadd [#allocation14], %s276
      %s279 = sshll.u32 [#allocation15], 4
      %s280 = int_to_ptr.vmem [resolvable:$true] %s279
      %282 = dma.hbm_to_vmem [thread:$0]  %s97, 16, %s280, [#allocation14]
    $region197: #{net_forward.1} parent=1 // pred_fallthru
      _
    // Predicated region
    $region198: #{net_forward.1} parent=1 // pred_check
      _
    $region199: #{net_forward.1} parent=1 // pred_check_branch
      %284 = sbr.rel (0) target = $region201
    $region200: #{net_forward.1} parent=1 // pred_region
      _
    $region201: #{net_forward.1} parent=1 // pred_fallthru
      _
    // Predicated region
    $region202: #{net_forward.1} parent=1 // pred_check
      _
    $region203: #{net_forward.1} parent=1 // pred_check_branch
      %286 = sbr.rel (0) target = $region205
    $region204: #{net_forward.1} parent=1 // pred_region
      %s288 = ssub.s32 16, 16
      %289 = vsyncadd [#allocation17], %s288
      %s291 = sshll.u32 [#allocation16], 4
      %s292 = int_to_ptr.vmem [resolvable:$true] %s291
      %294 = dma.hbm_to_vmem [thread:$0]  %s101, 16, %s292, [#allocation17]
    $region205: #{net_forward.1} parent=1 // pred_fallthru
      _
    // Predicated region
    $region206: #{net_forward.1} parent=1 // pred_check
      _
    $region207: #{net_forward.1} parent=1 // pred_check_branch
      %296 = sbr.rel (0) target = $region209
    $region208: #{net_forward.1} parent=1 // pred_region
      %s298 = ssub.s32 16, 16
      %299 = vsyncadd [#allocation17], %s298
      %s301 = sshll.u32 [#allocation18], 4
      %s302 = int_to_ptr.vmem [resolvable:$true] %s301
      %304 = dma.hbm_to_vmem [thread:$0]  %s103, 16, %s302, [#allocation17]
    $region209: #{net_forward.1} parent=1 // pred_fallthru
      _
    // Predicated region
    $region210: #{net_forward.1} parent=1 // pred_check
      _
    $region211: #{net_forward.1} parent=1 // pred_check_branch
      %306 = sbr.rel (0) target = $region213
    $region212: #{net_forward.1} parent=1 // pred_region
      %s308 = ssub.s32 16, 16
      %309 = vsyncadd [#allocation20], %s308
      %s311 = sshll.u32 [#allocation19], 4
      %s312 = int_to_ptr.vmem [resolvable:$true] %s311
      %314 = dma.hbm_to_vmem [thread:$0]  %s105, 16, %s312, [#allocation20]
    $region213: #{net_forward.1} parent=1 // pred_fallthru
      _
    // Predicated region
    $region214: #{net_forward.1} parent=1 // pred_check
      _
    $region215: #{net_forward.1} parent=1 // pred_check_branch
      %316 = sbr.rel (0) target = $region217
    $region216: #{net_forward.1} parent=1 // pred_region
      %s318 = ssub.s32 16, 16
      %319 = vsyncadd [#allocation20], %s318
      %s321 = sshll.u32 [#allocation21], 4
      %s322 = int_to_ptr.vmem [resolvable:$true] %s321
      %324 = dma.hbm_to_vmem [thread:$0]  %s107, 16, %s322, [#allocation20]
    $region217: #{net_forward.1} parent=1 // pred_fallthru
      _
    // Predicated region
    $region218: #{net_forward.1} parent=1 // pred_check
      _
    $region219: #{net_forward.1} parent=1 // pred_check_branch
      %326 = sbr.rel (0) target = $region221
    $region220: #{net_forward.1} parent=1 // pred_region
      _
    $region221: #{net_forward.1} parent=1 // pred_fallthru
      _
    // Predicated region
    $region222: #{net_forward.1} parent=1 // pred_check
      _
    $region223: #{net_forward.1} parent=1 // pred_check_branch
      %328 = sbr.rel (0) target = $region225
    $region224: #{net_forward.1} parent=1 // pred_region
      _
    $region225: #{net_forward.1} parent=1 // pred_fallthru
      _
    // Predicated region
    $region226: #{net_forward.1} parent=1 // pred_check
      _
    $region227: #{net_forward.1} parent=1 // pred_check_branch
      %330 = sbr.rel (0) target = $region229
    $region228: #{net_forward.1} parent=1 // pred_region
      %331 = dma.done [#allocation5], 16
    $region229: #{net_forward.1} parent=1 // pred_fallthru
      _
    // Predicated region
    $region230: #{net_forward.1} parent=1 // pred_check
      _
    $region231: #{net_forward.1} parent=1 // pred_check_branch
      %333 = sbr.rel (0) target = $region233
    $region232: #{net_forward.1} parent=1 // pred_region
      %334 = dma.done [#allocation8], 16
    $region233: #{net_forward.1} parent=1 // pred_fallthru
      _
    // Predicated region
    $region234: #{net_forward.1} parent=1 // pred_check
      _
    $region235: #{net_forward.1} parent=1 // pred_check_branch
      %336 = sbr.rel (0) target = $region237
    $region236: #{net_forward.1} parent=1 // pred_region
      %337 = dma.done [#allocation8], 16
    $region237: #{net_forward.1} parent=1 // pred_fallthru
      _
    // Predicated region
    $region238: #{net_forward.1} parent=1 // pred_check
      _
    $region239: #{net_forward.1} parent=1 // pred_check_branch
      %339 = sbr.rel (0) target = $region241
    $region240: #{net_forward.1} parent=1 // pred_region
      %340 = dma.done [#allocation11], 16
    $region241: #{net_forward.1} parent=1 // pred_fallthru
      _
    // Predicated region
    $region242: #{net_forward.1} parent=1 // pred_check
      _
    $region243: #{net_forward.1} parent=1 // pred_check_branch
      %342 = sbr.rel (0) target = $region245
    $region244: #{net_forward.1} parent=1 // pred_region
      %343 = dma.done [#allocation11], 32
    $region245: #{net_forward.1} parent=1 // pred_fallthru
      _
    // Predicated region
    $region246: #{net_forward.1} parent=1 // pred_check
      _
    $region247: #{net_forward.1} parent=1 // pred_check_branch
      %345 = sbr.rel (0) target = $region249
    $region248: #{net_forward.1} parent=1 // pred_region
      %346 = dma.done [#allocation14], 16
    $region249: #{net_forward.1} parent=1 // pred_fallthru
      _
    // Predicated region
    $region250: #{net_forward.1} parent=1 // pred_check
      _
    $region251: #{net_forward.1} parent=1 // pred_check_branch
      %348 = sbr.rel (0) target = $region253
    $region252: #{net_forward.1} parent=1 // pred_region
      %349 = dma.done [#allocation14], 16
    $region253: #{net_forward.1} parent=1 // pred_fallthru
      _
    // Predicated region
    $region254: #{net_forward.1} parent=1 // pred_check
      _
    $region255: #{net_forward.1} parent=1 // pred_check_branch
      %351 = sbr.rel (0) target = $region257
    $region256: #{net_forward.1} parent=1 // pred_region
      %352 = dma.done [#allocation17], 16
    $region257: #{net_forward.1} parent=1 // pred_fallthru
      _
    // Predicated region
    $region258: #{net_forward.1} parent=1 // pred_check
      _
    $region259: #{net_forward.1} parent=1 // pred_check_branch
      %354 = sbr.rel (0) target = $region261
    $region260: #{net_forward.1} parent=1 // pred_region
      %355 = dma.done [#allocation17], 16
    $region261: #{net_forward.1} parent=1 // pred_fallthru
      _
    // Predicated region
    $region262: #{net_forward.1} parent=1 // pred_check
      _
    $region263: #{net_forward.1} parent=1 // pred_check_branch
      %357 = sbr.rel (0) target = $region265
    $region264: #{net_forward.1} parent=1 // pred_region
      %358 = dma.done [#allocation20], 16
    $region265: #{net_forward.1} parent=1 // pred_fallthru
      _
    // Predicated region
    $region266: #{net_forward.1} parent=1 // pred_check
      _
    $region267: #{net_forward.1} parent=1 // pred_check_branch
      %360 = sbr.rel (0) target = $region269
    $region268: #{net_forward.1} parent=1 // pred_region
      %361 = dma.done [#allocation20], 16
    $region269: #{net_forward.1} parent=1 // pred_fallthru
      _
    %v363 = vld [vmem:[%s1] sm:$0xff]
    %v364 = vld [vmem:[%s1 + $0x8] sm:$0xff]
    %v365 = vld [vmem:[%s1 + $0x10] sm:$0xff]
    %v366 = vld [vmem:[%s1 + $0x18] sm:$0xff]
    %v367 = vld [vmem:[%s1 + $0x20] sm:$0xff]
    %v368 = vld [vmem:[%s1 + $0x28] sm:$0xff]
    %v369 = vld [vmem:[%s1 + $0x30] sm:$0xff]
    %v370 = vld [vmem:[%s1 + $0x38] sm:$0xff]
    %v371 = vld [vmem:[%s1 + $0x40] sm:$0xff]
    %v372 = vld [vmem:[%s1 + $0x48] sm:$0xff]
    %v373 = vld [vmem:[%s1 + $0x50] sm:$0xff]
    %v374 = vld [vmem:[%s1 + $0x58] sm:$0xff]
    %v375 = vld [vmem:[%s7] sm:$0xf]
    %v376 = vld [vmem:[%s7 + $0x4] sm:$0xf]
    %v377 = vld [vmem:[%s7 + $0x8] sm:$0xf]
    %v378 = vld [vmem:[%s7 + $0xc] sm:$0xf]
    %v379 = vld [vmem:[%s7 + $0x10] sm:$0xf]
    %v380 = vld [vmem:[%s7 + $0x14] sm:$0xf]
    %v381 = vld [vmem:[%s7 + $0x18] sm:$0xf]
    %v382 = vld [vmem:[%s7 + $0x1c] sm:$0xf]
    %v383 = vld [vmem:[%s7 + $0x20] sm:$0xf]
    %v384 = vld [vmem:[%s7 + $0x24] sm:$0xf]
    %v385 = vld [vmem:[%s7 + $0x28] sm:$0xf]
    %v386 = vld [vmem:[%s7 + $0x2c] sm:$0xf]
    %v387 = vld [vmem:[%s7 + $0x30] sm:$0xf]
    %v388 = vld [vmem:[%s7 + $0x34] sm:$0xf]
    %v389 = vld [vmem:[%s7 + $0x38] sm:$0xf]
    %v390 = vld [vmem:[%s7 + $0x3c] sm:$0xf]
    %v391 = vld [vmem:[%s7 + $0x40] sm:$0xf]
    %v392 = vld [vmem:[%s7 + $0x44] sm:$0xf]
    %v393 = vld [vmem:[%s7 + $0x48] sm:$0xf]
    %v394 = vld [vmem:[%s7 + $0x4c] sm:$0xf]
    %v395 = vld [vmem:[%s7 + $0x50] sm:$0xf]
    %v396 = vld [vmem:[%s7 + $0x54] sm:$0xf]
    %v397 = vld [vmem:[%s7 + $0x58] sm:$0xf]
    %v398 = vld [vmem:[%s7 + $0x5c] sm:$0xf]
    %v399 = vld [vmem:[%s7 + $0x60] sm:$0xf]
    %v400 = vld [vmem:[%s7 + $0x64] sm:$0xf]
    %v401 = vld [vmem:[%s7 + $0x68] sm:$0xf]
    %v402 = vld [vmem:[%s7 + $0x6c] sm:$0xf]
    %v403 = vld [vmem:[%s7 + $0x70] sm:$0xf]
    %v404 = vld [vmem:[%s7 + $0x74] sm:$0xf]
    %v405 = vld [vmem:[%s7 + $0x78] sm:$0xf]
    %v406 = vld [vmem:[%s7 + $0x7c] sm:$0xf]
    %v407 = vld [vmem:[%s7 + $0x80] sm:$0xf]
    %v408 = vld [vmem:[%s7 + $0x84] sm:$0xf]
    %v409 = vld [vmem:[%s7 + $0x88] sm:$0xf]
    %v410 = vld [vmem:[%s7 + $0x8c] sm:$0xf]
    %v411 = vld [vmem:[%s7 + $0x90] sm:$0xf]
    %v412 = vld [vmem:[%s7 + $0x94] sm:$0xf]
    %v413 = vld [vmem:[%s7 + $0x98] sm:$0xf]
    %v414 = vld [vmem:[%s7 + $0x9c] sm:$0xf]
    %v415 = vld [vmem:[%s7 + $0xa0] sm:$0xf]
    %v416 = vld [vmem:[%s7 + $0xa4] sm:$0xf]
    %v417 = vld [vmem:[%s7 + $0xa8] sm:$0xf]
    %v418 = vld [vmem:[%s7 + $0xac] sm:$0xf]
    %v419 = vld [vmem:[%s7 + $0xb0] sm:$0xf]
    %v420 = vld [vmem:[%s7 + $0xb4] sm:$0xf]
    %v421 = vld [vmem:[%s7 + $0xb8] sm:$0xf]
    %v422 = vld [vmem:[%s7 + $0xbc] sm:$0xf]
    %v423 = vld [vmem:[%s7 + $0xc0] sm:$0xf]
    %v424 = vld [vmem:[%s7 + $0xc4] sm:$0xf]
    %v425 = vld [vmem:[%s7 + $0xc8] sm:$0xf]
    %v426 = vld [vmem:[%s7 + $0xcc] sm:$0xf]
    %v427 = vld [vmem:[%s7 + $0xd0] sm:$0xf]
    %v428 = vld [vmem:[%s7 + $0xd4] sm:$0xf]
    %v429 = vld [vmem:[%s7 + $0xd8] sm:$0xf]
    %v430 = vld [vmem:[%s7 + $0xdc] sm:$0xf]
    %v431 = vld [vmem:[%s7 + $0xe0] sm:$0xf]
    %v432 = vld [vmem:[%s7 + $0xe4] sm:$0xf]
    %v433 = vld [vmem:[%s7 + $0xe8] sm:$0xf]
    %v434 = vld [vmem:[%s7 + $0xec] sm:$0xf]
    %v435 = vld [vmem:[%s7 + $0xf0] sm:$0xf]
    %v436 = vld [vmem:[%s7 + $0xf4] sm:$0xf]
    %v437 = vld [vmem:[%s7 + $0xf8] sm:$0xf]
    %v438 = vld [vmem:[%s7 + $0xfc] sm:$0xf]
    %v439 = vld [vmem:[%s7 + $0x100] sm:$0xf]
    %v440 = vld [vmem:[%s7 + $0x104] sm:$0xf]
    %v441 = vld [vmem:[%s7 + $0x108] sm:$0xf]
    %v442 = vld [vmem:[%s7 + $0x10c] sm:$0xf]
    %v443 = vld [vmem:[%s7 + $0x110] sm:$0xf]
    %v444 = vld [vmem:[%s7 + $0x114] sm:$0xf]
    %v445 = vld [vmem:[%s7 + $0x118] sm:$0xf]
    %v446 = vld [vmem:[%s7 + $0x11c] sm:$0xf]
    %v447 = vld [vmem:[%s7 + $0x120] sm:$0xf]
    %v448 = vld [vmem:[%s7 + $0x124] sm:$0xf]
    %v449 = vld [vmem:[%s7 + $0x128] sm:$0xf]
    %v450 = vld [vmem:[%s7 + $0x12c] sm:$0xf]
    %v451 = vld [vmem:[%s7 + $0x130] sm:$0xf]
    %v452 = vld [vmem:[%s7 + $0x134] sm:$0xf]
    %v453 = vld [vmem:[%s7 + $0x138] sm:$0xf]
    %v454 = vld [vmem:[%s7 + $0x13c] sm:$0xf]
    %v455 = vld [vmem:[%s7 + $0x140] sm:$0xf]
    %v456 = vld [vmem:[%s7 + $0x144] sm:$0xf]
    %v457 = vld [vmem:[%s7 + $0x148] sm:$0xf]
    %v458 = vld [vmem:[%s7 + $0x14c] sm:$0xf]
    %v459 = vld [vmem:[%s7 + $0x150] sm:$0xf]
    %v460 = vld [vmem:[%s7 + $0x154] sm:$0xf]
    %v461 = vld [vmem:[%s7 + $0x158] sm:$0xf]
    %v462 = vld [vmem:[%s7 + $0x15c] sm:$0xf]
    %v463 = vld [vmem:[%s7 + $0x160] sm:$0xf]
    %v464 = vld [vmem:[%s7 + $0x164] sm:$0xf]
    %v465 = vld [vmem:[%s7 + $0x168] sm:$0xf]
    %v466 = vld [vmem:[%s7 + $0x16c] sm:$0xf]
    %v467 = vld [vmem:[%s7 + $0x170] sm:$0xf]
    %v468 = vld [vmem:[%s7 + $0x174] sm:$0xf]
    %v469 = vld [vmem:[%s7 + $0x178] sm:$0xf]
    %v470 = vld [vmem:[%s7 + $0x17c] sm:$0xf]
    %v471 = vpack.c.bf16 %v369, %v363
    %v472 = vpack.c.bf16 %v370, %v364
    %v473 = vpack.c.bf16 %v371, %v365
    %v474 = vpack.c.bf16 %v372, %v366
    %v475 = vpack.c.bf16 %v373, %v367
    %v476 = vpack.c.bf16 %v374, %v368
    %v477 = vld [vmem:[#allocation4] sm:$0x1]
    %v479 = vlaneseq
    %v480 = vshrl.u32 %v479, 7
    %v481 = vsub.s32 0, %v480
    %v482 = vrot.slane %v477, %v481
    %v580 = vunpack.c.l.b16 %v375
    %v581 = vunpack.c.l.b16 %v376
    %v582 = vunpack.c.l.b16 %v377
    %v583 = vunpack.c.l.b16 %v378
    %v584 = vunpack.c.l.b16 %v379
    %v585 = vunpack.c.l.b16 %v380
    %v586 = vunpack.c.l.b16 %v381
    %v587 = vunpack.c.l.b16 %v382
    %v588 = vunpack.c.l.b16 %v383
    %v589 = vunpack.c.l.b16 %v384
    %v590 = vunpack.c.l.b16 %v385
    %v591 = vunpack.c.l.b16 %v386
    %v592 = vunpack.c.l.b16 %v387
    %v593 = vunpack.c.l.b16 %v388
    %v594 = vunpack.c.l.b16 %v389
    %v595 = vunpack.c.l.b16 %v390
    %v596 = vunpack.c.l.b16 %v391
    %v597 = vunpack.c.l.b16 %v392
    %v598 = vunpack.c.l.b16 %v393
    %v599 = vunpack.c.l.b16 %v394
    %v600 = vunpack.c.l.b16 %v395
    %v601 = vunpack.c.l.b16 %v396
    %v602 = vunpack.c.l.b16 %v397
    %v603 = vunpack.c.l.b16 %v398
    %v604 = vunpack.c.l.b16 %v399
    %v605 = vunpack.c.l.b16 %v400
    %v606 = vunpack.c.l.b16 %v401
    %v607 = vunpack.c.l.b16 %v402
    %v608 = vunpack.c.l.b16 %v403
    %v609 = vunpack.c.l.b16 %v404
    %v610 = vunpack.c.l.b16 %v405
    %v611 = vunpack.c.l.b16 %v406
    %v612 = vunpack.c.l.b16 %v407
    %v613 = vunpack.c.l.b16 %v408
    %v614 = vunpack.c.l.b16 %v409
    %v615 = vunpack.c.l.b16 %v410
    %v616 = vunpack.c.l.b16 %v411
    %v617 = vunpack.c.l.b16 %v412
    %v618 = vunpack.c.l.b16 %v413
    %v619 = vunpack.c.l.b16 %v414
    %v620 = vunpack.c.l.b16 %v415
    %v621 = vunpack.c.l.b16 %v416
    %v622 = vunpack.c.l.b16 %v417
    %v623 = vunpack.c.l.b16 %v418
    %v624 = vunpack.c.l.b16 %v419
    %v625 = vunpack.c.l.b16 %v420
    %v626 = vunpack.c.l.b16 %v421
    %v627 = vunpack.c.l.b16 %v422
    %v628 = vunpack.c.l.b16 %v423
    %v629 = vunpack.c.l.b16 %v424
    %v630 = vunpack.c.l.b16 %v425
    %v631 = vunpack.c.l.b16 %v426
    %v632 = vunpack.c.l.b16 %v427
    %v633 = vunpack.c.l.b16 %v428
    %v634 = vunpack.c.l.b16 %v429
    %v635 = vunpack.c.l.b16 %v430
    %v636 = vunpack.c.l.b16 %v431
    %v637 = vunpack.c.l.b16 %v432
    %v638 = vunpack.c.l.b16 %v433
    %v639 = vunpack.c.l.b16 %v434
    %v640 = vunpack.c.l.b16 %v435
    %v641 = vunpack.c.l.b16 %v436
    %v642 = vunpack.c.l.b16 %v437
    %v643 = vunpack.c.l.b16 %v438
    %v644 = vunpack.c.l.b16 %v439
    %v645 = vunpack.c.l.b16 %v440
    %v646 = vunpack.c.l.b16 %v441
    %v647 = vunpack.c.l.b16 %v442
    %v648 = vunpack.c.l.b16 %v443
    %v649 = vunpack.c.l.b16 %v444
    %v650 = vunpack.c.l.b16 %v445
    %v651 = vunpack.c.l.b16 %v446
    %v652 = vunpack.c.l.b16 %v447
    %v653 = vunpack.c.l.b16 %v448
    %v654 = vunpack.c.l.b16 %v449
    %v655 = vunpack.c.l.b16 %v450
    %v656 = vunpack.c.l.b16 %v451
    %v657 = vunpack.c.l.b16 %v452
    %v658 = vunpack.c.l.b16 %v453
    %v659 = vunpack.c.l.b16 %v454
    %v660 = vunpack.c.l.b16 %v455
    %v661 = vunpack.c.l.b16 %v456
    %v662 = vunpack.c.l.b16 %v457
    %v663 = vunpack.c.l.b16 %v458
    %v664 = vunpack.c.l.b16 %v459
    %v665 = vunpack.c.l.b16 %v460
    %v666 = vunpack.c.l.b16 %v461
    %v667 = vunpack.c.l.b16 %v462
    %v668 = vunpack.c.l.b16 %v463
    %v669 = vunpack.c.l.b16 %v464
    %v670 = vunpack.c.l.b16 %v465
    %v671 = vunpack.c.l.b16 %v466
    %v672 = vunpack.c.l.b16 %v467
    %v673 = vunpack.c.l.b16 %v468
    %v674 = vunpack.c.l.b16 %v469
    %v675 = vunpack.c.l.b16 %v470
    %v676 = vpack.c.b16 %v581, %v580
    %v677 = vpack.c.b16 %v583, %v582
    %v678 = vpack.c.b16 %v585, %v584
    %v679 = vpack.c.b16 %v587, %v586
    %v680 = vpack.c.b16 %v589, %v588
    %v681 = vpack.c.b16 %v591, %v590
    %v682 = vpack.c.b16 %v593, %v592
    %v683 = vpack.c.b16 %v595, %v594
    %v684 = vpack.c.b16 %v597, %v596
    %v685 = vpack.c.b16 %v599, %v598
    %v686 = vpack.c.b16 %v601, %v600
    %v687 = vpack.c.b16 %v603, %v602
    %v688 = vpack.c.b16 %v605, %v604
    %v689 = vpack.c.b16 %v607, %v606
    %v690 = vpack.c.b16 %v609, %v608
    %v691 = vpack.c.b16 %v611, %v610
    %v692 = vpack.c.b16 %v613, %v612
    %v693 = vpack.c.b16 %v615, %v614
    %v694 = vpack.c.b16 %v617, %v616
    %v695 = vpack.c.b16 %v619, %v618
    %v696 = vpack.c.b16 %v621, %v620
    %v697 = vpack.c.b16 %v623, %v622
    %v698 = vpack.c.b16 %v625, %v624
    %v699 = vpack.c.b16 %v627, %v626
    %v700 = vpack.c.b16 %v629, %v628
    %v701 = vpack.c.b16 %v631, %v630
    %v702 = vpack.c.b16 %v633, %v632
    %v703 = vpack.c.b16 %v635, %v634
    %v704 = vpack.c.b16 %v637, %v636
    %v705 = vpack.c.b16 %v639, %v638
    %v706 = vpack.c.b16 %v641, %v640
    %v707 = vpack.c.b16 %v643, %v642
    %v708 = vpack.c.b16 %v645, %v644
    %v709 = vpack.c.b16 %v647, %v646
    %v710 = vpack.c.b16 %v649, %v648
    %v711 = vpack.c.b16 %v651, %v650
    %v712 = vpack.c.b16 %v653, %v652
    %v713 = vpack.c.b16 %v655, %v654
    %v714 = vpack.c.b16 %v657, %v656
    %v715 = vpack.c.b16 %v659, %v658
    %v716 = vpack.c.b16 %v661, %v660
    %v717 = vpack.c.b16 %v663, %v662
    %v718 = vpack.c.b16 %v665, %v664
    %v719 = vpack.c.b16 %v667, %v666
    %v720 = vpack.c.b16 %v669, %v668
    %v721 = vpack.c.b16 %v671, %v670
    %v722 = vpack.c.b16 %v673, %v672
    %v723 = vpack.c.b16 %v675, %v674
    %772 = vmatprep.subr.bf16.mxu0 0
    %773 = vmatpush1.bf16.msra.mxu0 %v676
    %774 = vmatprep.subr.bf16.mxu0 0
    %775 = vmatpush1.bf16.msra.mxu0 %v677
    %776 = vmatprep.subr.bf16.mxu0 0
    %777 = vmatpush1.bf16.msra.mxu0 %v678
    %778 = vmatprep.subr.bf16.mxu0 0
    %779 = vmatpush1.bf16.msra.mxu0 %v679
    %780 = vmatprep.subr.bf16.mxu0 0
    %781 = vmatpush1.bf16.msra.mxu0 %v680
    %782 = vmatprep.subr.bf16.mxu0 0
    %783 = vmatpush1.bf16.msra.mxu0 %v681
    %784 = vmatprep.subr.bf16.mxu0 0
    %785 = vmatpush1.bf16.msra.mxu0 %v682
    %786 = vmatprep.subr.bf16.mxu0 0
    %787 = vmatpush1.bf16.msra.mxu0 %v683
    %788 = vmatprep.subr.bf16.mxu0 0
    %789 = vmatpush1.bf16.msra.mxu0 %v684
    %790 = vmatprep.subr.bf16.mxu0 0
    %791 = vmatpush1.bf16.msra.mxu0 %v685
    %792 = vmatprep.subr.bf16.mxu0 0
    %793 = vmatpush1.bf16.msra.mxu0 %v686
    %794 = vmatprep.subr.bf16.mxu0 0
    %795 = vmatpush1.bf16.msra.mxu0 %v687
    %796 = vmatprep.subr.bf16.mxu0 0
    %797 = vmatpush1.bf16.msra.mxu0 %v688
    %798 = vmatprep.subr.bf16.mxu0 0
    %799 = vmatpush1.bf16.msra.mxu0 %v689
    %800 = vmatprep.subr.bf16.mxu0 0
    %801 = vmatpush1.bf16.msra.mxu0 %v690
    %802 = vmatprep.subr.bf16.mxu0 0
    %803 = vmatpush1.bf16.msra.mxu0 %v691
    %804 = vmatprep.mubr.bf16.mxu0 %v472
    %805 = vmatmul.mubr.bf16.gmra.mrb[0].mxu0 %v471
    %v806 = vpop.f32.mrb[0].mxu0
    %v807 = vadd.f32 %v482, %v806
    %v808 = vpop.f32.mrb[0].mxu0
    %v809 = vpop.f32.mrb[0].mxu0
    %v810 = vadd.f32 %v482, %v809
    %v811 = vpop.f32.mrb[0].mxu0
    %812 = vdwg.mxu0
    %813 = vmatprep.subr.bf16.mxu0 0
    %814 = vmatpush1.bf16.msra.mxu0 %v692
    %815 = vmatprep.subr.bf16.mxu0 0
    %816 = vmatpush1.bf16.msra.mxu0 %v693
    %817 = vmatprep.subr.bf16.mxu0 0
    %818 = vmatpush1.bf16.msra.mxu0 %v694
    %819 = vmatprep.subr.bf16.mxu0 0
    %820 = vmatpush1.bf16.msra.mxu0 %v695
    %821 = vmatprep.subr.bf16.mxu0 0
    %822 = vmatpush1.bf16.msra.mxu0 %v696
    %823 = vmatprep.subr.bf16.mxu0 0
    %824 = vmatpush1.bf16.msra.mxu0 %v697
    %825 = vmatprep.subr.bf16.mxu0 0
    %826 = vmatpush1.bf16.msra.mxu0 %v698
    %827 = vmatprep.subr.bf16.mxu0 0
    %828 = vmatpush1.bf16.msra.mxu0 %v699
    %829 = vmatprep.subr.bf16.mxu0 0
    %830 = vmatpush1.bf16.msra.mxu0 %v700
    %831 = vmatprep.subr.bf16.mxu0 0
    %832 = vmatpush1.bf16.msra.mxu0 %v701
    %833 = vmatprep.subr.bf16.mxu0 0
    %834 = vmatpush1.bf16.msra.mxu0 %v702
    %835 = vmatprep.subr.bf16.mxu0 0
    %836 = vmatpush1.bf16.msra.mxu0 %v703
    %837 = vmatprep.subr.bf16.mxu0 0
    %838 = vmatpush1.bf16.msra.mxu0 %v704
    %839 = vmatprep.subr.bf16.mxu0 0
    %840 = vmatpush1.bf16.msra.mxu0 %v705
    %841 = vmatprep.subr.bf16.mxu0 0
    %842 = vmatpush1.bf16.msra.mxu0 %v706
    %843 = vmatprep.subr.bf16.mxu0 0
    %844 = vmatpush1.bf16.msra.mxu0 %v707
    %845 = vmatprep.mubr.bf16.mxu0 %v474
    %846 = vmatmul.mubr.bf16.gmra.mrb[0].mxu0 %v473
    %v847 = vpop.f32.mrb[0].mxu0
    %v848 = vadd.f32 %v807, %v847
    %v849 = vpop.f32.mrb[0].mxu0
    %v850 = vpop.f32.mrb[0].mxu0
    %v851 = vadd.f32 %v810, %v850
    %v852 = vpop.f32.mrb[0].mxu0
    %853 = vdwg.mxu0
    %854 = vmatprep.subr.bf16.mxu0 0
    %855 = vmatpush1.bf16.msra.mxu0 %v708
    %856 = vmatprep.subr.bf16.mxu0 0
    %857 = vmatpush1.bf16.msra.mxu0 %v709
    %858 = vmatprep.subr.bf16.mxu0 0
    %859 = vmatpush1.bf16.msra.mxu0 %v710
    %860 = vmatprep.subr.bf16.mxu0 0
    %861 = vmatpush1.bf16.msra.mxu0 %v711
    %862 = vmatprep.subr.bf16.mxu0 0
    %863 = vmatpush1.bf16.msra.mxu0 %v712
    %864 = vmatprep.subr.bf16.mxu0 0
    %865 = vmatpush1.bf16.msra.mxu0 %v713
    %866 = vmatprep.subr.bf16.mxu0 0
    %867 = vmatpush1.bf16.msra.mxu0 %v714
    %868 = vmatprep.subr.bf16.mxu0 0
    %869 = vmatpush1.bf16.msra.mxu0 %v715
    %870 = vmatprep.subr.bf16.mxu0 0
    %871 = vmatpush1.bf16.msra.mxu0 %v716
    %872 = vmatprep.subr.bf16.mxu0 0
    %873 = vmatpush1.bf16.msra.mxu0 %v717
    %874 = vmatprep.subr.bf16.mxu0 0
    %875 = vmatpush1.bf16.msra.mxu0 %v718
    %876 = vmatprep.subr.bf16.mxu0 0
    %877 = vmatpush1.bf16.msra.mxu0 %v719
    %878 = vmatprep.subr.bf16.mxu0 0
    %879 = vmatpush1.bf16.msra.mxu0 %v720
    %880 = vmatprep.subr.bf16.mxu0 0
    %881 = vmatpush1.bf16.msra.mxu0 %v721
    %882 = vmatprep.subr.bf16.mxu0 0
    %883 = vmatpush1.bf16.msra.mxu0 %v722
    %884 = vmatprep.subr.bf16.mxu0 0
    %885 = vmatpush1.bf16.msra.mxu0 %v723
    %886 = vmatprep.mubr.bf16.mxu0 %v476
    %887 = vmatmul.mubr.bf16.gmra.mrb[0].mxu0 %v475
    %v888 = vpop.f32.mrb[0].mxu0
    %v889 = vadd.f32 %v848, %v888
    %v890 = vpop.f32.mrb[0].mxu0
    %v891 = vpop.f32.mrb[0].mxu0
    %v892 = vadd.f32 %v851, %v891
    %v893 = vpop.f32.mrb[0].mxu0
    %894 = vdwg.mxu0
    %v895 = vld [vmem:[%s3] sm:$0x1]
    %v896 = vld [vmem:[%s3 + $0x1] sm:$0x1]
    %v897 = vld [vmem:[%s11] sm:$0xf]
    %v898 = vld [vmem:[%s11 + $0x4] sm:$0xf]
    %v899 = vld [vmem:[%s11 + $0x8] sm:$0xf]
    %v900 = vld [vmem:[%s11 + $0xc] sm:$0xf]
    %v901 = vld [vmem:[%s11 + $0x10] sm:$0xf]
    %v902 = vld [vmem:[%s11 + $0x14] sm:$0xf]
    %v903 = vld [vmem:[%s11 + $0x18] sm:$0xf]
    %v904 = vld [vmem:[%s11 + $0x1c] sm:$0xf]
    %v905 = vpack.c.bf16 %v895, %v895
    %v906 = vpack.c.bf16 %v896, %v896
    %v907 = vld [vmem:[#allocation7] sm:$0x1]
    %v916 = vunpack.c.l.b16 %v897
    %v917 = vunpack.c.l.b16 %v898
    %v918 = vunpack.c.l.b16 %v899
    %v919 = vunpack.c.l.b16 %v900
    %v920 = vunpack.c.l.b16 %v901
    %v921 = vunpack.c.l.b16 %v902
    %v922 = vunpack.c.l.b16 %v903
    %v923 = vunpack.c.l.b16 %v904
    %v924 = vpack.c.b16 %v917, %v916
    %v925 = vpack.c.b16 %v919, %v918
    %v926 = vpack.c.b16 %v921, %v920
    %v927 = vpack.c.b16 %v923, %v922
    %vm932 = vcmask 523264
    %v934 = vsel %vm932, %v905, 0
    %936 = vmatprep.subr.bf16.mxu0 0
    %937 = vmatpush1.bf16.msra.mxu0 %v924
    %938 = vmatprep.subr.bf16.mxu0 0
    %939 = vmatpush1.bf16.msra.mxu0 %v925
    %940 = vmatprep.subr.bf16.mxu0 0
    %941 = vmatpush1.bf16.msra.mxu0 %v926
    %942 = vmatprep.subr.bf16.mxu0 0
    %943 = vmatpush1.bf16.msra.mxu0 %v927
    %944 = vmatprep.subr.bf16.mxu0 0
    %945 = vmatpush1.bf16.msra.mxu0 0
    %946 = vmatprep.subr.bf16.mxu0 0
    %947 = vmatpush1.bf16.msra.mxu0 0
    %948 = vmatprep.subr.bf16.mxu0 0
    %949 = vmatpush1.bf16.msra.mxu0 0
    %950 = vmatprep.subr.bf16.mxu0 0
    %951 = vmatpush1.bf16.msra.mxu0 0
    %952 = vmatprep.subr.bf16.mxu0 0
    %953 = vmatpush1.bf16.msra.mxu0 0
    %954 = vmatprep.subr.bf16.mxu0 0
    %955 = vmatpush1.bf16.msra.mxu0 0
    %956 = vmatprep.subr.bf16.mxu0 0
    %957 = vmatpush1.bf16.msra.mxu0 0
    %958 = vmatprep.subr.bf16.mxu0 0
    %959 = vmatpush1.bf16.msra.mxu0 0
    %960 = vmatprep.subr.bf16.mxu0 0
    %961 = vmatpush1.bf16.msra.mxu0 0
    %962 = vmatprep.subr.bf16.mxu0 0
    %963 = vmatpush1.bf16.msra.mxu0 0
    %964 = vmatprep.subr.bf16.mxu0 0
    %965 = vmatpush1.bf16.msra.mxu0 0
    %966 = vmatprep.subr.bf16.mxu0 0
    %967 = vmatpush1.bf16.msra.mxu0 0
    %968 = vmatprep.mubr.bf16.mxu0 0
    %969 = vmatmul.mubr.bf16.gmra.mrb[0].mxu0 %v934
    %v970 = vpop.f32.mrb[0].mxu0
    %v971 = vadd.f32 %v907, %v970
    %v972 = vpop.f32.mrb[0].mxu0
    %v973 = vpop.f32.mrb[0].mxu0
    %v974 = vpop.f32.mrb[0].mxu0
    %975 = vdwg.mxu0
    %v977 = vsel %vm932, %v906, 0
    %979 = vmatprep.subr.bf16.mxu0 0
    %980 = vmatpush1.bf16.msra.mxu0 %v924
    %981 = vmatprep.subr.bf16.mxu0 0
    %982 = vmatpush1.bf16.msra.mxu0 %v925
    %983 = vmatprep.subr.bf16.mxu0 0
    %984 = vmatpush1.bf16.msra.mxu0 %v926
    %985 = vmatprep.subr.bf16.mxu0 0
    %986 = vmatpush1.bf16.msra.mxu0 %v927
    %987 = vmatprep.subr.bf16.mxu0 0
    %988 = vmatpush1.bf16.msra.mxu0 0
    %989 = vmatprep.subr.bf16.mxu0 0
    %990 = vmatpush1.bf16.msra.mxu0 0
    %991 = vmatprep.subr.bf16.mxu0 0
    %992 = vmatpush1.bf16.msra.mxu0 0
    %993 = vmatprep.subr.bf16.mxu0 0
    %994 = vmatpush1.bf16.msra.mxu0 0
    %995 = vmatprep.subr.bf16.mxu0 0
    %996 = vmatpush1.bf16.msra.mxu0 0
    %997 = vmatprep.subr.bf16.mxu0 0
    %998 = vmatpush1.bf16.msra.mxu0 0
    %999 = vmatprep.subr.bf16.mxu0 0
    %1000 = vmatpush1.bf16.msra.mxu0 0
    %1001 = vmatprep.subr.bf16.mxu0 0
    %1002 = vmatpush1.bf16.msra.mxu0 0
    %1003 = vmatprep.subr.bf16.mxu0 0
    %1004 = vmatpush1.bf16.msra.mxu0 0
    %1005 = vmatprep.subr.bf16.mxu0 0
    %1006 = vmatpush1.bf16.msra.mxu0 0
    %1007 = vmatprep.subr.bf16.mxu0 0
    %1008 = vmatpush1.bf16.msra.mxu0 0
    %1009 = vmatprep.subr.bf16.mxu0 0
    %1010 = vmatpush1.bf16.msra.mxu0 0
    %1011 = vmatprep.mubr.bf16.mxu0 0
    %1012 = vmatmul.mubr.bf16.gmra.mrb[0].mxu0 %v977
    %v1013 = vpop.f32.mrb[0].mxu0
    %v1014 = vadd.f32 %v907, %v1013
    %v1015 = vpop.f32.mrb[0].mxu0
    %v1016 = vpop.f32.mrb[0].mxu0
    %v1017 = vpop.f32.mrb[0].mxu0
    %1018 = vdwg.mxu0
    %v1019 = vmax.f32 %v971, 0.0
    %v1020 = vmax.f32 %v1014, 0.0
    %v1021 = vld [vmem:[%s15] sm:$0xf]
    %v1022 = vld [vmem:[%s15 + $0x4] sm:$0xf]
    %v1023 = vld [vmem:[%s15 + $0x8] sm:$0xf]
    %v1024 = vld [vmem:[%s15 + $0xc] sm:$0xf]
    %v1025 = vld [vmem:[%s15 + $0x10] sm:$0xf]
    %v1026 = vld [vmem:[%s15 + $0x14] sm:$0xf]
    %v1027 = vld [vmem:[%s15 + $0x18] sm:$0xf]
    %v1028 = vld [vmem:[%s15 + $0x1c] sm:$0xf]
    %v1029 = vpack.c.bf16 %v1019, %v1019
    %v1030 = vpack.c.bf16 %v1020, %v1020
    %v1031 = vld [vmem:[#allocation9] sm:$0x1]
    %v1040 = vunpack.c.l.b16 %v1021
    %v1041 = vunpack.c.l.b16 %v1022
    %v1042 = vunpack.c.l.b16 %v1023
    %v1043 = vunpack.c.l.b16 %v1024
    %v1044 = vunpack.c.l.b16 %v1025
    %v1045 = vunpack.c.l.b16 %v1026
    %v1046 = vunpack.c.l.b16 %v1027
    %v1047 = vunpack.c.l.b16 %v1028
    %v1048 = vpack.c.b16 %v1041, %v1040
    %v1049 = vpack.c.b16 %v1043, %v1042
    %v1050 = vpack.c.b16 %v1045, %v1044
    %v1051 = vpack.c.b16 %v1047, %v1046
    %v1057 = vsel %vm932, %v1029, 0
    %1059 = vmatprep.subr.bf16.mxu0 0
    %1060 = vmatpush1.bf16.msra.mxu0 %v1048
    %1061 = vmatprep.subr.bf16.mxu0 0
    %1062 = vmatpush1.bf16.msra.mxu0 %v1049
    %1063 = vmatprep.subr.bf16.mxu0 0
    %1064 = vmatpush1.bf16.msra.mxu0 %v1050
    %1065 = vmatprep.subr.bf16.mxu0 0
    %1066 = vmatpush1.bf16.msra.mxu0 %v1051
    %1067 = vmatprep.subr.bf16.mxu0 0
    %1068 = vmatpush1.bf16.msra.mxu0 0
    %1069 = vmatprep.subr.bf16.mxu0 0
    %1070 = vmatpush1.bf16.msra.mxu0 0
    %1071 = vmatprep.subr.bf16.mxu0 0
    %1072 = vmatpush1.bf16.msra.mxu0 0
    %1073 = vmatprep.subr.bf16.mxu0 0
    %1074 = vmatpush1.bf16.msra.mxu0 0
    %1075 = vmatprep.subr.bf16.mxu0 0
    %1076 = vmatpush1.bf16.msra.mxu0 0
    %1077 = vmatprep.subr.bf16.mxu0 0
    %1078 = vmatpush1.bf16.msra.mxu0 0
    %1079 = vmatprep.subr.bf16.mxu0 0
    %1080 = vmatpush1.bf16.msra.mxu0 0
    %1081 = vmatprep.subr.bf16.mxu0 0
    %1082 = vmatpush1.bf16.msra.mxu0 0
    %1083 = vmatprep.subr.bf16.mxu0 0
    %1084 = vmatpush1.bf16.msra.mxu0 0
    %1085 = vmatprep.subr.bf16.mxu0 0
    %1086 = vmatpush1.bf16.msra.mxu0 0
    %1087 = vmatprep.subr.bf16.mxu0 0
    %1088 = vmatpush1.bf16.msra.mxu0 0
    %1089 = vmatprep.subr.bf16.mxu0 0
    %1090 = vmatpush1.bf16.msra.mxu0 0
    %1091 = vmatprep.mubr.bf16.mxu0 0
    %1092 = vmatmul.mubr.bf16.gmra.mrb[0].mxu0 %v1057
    %v1093 = vpop.f32.mrb[0].mxu0
    %v1094 = vadd.f32 %v1031, %v1093
    %v1095 = vpop.f32.mrb[0].mxu0
    %v1096 = vpop.f32.mrb[0].mxu0
    %v1097 = vpop.f32.mrb[0].mxu0
    %1098 = vdwg.mxu0
    %v1100 = vsel %vm932, %v1030, 0
    %1102 = vmatprep.subr.bf16.mxu0 0
    %1103 = vmatpush1.bf16.msra.mxu0 %v1048
    %1104 = vmatprep.subr.bf16.mxu0 0
    %1105 = vmatpush1.bf16.msra.mxu0 %v1049
    %1106 = vmatprep.subr.bf16.mxu0 0
    %1107 = vmatpush1.bf16.msra.mxu0 %v1050
    %1108 = vmatprep.subr.bf16.mxu0 0
    %1109 = vmatpush1.bf16.msra.mxu0 %v1051
    %1110 = vmatprep.subr.bf16.mxu0 0
    %1111 = vmatpush1.bf16.msra.mxu0 0
    %1112 = vmatprep.subr.bf16.mxu0 0
    %1113 = vmatpush1.bf16.msra.mxu0 0
    %1114 = vmatprep.subr.bf16.mxu0 0
    %1115 = vmatpush1.bf16.msra.mxu0 0
    %1116 = vmatprep.subr.bf16.mxu0 0
    %1117 = vmatpush1.bf16.msra.mxu0 0
    %1118 = vmatprep.subr.bf16.mxu0 0
    %1119 = vmatpush1.bf16.msra.mxu0 0
    %1120 = vmatprep.subr.bf16.mxu0 0
    %1121 = vmatpush1.bf16.msra.mxu0 0
    %1122 = vmatprep.subr.bf16.mxu0 0
    %1123 = vmatpush1.bf16.msra.mxu0 0
    %1124 = vmatprep.subr.bf16.mxu0 0
    %1125 = vmatpush1.bf16.msra.mxu0 0
    %1126 = vmatprep.subr.bf16.mxu0 0
    %1127 = vmatpush1.bf16.msra.mxu0 0
    %1128 = vmatprep.subr.bf16.mxu0 0
    %1129 = vmatpush1.bf16.msra.mxu0 0
    %1130 = vmatprep.subr.bf16.mxu0 0
    %1131 = vmatpush1.bf16.msra.mxu0 0
    %1132 = vmatprep.subr.bf16.mxu0 0
    %1133 = vmatpush1.bf16.msra.mxu0 0
    %1134 = vmatprep.mubr.bf16.mxu0 0
    %1135 = vmatmul.mubr.bf16.gmra.mrb[0].mxu0 %v1100
    %v1136 = vpop.f32.mrb[0].mxu0
    %v1137 = vadd.f32 %v1031, %v1136
    %v1138 = vpop.f32.mrb[0].mxu0
    %v1139 = vpop.f32.mrb[0].mxu0
    %v1140 = vpop.f32.mrb[0].mxu0
    %1141 = vdwg.mxu0
    %v1142 = vld [vmem:[%s19] sm:$0xf]
    %v1143 = vld [vmem:[%s19 + $0x4] sm:$0xf]
    %v1144 = vld [vmem:[%s19 + $0x8] sm:$0xf]
    %v1145 = vld [vmem:[%s19 + $0xc] sm:$0xf]
    %v1146 = vld [vmem:[%s19 + $0x10] sm:$0xf]
    %v1147 = vld [vmem:[%s19 + $0x14] sm:$0xf]
    %v1148 = vld [vmem:[%s19 + $0x18] sm:$0xf]
    %v1149 = vld [vmem:[%s19 + $0x1c] sm:$0xf]
    %v1150 = vpack.c.bf16 %v1094, %v1094
    %v1151 = vpack.c.bf16 %v1137, %v1137
    %v1152 = vld [vmem:[#allocation10] sm:$0x1]
    %v1161 = vunpack.c.l.b16 %v1142
    %v1162 = vunpack.c.l.b16 %v1143
    %v1163 = vunpack.c.l.b16 %v1144
    %v1164 = vunpack.c.l.b16 %v1145
    %v1165 = vunpack.c.l.b16 %v1146
    %v1166 = vunpack.c.l.b16 %v1147
    %v1167 = vunpack.c.l.b16 %v1148
    %v1168 = vunpack.c.l.b16 %v1149
    %v1169 = vpack.c.b16 %v1162, %v1161
    %v1170 = vpack.c.b16 %v1164, %v1163
    %v1171 = vpack.c.b16 %v1166, %v1165
    %v1172 = vpack.c.b16 %v1168, %v1167
    %v1178 = vsel %vm932, %v1150, 0
    %1180 = vmatprep.subr.bf16.mxu0 0
    %1181 = vmatpush1.bf16.msra.mxu0 %v1169
    %1182 = vmatprep.subr.bf16.mxu0 0
    %1183 = vmatpush1.bf16.msra.mxu0 %v1170
    %1184 = vmatprep.subr.bf16.mxu0 0
    %1185 = vmatpush1.bf16.msra.mxu0 %v1171
    %1186 = vmatprep.subr.bf16.mxu0 0
    %1187 = vmatpush1.bf16.msra.mxu0 %v1172
    %1188 = vmatprep.subr.bf16.mxu0 0
    %1189 = vmatpush1.bf16.msra.mxu0 0
    %1190 = vmatprep.subr.bf16.mxu0 0
    %1191 = vmatpush1.bf16.msra.mxu0 0
    %1192 = vmatprep.subr.bf16.mxu0 0
    %1193 = vmatpush1.bf16.msra.mxu0 0
    %1194 = vmatprep.subr.bf16.mxu0 0
    %1195 = vmatpush1.bf16.msra.mxu0 0
    %1196 = vmatprep.subr.bf16.mxu0 0
    %1197 = vmatpush1.bf16.msra.mxu0 0
    %1198 = vmatprep.subr.bf16.mxu0 0
    %1199 = vmatpush1.bf16.msra.mxu0 0
    %1200 = vmatprep.subr.bf16.mxu0 0
    %1201 = vmatpush1.bf16.msra.mxu0 0
    %1202 = vmatprep.subr.bf16.mxu0 0
    %1203 = vmatpush1.bf16.msra.mxu0 0
    %1204 = vmatprep.subr.bf16.mxu0 0
    %1205 = vmatpush1.bf16.msra.mxu0 0
    %1206 = vmatprep.subr.bf16.mxu0 0
    %1207 = vmatpush1.bf16.msra.mxu0 0
    %1208 = vmatprep.subr.bf16.mxu0 0
    %1209 = vmatpush1.bf16.msra.mxu0 0
    %1210 = vmatprep.subr.bf16.mxu0 0
    %1211 = vmatpush1.bf16.msra.mxu0 0
    %1212 = vmatprep.mubr.bf16.mxu0 0
    %1213 = vmatmul.mubr.bf16.gmra.mrb[0].mxu0 %v1178
    %v1214 = vpop.f32.mrb[0].mxu0
    %v1215 = vadd.f32 %v1152, %v1214
    %v1216 = vpop.f32.mrb[0].mxu0
    %v1217 = vpop.f32.mrb[0].mxu0
    %v1218 = vpop.f32.mrb[0].mxu0
    %1219 = vdwg.mxu0
    %v1221 = vsel %vm932, %v1151, 0
    %1223 = vmatprep.subr.bf16.mxu0 0
    %1224 = vmatpush1.bf16.msra.mxu0 %v1169
    %1225 = vmatprep.subr.bf16.mxu0 0
    %1226 = vmatpush1.bf16.msra.mxu0 %v1170
    %1227 = vmatprep.subr.bf16.mxu0 0
    %1228 = vmatpush1.bf16.msra.mxu0 %v1171
    %1229 = vmatprep.subr.bf16.mxu0 0
    %1230 = vmatpush1.bf16.msra.mxu0 %v1172
    %1231 = vmatprep.subr.bf16.mxu0 0
    %1232 = vmatpush1.bf16.msra.mxu0 0
    %1233 = vmatprep.subr.bf16.mxu0 0
    %1234 = vmatpush1.bf16.msra.mxu0 0
    %1235 = vmatprep.subr.bf16.mxu0 0
    %1236 = vmatpush1.bf16.msra.mxu0 0
    %1237 = vmatprep.subr.bf16.mxu0 0
    %1238 = vmatpush1.bf16.msra.mxu0 0
    %1239 = vmatprep.subr.bf16.mxu0 0
    %1240 = vmatpush1.bf16.msra.mxu0 0
    %1241 = vmatprep.subr.bf16.mxu0 0
    %1242 = vmatpush1.bf16.msra.mxu0 0
    %1243 = vmatprep.subr.bf16.mxu0 0
    %1244 = vmatpush1.bf16.msra.mxu0 0
    %1245 = vmatprep.subr.bf16.mxu0 0
    %1246 = vmatpush1.bf16.msra.mxu0 0
    %1247 = vmatprep.subr.bf16.mxu0 0
    %1248 = vmatpush1.bf16.msra.mxu0 0
    %1249 = vmatprep.subr.bf16.mxu0 0
    %1250 = vmatpush1.bf16.msra.mxu0 0
    %1251 = vmatprep.subr.bf16.mxu0 0
    %1252 = vmatpush1.bf16.msra.mxu0 0
    %1253 = vmatprep.subr.bf16.mxu0 0
    %1254 = vmatpush1.bf16.msra.mxu0 0
    %1255 = vmatprep.mubr.bf16.mxu0 0
    %1256 = vmatmul.mubr.bf16.gmra.mrb[0].mxu0 %v1221
    %v1257 = vpop.f32.mrb[0].mxu0
    %v1258 = vadd.f32 %v1152, %v1257
    %v1259 = vpop.f32.mrb[0].mxu0
    %v1260 = vpop.f32.mrb[0].mxu0
    %v1261 = vpop.f32.mrb[0].mxu0
    %1262 = vdwg.mxu0
    %v1263 = vand.u32 2147483647, %v889
    %v1264 = vand.u32 2147483647, %v892
    %vm1265 = vcmask 261120
    %v1266 = vsel %vm1265, %v1263, 0.0
    %1267 = vadd.xlane.f32.xlu0 %v1266
    %v1268 = vpop.xlane.xlu0 %1267
    %v1269 = vsel %vm1265, %v1264, 0.0
    %1270 = vadd.xlane.f32.xlu0 %v1269
    %v1271 = vpop.xlane.xlu0 %1270
    %v1273 = vsel %vm1265, 1.0, 0
    %v1276 = vsel %vm1265, %v1263, 0
    %1278 = vmatprep.subr.mxu0 0.0
    %1279 = vmatpush1.xpose.msra.mxu0 %v1276
    %1280 = vmatprep.subr.mxu0 0.0
    %1281 = vmatpush1.xpose.msra.mxu0 0.0
    %1282 = vmatprep.subr.mxu0 0.0
    %1283 = vmatpush1.xpose.msra.mxu0 0.0
    %1284 = vmatprep.subr.mxu0 0.0
    %1285 = vmatpush1.xpose.msra.mxu0 0.0
    %1286 = vmatprep.subr.mxu0 0.0
    %1287 = vmatpush1.xpose.msra.mxu0 0.0
    %1288 = vmatprep.subr.mxu0 0.0
    %1289 = vmatpush1.xpose.msra.mxu0 0.0
    %1290 = vmatprep.subr.mxu0 0.0
    %1291 = vmatpush1.xpose.msra.mxu0 0.0
    %1292 = vmatprep.subr.mxu0 0.0
    %1293 = vmatpush1.xpose.msra.mxu0 0.0
    %1294 = vmatprep.subr.mxu0 0.0
    %1295 = vmatpush1.xpose.msra.mxu0 0.0
    %1296 = vmatprep.subr.mxu0 0.0
    %1297 = vmatpush1.xpose.msra.mxu0 0.0
    %1298 = vmatprep.subr.mxu0 0.0
    %1299 = vmatpush1.xpose.msra.mxu0 0.0
    %1300 = vmatprep.subr.mxu0 0.0
    %1301 = vmatpush1.xpose.msra.mxu0 0.0
    %1302 = vmatprep.subr.mxu0 0.0
    %1303 = vmatpush1.xpose.msra.mxu0 0.0
    %1304 = vmatprep.subr.mxu0 0.0
    %1305 = vmatpush1.xpose.msra.mxu0 0.0
    %1306 = vmatprep.subr.mxu0 0.0
    %1307 = vmatpush1.xpose.msra.mxu0 0.0
    %1308 = vmatprep.subr.mxu0 0.0
    %1309 = vmatpush1.xpose.msra.mxu0 0.0
    %1310 = vmatprep.subr.mxu0 0.0
    %1311 = vmatpush1.xpose.msra.mxu0 0.0
    %1312 = vmatprep.subr.mxu0 0.0
    %1313 = vmatpush1.xpose.msra.mxu0 0.0
    %1314 = vmatprep.subr.mxu0 0.0
    %1315 = vmatpush1.xpose.msra.mxu0 0.0
    %1316 = vmatprep.subr.mxu0 0.0
    %1317 = vmatpush1.xpose.msra.mxu0 0.0
    %1318 = vmatprep.subr.mxu0 0.0
    %1319 = vmatpush1.xpose.msra.mxu0 0.0
    %1320 = vmatprep.subr.mxu0 0.0
    %1321 = vmatpush1.xpose.msra.mxu0 0.0
    %1322 = vmatprep.subr.mxu0 0.0
    %1323 = vmatpush1.xpose.msra.mxu0 0.0
    %1324 = vmatprep.subr.mxu0 0.0
    %1325 = vmatpush1.xpose.msra.mxu0 0.0
    %1326 = vmatprep.subr.mxu0 0.0
    %1327 = vmatpush1.xpose.msra.mxu0 0.0
    %1328 = vmatprep.subr.mxu0 0.0
    %1329 = vmatpush1.xpose.msra.mxu0 0.0
    %1330 = vmatprep.subr.mxu0 0.0
    %1331 = vmatpush1.xpose.msra.mxu0 0.0
    %1332 = vmatprep.subr.mxu0 0.0
    %1333 = vmatpush1.xpose.msra.mxu0 0.0
    %1334 = vmatprep.subr.mxu0 0.0
    %1335 = vmatpush1.xpose.msra.mxu0 0.0
    %1336 = vmatprep.subr.mxu0 0.0
    %1337 = vmatpush1.xpose.msra.mxu0 0.0
    %1338 = vmatprep.subr.mxu0 0.0
    %1339 = vmatpush1.xpose.msra.mxu0 0.0
    %1340 = vmatprep.subr.mxu0 0.0
    %1341 = vmatpush1.xpose.msra.mxu0 0.0
    %1342 = vmatprep.mubr.f32.mxu0 0.0
    %1343 = vmatmul.mubr.f32.gmra.mrb[0].mxu0 %v1273
    %v1344 = vpop.f32.mrb[0].mxu0
    %v1345 = vadd.f32 0.0, %v1344
    %v1346 = vpop.f32.mrb[0].mxu0
    %1347 = vdwg.mxu0
    %v1349 = vsel %vm1265, %v1264, 0
    %1351 = vmatprep.subr.mxu0 0.0
    %1352 = vmatpush1.xpose.msra.mxu0 %v1349
    %1353 = vmatprep.subr.mxu0 0.0
    %1354 = vmatpush1.xpose.msra.mxu0 0.0
    %1355 = vmatprep.subr.mxu0 0.0
    %1356 = vmatpush1.xpose.msra.mxu0 0.0
    %1357 = vmatprep.subr.mxu0 0.0
    %1358 = vmatpush1.xpose.msra.mxu0 0.0
    %1359 = vmatprep.subr.mxu0 0.0
    %1360 = vmatpush1.xpose.msra.mxu0 0.0
    %1361 = vmatprep.subr.mxu0 0.0
    %1362 = vmatpush1.xpose.msra.mxu0 0.0
    %1363 = vmatprep.subr.mxu0 0.0
    %1364 = vmatpush1.xpose.msra.mxu0 0.0
    %1365 = vmatprep.subr.mxu0 0.0
    %1366 = vmatpush1.xpose.msra.mxu0 0.0
    %1367 = vmatprep.subr.mxu0 0.0
    %1368 = vmatpush1.xpose.msra.mxu0 0.0
    %1369 = vmatprep.subr.mxu0 0.0
    %1370 = vmatpush1.xpose.msra.mxu0 0.0
    %1371 = vmatprep.subr.mxu0 0.0
    %1372 = vmatpush1.xpose.msra.mxu0 0.0
    %1373 = vmatprep.subr.mxu0 0.0
    %1374 = vmatpush1.xpose.msra.mxu0 0.0
    %1375 = vmatprep.subr.mxu0 0.0
    %1376 = vmatpush1.xpose.msra.mxu0 0.0
    %1377 = vmatprep.subr.mxu0 0.0
    %1378 = vmatpush1.xpose.msra.mxu0 0.0
    %1379 = vmatprep.subr.mxu0 0.0
    %1380 = vmatpush1.xpose.msra.mxu0 0.0
    %1381 = vmatprep.subr.mxu0 0.0
    %1382 = vmatpush1.xpose.msra.mxu0 0.0
    %1383 = vmatprep.subr.mxu0 0.0
    %1384 = vmatpush1.xpose.msra.mxu0 0.0
    %1385 = vmatprep.subr.mxu0 0.0
    %1386 = vmatpush1.xpose.msra.mxu0 0.0
    %1387 = vmatprep.subr.mxu0 0.0
    %1388 = vmatpush1.xpose.msra.mxu0 0.0
    %1389 = vmatprep.subr.mxu0 0.0
    %1390 = vmatpush1.xpose.msra.mxu0 0.0
    %1391 = vmatprep.subr.mxu0 0.0
    %1392 = vmatpush1.xpose.msra.mxu0 0.0
    %1393 = vmatprep.subr.mxu0 0.0
    %1394 = vmatpush1.xpose.msra.mxu0 0.0
    %1395 = vmatprep.subr.mxu0 0.0
    %1396 = vmatpush1.xpose.msra.mxu0 0.0
    %1397 = vmatprep.subr.mxu0 0.0
    %1398 = vmatpush1.xpose.msra.mxu0 0.0
    %1399 = vmatprep.subr.mxu0 0.0
    %1400 = vmatpush1.xpose.msra.mxu0 0.0
    %1401 = vmatprep.subr.mxu0 0.0
    %1402 = vmatpush1.xpose.msra.mxu0 0.0
    %1403 = vmatprep.subr.mxu0 0.0
    %1404 = vmatpush1.xpose.msra.mxu0 0.0
    %1405 = vmatprep.subr.mxu0 0.0
    %1406 = vmatpush1.xpose.msra.mxu0 0.0
    %1407 = vmatprep.subr.mxu0 0.0
    %1408 = vmatpush1.xpose.msra.mxu0 0.0
    %1409 = vmatprep.subr.mxu0 0.0
    %1410 = vmatpush1.xpose.msra.mxu0 0.0
    %1411 = vmatprep.subr.mxu0 0.0
    %1412 = vmatpush1.xpose.msra.mxu0 0.0
    %1413 = vmatprep.subr.mxu0 0.0
    %1414 = vmatpush1.xpose.msra.mxu0 0.0
    %1415 = vmatprep.mubr.f32.mxu0 0.0
    %1416 = vmatmul.mubr.f32.gmra.mrb[0].mxu0 %v1273
    %v1417 = vpop.f32.mrb[0].mxu0
    %v1418 = vadd.f32 0.0, %v1417
    %v1419 = vpop.f32.mrb[0].mxu0
    %1420 = vdwg.mxu0
    %v1421 = vld [vmem:[%s23] sm:$0xf]
    %v1422 = vld [vmem:[%s23 + $0x4] sm:$0xf]
    %v1423 = vld [vmem:[%s23 + $0x8] sm:$0xf]
    %v1424 = vld [vmem:[%s23 + $0xc] sm:$0xf]
    %v1425 = vpack.c.bf16 %v892, %v889
    %v1426 = vld [vmem:[%s25] sm:$0x1]
    %v1427 = vlaneseq
    %v1428 = vshrl.u32 %v1427, 7
    %v1429 = vsub.s32 0, %v1428
    %v1430 = vrot.slane %v1426, %v1429
    %v1435 = vunpack.c.l.b16 %v1421
    %v1436 = vunpack.c.l.b16 %v1422
    %v1437 = vunpack.c.l.b16 %v1423
    %v1438 = vunpack.c.l.b16 %v1424
    %v1439 = vpack.c.b16 %v1436, %v1435
    %v1440 = vpack.c.b16 %v1438, %v1437
    %v1444 = vsel %vm1265, %v1425, 0
    %1446 = vmatprep.subr.bf16.mxu0 0
    %1447 = vmatpush1.bf16.msra.mxu0 %v1439
    %1448 = vmatprep.subr.bf16.mxu0 0
    %1449 = vmatpush1.bf16.msra.mxu0 %v1440
    %1450 = vmatprep.subr.bf16.mxu0 0
    %1451 = vmatpush1.bf16.msra.mxu0 0
    %1452 = vmatprep.subr.bf16.mxu0 0
    %1453 = vmatpush1.bf16.msra.mxu0 0
    %1454 = vmatprep.subr.bf16.mxu0 0
    %1455 = vmatpush1.bf16.msra.mxu0 0
    %1456 = vmatprep.subr.bf16.mxu0 0
    %1457 = vmatpush1.bf16.msra.mxu0 0
    %1458 = vmatprep.subr.bf16.mxu0 0
    %1459 = vmatpush1.bf16.msra.mxu0 0
    %1460 = vmatprep.subr.bf16.mxu0 0
    %1461 = vmatpush1.bf16.msra.mxu0 0
    %1462 = vmatprep.subr.bf16.mxu0 0
    %1463 = vmatpush1.bf16.msra.mxu0 0
    %1464 = vmatprep.subr.bf16.mxu0 0
    %1465 = vmatpush1.bf16.msra.mxu0 0
    %1466 = vmatprep.subr.bf16.mxu0 0
    %1467 = vmatpush1.bf16.msra.mxu0 0
    %1468 = vmatprep.subr.bf16.mxu0 0
    %1469 = vmatpush1.bf16.msra.mxu0 0
    %1470 = vmatprep.subr.bf16.mxu0 0
    %1471 = vmatpush1.bf16.msra.mxu0 0
    %1472 = vmatprep.subr.bf16.mxu0 0
    %1473 = vmatpush1.bf16.msra.mxu0 0
    %1474 = vmatprep.subr.bf16.mxu0 0
    %1475 = vmatpush1.bf16.msra.mxu0 0
    %1476 = vmatprep.subr.bf16.mxu0 0
    %1477 = vmatpush1.bf16.msra.mxu0 0
    %1478 = vmatprep.mubr.bf16.mxu0 0
    %1479 = vmatmul.mubr.bf16.gmra.mrb[0].mxu0 %v1444
    %v1480 = vpop.f32.mrb[0].mxu0
    %v1481 = vadd.f32 %v1430, %v1480
    %v1482 = vpop.f32.mrb[0].mxu0
    %v1483 = vpop.f32.mrb[0].mxu0
    %v1484 = vadd.f32 %v1430, %v1483
    %v1485 = vpop.f32.mrb[0].mxu0
    %1486 = vdwg.mxu0
    %v1487 = vmul.f32 %v1481, 0.35355338
    %v1488 = vmul.f32 %v1484, 0.35355338
    %v1489 = vpack.c.bf16 %v1487, %v1487
    %v1490 = vpack.c.bf16 %v1488, %v1488
    %v1491 = vpack.c.bf16 %v1481, %v1481
    %v1492 = vpack.c.bf16 %v1484, %v1484
    %1494 = vrot.lane.b32.xlu0 %v1491, 96
    %v1495 = vpop.permute.xlu0 %1494
    %vm1496 = vcmask 64512
    %v1498 = vsel %vm1496, %v1489, 0
    %v1501 = vsel %vm1496, %v1495, 0
    %1503 = vmatprep.subr.bf16.mxu0 0
    %1504 = vmatpush1.bf16.xpose.msra.mxu0 %v1501
    %1505 = vmatprep.subr.bf16.mxu0 0
    %1506 = vmatpush1.bf16.xpose.msra.mxu0 0
    %1507 = vmatprep.subr.bf16.mxu0 0
    %1508 = vmatpush1.bf16.xpose.msra.mxu0 0
    %1509 = vmatprep.subr.bf16.mxu0 0
    %1510 = vmatpush1.bf16.xpose.msra.mxu0 0
    %1511 = vmatprep.subr.bf16.mxu0 0
    %1512 = vmatpush1.bf16.xpose.msra.mxu0 0
    %1513 = vmatprep.subr.bf16.mxu0 0
    %1514 = vmatpush1.bf16.xpose.msra.mxu0 0
    %1515 = vmatprep.subr.bf16.mxu0 0
    %1516 = vmatpush1.bf16.xpose.msra.mxu0 0
    %1517 = vmatprep.subr.bf16.mxu0 0
    %1518 = vmatpush1.bf16.xpose.msra.mxu0 0
    %1519 = vmatprep.subr.bf16.mxu0 0
    %1520 = vmatpush1.bf16.xpose.msra.mxu0 0
    %1521 = vmatprep.subr.bf16.mxu0 0
    %1522 = vmatpush1.bf16.xpose.msra.mxu0 0
    %1523 = vmatprep.subr.bf16.mxu0 0
    %1524 = vmatpush1.bf16.xpose.msra.mxu0 0
    %1525 = vmatprep.subr.bf16.mxu0 0
    %1526 = vmatpush1.bf16.xpose.msra.mxu0 0
    %1527 = vmatprep.subr.bf16.mxu0 0
    %1528 = vmatpush1.bf16.xpose.msra.mxu0 0
    %1529 = vmatprep.subr.bf16.mxu0 0
    %1530 = vmatpush1.bf16.xpose.msra.mxu0 0
    %1531 = vmatprep.subr.bf16.mxu0 0
    %1532 = vmatpush1.bf16.xpose.msra.mxu0 0
    %1533 = vmatprep.subr.bf16.mxu0 0
    %1534 = vmatpush1.bf16.xpose.msra.mxu0 0
    %1535 = vmatprep.mubr.bf16.mxu0 0
    %1536 = vmatmul.mubr.bf16.gmra.mrb[0].mxu0 %v1498
    %v1537 = vpop.f32.mrb[0].mxu0
    %v1538 = vadd.f32 0.0, %v1537
    %v1539 = vpop.f32.mrb[0].mxu0
    %v1540 = vpop.f32.mrb[0].mxu0
    %v1541 = vpop.f32.mrb[0].mxu0
    %1542 = vdwg.mxu0
    %1544 = vrot.lane.b32.xlu0 %v1492, 96
    %v1545 = vpop.permute.xlu0 %1544
    %v1547 = vsel %vm1496, %v1490, 0
    %v1550 = vsel %vm1496, %v1545, 0
    %1552 = vmatprep.subr.bf16.mxu0 0
    %1553 = vmatpush1.bf16.xpose.msra.mxu0 %v1550
    %1554 = vmatprep.subr.bf16.mxu0 0
    %1555 = vmatpush1.bf16.xpose.msra.mxu0 0
    %1556 = vmatprep.subr.bf16.mxu0 0
    %1557 = vmatpush1.bf16.xpose.msra.mxu0 0
    %1558 = vmatprep.subr.bf16.mxu0 0
    %1559 = vmatpush1.bf16.xpose.msra.mxu0 0
    %1560 = vmatprep.subr.bf16.mxu0 0
    %1561 = vmatpush1.bf16.xpose.msra.mxu0 0
    %1562 = vmatprep.subr.bf16.mxu0 0
    %1563 = vmatpush1.bf16.xpose.msra.mxu0 0
    %1564 = vmatprep.subr.bf16.mxu0 0
    %1565 = vmatpush1.bf16.xpose.msra.mxu0 0
    %1566 = vmatprep.subr.bf16.mxu0 0
    %1567 = vmatpush1.bf16.xpose.msra.mxu0 0
    %1568 = vmatprep.subr.bf16.mxu0 0
    %1569 = vmatpush1.bf16.xpose.msra.mxu0 0
    %1570 = vmatprep.subr.bf16.mxu0 0
    %1571 = vmatpush1.bf16.xpose.msra.mxu0 0
    %1572 = vmatprep.subr.bf16.mxu0 0
    %1573 = vmatpush1.bf16.xpose.msra.mxu0 0
    %1574 = vmatprep.subr.bf16.mxu0 0
    %1575 = vmatpush1.bf16.xpose.msra.mxu0 0
    %1576 = vmatprep.subr.bf16.mxu0 0
    %1577 = vmatpush1.bf16.xpose.msra.mxu0 0
    %1578 = vmatprep.subr.bf16.mxu0 0
    %1579 = vmatpush1.bf16.xpose.msra.mxu0 0
    %1580 = vmatprep.subr.bf16.mxu0 0
    %1581 = vmatpush1.bf16.xpose.msra.mxu0 0
    %1582 = vmatprep.subr.bf16.mxu0 0
    %1583 = vmatpush1.bf16.xpose.msra.mxu0 0
    %1584 = vmatprep.mubr.bf16.mxu0 0
    %1585 = vmatmul.mubr.bf16.gmra.mrb[0].mxu0 %v1547
    %v1586 = vpop.f32.mrb[0].mxu0
    %v1587 = vadd.f32 0.0, %v1586
    %v1588 = vpop.f32.mrb[0].mxu0
    %v1589 = vpop.f32.mrb[0].mxu0
    %v1590 = vpop.f32.mrb[0].mxu0
    %1591 = vdwg.mxu0
    %vm1592 = vcmp.eq.f32.partialorder %v1345, 0.0
    %vm1593 = vcmp.eq.f32.partialorder %v1418, 0.0
    %v1594 = vsel %vm1592, -1e+09, %v1538
    %v1595 = vsel %vm1593, -1e+09, %v1587
    %v1596 = vsel %vm1496, %v1594, -inf
    %1597 = vmax.xlane.f32.xlu0 %v1596
    %v1598 = vpop.xlane.xlu0 %1597
    %v1599 = vsel %vm1496, %v1595, -inf
    %1600 = vmax.xlane.f32.xlu0 %v1599
    %v1601 = vpop.xlane.xlu0 %1600
    %v1602 = vsub.f32 %v1594, %v1598
    %v1603 = vsub.f32 %v1595, %v1601
    %v1604 = vmul.f32 %v1602, 1.442695
    %v1605 = vpow.pop %v1604
    %v1606 = vmul.f32 %v1603, 1.442695
    %v1607 = vpow.pop %v1606
    %v1608 = vsel %vm1496, %v1605, 0.0
    %1609 = vadd.xlane.f32.xlu0 %v1608
    %v1610 = vpop.xlane.xlu0 %1609
    %v1611 = vsel %vm1496, %v1607, 0.0
    %1612 = vadd.xlane.f32.xlu0 %v1611
    %v1613 = vpop.xlane.xlu0 %1612
    %v1614 = vrcp.pop %v1610
    %v1615 = vrcp.pop %v1613
    %v1616 = vmul.f32 %v1605, %v1614
    %v1617 = vmul.f32 %v1607, %v1615
    %v1618 = vpack.c.bf16 %v1616, %v1616
    %v1619 = vpack.c.bf16 %v1617, %v1617
    %1620 = vrot.lane.b32.xlu0 %v1491, 64
    %v1621 = vpop.permute.xlu0 %1620
    %v1623 = vsel %vm1496, %v1618, 0
    %vm1625 = vcmask 1043456
    %v1627 = vsel %vm1625, %v1621, 0
    %1629 = vmatprep.subr.bf16.mxu0 0
    %1630 = vmatpush1.bf16.msra.mxu0 %v1627
    %1631 = vmatprep.subr.bf16.mxu0 0
    %1632 = vmatpush1.bf16.msra.mxu0 0
    %1633 = vmatprep.subr.bf16.mxu0 0
    %1634 = vmatpush1.bf16.msra.mxu0 0
    %1635 = vmatprep.subr.bf16.mxu0 0
    %1636 = vmatpush1.bf16.msra.mxu0 0
    %1637 = vmatprep.subr.bf16.mxu0 0
    %1638 = vmatpush1.bf16.msra.mxu0 0
    %1639 = vmatprep.subr.bf16.mxu0 0
    %1640 = vmatpush1.bf16.msra.mxu0 0
    %1641 = vmatprep.subr.bf16.mxu0 0
    %1642 = vmatpush1.bf16.msra.mxu0 0
    %1643 = vmatprep.subr.bf16.mxu0 0
    %1644 = vmatpush1.bf16.msra.mxu0 0
    %1645 = vmatprep.subr.bf16.mxu0 0
    %1646 = vmatpush1.bf16.msra.mxu0 0
    %1647 = vmatprep.subr.bf16.mxu0 0
    %1648 = vmatpush1.bf16.msra.mxu0 0
    %1649 = vmatprep.subr.bf16.mxu0 0
    %1650 = vmatpush1.bf16.msra.mxu0 0
    %1651 = vmatprep.subr.bf16.mxu0 0
    %1652 = vmatpush1.bf16.msra.mxu0 0
    %1653 = vmatprep.subr.bf16.mxu0 0
    %1654 = vmatpush1.bf16.msra.mxu0 0
    %1655 = vmatprep.subr.bf16.mxu0 0
    %1656 = vmatpush1.bf16.msra.mxu0 0
    %1657 = vmatprep.subr.bf16.mxu0 0
    %1658 = vmatpush1.bf16.msra.mxu0 0
    %1659 = vmatprep.subr.bf16.mxu0 0
    %1660 = vmatpush1.bf16.msra.mxu0 0
    %1661 = vmatprep.mubr.bf16.mxu0 0
    %1662 = vmatmul.mubr.bf16.gmra.mrb[0].mxu0 %v1623
    %v1663 = vpop.f32.mrb[0].mxu0
    %v1664 = vadd.f32 0.0, %v1663
    %v1665 = vpop.f32.mrb[0].mxu0
    %v1666 = vpop.f32.mrb[0].mxu0
    %v1667 = vpop.f32.mrb[0].mxu0
    %1668 = vdwg.mxu0
    %1669 = vrot.lane.b32.xlu0 %v1492, 64
    %v1670 = vpop.permute.xlu0 %1669
    %v1672 = vsel %vm1496, %v1619, 0
    %v1675 = vsel %vm1625, %v1670, 0
    %1677 = vmatprep.subr.bf16.mxu0 0
    %1678 = vmatpush1.bf16.msra.mxu0 %v1675
    %1679 = vmatprep.subr.bf16.mxu0 0
    %1680 = vmatpush1.bf16.msra.mxu0 0
    %1681 = vmatprep.subr.bf16.mxu0 0
    %1682 = vmatpush1.bf16.msra.mxu0 0
    %1683 = vmatprep.subr.bf16.mxu0 0
    %1684 = vmatpush1.bf16.msra.mxu0 0
    %1685 = vmatprep.subr.bf16.mxu0 0
    %1686 = vmatpush1.bf16.msra.mxu0 0
    %1687 = vmatprep.subr.bf16.mxu0 0
    %1688 = vmatpush1.bf16.msra.mxu0 0
    %1689 = vmatprep.subr.bf16.mxu0 0
    %1690 = vmatpush1.bf16.msra.mxu0 0
    %1691 = vmatprep.subr.bf16.mxu0 0
    %1692 = vmatpush1.bf16.msra.mxu0 0
    %1693 = vmatprep.subr.bf16.mxu0 0
    %1694 = vmatpush1.bf16.msra.mxu0 0
    %1695 = vmatprep.subr.bf16.mxu0 0
    %1696 = vmatpush1.bf16.msra.mxu0 0
    %1697 = vmatprep.subr.bf16.mxu0 0
    %1698 = vmatpush1.bf16.msra.mxu0 0
    %1699 = vmatprep.subr.bf16.mxu0 0
    %1700 = vmatpush1.bf16.msra.mxu0 0
    %1701 = vmatprep.subr.bf16.mxu0 0
    %1702 = vmatpush1.bf16.msra.mxu0 0
    %1703 = vmatprep.subr.bf16.mxu0 0
    %1704 = vmatpush1.bf16.msra.mxu0 0
    %1705 = vmatprep.subr.bf16.mxu0 0
    %1706 = vmatpush1.bf16.msra.mxu0 0
    %1707 = vmatprep.subr.bf16.mxu0 0
    %1708 = vmatpush1.bf16.msra.mxu0 0
    %1709 = vmatprep.mubr.bf16.mxu0 0
    %1710 = vmatmul.mubr.bf16.gmra.mrb[0].mxu0 %v1672
    %v1711 = vpop.f32.mrb[0].mxu0
    %v1712 = vadd.f32 0.0, %v1711
    %v1713 = vpop.f32.mrb[0].mxu0
    %v1714 = vpop.f32.mrb[0].mxu0
    %v1715 = vpop.f32.mrb[0].mxu0
    %1716 = vdwg.mxu0
    %1718 = vrot.lane.b32.xlu0 %v1489, 120
    %v1719 = vpop.permute.xlu0 %1718
    %1720 = vrot.lane.b32.xlu0 %v1491, 88
    %v1721 = vpop.permute.xlu0 %1720
    %v1723 = vsel %vm1496, %v1719, 0
    %v1726 = vsel %vm1496, %v1721, 0
    %1728 = vmatprep.subr.bf16.mxu0 0
    %1729 = vmatpush1.bf16.xpose.msra.mxu0 %v1726
    %1730 = vmatprep.subr.bf16.mxu0 0
    %1731 = vmatpush1.bf16.xpose.msra.mxu0 0
    %1732 = vmatprep.subr.bf16.mxu0 0
    %1733 = vmatpush1.bf16.xpose.msra.mxu0 0
    %1734 = vmatprep.subr.bf16.mxu0 0
    %1735 = vmatpush1.bf16.xpose.msra.mxu0 0
    %1736 = vmatprep.subr.bf16.mxu0 0
    %1737 = vmatpush1.bf16.xpose.msra.mxu0 0
    %1738 = vmatprep.subr.bf16.mxu0 0
    %1739 = vmatpush1.bf16.xpose.msra.mxu0 0
    %1740 = vmatprep.subr.bf16.mxu0 0
    %1741 = vmatpush1.bf16.xpose.msra.mxu0 0
    %1742 = vmatprep.subr.bf16.mxu0 0
    %1743 = vmatpush1.bf16.xpose.msra.mxu0 0
    %1744 = vmatprep.subr.bf16.mxu0 0
    %1745 = vmatpush1.bf16.xpose.msra.mxu0 0
    %1746 = vmatprep.subr.bf16.mxu0 0
    %1747 = vmatpush1.bf16.xpose.msra.mxu0 0
    %1748 = vmatprep.subr.bf16.mxu0 0
    %1749 = vmatpush1.bf16.xpose.msra.mxu0 0
    %1750 = vmatprep.subr.bf16.mxu0 0
    %1751 = vmatpush1.bf16.xpose.msra.mxu0 0
    %1752 = vmatprep.subr.bf16.mxu0 0
    %1753 = vmatpush1.bf16.xpose.msra.mxu0 0
    %1754 = vmatprep.subr.bf16.mxu0 0
    %1755 = vmatpush1.bf16.xpose.msra.mxu0 0
    %1756 = vmatprep.subr.bf16.mxu0 0
    %1757 = vmatpush1.bf16.xpose.msra.mxu0 0
    %1758 = vmatprep.subr.bf16.mxu0 0
    %1759 = vmatpush1.bf16.xpose.msra.mxu0 0
    %1760 = vmatprep.mubr.bf16.mxu0 0
    %1761 = vmatmul.mubr.bf16.gmra.mrb[0].mxu0 %v1723
    %v1762 = vpop.f32.mrb[0].mxu0
    %v1763 = vadd.f32 0.0, %v1762
    %v1764 = vpop.f32.mrb[0].mxu0
    %v1765 = vpop.f32.mrb[0].mxu0
    %v1766 = vpop.f32.mrb[0].mxu0
    %1767 = vdwg.mxu0
    %1769 = vrot.lane.b32.xlu0 %v1490, 120
    %v1770 = vpop.permute.xlu0 %1769
    %1771 = vrot.lane.b32.xlu0 %v1492, 88
    %v1772 = vpop.permute.xlu0 %1771
    %v1774 = vsel %vm1496, %v1770, 0
    %v1777 = vsel %vm1496, %v1772, 0
    %1779 = vmatprep.subr.bf16.mxu0 0
    %1780 = vmatpush1.bf16.xpose.msra.mxu0 %v1777
    %1781 = vmatprep.subr.bf16.mxu0 0
    %1782 = vmatpush1.bf16.xpose.msra.mxu0 0
    %1783 = vmatprep.subr.bf16.mxu0 0
    %1784 = vmatpush1.bf16.xpose.msra.mxu0 0
    %1785 = vmatprep.subr.bf16.mxu0 0
    %1786 = vmatpush1.bf16.xpose.msra.mxu0 0
    %1787 = vmatprep.subr.bf16.mxu0 0
    %1788 = vmatpush1.bf16.xpose.msra.mxu0 0
    %1789 = vmatprep.subr.bf16.mxu0 0
    %1790 = vmatpush1.bf16.xpose.msra.mxu0 0
    %1791 = vmatprep.subr.bf16.mxu0 0
    %1792 = vmatpush1.bf16.xpose.msra.mxu0 0
    %1793 = vmatprep.subr.bf16.mxu0 0
    %1794 = vmatpush1.bf16.xpose.msra.mxu0 0
    %1795 = vmatprep.subr.bf16.mxu0 0
    %1796 = vmatpush1.bf16.xpose.msra.mxu0 0
    %1797 = vmatprep.subr.bf16.mxu0 0
    %1798 = vmatpush1.bf16.xpose.msra.mxu0 0
    %1799 = vmatprep.subr.bf16.mxu0 0
    %1800 = vmatpush1.bf16.xpose.msra.mxu0 0
    %1801 = vmatprep.subr.bf16.mxu0 0
    %1802 = vmatpush1.bf16.xpose.msra.mxu0 0
    %1803 = vmatprep.subr.bf16.mxu0 0
    %1804 = vmatpush1.bf16.xpose.msra.mxu0 0
    %1805 = vmatprep.subr.bf16.mxu0 0
    %1806 = vmatpush1.bf16.xpose.msra.mxu0 0
    %1807 = vmatprep.subr.bf16.mxu0 0
    %1808 = vmatpush1.bf16.xpose.msra.mxu0 0
    %1809 = vmatprep.subr.bf16.mxu0 0
    %1810 = vmatpush1.bf16.xpose.msra.mxu0 0
    %1811 = vmatprep.mubr.bf16.mxu0 0
    %1812 = vmatmul.mubr.bf16.gmra.mrb[0].mxu0 %v1774
    %v1813 = vpop.f32.mrb[0].mxu0
    %v1814 = vadd.f32 0.0, %v1813
    %v1815 = vpop.f32.mrb[0].mxu0
    %v1816 = vpop.f32.mrb[0].mxu0
    %v1817 = vpop.f32.mrb[0].mxu0
    %1818 = vdwg.mxu0
    %v1819 = vsel %vm1592, -1e+09, %v1763
    %v1820 = vsel %vm1593, -1e+09, %v1814
    %v1821 = vsel %vm1496, %v1819, -inf
    %1822 = vmax.xlane.f32.xlu0 %v1821
    %v1823 = vpop.xlane.xlu0 %1822
    %v1824 = vsel %vm1496, %v1820, -inf
    %1825 = vmax.xlane.f32.xlu0 %v1824
    %v1826 = vpop.xlane.xlu0 %1825
    %v1827 = vsub.f32 %v1819, %v1823
    %v1828 = vsub.f32 %v1820, %v1826
    %v1829 = vmul.f32 %v1827, 1.442695
    %v1830 = vpow.pop %v1829
    %v1831 = vmul.f32 %v1828, 1.442695
    %v1832 = vpow.pop %v1831
    %v1833 = vsel %vm1496, %v1830, 0.0
    %1834 = vadd.xlane.f32.xlu0 %v1833
    %v1835 = vpop.xlane.xlu0 %1834
    %v1836 = vsel %vm1496, %v1832, 0.0
    %1837 = vadd.xlane.f32.xlu0 %v1836
    %v1838 = vpop.xlane.xlu0 %1837
    %v1839 = vrcp.pop %v1835
    %v1840 = vrcp.pop %v1838
    %v1841 = vmul.f32 %v1830, %v1839
    %v1842 = vmul.f32 %v1832, %v1840
    %v1843 = vpack.c.bf16 %v1841, %v1841
    %v1844 = vpack.c.bf16 %v1842, %v1842
    %1845 = vrot.lane.b32.xlu0 %v1491, 56
    %v1846 = vpop.permute.xlu0 %1845
    %v1848 = vsel %vm1496, %v1843, 0
    %v1851 = vsel %vm1625, %v1846, 0
    %1853 = vmatprep.subr.bf16.mxu0 0
    %1854 = vmatpush1.bf16.msra.mxu0 %v1851
    %1855 = vmatprep.subr.bf16.mxu0 0
    %1856 = vmatpush1.bf16.msra.mxu0 0
    %1857 = vmatprep.subr.bf16.mxu0 0
    %1858 = vmatpush1.bf16.msra.mxu0 0
    %1859 = vmatprep.subr.bf16.mxu0 0
    %1860 = vmatpush1.bf16.msra.mxu0 0
    %1861 = vmatprep.subr.bf16.mxu0 0
    %1862 = vmatpush1.bf16.msra.mxu0 0
    %1863 = vmatprep.subr.bf16.mxu0 0
    %1864 = vmatpush1.bf16.msra.mxu0 0
    %1865 = vmatprep.subr.bf16.mxu0 0
    %1866 = vmatpush1.bf16.msra.mxu0 0
    %1867 = vmatprep.subr.bf16.mxu0 0
    %1868 = vmatpush1.bf16.msra.mxu0 0
    %1869 = vmatprep.subr.bf16.mxu0 0
    %1870 = vmatpush1.bf16.msra.mxu0 0
    %1871 = vmatprep.subr.bf16.mxu0 0
    %1872 = vmatpush1.bf16.msra.mxu0 0
    %1873 = vmatprep.subr.bf16.mxu0 0
    %1874 = vmatpush1.bf16.msra.mxu0 0
    %1875 = vmatprep.subr.bf16.mxu0 0
    %1876 = vmatpush1.bf16.msra.mxu0 0
    %1877 = vmatprep.subr.bf16.mxu0 0
    %1878 = vmatpush1.bf16.msra.mxu0 0
    %1879 = vmatprep.subr.bf16.mxu0 0
    %1880 = vmatpush1.bf16.msra.mxu0 0
    %1881 = vmatprep.subr.bf16.mxu0 0
    %1882 = vmatpush1.bf16.msra.mxu0 0
    %1883 = vmatprep.subr.bf16.mxu0 0
    %1884 = vmatpush1.bf16.msra.mxu0 0
    %1885 = vmatprep.mubr.bf16.mxu0 0
    %1886 = vmatmul.mubr.bf16.gmra.mrb[0].mxu0 %v1848
    %v1887 = vpop.f32.mrb[0].mxu0
    %v1888 = vadd.f32 0.0, %v1887
    %v1889 = vpop.f32.mrb[0].mxu0
    %v1890 = vpop.f32.mrb[0].mxu0
    %v1891 = vpop.f32.mrb[0].mxu0
    %1892 = vdwg.mxu0
    %1893 = vrot.lane.b32.xlu0 %v1492, 56
    %v1894 = vpop.permute.xlu0 %1893
    %v1896 = vsel %vm1496, %v1844, 0
    %v1899 = vsel %vm1625, %v1894, 0
    %1901 = vmatprep.subr.bf16.mxu0 0
    %1902 = vmatpush1.bf16.msra.mxu0 %v1899
    %1903 = vmatprep.subr.bf16.mxu0 0
    %1904 = vmatpush1.bf16.msra.mxu0 0
    %1905 = vmatprep.subr.bf16.mxu0 0
    %1906 = vmatpush1.bf16.msra.mxu0 0
    %1907 = vmatprep.subr.bf16.mxu0 0
    %1908 = vmatpush1.bf16.msra.mxu0 0
    %1909 = vmatprep.subr.bf16.mxu0 0
    %1910 = vmatpush1.bf16.msra.mxu0 0
    %1911 = vmatprep.subr.bf16.mxu0 0
    %1912 = vmatpush1.bf16.msra.mxu0 0
    %1913 = vmatprep.subr.bf16.mxu0 0
    %1914 = vmatpush1.bf16.msra.mxu0 0
    %1915 = vmatprep.subr.bf16.mxu0 0
    %1916 = vmatpush1.bf16.msra.mxu0 0
    %1917 = vmatprep.subr.bf16.mxu0 0
    %1918 = vmatpush1.bf16.msra.mxu0 0
    %1919 = vmatprep.subr.bf16.mxu0 0
    %1920 = vmatpush1.bf16.msra.mxu0 0
    %1921 = vmatprep.subr.bf16.mxu0 0
    %1922 = vmatpush1.bf16.msra.mxu0 0
    %1923 = vmatprep.subr.bf16.mxu0 0
    %1924 = vmatpush1.bf16.msra.mxu0 0
    %1925 = vmatprep.subr.bf16.mxu0 0
    %1926 = vmatpush1.bf16.msra.mxu0 0
    %1927 = vmatprep.subr.bf16.mxu0 0
    %1928 = vmatpush1.bf16.msra.mxu0 0
    %1929 = vmatprep.subr.bf16.mxu0 0
    %1930 = vmatpush1.bf16.msra.mxu0 0
    %1931 = vmatprep.subr.bf16.mxu0 0
    %1932 = vmatpush1.bf16.msra.mxu0 0
    %1933 = vmatprep.mubr.bf16.mxu0 0
    %1934 = vmatmul.mubr.bf16.gmra.mrb[0].mxu0 %v1896
    %v1935 = vpop.f32.mrb[0].mxu0
    %v1936 = vadd.f32 0.0, %v1935
    %v1937 = vpop.f32.mrb[0].mxu0
    %v1938 = vpop.f32.mrb[0].mxu0
    %v1939 = vpop.f32.mrb[0].mxu0
    %1940 = vdwg.mxu0
    %1941 = vrot.lane.b32.xlu0 %v1489, 112
    %v1942 = vpop.permute.xlu0 %1941
    %1943 = vrot.lane.b32.xlu0 %v1491, 80
    %v1944 = vpop.permute.xlu0 %1943
    %v1946 = vsel %vm1496, %v1942, 0
    %v1949 = vsel %vm1496, %v1944, 0
    %1951 = vmatprep.subr.bf16.mxu0 0
    %1952 = vmatpush1.bf16.xpose.msra.mxu0 %v1949
    %1953 = vmatprep.subr.bf16.mxu0 0
    %1954 = vmatpush1.bf16.xpose.msra.mxu0 0
    %1955 = vmatprep.subr.bf16.mxu0 0
    %1956 = vmatpush1.bf16.xpose.msra.mxu0 0
    %1957 = vmatprep.subr.bf16.mxu0 0
    %1958 = vmatpush1.bf16.xpose.msra.mxu0 0
    %1959 = vmatprep.subr.bf16.mxu0 0
    %1960 = vmatpush1.bf16.xpose.msra.mxu0 0
    %1961 = vmatprep.subr.bf16.mxu0 0
    %1962 = vmatpush1.bf16.xpose.msra.mxu0 0
    %1963 = vmatprep.subr.bf16.mxu0 0
    %1964 = vmatpush1.bf16.xpose.msra.mxu0 0
    %1965 = vmatprep.subr.bf16.mxu0 0
    %1966 = vmatpush1.bf16.xpose.msra.mxu0 0
    %1967 = vmatprep.subr.bf16.mxu0 0
    %1968 = vmatpush1.bf16.xpose.msra.mxu0 0
    %1969 = vmatprep.subr.bf16.mxu0 0
    %1970 = vmatpush1.bf16.xpose.msra.mxu0 0
    %1971 = vmatprep.subr.bf16.mxu0 0
    %1972 = vmatpush1.bf16.xpose.msra.mxu0 0
    %1973 = vmatprep.subr.bf16.mxu0 0
    %1974 = vmatpush1.bf16.xpose.msra.mxu0 0
    %1975 = vmatprep.subr.bf16.mxu0 0
    %1976 = vmatpush1.bf16.xpose.msra.mxu0 0
    %1977 = vmatprep.subr.bf16.mxu0 0
    %1978 = vmatpush1.bf16.xpose.msra.mxu0 0
    %1979 = vmatprep.subr.bf16.mxu0 0
    %1980 = vmatpush1.bf16.xpose.msra.mxu0 0
    %1981 = vmatprep.subr.bf16.mxu0 0
    %1982 = vmatpush1.bf16.xpose.msra.mxu0 0
    %1983 = vmatprep.mubr.bf16.mxu0 0
    %1984 = vmatmul.mubr.bf16.gmra.mrb[0].mxu0 %v1946
    %v1985 = vpop.f32.mrb[0].mxu0
    %v1986 = vadd.f32 0.0, %v1985
    %v1987 = vpop.f32.mrb[0].mxu0
    %v1988 = vpop.f32.mrb[0].mxu0
    %v1989 = vpop.f32.mrb[0].mxu0
    %1990 = vdwg.mxu0
    %1991 = vrot.lane.b32.xlu0 %v1490, 112
    %v1992 = vpop.permute.xlu0 %1991
    %1993 = vrot.lane.b32.xlu0 %v1492, 80
    %v1994 = vpop.permute.xlu0 %1993
    %v1996 = vsel %vm1496, %v1992, 0
    %v1999 = vsel %vm1496, %v1994, 0
    %2001 = vmatprep.subr.bf16.mxu0 0
    %2002 = vmatpush1.bf16.xpose.msra.mxu0 %v1999
    %2003 = vmatprep.subr.bf16.mxu0 0
    %2004 = vmatpush1.bf16.xpose.msra.mxu0 0
    %2005 = vmatprep.subr.bf16.mxu0 0
    %2006 = vmatpush1.bf16.xpose.msra.mxu0 0
    %2007 = vmatprep.subr.bf16.mxu0 0
    %2008 = vmatpush1.bf16.xpose.msra.mxu0 0
    %2009 = vmatprep.subr.bf16.mxu0 0
    %2010 = vmatpush1.bf16.xpose.msra.mxu0 0
    %2011 = vmatprep.subr.bf16.mxu0 0
    %2012 = vmatpush1.bf16.xpose.msra.mxu0 0
    %2013 = vmatprep.subr.bf16.mxu0 0
    %2014 = vmatpush1.bf16.xpose.msra.mxu0 0
    %2015 = vmatprep.subr.bf16.mxu0 0
    %2016 = vmatpush1.bf16.xpose.msra.mxu0 0
    %2017 = vmatprep.subr.bf16.mxu0 0
    %2018 = vmatpush1.bf16.xpose.msra.mxu0 0
    %2019 = vmatprep.subr.bf16.mxu0 0
    %2020 = vmatpush1.bf16.xpose.msra.mxu0 0
    %2021 = vmatprep.subr.bf16.mxu0 0
    %2022 = vmatpush1.bf16.xpose.msra.mxu0 0
    %2023 = vmatprep.subr.bf16.mxu0 0
    %2024 = vmatpush1.bf16.xpose.msra.mxu0 0
    %2025 = vmatprep.subr.bf16.mxu0 0
    %2026 = vmatpush1.bf16.xpose.msra.mxu0 0
    %2027 = vmatprep.subr.bf16.mxu0 0
    %2028 = vmatpush1.bf16.xpose.msra.mxu0 0
    %2029 = vmatprep.subr.bf16.mxu0 0
    %2030 = vmatpush1.bf16.xpose.msra.mxu0 0
    %2031 = vmatprep.subr.bf16.mxu0 0
    %2032 = vmatpush1.bf16.xpose.msra.mxu0 0
    %2033 = vmatprep.mubr.bf16.mxu0 0
    %2034 = vmatmul.mubr.bf16.gmra.mrb[0].mxu0 %v1996
    %v2035 = vpop.f32.mrb[0].mxu0
    %v2036 = vadd.f32 0.0, %v2035
    %v2037 = vpop.f32.mrb[0].mxu0
    %v2038 = vpop.f32.mrb[0].mxu0
    %v2039 = vpop.f32.mrb[0].mxu0
    %2040 = vdwg.mxu0
    %v2041 = vsel %vm1592, -1e+09, %v1986
    %v2042 = vsel %vm1593, -1e+09, %v2036
    %v2043 = vsel %vm1496, %v2041, -inf
    %2044 = vmax.xlane.f32.xlu0 %v2043
    %v2045 = vpop.xlane.xlu0 %2044
    %v2046 = vsel %vm1496, %v2042, -inf
    %2047 = vmax.xlane.f32.xlu0 %v2046
    %v2048 = vpop.xlane.xlu0 %2047
    %v2049 = vsub.f32 %v2041, %v2045
    %v2050 = vsub.f32 %v2042, %v2048
    %v2051 = vmul.f32 %v2049, 1.442695
    %v2052 = vpow.pop %v2051
    %v2053 = vmul.f32 %v2050, 1.442695
    %v2054 = vpow.pop %v2053
    %v2055 = vsel %vm1496, %v2052, 0.0
    %2056 = vadd.xlane.f32.xlu0 %v2055
    %v2057 = vpop.xlane.xlu0 %2056
    %v2058 = vsel %vm1496, %v2054, 0.0
    %2059 = vadd.xlane.f32.xlu0 %v2058
    %v2060 = vpop.xlane.xlu0 %2059
    %v2061 = vrcp.pop %v2057
    %v2062 = vrcp.pop %v2060
    %v2063 = vmul.f32 %v2052, %v2061
    %v2064 = vmul.f32 %v2054, %v2062
    %v2065 = vpack.c.bf16 %v2063, %v2063
    %v2066 = vpack.c.bf16 %v2064, %v2064
    %2067 = vrot.lane.b32.xlu0 %v1491, 48
    %v2068 = vpop.permute.xlu0 %2067
    %v2070 = vsel %vm1496, %v2065, 0
    %v2073 = vsel %vm1625, %v2068, 0
    %2075 = vmatprep.subr.bf16.mxu0 0
    %2076 = vmatpush1.bf16.msra.mxu0 %v2073
    %2077 = vmatprep.subr.bf16.mxu0 0
    %2078 = vmatpush1.bf16.msra.mxu0 0
    %2079 = vmatprep.subr.bf16.mxu0 0
    %2080 = vmatpush1.bf16.msra.mxu0 0
    %2081 = vmatprep.subr.bf16.mxu0 0
    %2082 = vmatpush1.bf16.msra.mxu0 0
    %2083 = vmatprep.subr.bf16.mxu0 0
    %2084 = vmatpush1.bf16.msra.mxu0 0
    %2085 = vmatprep.subr.bf16.mxu0 0
    %2086 = vmatpush1.bf16.msra.mxu0 0
    %2087 = vmatprep.subr.bf16.mxu0 0
    %2088 = vmatpush1.bf16.msra.mxu0 0
    %2089 = vmatprep.subr.bf16.mxu0 0
    %2090 = vmatpush1.bf16.msra.mxu0 0
    %2091 = vmatprep.subr.bf16.mxu0 0
    %2092 = vmatpush1.bf16.msra.mxu0 0
    %2093 = vmatprep.subr.bf16.mxu0 0
    %2094 = vmatpush1.bf16.msra.mxu0 0
    %2095 = vmatprep.subr.bf16.mxu0 0
    %2096 = vmatpush1.bf16.msra.mxu0 0
    %2097 = vmatprep.subr.bf16.mxu0 0
    %2098 = vmatpush1.bf16.msra.mxu0 0
    %2099 = vmatprep.subr.bf16.mxu0 0
    %2100 = vmatpush1.bf16.msra.mxu0 0
    %2101 = vmatprep.subr.bf16.mxu0 0
    %2102 = vmatpush1.bf16.msra.mxu0 0
    %2103 = vmatprep.subr.bf16.mxu0 0
    %2104 = vmatpush1.bf16.msra.mxu0 0
    %2105 = vmatprep.subr.bf16.mxu0 0
    %2106 = vmatpush1.bf16.msra.mxu0 0
    %2107 = vmatprep.mubr.bf16.mxu0 0
    %2108 = vmatmul.mubr.bf16.gmra.mrb[0].mxu0 %v2070
    %v2109 = vpop.f32.mrb[0].mxu0
    %v2110 = vadd.f32 0.0, %v2109
    %v2111 = vpop.f32.mrb[0].mxu0
    %v2112 = vpop.f32.mrb[0].mxu0
    %v2113 = vpop.f32.mrb[0].mxu0
    %2114 = vdwg.mxu0
    %2115 = vrot.lane.b32.xlu0 %v1492, 48
    %v2116 = vpop.permute.xlu0 %2115
    %v2118 = vsel %vm1496, %v2066, 0
    %v2121 = vsel %vm1625, %v2116, 0
    %2123 = vmatprep.subr.bf16.mxu0 0
    %2124 = vmatpush1.bf16.msra.mxu0 %v2121
    %2125 = vmatprep.subr.bf16.mxu0 0
    %2126 = vmatpush1.bf16.msra.mxu0 0
    %2127 = vmatprep.subr.bf16.mxu0 0
    %2128 = vmatpush1.bf16.msra.mxu0 0
    %2129 = vmatprep.subr.bf16.mxu0 0
    %2130 = vmatpush1.bf16.msra.mxu0 0
    %2131 = vmatprep.subr.bf16.mxu0 0
    %2132 = vmatpush1.bf16.msra.mxu0 0
    %2133 = vmatprep.subr.bf16.mxu0 0
    %2134 = vmatpush1.bf16.msra.mxu0 0
    %2135 = vmatprep.subr.bf16.mxu0 0
    %2136 = vmatpush1.bf16.msra.mxu0 0
    %2137 = vmatprep.subr.bf16.mxu0 0
    %2138 = vmatpush1.bf16.msra.mxu0 0
    %2139 = vmatprep.subr.bf16.mxu0 0
    %2140 = vmatpush1.bf16.msra.mxu0 0
    %2141 = vmatprep.subr.bf16.mxu0 0
    %2142 = vmatpush1.bf16.msra.mxu0 0
    %2143 = vmatprep.subr.bf16.mxu0 0
    %2144 = vmatpush1.bf16.msra.mxu0 0
    %2145 = vmatprep.subr.bf16.mxu0 0
    %2146 = vmatpush1.bf16.msra.mxu0 0
    %2147 = vmatprep.subr.bf16.mxu0 0
    %2148 = vmatpush1.bf16.msra.mxu0 0
    %2149 = vmatprep.subr.bf16.mxu0 0
    %2150 = vmatpush1.bf16.msra.mxu0 0
    %2151 = vmatprep.subr.bf16.mxu0 0
    %2152 = vmatpush1.bf16.msra.mxu0 0
    %2153 = vmatprep.subr.bf16.mxu0 0
    %2154 = vmatpush1.bf16.msra.mxu0 0
    %2155 = vmatprep.mubr.bf16.mxu0 0
    %2156 = vmatmul.mubr.bf16.gmra.mrb[0].mxu0 %v2118
    %v2157 = vpop.f32.mrb[0].mxu0
    %v2158 = vadd.f32 0.0, %v2157
    %v2159 = vpop.f32.mrb[0].mxu0
    %v2160 = vpop.f32.mrb[0].mxu0
    %v2161 = vpop.f32.mrb[0].mxu0
    %2162 = vdwg.mxu0
    %2163 = vrot.lane.b32.xlu0 %v1489, 104
    %v2164 = vpop.permute.xlu0 %2163
    %2165 = vrot.lane.b32.xlu0 %v1491, 72
    %v2166 = vpop.permute.xlu0 %2165
    %v2168 = vsel %vm1496, %v2164, 0
    %v2171 = vsel %vm1496, %v2166, 0
    %2173 = vmatprep.subr.bf16.mxu0 0
    %2174 = vmatpush1.bf16.xpose.msra.mxu0 %v2171
    %2175 = vmatprep.subr.bf16.mxu0 0
    %2176 = vmatpush1.bf16.xpose.msra.mxu0 0
    %2177 = vmatprep.subr.bf16.mxu0 0
    %2178 = vmatpush1.bf16.xpose.msra.mxu0 0
    %2179 = vmatprep.subr.bf16.mxu0 0
    %2180 = vmatpush1.bf16.xpose.msra.mxu0 0
    %2181 = vmatprep.subr.bf16.mxu0 0
    %2182 = vmatpush1.bf16.xpose.msra.mxu0 0
    %2183 = vmatprep.subr.bf16.mxu0 0
    %2184 = vmatpush1.bf16.xpose.msra.mxu0 0
    %2185 = vmatprep.subr.bf16.mxu0 0
    %2186 = vmatpush1.bf16.xpose.msra.mxu0 0
    %2187 = vmatprep.subr.bf16.mxu0 0
    %2188 = vmatpush1.bf16.xpose.msra.mxu0 0
    %2189 = vmatprep.subr.bf16.mxu0 0
    %2190 = vmatpush1.bf16.xpose.msra.mxu0 0
    %2191 = vmatprep.subr.bf16.mxu0 0
    %2192 = vmatpush1.bf16.xpose.msra.mxu0 0
    %2193 = vmatprep.subr.bf16.mxu0 0
    %2194 = vmatpush1.bf16.xpose.msra.mxu0 0
    %2195 = vmatprep.subr.bf16.mxu0 0
    %2196 = vmatpush1.bf16.xpose.msra.mxu0 0
    %2197 = vmatprep.subr.bf16.mxu0 0
    %2198 = vmatpush1.bf16.xpose.msra.mxu0 0
    %2199 = vmatprep.subr.bf16.mxu0 0
    %2200 = vmatpush1.bf16.xpose.msra.mxu0 0
    %2201 = vmatprep.subr.bf16.mxu0 0
    %2202 = vmatpush1.bf16.xpose.msra.mxu0 0
    %2203 = vmatprep.subr.bf16.mxu0 0
    %2204 = vmatpush1.bf16.xpose.msra.mxu0 0
    %2205 = vmatprep.mubr.bf16.mxu0 0
    %2206 = vmatmul.mubr.bf16.gmra.mrb[0].mxu0 %v2168
    %v2207 = vpop.f32.mrb[0].mxu0
    %v2208 = vadd.f32 0.0, %v2207
    %v2209 = vpop.f32.mrb[0].mxu0
    %v2210 = vpop.f32.mrb[0].mxu0
    %v2211 = vpop.f32.mrb[0].mxu0
    %2212 = vdwg.mxu0
    %2213 = vrot.lane.b32.xlu0 %v1490, 104
    %v2214 = vpop.permute.xlu0 %2213
    %2215 = vrot.lane.b32.xlu0 %v1492, 72
    %v2216 = vpop.permute.xlu0 %2215
    %v2218 = vsel %vm1496, %v2214, 0
    %v2221 = vsel %vm1496, %v2216, 0
    %2223 = vmatprep.subr.bf16.mxu0 0
    %2224 = vmatpush1.bf16.xpose.msra.mxu0 %v2221
    %2225 = vmatprep.subr.bf16.mxu0 0
    %2226 = vmatpush1.bf16.xpose.msra.mxu0 0
    %2227 = vmatprep.subr.bf16.mxu0 0
    %2228 = vmatpush1.bf16.xpose.msra.mxu0 0
    %2229 = vmatprep.subr.bf16.mxu0 0
    %2230 = vmatpush1.bf16.xpose.msra.mxu0 0
    %2231 = vmatprep.subr.bf16.mxu0 0
    %2232 = vmatpush1.bf16.xpose.msra.mxu0 0
    %2233 = vmatprep.subr.bf16.mxu0 0
    %2234 = vmatpush1.bf16.xpose.msra.mxu0 0
    %2235 = vmatprep.subr.bf16.mxu0 0
    %2236 = vmatpush1.bf16.xpose.msra.mxu0 0
    %2237 = vmatprep.subr.bf16.mxu0 0
    %2238 = vmatpush1.bf16.xpose.msra.mxu0 0
    %2239 = vmatprep.subr.bf16.mxu0 0
    %2240 = vmatpush1.bf16.xpose.msra.mxu0 0
    %2241 = vmatprep.subr.bf16.mxu0 0
    %2242 = vmatpush1.bf16.xpose.msra.mxu0 0
    %2243 = vmatprep.subr.bf16.mxu0 0
    %2244 = vmatpush1.bf16.xpose.msra.mxu0 0
    %2245 = vmatprep.subr.bf16.mxu0 0
    %2246 = vmatpush1.bf16.xpose.msra.mxu0 0
    %2247 = vmatprep.subr.bf16.mxu0 0
    %2248 = vmatpush1.bf16.xpose.msra.mxu0 0
    %2249 = vmatprep.subr.bf16.mxu0 0
    %2250 = vmatpush1.bf16.xpose.msra.mxu0 0
    %2251 = vmatprep.subr.bf16.mxu0 0
    %2252 = vmatpush1.bf16.xpose.msra.mxu0 0
    %2253 = vmatprep.subr.bf16.mxu0 0
    %2254 = vmatpush1.bf16.xpose.msra.mxu0 0
    %2255 = vmatprep.mubr.bf16.mxu0 0
    %2256 = vmatmul.mubr.bf16.gmra.mrb[0].mxu0 %v2218
    %v2257 = vpop.f32.mrb[0].mxu0
    %v2258 = vadd.f32 0.0, %v2257
    %v2259 = vpop.f32.mrb[0].mxu0
    %v2260 = vpop.f32.mrb[0].mxu0
    %v2261 = vpop.f32.mrb[0].mxu0
    %2262 = vdwg.mxu0
    %v2263 = vsel %vm1592, -1e+09, %v2208
    %v2264 = vsel %vm1593, -1e+09, %v2258
    %v2265 = vsel %vm1496, %v2263, -inf
    %2266 = vmax.xlane.f32.xlu0 %v2265
    %v2267 = vpop.xlane.xlu0 %2266
    %v2268 = vsel %vm1496, %v2264, -inf
    %2269 = vmax.xlane.f32.xlu0 %v2268
    %v2270 = vpop.xlane.xlu0 %2269
    %v2271 = vsub.f32 %v2263, %v2267
    %v2272 = vsub.f32 %v2264, %v2270
    %v2273 = vmul.f32 %v2271, 1.442695
    %v2274 = vpow.pop %v2273
    %v2275 = vmul.f32 %v2272, 1.442695
    %v2276 = vpow.pop %v2275
    %v2277 = vsel %vm1496, %v2274, 0.0
    %2278 = vadd.xlane.f32.xlu0 %v2277
    %v2279 = vpop.xlane.xlu0 %2278
    %v2280 = vsel %vm1496, %v2276, 0.0
    %2281 = vadd.xlane.f32.xlu0 %v2280
    %v2282 = vpop.xlane.xlu0 %2281
    %v2283 = vrcp.pop %v2279
    %v2284 = vrcp.pop %v2282
    %v2285 = vmul.f32 %v2274, %v2283
    %v2286 = vmul.f32 %v2276, %v2284
    %v2287 = vpack.c.bf16 %v2285, %v2285
    %v2288 = vpack.c.bf16 %v2286, %v2286
    %2289 = vrot.lane.b32.xlu0 %v1491, 40
    %v2290 = vpop.permute.xlu0 %2289
    %v2292 = vsel %vm1496, %v2287, 0
    %v2295 = vsel %vm1625, %v2290, 0
    %2297 = vmatprep.subr.bf16.mxu0 0
    %2298 = vmatpush1.bf16.msra.mxu0 %v2295
    %2299 = vmatprep.subr.bf16.mxu0 0
    %2300 = vmatpush1.bf16.msra.mxu0 0
    %2301 = vmatprep.subr.bf16.mxu0 0
    %2302 = vmatpush1.bf16.msra.mxu0 0
    %2303 = vmatprep.subr.bf16.mxu0 0
    %2304 = vmatpush1.bf16.msra.mxu0 0
    %2305 = vmatprep.subr.bf16.mxu0 0
    %2306 = vmatpush1.bf16.msra.mxu0 0
    %2307 = vmatprep.subr.bf16.mxu0 0
    %2308 = vmatpush1.bf16.msra.mxu0 0
    %2309 = vmatprep.subr.bf16.mxu0 0
    %2310 = vmatpush1.bf16.msra.mxu0 0
    %2311 = vmatprep.subr.bf16.mxu0 0
    %2312 = vmatpush1.bf16.msra.mxu0 0
    %2313 = vmatprep.subr.bf16.mxu0 0
    %2314 = vmatpush1.bf16.msra.mxu0 0
    %2315 = vmatprep.subr.bf16.mxu0 0
    %2316 = vmatpush1.bf16.msra.mxu0 0
    %2317 = vmatprep.subr.bf16.mxu0 0
    %2318 = vmatpush1.bf16.msra.mxu0 0
    %2319 = vmatprep.subr.bf16.mxu0 0
    %2320 = vmatpush1.bf16.msra.mxu0 0
    %2321 = vmatprep.subr.bf16.mxu0 0
    %2322 = vmatpush1.bf16.msra.mxu0 0
    %2323 = vmatprep.subr.bf16.mxu0 0
    %2324 = vmatpush1.bf16.msra.mxu0 0
    %2325 = vmatprep.subr.bf16.mxu0 0
    %2326 = vmatpush1.bf16.msra.mxu0 0
    %2327 = vmatprep.subr.bf16.mxu0 0
    %2328 = vmatpush1.bf16.msra.mxu0 0
    %2329 = vmatprep.mubr.bf16.mxu0 0
    %2330 = vmatmul.mubr.bf16.gmra.mrb[0].mxu0 %v2292
    %v2331 = vpop.f32.mrb[0].mxu0
    %v2332 = vadd.f32 0.0, %v2331
    %v2333 = vpop.f32.mrb[0].mxu0
    %v2334 = vpop.f32.mrb[0].mxu0
    %v2335 = vpop.f32.mrb[0].mxu0
    %2336 = vdwg.mxu0
    %2337 = vrot.lane.b32.xlu0 %v1492, 40
    %v2338 = vpop.permute.xlu0 %2337
    %v2340 = vsel %vm1496, %v2288, 0
    %v2343 = vsel %vm1625, %v2338, 0
    %2345 = vmatprep.subr.bf16.mxu0 0
    %2346 = vmatpush1.bf16.msra.mxu0 %v2343
    %2347 = vmatprep.subr.bf16.mxu0 0
    %2348 = vmatpush1.bf16.msra.mxu0 0
    %2349 = vmatprep.subr.bf16.mxu0 0
    %2350 = vmatpush1.bf16.msra.mxu0 0
    %2351 = vmatprep.subr.bf16.mxu0 0
    %2352 = vmatpush1.bf16.msra.mxu0 0
    %2353 = vmatprep.subr.bf16.mxu0 0
    %2354 = vmatpush1.bf16.msra.mxu0 0
    %2355 = vmatprep.subr.bf16.mxu0 0
    %2356 = vmatpush1.bf16.msra.mxu0 0
    %2357 = vmatprep.subr.bf16.mxu0 0
    %2358 = vmatpush1.bf16.msra.mxu0 0
    %2359 = vmatprep.subr.bf16.mxu0 0
    %2360 = vmatpush1.bf16.msra.mxu0 0
    %2361 = vmatprep.subr.bf16.mxu0 0
    %2362 = vmatpush1.bf16.msra.mxu0 0
    %2363 = vmatprep.subr.bf16.mxu0 0
    %2364 = vmatpush1.bf16.msra.mxu0 0
    %2365 = vmatprep.subr.bf16.mxu0 0
    %2366 = vmatpush1.bf16.msra.mxu0 0
    %2367 = vmatprep.subr.bf16.mxu0 0
    %2368 = vmatpush1.bf16.msra.mxu0 0
    %2369 = vmatprep.subr.bf16.mxu0 0
    %2370 = vmatpush1.bf16.msra.mxu0 0
    %2371 = vmatprep.subr.bf16.mxu0 0
    %2372 = vmatpush1.bf16.msra.mxu0 0
    %2373 = vmatprep.subr.bf16.mxu0 0
    %2374 = vmatpush1.bf16.msra.mxu0 0
    %2375 = vmatprep.subr.bf16.mxu0 0
    %2376 = vmatpush1.bf16.msra.mxu0 0
    %2377 = vmatprep.mubr.bf16.mxu0 0
    %2378 = vmatmul.mubr.bf16.gmra.mrb[0].mxu0 %v2340
    %v2379 = vpop.f32.mrb[0].mxu0
    %v2380 = vadd.f32 0.0, %v2379
    %v2381 = vpop.f32.mrb[0].mxu0
    %v2382 = vpop.f32.mrb[0].mxu0
    %v2383 = vpop.f32.mrb[0].mxu0
    %2384 = vdwg.mxu0
    %2387 = vrot.lane.b32.xlu0 %v1888, 8
    %v2388 = vpop.permute.xlu0 %2387
    %2389 = vrot.lane.b32.xlu0 %v1936, 8
    %v2390 = vpop.permute.xlu0 %2389
    %2395 = vrot.lane.b32.xlu0 %v2110, 16
    %v2396 = vpop.permute.xlu0 %2395
    %2397 = vrot.lane.b32.xlu0 %v2158, 16
    %v2398 = vpop.permute.xlu0 %2397
    %2403 = vrot.lane.b32.xlu0 %v2332, 24
    %v2404 = vpop.permute.xlu0 %2403
    %2405 = vrot.lane.b32.xlu0 %v2380, 24
    %v2406 = vpop.permute.xlu0 %2405
    %v2409 = vsel %vm1496, %v1664, %v2388
    %v2410 = vsel %vm1496, %v1712, %v2390
    %vm2411 = vcmask 130048
    %v2412 = vsel %vm2411, %v2409, %v2396
    %v2413 = vsel %vm2411, %v2410, %v2398
    %vm2414 = vcmask 195584
    %v2415 = vsel %vm2414, %v2412, %v2404
    %v2416 = vsel %vm2414, %v2413, %v2406
    %v2417 = vld [vmem:[%s27] sm:$0xf]
    %v2418 = vld [vmem:[%s27 + $0x4] sm:$0xf]
    %v2419 = vld [vmem:[%s27 + $0x8] sm:$0xf]
    %v2420 = vld [vmem:[%s27 + $0xc] sm:$0xf]
    %v2421 = vpack.c.bf16 %v2416, %v2415
    %v2422 = vld [vmem:[%s29] sm:$0x1]
    %v2423 = vlaneseq
    %v2424 = vshrl.u32 %v2423, 7
    %v2425 = vsub.s32 0, %v2424
    %v2426 = vrot.slane %v2422, %v2425
    %v2431 = vunpack.c.l.b16 %v2417
    %v2432 = vunpack.c.l.b16 %v2418
    %v2433 = vunpack.c.l.b16 %v2419
    %v2434 = vunpack.c.l.b16 %v2420
    %v2435 = vpack.c.b16 %v2432, %v2431
    %v2436 = vpack.c.b16 %v2434, %v2433
    %v2440 = vsel %vm1265, %v2421, 0
    %2442 = vmatprep.subr.bf16.mxu0 0
    %2443 = vmatpush1.bf16.msra.mxu0 %v2435
    %2444 = vmatprep.subr.bf16.mxu0 0
    %2445 = vmatpush1.bf16.msra.mxu0 %v2436
    %2446 = vmatprep.subr.bf16.mxu0 0
    %2447 = vmatpush1.bf16.msra.mxu0 0
    %2448 = vmatprep.subr.bf16.mxu0 0
    %2449 = vmatpush1.bf16.msra.mxu0 0
    %2450 = vmatprep.subr.bf16.mxu0 0
    %2451 = vmatpush1.bf16.msra.mxu0 0
    %2452 = vmatprep.subr.bf16.mxu0 0
    %2453 = vmatpush1.bf16.msra.mxu0 0
    %2454 = vmatprep.subr.bf16.mxu0 0
    %2455 = vmatpush1.bf16.msra.mxu0 0
    %2456 = vmatprep.subr.bf16.mxu0 0
    %2457 = vmatpush1.bf16.msra.mxu0 0
    %2458 = vmatprep.subr.bf16.mxu0 0
    %2459 = vmatpush1.bf16.msra.mxu0 0
    %2460 = vmatprep.subr.bf16.mxu0 0
    %2461 = vmatpush1.bf16.msra.mxu0 0
    %2462 = vmatprep.subr.bf16.mxu0 0
    %2463 = vmatpush1.bf16.msra.mxu0 0
    %2464 = vmatprep.subr.bf16.mxu0 0
    %2465 = vmatpush1.bf16.msra.mxu0 0
    %2466 = vmatprep.subr.bf16.mxu0 0
    %2467 = vmatpush1.bf16.msra.mxu0 0
    %2468 = vmatprep.subr.bf16.mxu0 0
    %2469 = vmatpush1.bf16.msra.mxu0 0
    %2470 = vmatprep.subr.bf16.mxu0 0
    %2471 = vmatpush1.bf16.msra.mxu0 0
    %2472 = vmatprep.subr.bf16.mxu0 0
    %2473 = vmatpush1.bf16.msra.mxu0 0
    %2474 = vmatprep.mubr.bf16.mxu0 0
    %2475 = vmatmul.mubr.bf16.gmra.mrb[0].mxu0 %v2440
    %v2476 = vpop.f32.mrb[0].mxu0
    %v2477 = vadd.f32 %v2426, %v2476
    %v2478 = vpop.f32.mrb[0].mxu0
    %v2479 = vpop.f32.mrb[0].mxu0
    %v2480 = vadd.f32 %v2426, %v2479
    %v2481 = vpop.f32.mrb[0].mxu0
    %2482 = vdwg.mxu0
    %v2483 = vadd.f32 %v889, %v2477
    %v2484 = vadd.f32 %v892, %v2480
    %v2485 = vld [vmem:[%s31] sm:$0x1]
    %v2486 = vld [vmem:[%s33] sm:$0x1]
    %v2487 = vsel %vm1265, %v2483, 0.0
    %2488 = vadd.xlane.f32.xlu0 %v2487
    %v2489 = vpop.xlane.xlu0 %2488
    %v2490 = vsel %vm1265, %v2484, 0.0
    %2491 = vadd.xlane.f32.xlu0 %v2490
    %v2492 = vpop.xlane.xlu0 %2491
    %v2493 = vrcp.pop 32.0
    %v2494 = vmul.f32 %v2489, %v2493
    %v2495 = vmul.f32 %v2492, %v2493
    %v2496 = vsub.f32 %v2483, %v2494
    %v2497 = vsub.f32 %v2484, %v2495
    %v2498 = vmul.f32 %v2496, %v2496
    %v2499 = vmul.f32 %v2497, %v2497
    %v2500 = vsel %vm1265, %v2498, 0.0
    %2501 = vadd.xlane.f32.xlu0 %v2500
    %v2502 = vpop.xlane.xlu0 %2501
    %v2503 = vsel %vm1265, %v2499, 0.0
    %2504 = vadd.xlane.f32.xlu0 %v2503
    %v2505 = vpop.xlane.xlu0 %2504
    %v2506 = vmul.f32 %v2502, 0.032258064
    %v2507 = vmul.f32 %v2505, 0.032258064
    %v2508 = vlaneseq
    %v2509 = vshrl.u32 %v2508, 7
    %v2510 = vsub.s32 0, %v2509
    %v2511 = vrot.slane %v2485, %v2510
    %v2512 = vmul.f32 %v2511, %v2496
    %v2513 = vmul.f32 %v2511, %v2497
    %v2514 = vrsqrt.pop %v2506
    %v2515 = vmul.f32 %v2506, %v2514
    %vm2516 = vcmp.eq.f32.partialorder %v2506, inf
    %v2517 = vsel %vm2516, %v2506, %v2515
    %vm2518 = vcmp.eq.f32.partialorder %v2506, 0.0
    %v2519 = vand.u32 %v2506, 2147483648
    %v2520 = vsel %vm2518, %v2519, %v2517
    %v2521 = vrsqrt.pop %v2507
    %v2522 = vmul.f32 %v2507, %v2521
    %vm2523 = vcmp.eq.f32.partialorder %v2507, inf
    %v2524 = vsel %vm2523, %v2507, %v2522
    %vm2525 = vcmp.eq.f32.partialorder %v2507, 0.0
    %v2526 = vand.u32 %v2507, 2147483648
    %v2527 = vsel %vm2525, %v2526, %v2524
    %v2528 = vadd.f32 %v2520, 1e-06
    %v2529 = vadd.f32 %v2527, 1e-06
    %v2530 = vrcp.pop %v2528
    %v2531 = vmul.f32 %v2512, %v2530
    %v2532 = vrcp.pop %v2529
    %v2533 = vmul.f32 %v2513, %v2532
    %v2534 = vlaneseq
    %v2535 = vshrl.u32 %v2534, 7
    %v2536 = vsub.s32 0, %v2535
    %v2537 = vrot.slane %v2486, %v2536
    %v2538 = vadd.f32 %v2531, %v2537
    %v2539 = vadd.f32 %v2533, %v2537
    %v2540 = vld [vmem:[%s35] sm:$0xf]
    %v2541 = vld [vmem:[%s35 + $0x4] sm:$0xf]
    %v2542 = vld [vmem:[%s35 + $0x8] sm:$0xf]
    %v2543 = vld [vmem:[%s35 + $0xc] sm:$0xf]
    %v2544 = vpack.c.bf16 %v2539, %v2538
    %v2545 = vld [vmem:[%s37] sm:$0x1]
    %v2546 = vlaneseq
    %v2547 = vshrl.u32 %v2546, 7
    %v2548 = vsub.s32 0, %v2547
    %v2549 = vrot.slane %v2545, %v2548
    %v2554 = vunpack.c.l.b16 %v2540
    %v2555 = vunpack.c.l.b16 %v2541
    %v2556 = vunpack.c.l.b16 %v2542
    %v2557 = vunpack.c.l.b16 %v2543
    %v2558 = vpack.c.b16 %v2555, %v2554
    %v2559 = vpack.c.b16 %v2557, %v2556
    %v2563 = vsel %vm1265, %v2544, 0
    %2565 = vmatprep.subr.bf16.mxu0 0
    %2566 = vmatpush1.bf16.msra.mxu0 %v2558
    %2567 = vmatprep.subr.bf16.mxu0 0
    %2568 = vmatpush1.bf16.msra.mxu0 %v2559
    %2569 = vmatprep.subr.bf16.mxu0 0
    %2570 = vmatpush1.bf16.msra.mxu0 0
    %2571 = vmatprep.subr.bf16.mxu0 0
    %2572 = vmatpush1.bf16.msra.mxu0 0
    %2573 = vmatprep.subr.bf16.mxu0 0
    %2574 = vmatpush1.bf16.msra.mxu0 0
    %2575 = vmatprep.subr.bf16.mxu0 0
    %2576 = vmatpush1.bf16.msra.mxu0 0
    %2577 = vmatprep.subr.bf16.mxu0 0
    %2578 = vmatpush1.bf16.msra.mxu0 0
    %2579 = vmatprep.subr.bf16.mxu0 0
    %2580 = vmatpush1.bf16.msra.mxu0 0
    %2581 = vmatprep.subr.bf16.mxu0 0
    %2582 = vmatpush1.bf16.msra.mxu0 0
    %2583 = vmatprep.subr.bf16.mxu0 0
    %2584 = vmatpush1.bf16.msra.mxu0 0
    %2585 = vmatprep.subr.bf16.mxu0 0
    %2586 = vmatpush1.bf16.msra.mxu0 0
    %2587 = vmatprep.subr.bf16.mxu0 0
    %2588 = vmatpush1.bf16.msra.mxu0 0
    %2589 = vmatprep.subr.bf16.mxu0 0
    %2590 = vmatpush1.bf16.msra.mxu0 0
    %2591 = vmatprep.subr.bf16.mxu0 0
    %2592 = vmatpush1.bf16.msra.mxu0 0
    %2593 = vmatprep.subr.bf16.mxu0 0
    %2594 = vmatpush1.bf16.msra.mxu0 0
    %2595 = vmatprep.subr.bf16.mxu0 0
    %2596 = vmatpush1.bf16.msra.mxu0 0
    %2597 = vmatprep.mubr.bf16.mxu0 0
    %2598 = vmatmul.mubr.bf16.gmra.mrb[0].mxu0 %v2563
    %v2599 = vpop.f32.mrb[0].mxu0
    %v2600 = vadd.f32 %v2549, %v2599
    %v2601 = vpop.f32.mrb[0].mxu0
    %v2602 = vpop.f32.mrb[0].mxu0
    %v2603 = vadd.f32 %v2549, %v2602
    %v2604 = vpop.f32.mrb[0].mxu0
    %2605 = vdwg.mxu0
    %v2606 = vmax.f32 %v2600, 0.0
    %v2607 = vmax.f32 %v2603, 0.0
    %v2608 = vld [vmem:[%s39] sm:$0xf]
    %v2609 = vld [vmem:[%s39 + $0x4] sm:$0xf]
    %v2610 = vld [vmem:[%s39 + $0x8] sm:$0xf]
    %v2611 = vld [vmem:[%s39 + $0xc] sm:$0xf]
    %v2612 = vld [vmem:[%s39 + $0x10] sm:$0xf]
    %v2613 = vld [vmem:[%s39 + $0x14] sm:$0xf]
    %v2614 = vld [vmem:[%s39 + $0x18] sm:$0xf]
    %v2615 = vld [vmem:[%s39 + $0x1c] sm:$0xf]
    %v2616 = vpack.c.bf16 %v2607, %v2606
    %v2617 = vld [vmem:[%s41] sm:$0x1]
    %v2618 = vlaneseq
    %v2619 = vshrl.u32 %v2618, 7
    %v2620 = vsub.s32 0, %v2619
    %v2621 = vrot.slane %v2617, %v2620
    %v2630 = vunpack.c.l.b16 %v2608
    %v2631 = vunpack.c.l.b16 %v2609
    %v2632 = vunpack.c.l.b16 %v2610
    %v2633 = vunpack.c.l.b16 %v2611
    %v2634 = vunpack.c.l.b16 %v2612
    %v2635 = vunpack.c.l.b16 %v2613
    %v2636 = vunpack.c.l.b16 %v2614
    %v2637 = vunpack.c.l.b16 %v2615
    %v2638 = vpack.c.b16 %v2631, %v2630
    %v2639 = vpack.c.b16 %v2633, %v2632
    %v2640 = vpack.c.b16 %v2635, %v2634
    %v2641 = vpack.c.b16 %v2637, %v2636
    %v2647 = vsel %vm932, %v2616, 0
    %2649 = vmatprep.subr.bf16.mxu0 0
    %2650 = vmatpush1.bf16.msra.mxu0 %v2638
    %2651 = vmatprep.subr.bf16.mxu0 0
    %2652 = vmatpush1.bf16.msra.mxu0 %v2639
    %2653 = vmatprep.subr.bf16.mxu0 0
    %2654 = vmatpush1.bf16.msra.mxu0 %v2640
    %2655 = vmatprep.subr.bf16.mxu0 0
    %2656 = vmatpush1.bf16.msra.mxu0 %v2641
    %2657 = vmatprep.subr.bf16.mxu0 0
    %2658 = vmatpush1.bf16.msra.mxu0 0
    %2659 = vmatprep.subr.bf16.mxu0 0
    %2660 = vmatpush1.bf16.msra.mxu0 0
    %2661 = vmatprep.subr.bf16.mxu0 0
    %2662 = vmatpush1.bf16.msra.mxu0 0
    %2663 = vmatprep.subr.bf16.mxu0 0
    %2664 = vmatpush1.bf16.msra.mxu0 0
    %2665 = vmatprep.subr.bf16.mxu0 0
    %2666 = vmatpush1.bf16.msra.mxu0 0
    %2667 = vmatprep.subr.bf16.mxu0 0
    %2668 = vmatpush1.bf16.msra.mxu0 0
    %2669 = vmatprep.subr.bf16.mxu0 0
    %2670 = vmatpush1.bf16.msra.mxu0 0
    %2671 = vmatprep.subr.bf16.mxu0 0
    %2672 = vmatpush1.bf16.msra.mxu0 0
    %2673 = vmatprep.subr.bf16.mxu0 0
    %2674 = vmatpush1.bf16.msra.mxu0 0
    %2675 = vmatprep.subr.bf16.mxu0 0
    %2676 = vmatpush1.bf16.msra.mxu0 0
    %2677 = vmatprep.subr.bf16.mxu0 0
    %2678 = vmatpush1.bf16.msra.mxu0 0
    %2679 = vmatprep.subr.bf16.mxu0 0
    %2680 = vmatpush1.bf16.msra.mxu0 0
    %2681 = vmatprep.mubr.bf16.mxu0 0
    %2682 = vmatmul.mubr.bf16.gmra.mrb[0].mxu0 %v2647
    %v2683 = vpop.f32.mrb[0].mxu0
    %v2684 = vadd.f32 %v2621, %v2683
    %v2685 = vpop.f32.mrb[0].mxu0
    %v2686 = vpop.f32.mrb[0].mxu0
    %v2687 = vadd.f32 %v2621, %v2686
    %v2688 = vpop.f32.mrb[0].mxu0
    %2689 = vdwg.mxu0
    %v2690 = vadd.f32 %v2538, %v2684
    %v2691 = vadd.f32 %v2539, %v2687
    %v2692 = vld [vmem:[%s43] sm:$0x1]
    %v2693 = vld [vmem:[%s45] sm:$0x1]
    %v2694 = vsel %vm1265, %v2690, 0.0
    %2695 = vadd.xlane.f32.xlu0 %v2694
    %v2696 = vpop.xlane.xlu0 %2695
    %v2697 = vsel %vm1265, %v2691, 0.0
    %2698 = vadd.xlane.f32.xlu0 %v2697
    %v2699 = vpop.xlane.xlu0 %2698
    %v2700 = vmul.f32 %v2696, %v2493
    %v2701 = vmul.f32 %v2699, %v2493
    %v2702 = vsub.f32 %v2690, %v2700
    %v2703 = vsub.f32 %v2691, %v2701
    %v2704 = vmul.f32 %v2702, %v2702
    %v2705 = vmul.f32 %v2703, %v2703
    %v2706 = vsel %vm1265, %v2704, 0.0
    %2707 = vadd.xlane.f32.xlu0 %v2706
    %v2708 = vpop.xlane.xlu0 %2707
    %v2709 = vsel %vm1265, %v2705, 0.0
    %2710 = vadd.xlane.f32.xlu0 %v2709
    %v2711 = vpop.xlane.xlu0 %2710
    %v2712 = vmul.f32 %v2708, 0.032258064
    %v2713 = vmul.f32 %v2711, 0.032258064
    %v2714 = vlaneseq
    %v2715 = vshrl.u32 %v2714, 7
    %v2716 = vsub.s32 0, %v2715
    %v2717 = vrot.slane %v2692, %v2716
    %v2718 = vmul.f32 %v2717, %v2702
    %v2719 = vmul.f32 %v2717, %v2703
    %v2720 = vrsqrt.pop %v2712
    %v2721 = vmul.f32 %v2712, %v2720
    %vm2722 = vcmp.eq.f32.partialorder %v2712, inf
    %v2723 = vsel %vm2722, %v2712, %v2721
    %vm2724 = vcmp.eq.f32.partialorder %v2712, 0.0
    %v2725 = vand.u32 %v2712, 2147483648
    %v2726 = vsel %vm2724, %v2725, %v2723
    %v2727 = vrsqrt.pop %v2713
    %v2728 = vmul.f32 %v2713, %v2727
    %vm2729 = vcmp.eq.f32.partialorder %v2713, inf
    %v2730 = vsel %vm2729, %v2713, %v2728
    %vm2731 = vcmp.eq.f32.partialorder %v2713, 0.0
    %v2732 = vand.u32 %v2713, 2147483648
    %v2733 = vsel %vm2731, %v2732, %v2730
    %v2734 = vadd.f32 %v2726, 1e-06
    %v2735 = vadd.f32 %v2733, 1e-06
    %v2736 = vrcp.pop %v2734
    %v2737 = vmul.f32 %v2718, %v2736
    %v2738 = vrcp.pop %v2735
    %v2739 = vmul.f32 %v2719, %v2738
    %v2740 = vlaneseq
    %v2741 = vshrl.u32 %v2740, 7
    %v2742 = vsub.s32 0, %v2741
    %v2743 = vrot.slane %v2693, %v2742
    %v2744 = vadd.f32 %v2737, %v2743
    %v2745 = vadd.f32 %v2739, %v2743
    %s2746 = scalar_lea.vmem %s23, 16
    %v2747 = vld [vmem:[%s2746] sm:$0xf]
    %v2748 = vld [vmem:[%s2746 + $0x4] sm:$0xf]
    %v2749 = vld [vmem:[%s2746 + $0x8] sm:$0xf]
    %v2750 = vld [vmem:[%s2746 + $0xc] sm:$0xf]
    %v2751 = vpack.c.bf16 %v2745, %v2744
    %v2752 = vld [vmem:[%s25 + $0x1] sm:$0x1]
    %v2753 = vlaneseq
    %v2754 = vshrl.u32 %v2753, 7
    %v2755 = vsub.s32 0, %v2754
    %v2756 = vrot.slane %v2752, %v2755
    %v2761 = vunpack.c.l.b16 %v2747
    %v2762 = vunpack.c.l.b16 %v2748
    %v2763 = vunpack.c.l.b16 %v2749
    %v2764 = vunpack.c.l.b16 %v2750
    %v2765 = vpack.c.b16 %v2762, %v2761
    %v2766 = vpack.c.b16 %v2764, %v2763
    %v2770 = vsel %vm1265, %v2751, 0
    %2772 = vmatprep.subr.bf16.mxu0 0
    %2773 = vmatpush1.bf16.msra.mxu0 %v2765
    %2774 = vmatprep.subr.bf16.mxu0 0
    %2775 = vmatpush1.bf16.msra.mxu0 %v2766
    %2776 = vmatprep.subr.bf16.mxu0 0
    %2777 = vmatpush1.bf16.msra.mxu0 0
    %2778 = vmatprep.subr.bf16.mxu0 0
    %2779 = vmatpush1.bf16.msra.mxu0 0
    %2780 = vmatprep.subr.bf16.mxu0 0
    %2781 = vmatpush1.bf16.msra.mxu0 0
    %2782 = vmatprep.subr.bf16.mxu0 0
    %2783 = vmatpush1.bf16.msra.mxu0 0
    %2784 = vmatprep.subr.bf16.mxu0 0
    %2785 = vmatpush1.bf16.msra.mxu0 0
    %2786 = vmatprep.subr.bf16.mxu0 0
    %2787 = vmatpush1.bf16.msra.mxu0 0
    %2788 = vmatprep.subr.bf16.mxu0 0
    %2789 = vmatpush1.bf16.msra.mxu0 0
    %2790 = vmatprep.subr.bf16.mxu0 0
    %2791 = vmatpush1.bf16.msra.mxu0 0
    %2792 = vmatprep.subr.bf16.mxu0 0
    %2793 = vmatpush1.bf16.msra.mxu0 0
    %2794 = vmatprep.subr.bf16.mxu0 0
    %2795 = vmatpush1.bf16.msra.mxu0 0
    %2796 = vmatprep.subr.bf16.mxu0 0
    %2797 = vmatpush1.bf16.msra.mxu0 0
    %2798 = vmatprep.subr.bf16.mxu0 0
    %2799 = vmatpush1.bf16.msra.mxu0 0
    %2800 = vmatprep.subr.bf16.mxu0 0
    %2801 = vmatpush1.bf16.msra.mxu0 0
    %2802 = vmatprep.subr.bf16.mxu0 0
    %2803 = vmatpush1.bf16.msra.mxu0 0
    %2804 = vmatprep.mubr.bf16.mxu0 0
    %2805 = vmatmul.mubr.bf16.gmra.mrb[0].mxu0 %v2770
    %v2806 = vpop.f32.mrb[0].mxu0
    %v2807 = vadd.f32 %v2756, %v2806
    %v2808 = vpop.f32.mrb[0].mxu0
    %v2809 = vpop.f32.mrb[0].mxu0
    %v2810 = vadd.f32 %v2756, %v2809
    %v2811 = vpop.f32.mrb[0].mxu0
    %2812 = vdwg.mxu0
    %v2813 = vmul.f32 %v2807, 0.35355338
    %v2814 = vmul.f32 %v2810, 0.35355338
    %v2815 = vpack.c.bf16 %v2813, %v2813
    %v2816 = vpack.c.bf16 %v2814, %v2814
    %v2817 = vpack.c.bf16 %v2807, %v2807
    %v2818 = vpack.c.bf16 %v2810, %v2810
    %2820 = vrot.lane.b32.xlu0 %v2817, 96
    %v2821 = vpop.permute.xlu0 %2820
    %v2823 = vsel %vm1496, %v2815, 0
    %v2826 = vsel %vm1496, %v2821, 0
    %2828 = vmatprep.subr.bf16.mxu0 0
    %2829 = vmatpush1.bf16.xpose.msra.mxu0 %v2826
    %2830 = vmatprep.subr.bf16.mxu0 0
    %2831 = vmatpush1.bf16.xpose.msra.mxu0 0
    %2832 = vmatprep.subr.bf16.mxu0 0
    %2833 = vmatpush1.bf16.xpose.msra.mxu0 0
    %2834 = vmatprep.subr.bf16.mxu0 0
    %2835 = vmatpush1.bf16.xpose.msra.mxu0 0
    %2836 = vmatprep.subr.bf16.mxu0 0
    %2837 = vmatpush1.bf16.xpose.msra.mxu0 0
    %2838 = vmatprep.subr.bf16.mxu0 0
    %2839 = vmatpush1.bf16.xpose.msra.mxu0 0
    %2840 = vmatprep.subr.bf16.mxu0 0
    %2841 = vmatpush1.bf16.xpose.msra.mxu0 0
    %2842 = vmatprep.subr.bf16.mxu0 0
    %2843 = vmatpush1.bf16.xpose.msra.mxu0 0
    %2844 = vmatprep.subr.bf16.mxu0 0
    %2845 = vmatpush1.bf16.xpose.msra.mxu0 0
    %2846 = vmatprep.subr.bf16.mxu0 0
    %2847 = vmatpush1.bf16.xpose.msra.mxu0 0
    %2848 = vmatprep.subr.bf16.mxu0 0
    %2849 = vmatpush1.bf16.xpose.msra.mxu0 0
    %2850 = vmatprep.subr.bf16.mxu0 0
    %2851 = vmatpush1.bf16.xpose.msra.mxu0 0
    %2852 = vmatprep.subr.bf16.mxu0 0
    %2853 = vmatpush1.bf16.xpose.msra.mxu0 0
    %2854 = vmatprep.subr.bf16.mxu0 0
    %2855 = vmatpush1.bf16.xpose.msra.mxu0 0
    %2856 = vmatprep.subr.bf16.mxu0 0
    %2857 = vmatpush1.bf16.xpose.msra.mxu0 0
    %2858 = vmatprep.subr.bf16.mxu0 0
    %2859 = vmatpush1.bf16.xpose.msra.mxu0 0
    %2860 = vmatprep.mubr.bf16.mxu0 0
    %2861 = vmatmul.mubr.bf16.gmra.mrb[0].mxu0 %v2823
    %v2862 = vpop.f32.mrb[0].mxu0
    %v2863 = vadd.f32 0.0, %v2862
    %v2864 = vpop.f32.mrb[0].mxu0
    %v2865 = vpop.f32.mrb[0].mxu0
    %v2866 = vpop.f32.mrb[0].mxu0
    %2867 = vdwg.mxu0
    %2869 = vrot.lane.b32.xlu0 %v2818, 96
    %v2870 = vpop.permute.xlu0 %2869
    %v2872 = vsel %vm1496, %v2816, 0
    %v2875 = vsel %vm1496, %v2870, 0
    %2877 = vmatprep.subr.bf16.mxu0 0
    %2878 = vmatpush1.bf16.xpose.msra.mxu0 %v2875
    %2879 = vmatprep.subr.bf16.mxu0 0
    %2880 = vmatpush1.bf16.xpose.msra.mxu0 0
    %2881 = vmatprep.subr.bf16.mxu0 0
    %2882 = vmatpush1.bf16.xpose.msra.mxu0 0
    %2883 = vmatprep.subr.bf16.mxu0 0
    %2884 = vmatpush1.bf16.xpose.msra.mxu0 0
    %2885 = vmatprep.subr.bf16.mxu0 0
    %2886 = vmatpush1.bf16.xpose.msra.mxu0 0
    %2887 = vmatprep.subr.bf16.mxu0 0
    %2888 = vmatpush1.bf16.xpose.msra.mxu0 0
    %2889 = vmatprep.subr.bf16.mxu0 0
    %2890 = vmatpush1.bf16.xpose.msra.mxu0 0
    %2891 = vmatprep.subr.bf16.mxu0 0
    %2892 = vmatpush1.bf16.xpose.msra.mxu0 0
    %2893 = vmatprep.subr.bf16.mxu0 0
    %2894 = vmatpush1.bf16.xpose.msra.mxu0 0
    %2895 = vmatprep.subr.bf16.mxu0 0
    %2896 = vmatpush1.bf16.xpose.msra.mxu0 0
    %2897 = vmatprep.subr.bf16.mxu0 0
    %2898 = vmatpush1.bf16.xpose.msra.mxu0 0
    %2899 = vmatprep.subr.bf16.mxu0 0
    %2900 = vmatpush1.bf16.xpose.msra.mxu0 0
    %2901 = vmatprep.subr.bf16.mxu0 0
    %2902 = vmatpush1.bf16.xpose.msra.mxu0 0
    %2903 = vmatprep.subr.bf16.mxu0 0
    %2904 = vmatpush1.bf16.xpose.msra.mxu0 0
    %2905 = vmatprep.subr.bf16.mxu0 0
    %2906 = vmatpush1.bf16.xpose.msra.mxu0 0
    %2907 = vmatprep.subr.bf16.mxu0 0
    %2908 = vmatpush1.bf16.xpose.msra.mxu0 0
    %2909 = vmatprep.mubr.bf16.mxu0 0
    %2910 = vmatmul.mubr.bf16.gmra.mrb[0].mxu0 %v2872
    %v2911 = vpop.f32.mrb[0].mxu0
    %v2912 = vadd.f32 0.0, %v2911
    %v2913 = vpop.f32.mrb[0].mxu0
    %v2914 = vpop.f32.mrb[0].mxu0
    %v2915 = vpop.f32.mrb[0].mxu0
    %2916 = vdwg.mxu0
    %v2917 = vsel %vm1592, -1e+09, %v2863
    %v2918 = vsel %vm1593, -1e+09, %v2912
    %v2919 = vsel %vm1496, %v2917, -inf
    %2920 = vmax.xlane.f32.xlu0 %v2919
    %v2921 = vpop.xlane.xlu0 %2920
    %v2922 = vsel %vm1496, %v2918, -inf
    %2923 = vmax.xlane.f32.xlu0 %v2922
    %v2924 = vpop.xlane.xlu0 %2923
    %v2925 = vsub.f32 %v2917, %v2921
    %v2926 = vsub.f32 %v2918, %v2924
    %v2927 = vmul.f32 %v2925, 1.442695
    %v2928 = vpow.pop %v2927
    %v2929 = vmul.f32 %v2926, 1.442695
    %v2930 = vpow.pop %v2929
    %v2931 = vsel %vm1496, %v2928, 0.0
    %2932 = vadd.xlane.f32.xlu0 %v2931
    %v2933 = vpop.xlane.xlu0 %2932
    %v2934 = vsel %vm1496, %v2930, 0.0
    %2935 = vadd.xlane.f32.xlu0 %v2934
    %v2936 = vpop.xlane.xlu0 %2935
    %v2937 = vrcp.pop %v2933
    %v2938 = vrcp.pop %v2936
    %v2939 = vmul.f32 %v2928, %v2937
    %v2940 = vmul.f32 %v2930, %v2938
    %v2941 = vpack.c.bf16 %v2939, %v2939
    %v2942 = vpack.c.bf16 %v2940, %v2940
    %2943 = vrot.lane.b32.xlu0 %v2817, 64
    %v2944 = vpop.permute.xlu0 %2943
    %v2946 = vsel %vm1496, %v2941, 0
    %v2949 = vsel %vm1625, %v2944, 0
    %2951 = vmatprep.subr.bf16.mxu0 0
    %2952 = vmatpush1.bf16.msra.mxu0 %v2949
    %2953 = vmatprep.subr.bf16.mxu0 0
    %2954 = vmatpush1.bf16.msra.mxu0 0
    %2955 = vmatprep.subr.bf16.mxu0 0
    %2956 = vmatpush1.bf16.msra.mxu0 0
    %2957 = vmatprep.subr.bf16.mxu0 0
    %2958 = vmatpush1.bf16.msra.mxu0 0
    %2959 = vmatprep.subr.bf16.mxu0 0
    %2960 = vmatpush1.bf16.msra.mxu0 0
    %2961 = vmatprep.subr.bf16.mxu0 0
    %2962 = vmatpush1.bf16.msra.mxu0 0
    %2963 = vmatprep.subr.bf16.mxu0 0
    %2964 = vmatpush1.bf16.msra.mxu0 0
    %2965 = vmatprep.subr.bf16.mxu0 0
    %2966 = vmatpush1.bf16.msra.mxu0 0
    %2967 = vmatprep.subr.bf16.mxu0 0
    %2968 = vmatpush1.bf16.msra.mxu0 0
    %2969 = vmatprep.subr.bf16.mxu0 0
    %2970 = vmatpush1.bf16.msra.mxu0 0
    %2971 = vmatprep.subr.bf16.mxu0 0
    %2972 = vmatpush1.bf16.msra.mxu0 0
    %2973 = vmatprep.subr.bf16.mxu0 0
    %2974 = vmatpush1.bf16.msra.mxu0 0
    %2975 = vmatprep.subr.bf16.mxu0 0
    %2976 = vmatpush1.bf16.msra.mxu0 0
    %2977 = vmatprep.subr.bf16.mxu0 0
    %2978 = vmatpush1.bf16.msra.mxu0 0
    %2979 = vmatprep.subr.bf16.mxu0 0
    %2980 = vmatpush1.bf16.msra.mxu0 0
    %2981 = vmatprep.subr.bf16.mxu0 0
    %2982 = vmatpush1.bf16.msra.mxu0 0
    %2983 = vmatprep.mubr.bf16.mxu0 0
    %2984 = vmatmul.mubr.bf16.gmra.mrb[0].mxu0 %v2946
    %v2985 = vpop.f32.mrb[0].mxu0
    %v2986 = vadd.f32 0.0, %v2985
    %v2987 = vpop.f32.mrb[0].mxu0
    %v2988 = vpop.f32.mrb[0].mxu0
    %v2989 = vpop.f32.mrb[0].mxu0
    %2990 = vdwg.mxu0
    %2991 = vrot.lane.b32.xlu0 %v2818, 64
    %v2992 = vpop.permute.xlu0 %2991
    %v2994 = vsel %vm1496, %v2942, 0
    %v2997 = vsel %vm1625, %v2992, 0
    %2999 = vmatprep.subr.bf16.mxu0 0
    %3000 = vmatpush1.bf16.msra.mxu0 %v2997
    %3001 = vmatprep.subr.bf16.mxu0 0
    %3002 = vmatpush1.bf16.msra.mxu0 0
    %3003 = vmatprep.subr.bf16.mxu0 0
    %3004 = vmatpush1.bf16.msra.mxu0 0
    %3005 = vmatprep.subr.bf16.mxu0 0
    %3006 = vmatpush1.bf16.msra.mxu0 0
    %3007 = vmatprep.subr.bf16.mxu0 0
    %3008 = vmatpush1.bf16.msra.mxu0 0
    %3009 = vmatprep.subr.bf16.mxu0 0
    %3010 = vmatpush1.bf16.msra.mxu0 0
    %3011 = vmatprep.subr.bf16.mxu0 0
    %3012 = vmatpush1.bf16.msra.mxu0 0
    %3013 = vmatprep.subr.bf16.mxu0 0
    %3014 = vmatpush1.bf16.msra.mxu0 0
    %3015 = vmatprep.subr.bf16.mxu0 0
    %3016 = vmatpush1.bf16.msra.mxu0 0
    %3017 = vmatprep.subr.bf16.mxu0 0
    %3018 = vmatpush1.bf16.msra.mxu0 0
    %3019 = vmatprep.subr.bf16.mxu0 0
    %3020 = vmatpush1.bf16.msra.mxu0 0
    %3021 = vmatprep.subr.bf16.mxu0 0
    %3022 = vmatpush1.bf16.msra.mxu0 0
    %3023 = vmatprep.subr.bf16.mxu0 0
    %3024 = vmatpush1.bf16.msra.mxu0 0
    %3025 = vmatprep.subr.bf16.mxu0 0
    %3026 = vmatpush1.bf16.msra.mxu0 0
    %3027 = vmatprep.subr.bf16.mxu0 0
    %3028 = vmatpush1.bf16.msra.mxu0 0
    %3029 = vmatprep.subr.bf16.mxu0 0
    %3030 = vmatpush1.bf16.msra.mxu0 0
    %3031 = vmatprep.mubr.bf16.mxu0 0
    %3032 = vmatmul.mubr.bf16.gmra.mrb[0].mxu0 %v2994
    %v3033 = vpop.f32.mrb[0].mxu0
    %v3034 = vadd.f32 0.0, %v3033
    %v3035 = vpop.f32.mrb[0].mxu0
    %v3036 = vpop.f32.mrb[0].mxu0
    %v3037 = vpop.f32.mrb[0].mxu0
    %3038 = vdwg.mxu0
    %3040 = vrot.lane.b32.xlu0 %v2815, 120
    %v3041 = vpop.permute.xlu0 %3040
    %3042 = vrot.lane.b32.xlu0 %v2817, 88
    %v3043 = vpop.permute.xlu0 %3042
    %v3045 = vsel %vm1496, %v3041, 0
    %v3048 = vsel %vm1496, %v3043, 0
    %3050 = vmatprep.subr.bf16.mxu0 0
    %3051 = vmatpush1.bf16.xpose.msra.mxu0 %v3048
    %3052 = vmatprep.subr.bf16.mxu0 0
    %3053 = vmatpush1.bf16.xpose.msra.mxu0 0
    %3054 = vmatprep.subr.bf16.mxu0 0
    %3055 = vmatpush1.bf16.xpose.msra.mxu0 0
    %3056 = vmatprep.subr.bf16.mxu0 0
    %3057 = vmatpush1.bf16.xpose.msra.mxu0 0
    %3058 = vmatprep.subr.bf16.mxu0 0
    %3059 = vmatpush1.bf16.xpose.msra.mxu0 0
    %3060 = vmatprep.subr.bf16.mxu0 0
    %3061 = vmatpush1.bf16.xpose.msra.mxu0 0
    %3062 = vmatprep.subr.bf16.mxu0 0
    %3063 = vmatpush1.bf16.xpose.msra.mxu0 0
    %3064 = vmatprep.subr.bf16.mxu0 0
    %3065 = vmatpush1.bf16.xpose.msra.mxu0 0
    %3066 = vmatprep.subr.bf16.mxu0 0
    %3067 = vmatpush1.bf16.xpose.msra.mxu0 0
    %3068 = vmatprep.subr.bf16.mxu0 0
    %3069 = vmatpush1.bf16.xpose.msra.mxu0 0
    %3070 = vmatprep.subr.bf16.mxu0 0
    %3071 = vmatpush1.bf16.xpose.msra.mxu0 0
    %3072 = vmatprep.subr.bf16.mxu0 0
    %3073 = vmatpush1.bf16.xpose.msra.mxu0 0
    %3074 = vmatprep.subr.bf16.mxu0 0
    %3075 = vmatpush1.bf16.xpose.msra.mxu0 0
    %3076 = vmatprep.subr.bf16.mxu0 0
    %3077 = vmatpush1.bf16.xpose.msra.mxu0 0
    %3078 = vmatprep.subr.bf16.mxu0 0
    %3079 = vmatpush1.bf16.xpose.msra.mxu0 0
    %3080 = vmatprep.subr.bf16.mxu0 0
    %3081 = vmatpush1.bf16.xpose.msra.mxu0 0
    %3082 = vmatprep.mubr.bf16.mxu0 0
    %3083 = vmatmul.mubr.bf16.gmra.mrb[0].mxu0 %v3045
    %v3084 = vpop.f32.mrb[0].mxu0
    %v3085 = vadd.f32 0.0, %v3084
    %v3086 = vpop.f32.mrb[0].mxu0
    %v3087 = vpop.f32.mrb[0].mxu0
    %v3088 = vpop.f32.mrb[0].mxu0
    %3089 = vdwg.mxu0
    %3091 = vrot.lane.b32.xlu0 %v2816, 120
    %v3092 = vpop.permute.xlu0 %3091
    %3093 = vrot.lane.b32.xlu0 %v2818, 88
    %v3094 = vpop.permute.xlu0 %3093
    %v3096 = vsel %vm1496, %v3092, 0
    %v3099 = vsel %vm1496, %v3094, 0
    %3101 = vmatprep.subr.bf16.mxu0 0
    %3102 = vmatpush1.bf16.xpose.msra.mxu0 %v3099
    %3103 = vmatprep.subr.bf16.mxu0 0
    %3104 = vmatpush1.bf16.xpose.msra.mxu0 0
    %3105 = vmatprep.subr.bf16.mxu0 0
    %3106 = vmatpush1.bf16.xpose.msra.mxu0 0
    %3107 = vmatprep.subr.bf16.mxu0 0
    %3108 = vmatpush1.bf16.xpose.msra.mxu0 0
    %3109 = vmatprep.subr.bf16.mxu0 0
    %3110 = vmatpush1.bf16.xpose.msra.mxu0 0
    %3111 = vmatprep.subr.bf16.mxu0 0
    %3112 = vmatpush1.bf16.xpose.msra.mxu0 0
    %3113 = vmatprep.subr.bf16.mxu0 0
    %3114 = vmatpush1.bf16.xpose.msra.mxu0 0
    %3115 = vmatprep.subr.bf16.mxu0 0
    %3116 = vmatpush1.bf16.xpose.msra.mxu0 0
    %3117 = vmatprep.subr.bf16.mxu0 0
    %3118 = vmatpush1.bf16.xpose.msra.mxu0 0
    %3119 = vmatprep.subr.bf16.mxu0 0
    %3120 = vmatpush1.bf16.xpose.msra.mxu0 0
    %3121 = vmatprep.subr.bf16.mxu0 0
    %3122 = vmatpush1.bf16.xpose.msra.mxu0 0
    %3123 = vmatprep.subr.bf16.mxu0 0
    %3124 = vmatpush1.bf16.xpose.msra.mxu0 0
    %3125 = vmatprep.subr.bf16.mxu0 0
    %3126 = vmatpush1.bf16.xpose.msra.mxu0 0
    %3127 = vmatprep.subr.bf16.mxu0 0
    %3128 = vmatpush1.bf16.xpose.msra.mxu0 0
    %3129 = vmatprep.subr.bf16.mxu0 0
    %3130 = vmatpush1.bf16.xpose.msra.mxu0 0
    %3131 = vmatprep.subr.bf16.mxu0 0
    %3132 = vmatpush1.bf16.xpose.msra.mxu0 0
    %3133 = vmatprep.mubr.bf16.mxu0 0
    %3134 = vmatmul.mubr.bf16.gmra.mrb[0].mxu0 %v3096
    %v3135 = vpop.f32.mrb[0].mxu0
    %v3136 = vadd.f32 0.0, %v3135
    %v3137 = vpop.f32.mrb[0].mxu0
    %v3138 = vpop.f32.mrb[0].mxu0
    %v3139 = vpop.f32.mrb[0].mxu0
    %3140 = vdwg.mxu0
    %v3141 = vsel %vm1592, -1e+09, %v3085
    %v3142 = vsel %vm1593, -1e+09, %v3136
    %v3143 = vsel %vm1496, %v3141, -inf
    %3144 = vmax.xlane.f32.xlu0 %v3143
    %v3145 = vpop.xlane.xlu0 %3144
    %v3146 = vsel %vm1496, %v3142, -inf
    %3147 = vmax.xlane.f32.xlu0 %v3146
    %v3148 = vpop.xlane.xlu0 %3147
    %v3149 = vsub.f32 %v3141, %v3145
    %v3150 = vsub.f32 %v3142, %v3148
    %v3151 = vmul.f32 %v3149, 1.442695
    %v3152 = vpow.pop %v3151
    %v3153 = vmul.f32 %v3150, 1.442695
    %v3154 = vpow.pop %v3153
    %v3155 = vsel %vm1496, %v3152, 0.0
    %3156 = vadd.xlane.f32.xlu0 %v3155
    %v3157 = vpop.xlane.xlu0 %3156
    %v3158 = vsel %vm1496, %v3154, 0.0
    %3159 = vadd.xlane.f32.xlu0 %v3158
    %v3160 = vpop.xlane.xlu0 %3159
    %v3161 = vrcp.pop %v3157
    %v3162 = vrcp.pop %v3160
    %v3163 = vmul.f32 %v3152, %v3161
    %v3164 = vmul.f32 %v3154, %v3162
    %v3165 = vpack.c.bf16 %v3163, %v3163
    %v3166 = vpack.c.bf16 %v3164, %v3164
    %3167 = vrot.lane.b32.xlu0 %v2817, 56
    %v3168 = vpop.permute.xlu0 %3167
    %v3170 = vsel %vm1496, %v3165, 0
    %v3173 = vsel %vm1625, %v3168, 0
    %3175 = vmatprep.subr.bf16.mxu0 0
    %3176 = vmatpush1.bf16.msra.mxu0 %v3173
    %3177 = vmatprep.subr.bf16.mxu0 0
    %3178 = vmatpush1.bf16.msra.mxu0 0
    %3179 = vmatprep.subr.bf16.mxu0 0
    %3180 = vmatpush1.bf16.msra.mxu0 0
    %3181 = vmatprep.subr.bf16.mxu0 0
    %3182 = vmatpush1.bf16.msra.mxu0 0
    %3183 = vmatprep.subr.bf16.mxu0 0
    %3184 = vmatpush1.bf16.msra.mxu0 0
    %3185 = vmatprep.subr.bf16.mxu0 0
    %3186 = vmatpush1.bf16.msra.mxu0 0
    %3187 = vmatprep.subr.bf16.mxu0 0
    %3188 = vmatpush1.bf16.msra.mxu0 0
    %3189 = vmatprep.subr.bf16.mxu0 0
    %3190 = vmatpush1.bf16.msra.mxu0 0
    %3191 = vmatprep.subr.bf16.mxu0 0
    %3192 = vmatpush1.bf16.msra.mxu0 0
    %3193 = vmatprep.subr.bf16.mxu0 0
    %3194 = vmatpush1.bf16.msra.mxu0 0
    %3195 = vmatprep.subr.bf16.mxu0 0
    %3196 = vmatpush1.bf16.msra.mxu0 0
    %3197 = vmatprep.subr.bf16.mxu0 0
    %3198 = vmatpush1.bf16.msra.mxu0 0
    %3199 = vmatprep.subr.bf16.mxu0 0
    %3200 = vmatpush1.bf16.msra.mxu0 0
    %3201 = vmatprep.subr.bf16.mxu0 0
    %3202 = vmatpush1.bf16.msra.mxu0 0
    %3203 = vmatprep.subr.bf16.mxu0 0
    %3204 = vmatpush1.bf16.msra.mxu0 0
    %3205 = vmatprep.subr.bf16.mxu0 0
    %3206 = vmatpush1.bf16.msra.mxu0 0
    %3207 = vmatprep.mubr.bf16.mxu0 0
    %3208 = vmatmul.mubr.bf16.gmra.mrb[0].mxu0 %v3170
    %v3209 = vpop.f32.mrb[0].mxu0
    %v3210 = vadd.f32 0.0, %v3209
    %v3211 = vpop.f32.mrb[0].mxu0
    %v3212 = vpop.f32.mrb[0].mxu0
    %v3213 = vpop.f32.mrb[0].mxu0
    %3214 = vdwg.mxu0
    %3215 = vrot.lane.b32.xlu0 %v2818, 56
    %v3216 = vpop.permute.xlu0 %3215
    %v3218 = vsel %vm1496, %v3166, 0
    %v3221 = vsel %vm1625, %v3216, 0
    %3223 = vmatprep.subr.bf16.mxu0 0
    %3224 = vmatpush1.bf16.msra.mxu0 %v3221
    %3225 = vmatprep.subr.bf16.mxu0 0
    %3226 = vmatpush1.bf16.msra.mxu0 0
    %3227 = vmatprep.subr.bf16.mxu0 0
    %3228 = vmatpush1.bf16.msra.mxu0 0
    %3229 = vmatprep.subr.bf16.mxu0 0
    %3230 = vmatpush1.bf16.msra.mxu0 0
    %3231 = vmatprep.subr.bf16.mxu0 0
    %3232 = vmatpush1.bf16.msra.mxu0 0
    %3233 = vmatprep.subr.bf16.mxu0 0
    %3234 = vmatpush1.bf16.msra.mxu0 0
    %3235 = vmatprep.subr.bf16.mxu0 0
    %3236 = vmatpush1.bf16.msra.mxu0 0
    %3237 = vmatprep.subr.bf16.mxu0 0
    %3238 = vmatpush1.bf16.msra.mxu0 0
    %3239 = vmatprep.subr.bf16.mxu0 0
    %3240 = vmatpush1.bf16.msra.mxu0 0
    %3241 = vmatprep.subr.bf16.mxu0 0
    %3242 = vmatpush1.bf16.msra.mxu0 0
    %3243 = vmatprep.subr.bf16.mxu0 0
    %3244 = vmatpush1.bf16.msra.mxu0 0
    %3245 = vmatprep.subr.bf16.mxu0 0
    %3246 = vmatpush1.bf16.msra.mxu0 0
    %3247 = vmatprep.subr.bf16.mxu0 0
    %3248 = vmatpush1.bf16.msra.mxu0 0
    %3249 = vmatprep.subr.bf16.mxu0 0
    %3250 = vmatpush1.bf16.msra.mxu0 0
    %3251 = vmatprep.subr.bf16.mxu0 0
    %3252 = vmatpush1.bf16.msra.mxu0 0
    %3253 = vmatprep.subr.bf16.mxu0 0
    %3254 = vmatpush1.bf16.msra.mxu0 0
    %3255 = vmatprep.mubr.bf16.mxu0 0
    %3256 = vmatmul.mubr.bf16.gmra.mrb[0].mxu0 %v3218
    %v3257 = vpop.f32.mrb[0].mxu0
    %v3258 = vadd.f32 0.0, %v3257
    %v3259 = vpop.f32.mrb[0].mxu0
    %v3260 = vpop.f32.mrb[0].mxu0
    %v3261 = vpop.f32.mrb[0].mxu0
    %3262 = vdwg.mxu0
    %3263 = vrot.lane.b32.xlu0 %v2815, 112
    %v3264 = vpop.permute.xlu0 %3263
    %3265 = vrot.lane.b32.xlu0 %v2817, 80
    %v3266 = vpop.permute.xlu0 %3265
    %v3268 = vsel %vm1496, %v3264, 0
    %v3271 = vsel %vm1496, %v3266, 0
    %3273 = vmatprep.subr.bf16.mxu0 0
    %3274 = vmatpush1.bf16.xpose.msra.mxu0 %v3271
    %3275 = vmatprep.subr.bf16.mxu0 0
    %3276 = vmatpush1.bf16.xpose.msra.mxu0 0
    %3277 = vmatprep.subr.bf16.mxu0 0
    %3278 = vmatpush1.bf16.xpose.msra.mxu0 0
    %3279 = vmatprep.subr.bf16.mxu0 0
    %3280 = vmatpush1.bf16.xpose.msra.mxu0 0
    %3281 = vmatprep.subr.bf16.mxu0 0
    %3282 = vmatpush1.bf16.xpose.msra.mxu0 0
    %3283 = vmatprep.subr.bf16.mxu0 0
    %3284 = vmatpush1.bf16.xpose.msra.mxu0 0
    %3285 = vmatprep.subr.bf16.mxu0 0
    %3286 = vmatpush1.bf16.xpose.msra.mxu0 0
    %3287 = vmatprep.subr.bf16.mxu0 0
    %3288 = vmatpush1.bf16.xpose.msra.mxu0 0
    %3289 = vmatprep.subr.bf16.mxu0 0
    %3290 = vmatpush1.bf16.xpose.msra.mxu0 0
    %3291 = vmatprep.subr.bf16.mxu0 0
    %3292 = vmatpush1.bf16.xpose.msra.mxu0 0
    %3293 = vmatprep.subr.bf16.mxu0 0
    %3294 = vmatpush1.bf16.xpose.msra.mxu0 0
    %3295 = vmatprep.subr.bf16.mxu0 0
    %3296 = vmatpush1.bf16.xpose.msra.mxu0 0
    %3297 = vmatprep.subr.bf16.mxu0 0
    %3298 = vmatpush1.bf16.xpose.msra.mxu0 0
    %3299 = vmatprep.subr.bf16.mxu0 0
    %3300 = vmatpush1.bf16.xpose.msra.mxu0 0
    %3301 = vmatprep.subr.bf16.mxu0 0
    %3302 = vmatpush1.bf16.xpose.msra.mxu0 0
    %3303 = vmatprep.subr.bf16.mxu0 0
    %3304 = vmatpush1.bf16.xpose.msra.mxu0 0
    %3305 = vmatprep.mubr.bf16.mxu0 0
    %3306 = vmatmul.mubr.bf16.gmra.mrb[0].mxu0 %v3268
    %v3307 = vpop.f32.mrb[0].mxu0
    %v3308 = vadd.f32 0.0, %v3307
    %v3309 = vpop.f32.mrb[0].mxu0
    %v3310 = vpop.f32.mrb[0].mxu0
    %v3311 = vpop.f32.mrb[0].mxu0
    %3312 = vdwg.mxu0
    %3313 = vrot.lane.b32.xlu0 %v2816, 112
    %v3314 = vpop.permute.xlu0 %3313
    %3315 = vrot.lane.b32.xlu0 %v2818, 80
    %v3316 = vpop.permute.xlu0 %3315
    %v3318 = vsel %vm1496, %v3314, 0
    %v3321 = vsel %vm1496, %v3316, 0
    %3323 = vmatprep.subr.bf16.mxu0 0
    %3324 = vmatpush1.bf16.xpose.msra.mxu0 %v3321
    %3325 = vmatprep.subr.bf16.mxu0 0
    %3326 = vmatpush1.bf16.xpose.msra.mxu0 0
    %3327 = vmatprep.subr.bf16.mxu0 0
    %3328 = vmatpush1.bf16.xpose.msra.mxu0 0
    %3329 = vmatprep.subr.bf16.mxu0 0
    %3330 = vmatpush1.bf16.xpose.msra.mxu0 0
    %3331 = vmatprep.subr.bf16.mxu0 0
    %3332 = vmatpush1.bf16.xpose.msra.mxu0 0
    %3333 = vmatprep.subr.bf16.mxu0 0
    %3334 = vmatpush1.bf16.xpose.msra.mxu0 0
    %3335 = vmatprep.subr.bf16.mxu0 0
    %3336 = vmatpush1.bf16.xpose.msra.mxu0 0
    %3337 = vmatprep.subr.bf16.mxu0 0
    %3338 = vmatpush1.bf16.xpose.msra.mxu0 0
    %3339 = vmatprep.subr.bf16.mxu0 0
    %3340 = vmatpush1.bf16.xpose.msra.mxu0 0
    %3341 = vmatprep.subr.bf16.mxu0 0
    %3342 = vmatpush1.bf16.xpose.msra.mxu0 0
    %3343 = vmatprep.subr.bf16.mxu0 0
    %3344 = vmatpush1.bf16.xpose.msra.mxu0 0
    %3345 = vmatprep.subr.bf16.mxu0 0
    %3346 = vmatpush1.bf16.xpose.msra.mxu0 0
    %3347 = vmatprep.subr.bf16.mxu0 0
    %3348 = vmatpush1.bf16.xpose.msra.mxu0 0
    %3349 = vmatprep.subr.bf16.mxu0 0
    %3350 = vmatpush1.bf16.xpose.msra.mxu0 0
    %3351 = vmatprep.subr.bf16.mxu0 0
    %3352 = vmatpush1.bf16.xpose.msra.mxu0 0
    %3353 = vmatprep.subr.bf16.mxu0 0
    %3354 = vmatpush1.bf16.xpose.msra.mxu0 0
    %3355 = vmatprep.mubr.bf16.mxu0 0
    %3356 = vmatmul.mubr.bf16.gmra.mrb[0].mxu0 %v3318
    %v3357 = vpop.f32.mrb[0].mxu0
    %v3358 = vadd.f32 0.0, %v3357
    %v3359 = vpop.f32.mrb[0].mxu0
    %v3360 = vpop.f32.mrb[0].mxu0
    %v3361 = vpop.f32.mrb[0].mxu0
    %3362 = vdwg.mxu0
    %v3363 = vsel %vm1592, -1e+09, %v3308
    %v3364 = vsel %vm1593, -1e+09, %v3358
    %v3365 = vsel %vm1496, %v3363, -inf
    %3366 = vmax.xlane.f32.xlu0 %v3365
    %v3367 = vpop.xlane.xlu0 %3366
    %v3368 = vsel %vm1496, %v3364, -inf
    %3369 = vmax.xlane.f32.xlu0 %v3368
    %v3370 = vpop.xlane.xlu0 %3369
    %v3371 = vsub.f32 %v3363, %v3367
    %v3372 = vsub.f32 %v3364, %v3370
    %v3373 = vmul.f32 %v3371, 1.442695
    %v3374 = vpow.pop %v3373
    %v3375 = vmul.f32 %v3372, 1.442695
    %v3376 = vpow.pop %v3375
    %v3377 = vsel %vm1496, %v3374, 0.0
    %3378 = vadd.xlane.f32.xlu0 %v3377
    %v3379 = vpop.xlane.xlu0 %3378
    %v3380 = vsel %vm1496, %v3376, 0.0
    %3381 = vadd.xlane.f32.xlu0 %v3380
    %v3382 = vpop.xlane.xlu0 %3381
    %v3383 = vrcp.pop %v3379
    %v3384 = vrcp.pop %v3382
    %v3385 = vmul.f32 %v3374, %v3383
    %v3386 = vmul.f32 %v3376, %v3384
    %v3387 = vpack.c.bf16 %v3385, %v3385
    %v3388 = vpack.c.bf16 %v3386, %v3386
    %3389 = vrot.lane.b32.xlu0 %v2817, 48
    %v3390 = vpop.permute.xlu0 %3389
    %v3392 = vsel %vm1496, %v3387, 0
    %v3395 = vsel %vm1625, %v3390, 0
    %3397 = vmatprep.subr.bf16.mxu0 0
    %3398 = vmatpush1.bf16.msra.mxu0 %v3395
    %3399 = vmatprep.subr.bf16.mxu0 0
    %3400 = vmatpush1.bf16.msra.mxu0 0
    %3401 = vmatprep.subr.bf16.mxu0 0
    %3402 = vmatpush1.bf16.msra.mxu0 0
    %3403 = vmatprep.subr.bf16.mxu0 0
    %3404 = vmatpush1.bf16.msra.mxu0 0
    %3405 = vmatprep.subr.bf16.mxu0 0
    %3406 = vmatpush1.bf16.msra.mxu0 0
    %3407 = vmatprep.subr.bf16.mxu0 0
    %3408 = vmatpush1.bf16.msra.mxu0 0
    %3409 = vmatprep.subr.bf16.mxu0 0
    %3410 = vmatpush1.bf16.msra.mxu0 0
    %3411 = vmatprep.subr.bf16.mxu0 0
    %3412 = vmatpush1.bf16.msra.mxu0 0
    %3413 = vmatprep.subr.bf16.mxu0 0
    %3414 = vmatpush1.bf16.msra.mxu0 0
    %3415 = vmatprep.subr.bf16.mxu0 0
    %3416 = vmatpush1.bf16.msra.mxu0 0
    %3417 = vmatprep.subr.bf16.mxu0 0
    %3418 = vmatpush1.bf16.msra.mxu0 0
    %3419 = vmatprep.subr.bf16.mxu0 0
    %3420 = vmatpush1.bf16.msra.mxu0 0
    %3421 = vmatprep.subr.bf16.mxu0 0
    %3422 = vmatpush1.bf16.msra.mxu0 0
    %3423 = vmatprep.subr.bf16.mxu0 0
    %3424 = vmatpush1.bf16.msra.mxu0 0
    %3425 = vmatprep.subr.bf16.mxu0 0
    %3426 = vmatpush1.bf16.msra.mxu0 0
    %3427 = vmatprep.subr.bf16.mxu0 0
    %3428 = vmatpush1.bf16.msra.mxu0 0
    %3429 = vmatprep.mubr.bf16.mxu0 0
    %3430 = vmatmul.mubr.bf16.gmra.mrb[0].mxu0 %v3392
    %v3431 = vpop.f32.mrb[0].mxu0
    %v3432 = vadd.f32 0.0, %v3431
    %v3433 = vpop.f32.mrb[0].mxu0
    %v3434 = vpop.f32.mrb[0].mxu0
    %v3435 = vpop.f32.mrb[0].mxu0
    %3436 = vdwg.mxu0
    %3437 = vrot.lane.b32.xlu0 %v2818, 48
    %v3438 = vpop.permute.xlu0 %3437
    %v3440 = vsel %vm1496, %v3388, 0
    %v3443 = vsel %vm1625, %v3438, 0
    %3445 = vmatprep.subr.bf16.mxu0 0
    %3446 = vmatpush1.bf16.msra.mxu0 %v3443
    %3447 = vmatprep.subr.bf16.mxu0 0
    %3448 = vmatpush1.bf16.msra.mxu0 0
    %3449 = vmatprep.subr.bf16.mxu0 0
    %3450 = vmatpush1.bf16.msra.mxu0 0
    %3451 = vmatprep.subr.bf16.mxu0 0
    %3452 = vmatpush1.bf16.msra.mxu0 0
    %3453 = vmatprep.subr.bf16.mxu0 0
    %3454 = vmatpush1.bf16.msra.mxu0 0
    %3455 = vmatprep.subr.bf16.mxu0 0
    %3456 = vmatpush1.bf16.msra.mxu0 0
    %3457 = vmatprep.subr.bf16.mxu0 0
    %3458 = vmatpush1.bf16.msra.mxu0 0
    %3459 = vmatprep.subr.bf16.mxu0 0
    %3460 = vmatpush1.bf16.msra.mxu0 0
    %3461 = vmatprep.subr.bf16.mxu0 0
    %3462 = vmatpush1.bf16.msra.mxu0 0
    %3463 = vmatprep.subr.bf16.mxu0 0
    %3464 = vmatpush1.bf16.msra.mxu0 0
    %3465 = vmatprep.subr.bf16.mxu0 0
    %3466 = vmatpush1.bf16.msra.mxu0 0
    %3467 = vmatprep.subr.bf16.mxu0 0
    %3468 = vmatpush1.bf16.msra.mxu0 0
    %3469 = vmatprep.subr.bf16.mxu0 0
    %3470 = vmatpush1.bf16.msra.mxu0 0
    %3471 = vmatprep.subr.bf16.mxu0 0
    %3472 = vmatpush1.bf16.msra.mxu0 0
    %3473 = vmatprep.subr.bf16.mxu0 0
    %3474 = vmatpush1.bf16.msra.mxu0 0
    %3475 = vmatprep.subr.bf16.mxu0 0
    %3476 = vmatpush1.bf16.msra.mxu0 0
    %3477 = vmatprep.mubr.bf16.mxu0 0
    %3478 = vmatmul.mubr.bf16.gmra.mrb[0].mxu0 %v3440
    %v3479 = vpop.f32.mrb[0].mxu0
    %v3480 = vadd.f32 0.0, %v3479
    %v3481 = vpop.f32.mrb[0].mxu0
    %v3482 = vpop.f32.mrb[0].mxu0
    %v3483 = vpop.f32.mrb[0].mxu0
    %3484 = vdwg.mxu0
    %3485 = vrot.lane.b32.xlu0 %v2815, 104
    %v3486 = vpop.permute.xlu0 %3485
    %3487 = vrot.lane.b32.xlu0 %v2817, 72
    %v3488 = vpop.permute.xlu0 %3487
    %v3490 = vsel %vm1496, %v3486, 0
    %v3493 = vsel %vm1496, %v3488, 0
    %3495 = vmatprep.subr.bf16.mxu0 0
    %3496 = vmatpush1.bf16.xpose.msra.mxu0 %v3493
    %3497 = vmatprep.subr.bf16.mxu0 0
    %3498 = vmatpush1.bf16.xpose.msra.mxu0 0
    %3499 = vmatprep.subr.bf16.mxu0 0
    %3500 = vmatpush1.bf16.xpose.msra.mxu0 0
    %3501 = vmatprep.subr.bf16.mxu0 0
    %3502 = vmatpush1.bf16.xpose.msra.mxu0 0
    %3503 = vmatprep.subr.bf16.mxu0 0
    %3504 = vmatpush1.bf16.xpose.msra.mxu0 0
    %3505 = vmatprep.subr.bf16.mxu0 0
    %3506 = vmatpush1.bf16.xpose.msra.mxu0 0
    %3507 = vmatprep.subr.bf16.mxu0 0
    %3508 = vmatpush1.bf16.xpose.msra.mxu0 0
    %3509 = vmatprep.subr.bf16.mxu0 0
    %3510 = vmatpush1.bf16.xpose.msra.mxu0 0
    %3511 = vmatprep.subr.bf16.mxu0 0
    %3512 = vmatpush1.bf16.xpose.msra.mxu0 0
    %3513 = vmatprep.subr.bf16.mxu0 0
    %3514 = vmatpush1.bf16.xpose.msra.mxu0 0
    %3515 = vmatprep.subr.bf16.mxu0 0
    %3516 = vmatpush1.bf16.xpose.msra.mxu0 0
    %3517 = vmatprep.subr.bf16.mxu0 0
    %3518 = vmatpush1.bf16.xpose.msra.mxu0 0
    %3519 = vmatprep.subr.bf16.mxu0 0
    %3520 = vmatpush1.bf16.xpose.msra.mxu0 0
    %3521 = vmatprep.subr.bf16.mxu0 0
    %3522 = vmatpush1.bf16.xpose.msra.mxu0 0
    %3523 = vmatprep.subr.bf16.mxu0 0
    %3524 = vmatpush1.bf16.xpose.msra.mxu0 0
    %3525 = vmatprep.subr.bf16.mxu0 0
    %3526 = vmatpush1.bf16.xpose.msra.mxu0 0
    %3527 = vmatprep.mubr.bf16.mxu0 0
    %3528 = vmatmul.mubr.bf16.gmra.mrb[0].mxu0 %v3490
    %v3529 = vpop.f32.mrb[0].mxu0
    %v3530 = vadd.f32 0.0, %v3529
    %v3531 = vpop.f32.mrb[0].mxu0
    %v3532 = vpop.f32.mrb[0].mxu0
    %v3533 = vpop.f32.mrb[0].mxu0
    %3534 = vdwg.mxu0
    %3535 = vrot.lane.b32.xlu0 %v2816, 104
    %v3536 = vpop.permute.xlu0 %3535
    %3537 = vrot.lane.b32.xlu0 %v2818, 72
    %v3538 = vpop.permute.xlu0 %3537
    %v3540 = vsel %vm1496, %v3536, 0
    %v3543 = vsel %vm1496, %v3538, 0
    %3545 = vmatprep.subr.bf16.mxu0 0
    %3546 = vmatpush1.bf16.xpose.msra.mxu0 %v3543
    %3547 = vmatprep.subr.bf16.mxu0 0
    %3548 = vmatpush1.bf16.xpose.msra.mxu0 0
    %3549 = vmatprep.subr.bf16.mxu0 0
    %3550 = vmatpush1.bf16.xpose.msra.mxu0 0
    %3551 = vmatprep.subr.bf16.mxu0 0
    %3552 = vmatpush1.bf16.xpose.msra.mxu0 0
    %3553 = vmatprep.subr.bf16.mxu0 0
    %3554 = vmatpush1.bf16.xpose.msra.mxu0 0
    %3555 = vmatprep.subr.bf16.mxu0 0
    %3556 = vmatpush1.bf16.xpose.msra.mxu0 0
    %3557 = vmatprep.subr.bf16.mxu0 0
    %3558 = vmatpush1.bf16.xpose.msra.mxu0 0
    %3559 = vmatprep.subr.bf16.mxu0 0
    %3560 = vmatpush1.bf16.xpose.msra.mxu0 0
    %3561 = vmatprep.subr.bf16.mxu0 0
    %3562 = vmatpush1.bf16.xpose.msra.mxu0 0
    %3563 = vmatprep.subr.bf16.mxu0 0
    %3564 = vmatpush1.bf16.xpose.msra.mxu0 0
    %3565 = vmatprep.subr.bf16.mxu0 0
    %3566 = vmatpush1.bf16.xpose.msra.mxu0 0
    %3567 = vmatprep.subr.bf16.mxu0 0
    %3568 = vmatpush1.bf16.xpose.msra.mxu0 0
    %3569 = vmatprep.subr.bf16.mxu0 0
    %3570 = vmatpush1.bf16.xpose.msra.mxu0 0
    %3571 = vmatprep.subr.bf16.mxu0 0
    %3572 = vmatpush1.bf16.xpose.msra.mxu0 0
    %3573 = vmatprep.subr.bf16.mxu0 0
    %3574 = vmatpush1.bf16.xpose.msra.mxu0 0
    %3575 = vmatprep.subr.bf16.mxu0 0
    %3576 = vmatpush1.bf16.xpose.msra.mxu0 0
    %3577 = vmatprep.mubr.bf16.mxu0 0
    %3578 = vmatmul.mubr.bf16.gmra.mrb[0].mxu0 %v3540
    %v3579 = vpop.f32.mrb[0].mxu0
    %v3580 = vadd.f32 0.0, %v3579
    %v3581 = vpop.f32.mrb[0].mxu0
    %v3582 = vpop.f32.mrb[0].mxu0
    %v3583 = vpop.f32.mrb[0].mxu0
    %3584 = vdwg.mxu0
    %v3585 = vsel %vm1592, -1e+09, %v3530
    %v3586 = vsel %vm1593, -1e+09, %v3580
    %v3587 = vsel %vm1496, %v3585, -inf
    %3588 = vmax.xlane.f32.xlu0 %v3587
    %v3589 = vpop.xlane.xlu0 %3588
    %v3590 = vsel %vm1496, %v3586, -inf
    %3591 = vmax.xlane.f32.xlu0 %v3590
    %v3592 = vpop.xlane.xlu0 %3591
    %v3593 = vsub.f32 %v3585, %v3589
    %v3594 = vsub.f32 %v3586, %v3592
    %v3595 = vmul.f32 %v3593, 1.442695
    %v3596 = vpow.pop %v3595
    %v3597 = vmul.f32 %v3594, 1.442695
    %v3598 = vpow.pop %v3597
    %v3599 = vsel %vm1496, %v3596, 0.0
    %3600 = vadd.xlane.f32.xlu0 %v3599
    %v3601 = vpop.xlane.xlu0 %3600
    %v3602 = vsel %vm1496, %v3598, 0.0
    %3603 = vadd.xlane.f32.xlu0 %v3602
    %v3604 = vpop.xlane.xlu0 %3603
    %v3605 = vrcp.pop %v3601
    %v3606 = vrcp.pop %v3604
    %v3607 = vmul.f32 %v3596, %v3605
    %v3608 = vmul.f32 %v3598, %v3606
    %v3609 = vpack.c.bf16 %v3607, %v3607
    %v3610 = vpack.c.bf16 %v3608, %v3608
    %3611 = vrot.lane.b32.xlu0 %v2817, 40
    %v3612 = vpop.permute.xlu0 %3611
    %v3614 = vsel %vm1496, %v3609, 0
    %v3617 = vsel %vm1625, %v3612, 0
    %3619 = vmatprep.subr.bf16.mxu0 0
    %3620 = vmatpush1.bf16.msra.mxu0 %v3617
    %3621 = vmatprep.subr.bf16.mxu0 0
    %3622 = vmatpush1.bf16.msra.mxu0 0
    %3623 = vmatprep.subr.bf16.mxu0 0
    %3624 = vmatpush1.bf16.msra.mxu0 0
    %3625 = vmatprep.subr.bf16.mxu0 0
    %3626 = vmatpush1.bf16.msra.mxu0 0
    %3627 = vmatprep.subr.bf16.mxu0 0
    %3628 = vmatpush1.bf16.msra.mxu0 0
    %3629 = vmatprep.subr.bf16.mxu0 0
    %3630 = vmatpush1.bf16.msra.mxu0 0
    %3631 = vmatprep.subr.bf16.mxu0 0
    %3632 = vmatpush1.bf16.msra.mxu0 0
    %3633 = vmatprep.subr.bf16.mxu0 0
    %3634 = vmatpush1.bf16.msra.mxu0 0
    %3635 = vmatprep.subr.bf16.mxu0 0
    %3636 = vmatpush1.bf16.msra.mxu0 0
    %3637 = vmatprep.subr.bf16.mxu0 0
    %3638 = vmatpush1.bf16.msra.mxu0 0
    %3639 = vmatprep.subr.bf16.mxu0 0
    %3640 = vmatpush1.bf16.msra.mxu0 0
    %3641 = vmatprep.subr.bf16.mxu0 0
    %3642 = vmatpush1.bf16.msra.mxu0 0
    %3643 = vmatprep.subr.bf16.mxu0 0
    %3644 = vmatpush1.bf16.msra.mxu0 0
    %3645 = vmatprep.subr.bf16.mxu0 0
    %3646 = vmatpush1.bf16.msra.mxu0 0
    %3647 = vmatprep.subr.bf16.mxu0 0
    %3648 = vmatpush1.bf16.msra.mxu0 0
    %3649 = vmatprep.subr.bf16.mxu0 0
    %3650 = vmatpush1.bf16.msra.mxu0 0
    %3651 = vmatprep.mubr.bf16.mxu0 0
    %3652 = vmatmul.mubr.bf16.gmra.mrb[0].mxu0 %v3614
    %v3653 = vpop.f32.mrb[0].mxu0
    %v3654 = vadd.f32 0.0, %v3653
    %v3655 = vpop.f32.mrb[0].mxu0
    %v3656 = vpop.f32.mrb[0].mxu0
    %v3657 = vpop.f32.mrb[0].mxu0
    %3658 = vdwg.mxu0
    %3659 = vrot.lane.b32.xlu0 %v2818, 40
    %v3660 = vpop.permute.xlu0 %3659
    %v3662 = vsel %vm1496, %v3610, 0
    %v3665 = vsel %vm1625, %v3660, 0
    %3667 = vmatprep.subr.bf16.mxu0 0
    %3668 = vmatpush1.bf16.msra.mxu0 %v3665
    %3669 = vmatprep.subr.bf16.mxu0 0
    %3670 = vmatpush1.bf16.msra.mxu0 0
    %3671 = vmatprep.subr.bf16.mxu0 0
    %3672 = vmatpush1.bf16.msra.mxu0 0
    %3673 = vmatprep.subr.bf16.mxu0 0
    %3674 = vmatpush1.bf16.msra.mxu0 0
    %3675 = vmatprep.subr.bf16.mxu0 0
    %3676 = vmatpush1.bf16.msra.mxu0 0
    %3677 = vmatprep.subr.bf16.mxu0 0
    %3678 = vmatpush1.bf16.msra.mxu0 0
    %3679 = vmatprep.subr.bf16.mxu0 0
    %3680 = vmatpush1.bf16.msra.mxu0 0
    %3681 = vmatprep.subr.bf16.mxu0 0
    %3682 = vmatpush1.bf16.msra.mxu0 0
    %3683 = vmatprep.subr.bf16.mxu0 0
    %3684 = vmatpush1.bf16.msra.mxu0 0
    %3685 = vmatprep.subr.bf16.mxu0 0
    %3686 = vmatpush1.bf16.msra.mxu0 0
    %3687 = vmatprep.subr.bf16.mxu0 0
    %3688 = vmatpush1.bf16.msra.mxu0 0
    %3689 = vmatprep.subr.bf16.mxu0 0
    %3690 = vmatpush1.bf16.msra.mxu0 0
    %3691 = vmatprep.subr.bf16.mxu0 0
    %3692 = vmatpush1.bf16.msra.mxu0 0
    %3693 = vmatprep.subr.bf16.mxu0 0
    %3694 = vmatpush1.bf16.msra.mxu0 0
    %3695 = vmatprep.subr.bf16.mxu0 0
    %3696 = vmatpush1.bf16.msra.mxu0 0
    %3697 = vmatprep.subr.bf16.mxu0 0
    %3698 = vmatpush1.bf16.msra.mxu0 0
    %3699 = vmatprep.mubr.bf16.mxu0 0
    %3700 = vmatmul.mubr.bf16.gmra.mrb[0].mxu0 %v3662
    %v3701 = vpop.f32.mrb[0].mxu0
    %v3702 = vadd.f32 0.0, %v3701
    %v3703 = vpop.f32.mrb[0].mxu0
    %v3704 = vpop.f32.mrb[0].mxu0
    %v3705 = vpop.f32.mrb[0].mxu0
    %3706 = vdwg.mxu0
    %3709 = vrot.lane.b32.xlu0 %v3210, 8
    %v3710 = vpop.permute.xlu0 %3709
    %3711 = vrot.lane.b32.xlu0 %v3258, 8
    %v3712 = vpop.permute.xlu0 %3711
    %3717 = vrot.lane.b32.xlu0 %v3432, 16
    %v3718 = vpop.permute.xlu0 %3717
    %3719 = vrot.lane.b32.xlu0 %v3480, 16
    %v3720 = vpop.permute.xlu0 %3719
    %3725 = vrot.lane.b32.xlu0 %v3654, 24
    %v3726 = vpop.permute.xlu0 %3725
    %3727 = vrot.lane.b32.xlu0 %v3702, 24
    %v3728 = vpop.permute.xlu0 %3727
    %v3731 = vsel %vm1496, %v2986, %v3710
    %v3732 = vsel %vm1496, %v3034, %v3712
    %v3733 = vsel %vm2411, %v3731, %v3718
    %v3734 = vsel %vm2411, %v3732, %v3720
    %v3735 = vsel %vm2414, %v3733, %v3726
    %v3736 = vsel %vm2414, %v3734, %v3728
    %s3737 = scalar_lea.vmem %s27, 16
    %v3738 = vld [vmem:[%s3737] sm:$0xf]
    %v3739 = vld [vmem:[%s3737 + $0x4] sm:$0xf]
    %v3740 = vld [vmem:[%s3737 + $0x8] sm:$0xf]
    %v3741 = vld [vmem:[%s3737 + $0xc] sm:$0xf]
    %v3742 = vpack.c.bf16 %v3736, %v3735
    %v3743 = vld [vmem:[%s29 + $0x1] sm:$0x1]
    %v3744 = vlaneseq
    %v3745 = vshrl.u32 %v3744, 7
    %v3746 = vsub.s32 0, %v3745
    %v3747 = vrot.slane %v3743, %v3746
    %v3752 = vunpack.c.l.b16 %v3738
    %v3753 = vunpack.c.l.b16 %v3739
    %v3754 = vunpack.c.l.b16 %v3740
    %v3755 = vunpack.c.l.b16 %v3741
    %v3756 = vpack.c.b16 %v3753, %v3752
    %v3757 = vpack.c.b16 %v3755, %v3754
    %v3761 = vsel %vm1265, %v3742, 0
    %3763 = vmatprep.subr.bf16.mxu0 0
    %3764 = vmatpush1.bf16.msra.mxu0 %v3756
    %3765 = vmatprep.subr.bf16.mxu0 0
    %3766 = vmatpush1.bf16.msra.mxu0 %v3757
    %3767 = vmatprep.subr.bf16.mxu0 0
    %3768 = vmatpush1.bf16.msra.mxu0 0
    %3769 = vmatprep.subr.bf16.mxu0 0
    %3770 = vmatpush1.bf16.msra.mxu0 0
    %3771 = vmatprep.subr.bf16.mxu0 0
    %3772 = vmatpush1.bf16.msra.mxu0 0
    %3773 = vmatprep.subr.bf16.mxu0 0
    %3774 = vmatpush1.bf16.msra.mxu0 0
    %3775 = vmatprep.subr.bf16.mxu0 0
    %3776 = vmatpush1.bf16.msra.mxu0 0
    %3777 = vmatprep.subr.bf16.mxu0 0
    %3778 = vmatpush1.bf16.msra.mxu0 0
    %3779 = vmatprep.subr.bf16.mxu0 0
    %3780 = vmatpush1.bf16.msra.mxu0 0
    %3781 = vmatprep.subr.bf16.mxu0 0
    %3782 = vmatpush1.bf16.msra.mxu0 0
    %3783 = vmatprep.subr.bf16.mxu0 0
    %3784 = vmatpush1.bf16.msra.mxu0 0
    %3785 = vmatprep.subr.bf16.mxu0 0
    %3786 = vmatpush1.bf16.msra.mxu0 0
    %3787 = vmatprep.subr.bf16.mxu0 0
    %3788 = vmatpush1.bf16.msra.mxu0 0
    %3789 = vmatprep.subr.bf16.mxu0 0
    %3790 = vmatpush1.bf16.msra.mxu0 0
    %3791 = vmatprep.subr.bf16.mxu0 0
    %3792 = vmatpush1.bf16.msra.mxu0 0
    %3793 = vmatprep.subr.bf16.mxu0 0
    %3794 = vmatpush1.bf16.msra.mxu0 0
    %3795 = vmatprep.mubr.bf16.mxu0 0
    %3796 = vmatmul.mubr.bf16.gmra.mrb[0].mxu0 %v3761
    %v3797 = vpop.f32.mrb[0].mxu0
    %v3798 = vadd.f32 %v3747, %v3797
    %v3799 = vpop.f32.mrb[0].mxu0
    %v3800 = vpop.f32.mrb[0].mxu0
    %v3801 = vadd.f32 %v3747, %v3800
    %v3802 = vpop.f32.mrb[0].mxu0
    %3803 = vdwg.mxu0
    %v3804 = vadd.f32 %v2744, %v3798
    %v3805 = vadd.f32 %v2745, %v3801
    %v3806 = vld [vmem:[%s31 + $0x1] sm:$0x1]
    %v3807 = vld [vmem:[%s33 + $0x1] sm:$0x1]
    %v3808 = vsel %vm1265, %v3804, 0.0
    %3809 = vadd.xlane.f32.xlu0 %v3808
    %v3810 = vpop.xlane.xlu0 %3809
    %v3811 = vsel %vm1265, %v3805, 0.0
    %3812 = vadd.xlane.f32.xlu0 %v3811
    %v3813 = vpop.xlane.xlu0 %3812
    %v3814 = vmul.f32 %v3810, %v2493
    %v3815 = vmul.f32 %v3813, %v2493
    %v3816 = vsub.f32 %v3804, %v3814
    %v3817 = vsub.f32 %v3805, %v3815
    %v3818 = vmul.f32 %v3816, %v3816
    %v3819 = vmul.f32 %v3817, %v3817
    %v3820 = vsel %vm1265, %v3818, 0.0
    %3821 = vadd.xlane.f32.xlu0 %v3820
    %v3822 = vpop.xlane.xlu0 %3821
    %v3823 = vsel %vm1265, %v3819, 0.0
    %3824 = vadd.xlane.f32.xlu0 %v3823
    %v3825 = vpop.xlane.xlu0 %3824
    %v3826 = vmul.f32 %v3822, 0.032258064
    %v3827 = vmul.f32 %v3825, 0.032258064
    %v3828 = vlaneseq
    %v3829 = vshrl.u32 %v3828, 7
    %v3830 = vsub.s32 0, %v3829
    %v3831 = vrot.slane %v3806, %v3830
    %v3832 = vmul.f32 %v3831, %v3816
    %v3833 = vmul.f32 %v3831, %v3817
    %v3834 = vrsqrt.pop %v3826
    %v3835 = vmul.f32 %v3826, %v3834
    %vm3836 = vcmp.eq.f32.partialorder %v3826, inf
    %v3837 = vsel %vm3836, %v3826, %v3835
    %vm3838 = vcmp.eq.f32.partialorder %v3826, 0.0
    %v3839 = vand.u32 %v3826, 2147483648
    %v3840 = vsel %vm3838, %v3839, %v3837
    %v3841 = vrsqrt.pop %v3827
    %v3842 = vmul.f32 %v3827, %v3841
    %vm3843 = vcmp.eq.f32.partialorder %v3827, inf
    %v3844 = vsel %vm3843, %v3827, %v3842
    %vm3845 = vcmp.eq.f32.partialorder %v3827, 0.0
    %v3846 = vand.u32 %v3827, 2147483648
    %v3847 = vsel %vm3845, %v3846, %v3844
    %v3848 = vadd.f32 %v3840, 1e-06
    %v3849 = vadd.f32 %v3847, 1e-06
    %v3850 = vrcp.pop %v3848
    %v3851 = vmul.f32 %v3832, %v3850
    %v3852 = vrcp.pop %v3849
    %v3853 = vmul.f32 %v3833, %v3852
    %v3854 = vlaneseq
    %v3855 = vshrl.u32 %v3854, 7
    %v3856 = vsub.s32 0, %v3855
    %v3857 = vrot.slane %v3807, %v3856
    %v3858 = vadd.f32 %v3851, %v3857
    %v3859 = vadd.f32 %v3853, %v3857
    %s3860 = scalar_lea.vmem %s35, 16
    %v3861 = vld [vmem:[%s3860] sm:$0xf]
    %v3862 = vld [vmem:[%s3860 + $0x4] sm:$0xf]
    %v3863 = vld [vmem:[%s3860 + $0x8] sm:$0xf]
    %v3864 = vld [vmem:[%s3860 + $0xc] sm:$0xf]
    %v3865 = vpack.c.bf16 %v3859, %v3858
    %v3866 = vld [vmem:[%s37 + $0x1] sm:$0x1]
    %v3867 = vlaneseq
    %v3868 = vshrl.u32 %v3867, 7
    %v3869 = vsub.s32 0, %v3868
    %v3870 = vrot.slane %v3866, %v3869
    %v3875 = vunpack.c.l.b16 %v3861
    %v3876 = vunpack.c.l.b16 %v3862
    %v3877 = vunpack.c.l.b16 %v3863
    %v3878 = vunpack.c.l.b16 %v3864
    %v3879 = vpack.c.b16 %v3876, %v3875
    %v3880 = vpack.c.b16 %v3878, %v3877
    %v3884 = vsel %vm1265, %v3865, 0
    %3886 = vmatprep.subr.bf16.mxu0 0
    %3887 = vmatpush1.bf16.msra.mxu0 %v3879
    %3888 = vmatprep.subr.bf16.mxu0 0
    %3889 = vmatpush1.bf16.msra.mxu0 %v3880
    %3890 = vmatprep.subr.bf16.mxu0 0
    %3891 = vmatpush1.bf16.msra.mxu0 0
    %3892 = vmatprep.subr.bf16.mxu0 0
    %3893 = vmatpush1.bf16.msra.mxu0 0
    %3894 = vmatprep.subr.bf16.mxu0 0
    %3895 = vmatpush1.bf16.msra.mxu0 0
    %3896 = vmatprep.subr.bf16.mxu0 0
    %3897 = vmatpush1.bf16.msra.mxu0 0
    %3898 = vmatprep.subr.bf16.mxu0 0
    %3899 = vmatpush1.bf16.msra.mxu0 0
    %3900 = vmatprep.subr.bf16.mxu0 0
    %3901 = vmatpush1.bf16.msra.mxu0 0
    %3902 = vmatprep.subr.bf16.mxu0 0
    %3903 = vmatpush1.bf16.msra.mxu0 0
    %3904 = vmatprep.subr.bf16.mxu0 0
    %3905 = vmatpush1.bf16.msra.mxu0 0
    %3906 = vmatprep.subr.bf16.mxu0 0
    %3907 = vmatpush1.bf16.msra.mxu0 0
    %3908 = vmatprep.subr.bf16.mxu0 0
    %3909 = vmatpush1.bf16.msra.mxu0 0
    %3910 = vmatprep.subr.bf16.mxu0 0
    %3911 = vmatpush1.bf16.msra.mxu0 0
    %3912 = vmatprep.subr.bf16.mxu0 0
    %3913 = vmatpush1.bf16.msra.mxu0 0
    %3914 = vmatprep.subr.bf16.mxu0 0
    %3915 = vmatpush1.bf16.msra.mxu0 0
    %3916 = vmatprep.subr.bf16.mxu0 0
    %3917 = vmatpush1.bf16.msra.mxu0 0
    %3918 = vmatprep.mubr.bf16.mxu0 0
    %3919 = vmatmul.mubr.bf16.gmra.mrb[0].mxu0 %v3884
    %v3920 = vpop.f32.mrb[0].mxu0
    %v3921 = vadd.f32 %v3870, %v3920
    %v3922 = vpop.f32.mrb[0].mxu0
    %v3923 = vpop.f32.mrb[0].mxu0
    %v3924 = vadd.f32 %v3870, %v3923
    %v3925 = vpop.f32.mrb[0].mxu0
    %3926 = vdwg.mxu0
    %v3927 = vmax.f32 %v3921, 0.0
    %v3928 = vmax.f32 %v3924, 0.0
    %s3929 = scalar_lea.vmem %s39, 32
    %v3930 = vld [vmem:[%s3929] sm:$0xf]
    %v3931 = vld [vmem:[%s3929 + $0x4] sm:$0xf]
    %v3932 = vld [vmem:[%s3929 + $0x8] sm:$0xf]
    %v3933 = vld [vmem:[%s3929 + $0xc] sm:$0xf]
    %v3934 = vld [vmem:[%s3929 + $0x10] sm:$0xf]
    %v3935 = vld [vmem:[%s3929 + $0x14] sm:$0xf]
    %v3936 = vld [vmem:[%s3929 + $0x18] sm:$0xf]
    %v3937 = vld [vmem:[%s3929 + $0x1c] sm:$0xf]
    %v3938 = vpack.c.bf16 %v3928, %v3927
    %v3939 = vld [vmem:[%s41 + $0x1] sm:$0x1]
    %v3940 = vlaneseq
    %v3941 = vshrl.u32 %v3940, 7
    %v3942 = vsub.s32 0, %v3941
    %v3943 = vrot.slane %v3939, %v3942
    %v3952 = vunpack.c.l.b16 %v3930
    %v3953 = vunpack.c.l.b16 %v3931
    %v3954 = vunpack.c.l.b16 %v3932
    %v3955 = vunpack.c.l.b16 %v3933
    %v3956 = vunpack.c.l.b16 %v3934
    %v3957 = vunpack.c.l.b16 %v3935
    %v3958 = vunpack.c.l.b16 %v3936
    %v3959 = vunpack.c.l.b16 %v3937
    %v3960 = vpack.c.b16 %v3953, %v3952
    %v3961 = vpack.c.b16 %v3955, %v3954
    %v3962 = vpack.c.b16 %v3957, %v3956
    %v3963 = vpack.c.b16 %v3959, %v3958
    %v3969 = vsel %vm932, %v3938, 0
    %3971 = vmatprep.subr.bf16.mxu0 0
    %3972 = vmatpush1.bf16.msra.mxu0 %v3960
    %3973 = vmatprep.subr.bf16.mxu0 0
    %3974 = vmatpush1.bf16.msra.mxu0 %v3961
    %3975 = vmatprep.subr.bf16.mxu0 0
    %3976 = vmatpush1.bf16.msra.mxu0 %v3962
    %3977 = vmatprep.subr.bf16.mxu0 0
    %3978 = vmatpush1.bf16.msra.mxu0 %v3963
    %3979 = vmatprep.subr.bf16.mxu0 0
    %3980 = vmatpush1.bf16.msra.mxu0 0
    %3981 = vmatprep.subr.bf16.mxu0 0
    %3982 = vmatpush1.bf16.msra.mxu0 0
    %3983 = vmatprep.subr.bf16.mxu0 0
    %3984 = vmatpush1.bf16.msra.mxu0 0
    %3985 = vmatprep.subr.bf16.mxu0 0
    %3986 = vmatpush1.bf16.msra.mxu0 0
    %3987 = vmatprep.subr.bf16.mxu0 0
    %3988 = vmatpush1.bf16.msra.mxu0 0
    %3989 = vmatprep.subr.bf16.mxu0 0
    %3990 = vmatpush1.bf16.msra.mxu0 0
    %3991 = vmatprep.subr.bf16.mxu0 0
    %3992 = vmatpush1.bf16.msra.mxu0 0
    %3993 = vmatprep.subr.bf16.mxu0 0
    %3994 = vmatpush1.bf16.msra.mxu0 0
    %3995 = vmatprep.subr.bf16.mxu0 0
    %3996 = vmatpush1.bf16.msra.mxu0 0
    %3997 = vmatprep.subr.bf16.mxu0 0
    %3998 = vmatpush1.bf16.msra.mxu0 0
    %3999 = vmatprep.subr.bf16.mxu0 0
    %4000 = vmatpush1.bf16.msra.mxu0 0
    %4001 = vmatprep.subr.bf16.mxu0 0
    %4002 = vmatpush1.bf16.msra.mxu0 0
    %4003 = vmatprep.mubr.bf16.mxu0 0
    %4004 = vmatmul.mubr.bf16.gmra.mrb[0].mxu0 %v3969
    %v4005 = vpop.f32.mrb[0].mxu0
    %v4006 = vadd.f32 %v3943, %v4005
    %v4007 = vpop.f32.mrb[0].mxu0
    %v4008 = vpop.f32.mrb[0].mxu0
    %v4009 = vadd.f32 %v3943, %v4008
    %v4010 = vpop.f32.mrb[0].mxu0
    %4011 = vdwg.mxu0
    %v4012 = vadd.f32 %v3858, %v4006
    %v4013 = vadd.f32 %v3859, %v4009
    %v4014 = vld [vmem:[%s43 + $0x1] sm:$0x1]
    %v4015 = vld [vmem:[%s45 + $0x1] sm:$0x1]
    %v4016 = vsel %vm1265, %v4012, 0.0
    %4017 = vadd.xlane.f32.xlu0 %v4016
    %v4018 = vpop.xlane.xlu0 %4017
    %v4019 = vsel %vm1265, %v4013, 0.0
    %4020 = vadd.xlane.f32.xlu0 %v4019
    %v4021 = vpop.xlane.xlu0 %4020
    %v4022 = vmul.f32 %v4018, %v2493
    %v4023 = vmul.f32 %v4021, %v2493
    %v4024 = vsub.f32 %v4012, %v4022
    %v4025 = vsub.f32 %v4013, %v4023
    %v4026 = vmul.f32 %v4024, %v4024
    %v4027 = vmul.f32 %v4025, %v4025
    %v4028 = vsel %vm1265, %v4026, 0.0
    %4029 = vadd.xlane.f32.xlu0 %v4028
    %v4030 = vpop.xlane.xlu0 %4029
    %v4031 = vsel %vm1265, %v4027, 0.0
    %4032 = vadd.xlane.f32.xlu0 %v4031
    %v4033 = vpop.xlane.xlu0 %4032
    %v4034 = vmul.f32 %v4030, 0.032258064
    %v4035 = vmul.f32 %v4033, 0.032258064
    %v4036 = vlaneseq
    %v4037 = vshrl.u32 %v4036, 7
    %v4038 = vsub.s32 0, %v4037
    %v4039 = vrot.slane %v4014, %v4038
    %v4040 = vmul.f32 %v4039, %v4024
    %v4041 = vmul.f32 %v4039, %v4025
    %v4042 = vrsqrt.pop %v4034
    %v4043 = vmul.f32 %v4034, %v4042
    %vm4044 = vcmp.eq.f32.partialorder %v4034, inf
    %v4045 = vsel %vm4044, %v4034, %v4043
    %vm4046 = vcmp.eq.f32.partialorder %v4034, 0.0
    %v4047 = vand.u32 %v4034, 2147483648
    %v4048 = vsel %vm4046, %v4047, %v4045
    %v4049 = vrsqrt.pop %v4035
    %v4050 = vmul.f32 %v4035, %v4049
    %vm4051 = vcmp.eq.f32.partialorder %v4035, inf
    %v4052 = vsel %vm4051, %v4035, %v4050
    %vm4053 = vcmp.eq.f32.partialorder %v4035, 0.0
    %v4054 = vand.u32 %v4035, 2147483648
    %v4055 = vsel %vm4053, %v4054, %v4052
    %v4056 = vadd.f32 %v4048, 1e-06
    %v4057 = vadd.f32 %v4055, 1e-06
    %v4058 = vrcp.pop %v4056
    %v4059 = vmul.f32 %v4040, %v4058
    %v4060 = vrcp.pop %v4057
    %v4061 = vmul.f32 %v4041, %v4060
    %v4062 = vlaneseq
    %v4063 = vshrl.u32 %v4062, 7
    %v4064 = vsub.s32 0, %v4063
    %v4065 = vrot.slane %v4015, %v4064
    %v4066 = vadd.f32 %v4059, %v4065
    %v4067 = vadd.f32 %v4061, %v4065
    %v4068 = vld [vmem:[%s47] sm:$0xf]
    %v4069 = vld [vmem:[%s47 + $0x4] sm:$0xf]
    %v4070 = vld [vmem:[%s47 + $0x8] sm:$0xf]
    %v4071 = vld [vmem:[%s47 + $0xc] sm:$0xf]
    %v4072 = vpack.c.bf16 %v1215, %v1215
    %v4073 = vpack.c.bf16 %v1258, %v1258
    %v4074 = vld [vmem:[%s49] sm:$0x1]
    %v4079 = vunpack.c.l.b16 %v4068
    %v4080 = vunpack.c.l.b16 %v4069
    %v4081 = vunpack.c.l.b16 %v4070
    %v4082 = vunpack.c.l.b16 %v4071
    %v4083 = vpack.c.b16 %v4080, %v4079
    %v4084 = vpack.c.b16 %v4082, %v4081
    %v4088 = vsel %vm1265, %v4072, 0
    %4090 = vmatprep.subr.bf16.mxu0 0
    %4091 = vmatpush1.bf16.msra.mxu0 %v4083
    %4092 = vmatprep.subr.bf16.mxu0 0
    %4093 = vmatpush1.bf16.msra.mxu0 %v4084
    %4094 = vmatprep.subr.bf16.mxu0 0
    %4095 = vmatpush1.bf16.msra.mxu0 0
    %4096 = vmatprep.subr.bf16.mxu0 0
    %4097 = vmatpush1.bf16.msra.mxu0 0
    %4098 = vmatprep.subr.bf16.mxu0 0
    %4099 = vmatpush1.bf16.msra.mxu0 0
    %4100 = vmatprep.subr.bf16.mxu0 0
    %4101 = vmatpush1.bf16.msra.mxu0 0
    %4102 = vmatprep.subr.bf16.mxu0 0
    %4103 = vmatpush1.bf16.msra.mxu0 0
    %4104 = vmatprep.subr.bf16.mxu0 0
    %4105 = vmatpush1.bf16.msra.mxu0 0
    %4106 = vmatprep.subr.bf16.mxu0 0
    %4107 = vmatpush1.bf16.msra.mxu0 0
    %4108 = vmatprep.subr.bf16.mxu0 0
    %4109 = vmatpush1.bf16.msra.mxu0 0
    %4110 = vmatprep.subr.bf16.mxu0 0
    %4111 = vmatpush1.bf16.msra.mxu0 0
    %4112 = vmatprep.subr.bf16.mxu0 0
    %4113 = vmatpush1.bf16.msra.mxu0 0
    %4114 = vmatprep.subr.bf16.mxu0 0
    %4115 = vmatpush1.bf16.msra.mxu0 0
    %4116 = vmatprep.subr.bf16.mxu0 0
    %4117 = vmatpush1.bf16.msra.mxu0 0
    %4118 = vmatprep.subr.bf16.mxu0 0
    %4119 = vmatpush1.bf16.msra.mxu0 0
    %4120 = vmatprep.subr.bf16.mxu0 0
    %4121 = vmatpush1.bf16.msra.mxu0 0
    %4122 = vmatprep.mubr.bf16.mxu0 0
    %4123 = vmatmul.mubr.bf16.gmra.mrb[0].mxu0 %v4088
    %v4124 = vpop.f32.mrb[0].mxu0
    %v4125 = vadd.f32 %v4074, %v4124
    %v4126 = vpop.f32.mrb[0].mxu0
    %v4127 = vpop.f32.mrb[0].mxu0
    %v4128 = vpop.f32.mrb[0].mxu0
    %4129 = vdwg.mxu0
    %v4131 = vsel %vm1265, %v4073, 0
    %4133 = vmatprep.subr.bf16.mxu0 0
    %4134 = vmatpush1.bf16.msra.mxu0 %v4083
    %4135 = vmatprep.subr.bf16.mxu0 0
    %4136 = vmatpush1.bf16.msra.mxu0 %v4084
    %4137 = vmatprep.subr.bf16.mxu0 0
    %4138 = vmatpush1.bf16.msra.mxu0 0
    %4139 = vmatprep.subr.bf16.mxu0 0
    %4140 = vmatpush1.bf16.msra.mxu0 0
    %4141 = vmatprep.subr.bf16.mxu0 0
    %4142 = vmatpush1.bf16.msra.mxu0 0
    %4143 = vmatprep.subr.bf16.mxu0 0
    %4144 = vmatpush1.bf16.msra.mxu0 0
    %4145 = vmatprep.subr.bf16.mxu0 0
    %4146 = vmatpush1.bf16.msra.mxu0 0
    %4147 = vmatprep.subr.bf16.mxu0 0
    %4148 = vmatpush1.bf16.msra.mxu0 0
    %4149 = vmatprep.subr.bf16.mxu0 0
    %4150 = vmatpush1.bf16.msra.mxu0 0
    %4151 = vmatprep.subr.bf16.mxu0 0
    %4152 = vmatpush1.bf16.msra.mxu0 0
    %4153 = vmatprep.subr.bf16.mxu0 0
    %4154 = vmatpush1.bf16.msra.mxu0 0
    %4155 = vmatprep.subr.bf16.mxu0 0
    %4156 = vmatpush1.bf16.msra.mxu0 0
    %4157 = vmatprep.subr.bf16.mxu0 0
    %4158 = vmatpush1.bf16.msra.mxu0 0
    %4159 = vmatprep.subr.bf16.mxu0 0
    %4160 = vmatpush1.bf16.msra.mxu0 0
    %4161 = vmatprep.subr.bf16.mxu0 0
    %4162 = vmatpush1.bf16.msra.mxu0 0
    %4163 = vmatprep.subr.bf16.mxu0 0
    %4164 = vmatpush1.bf16.msra.mxu0 0
    %4165 = vmatprep.mubr.bf16.mxu0 0
    %4166 = vmatmul.mubr.bf16.gmra.mrb[0].mxu0 %v4131
    %v4167 = vpop.f32.mrb[0].mxu0
    %v4168 = vadd.f32 %v4074, %v4167
    %v4169 = vpop.f32.mrb[0].mxu0
    %v4170 = vpop.f32.mrb[0].mxu0
    %v4171 = vpop.f32.mrb[0].mxu0
    %4172 = vdwg.mxu0
    %v4173 = vld [vmem:[%s51] sm:$0xf]
    %v4174 = vld [vmem:[%s51 + $0x4] sm:$0xf]
    %v4175 = vld [vmem:[%s51 + $0x8] sm:$0xf]
    %v4176 = vld [vmem:[%s51 + $0xc] sm:$0xf]
    %v4177 = vpack.c.bf16 %v4125, %v4125
    %v4178 = vpack.c.bf16 %v4168, %v4168
    %v4179 = vld [vmem:[%s53] sm:$0x1]
    %v4184 = vunpack.c.l.b16 %v4173
    %v4185 = vunpack.c.l.b16 %v4174
    %v4186 = vunpack.c.l.b16 %v4175
    %v4187 = vunpack.c.l.b16 %v4176
    %v4188 = vpack.c.b16 %v4185, %v4184
    %v4189 = vpack.c.b16 %v4187, %v4186
    %v4193 = vsel %vm1265, %v4177, 0
    %4195 = vmatprep.subr.bf16.mxu0 0
    %4196 = vmatpush1.bf16.msra.mxu0 %v4188
    %4197 = vmatprep.subr.bf16.mxu0 0
    %4198 = vmatpush1.bf16.msra.mxu0 %v4189
    %4199 = vmatprep.subr.bf16.mxu0 0
    %4200 = vmatpush1.bf16.msra.mxu0 0
    %4201 = vmatprep.subr.bf16.mxu0 0
    %4202 = vmatpush1.bf16.msra.mxu0 0
    %4203 = vmatprep.subr.bf16.mxu0 0
    %4204 = vmatpush1.bf16.msra.mxu0 0
    %4205 = vmatprep.subr.bf16.mxu0 0
    %4206 = vmatpush1.bf16.msra.mxu0 0
    %4207 = vmatprep.subr.bf16.mxu0 0
    %4208 = vmatpush1.bf16.msra.mxu0 0
    %4209 = vmatprep.subr.bf16.mxu0 0
    %4210 = vmatpush1.bf16.msra.mxu0 0
    %4211 = vmatprep.subr.bf16.mxu0 0
    %4212 = vmatpush1.bf16.msra.mxu0 0
    %4213 = vmatprep.subr.bf16.mxu0 0
    %4214 = vmatpush1.bf16.msra.mxu0 0
    %4215 = vmatprep.subr.bf16.mxu0 0
    %4216 = vmatpush1.bf16.msra.mxu0 0
    %4217 = vmatprep.subr.bf16.mxu0 0
    %4218 = vmatpush1.bf16.msra.mxu0 0
    %4219 = vmatprep.subr.bf16.mxu0 0
    %4220 = vmatpush1.bf16.msra.mxu0 0
    %4221 = vmatprep.subr.bf16.mxu0 0
    %4222 = vmatpush1.bf16.msra.mxu0 0
    %4223 = vmatprep.subr.bf16.mxu0 0
    %4224 = vmatpush1.bf16.msra.mxu0 0
    %4225 = vmatprep.subr.bf16.mxu0 0
    %4226 = vmatpush1.bf16.msra.mxu0 0
    %4227 = vmatprep.mubr.bf16.mxu0 0
    %4228 = vmatmul.mubr.bf16.gmra.mrb[0].mxu0 %v4193
    %v4229 = vpop.f32.mrb[0].mxu0
    %v4230 = vadd.f32 %v4179, %v4229
    %v4231 = vpop.f32.mrb[0].mxu0
    %v4232 = vpop.f32.mrb[0].mxu0
    %v4233 = vpop.f32.mrb[0].mxu0
    %4234 = vdwg.mxu0
    %v4236 = vsel %vm1265, %v4178, 0
    %4238 = vmatprep.subr.bf16.mxu0 0
    %4239 = vmatpush1.bf16.msra.mxu0 %v4188
    %4240 = vmatprep.subr.bf16.mxu0 0
    %4241 = vmatpush1.bf16.msra.mxu0 %v4189
    %4242 = vmatprep.subr.bf16.mxu0 0
    %4243 = vmatpush1.bf16.msra.mxu0 0
    %4244 = vmatprep.subr.bf16.mxu0 0
    %4245 = vmatpush1.bf16.msra.mxu0 0
    %4246 = vmatprep.subr.bf16.mxu0 0
    %4247 = vmatpush1.bf16.msra.mxu0 0
    %4248 = vmatprep.subr.bf16.mxu0 0
    %4249 = vmatpush1.bf16.msra.mxu0 0
    %4250 = vmatprep.subr.bf16.mxu0 0
    %4251 = vmatpush1.bf16.msra.mxu0 0
    %4252 = vmatprep.subr.bf16.mxu0 0
    %4253 = vmatpush1.bf16.msra.mxu0 0
    %4254 = vmatprep.subr.bf16.mxu0 0
    %4255 = vmatpush1.bf16.msra.mxu0 0
    %4256 = vmatprep.subr.bf16.mxu0 0
    %4257 = vmatpush1.bf16.msra.mxu0 0
    %4258 = vmatprep.subr.bf16.mxu0 0
    %4259 = vmatpush1.bf16.msra.mxu0 0
    %4260 = vmatprep.subr.bf16.mxu0 0
    %4261 = vmatpush1.bf16.msra.mxu0 0
    %4262 = vmatprep.subr.bf16.mxu0 0
    %4263 = vmatpush1.bf16.msra.mxu0 0
    %4264 = vmatprep.subr.bf16.mxu0 0
    %4265 = vmatpush1.bf16.msra.mxu0 0
    %4266 = vmatprep.subr.bf16.mxu0 0
    %4267 = vmatpush1.bf16.msra.mxu0 0
    %4268 = vmatprep.subr.bf16.mxu0 0
    %4269 = vmatpush1.bf16.msra.mxu0 0
    %4270 = vmatprep.mubr.bf16.mxu0 0
    %4271 = vmatmul.mubr.bf16.gmra.mrb[0].mxu0 %v4236
    %v4272 = vpop.f32.mrb[0].mxu0
    %v4273 = vadd.f32 %v4179, %v4272
    %v4274 = vpop.f32.mrb[0].mxu0
    %v4275 = vpop.f32.mrb[0].mxu0
    %v4276 = vpop.f32.mrb[0].mxu0
    %4277 = vdwg.mxu0
    %v4278 = vadd.f32 %v1215, %v4230
    %v4279 = vadd.f32 %v1258, %v4273
    %v4280 = vld [vmem:[%s55] sm:$0x1]
    %v4281 = vld [vmem:[%s57] sm:$0x1]
    %vm4282 = vcmask 253952
    %v4283 = vsel %vm4282, %v4278, 0.0
    %4284 = vadd.xlane.f32.xlu0 %v4283
    %v4285 = vpop.xlane.xlu0 %4284
    %v4286 = vsel %vm4282, %v4279, 0.0
    %4287 = vadd.xlane.f32.xlu0 %v4286
    %v4288 = vpop.xlane.xlu0 %4287
    %v4289 = vmul.f32 %v4285, %v2493
    %v4290 = vmul.f32 %v4288, %v2493
    %v4291 = vsub.f32 %v4278, %v4289
    %v4292 = vsub.f32 %v4279, %v4290
    %v4293 = vmul.f32 %v4291, %v4291
    %v4294 = vmul.f32 %v4292, %v4292
    %v4295 = vsel %vm4282, %v4293, 0.0
    %4296 = vadd.xlane.f32.xlu0 %v4295
    %v4297 = vpop.xlane.xlu0 %4296
    %v4298 = vsel %vm4282, %v4294, 0.0
    %4299 = vadd.xlane.f32.xlu0 %v4298
    %v4300 = vpop.xlane.xlu0 %4299
    %v4301 = vmul.f32 %v4297, 0.032258064
    %v4302 = vmul.f32 %v4300, 0.032258064
    %v4303 = vmul.f32 %v4280, %v4291
    %v4304 = vmul.f32 %v4280, %v4292
    %v4305 = vrsqrt.pop %v4301
    %v4306 = vmul.f32 %v4301, %v4305
    %vm4307 = vcmp.eq.f32.partialorder %v4301, inf
    %v4308 = vsel %vm4307, %v4301, %v4306
    %vm4309 = vcmp.eq.f32.partialorder %v4301, 0.0
    %v4310 = vand.u32 %v4301, 2147483648
    %v4311 = vsel %vm4309, %v4310, %v4308
    %v4312 = vrsqrt.pop %v4302
    %v4313 = vmul.f32 %v4302, %v4312
    %vm4314 = vcmp.eq.f32.partialorder %v4302, inf
    %v4315 = vsel %vm4314, %v4302, %v4313
    %vm4316 = vcmp.eq.f32.partialorder %v4302, 0.0
    %v4317 = vand.u32 %v4302, 2147483648
    %v4318 = vsel %vm4316, %v4317, %v4315
    %v4319 = vadd.f32 %v4311, 1e-06
    %v4320 = vadd.f32 %v4318, 1e-06
    %v4321 = vrcp.pop %v4319
    %v4322 = vmul.f32 %v4303, %v4321
    %v4323 = vrcp.pop %v4320
    %v4324 = vmul.f32 %v4304, %v4323
    %v4325 = vadd.f32 %v4322, %v4281
    %v4326 = vadd.f32 %v4324, %v4281
    %v4327 = vld [vmem:[%s59] sm:$0xf]
    %v4328 = vld [vmem:[%s59 + $0x4] sm:$0xf]
    %v4329 = vld [vmem:[%s59 + $0x8] sm:$0xf]
    %v4330 = vld [vmem:[%s59 + $0xc] sm:$0xf]
    %v4331 = vpack.c.bf16 %v4325, %v4325
    %v4332 = vpack.c.bf16 %v4326, %v4326
    %v4333 = vld [vmem:[%s61] sm:$0x1]
    %v4338 = vunpack.c.l.b16 %v4327
    %v4339 = vunpack.c.l.b16 %v4328
    %v4340 = vunpack.c.l.b16 %v4329
    %v4341 = vunpack.c.l.b16 %v4330
    %v4342 = vpack.c.b16 %v4339, %v4338
    %v4343 = vpack.c.b16 %v4341, %v4340
    %v4347 = vsel %vm1265, %v4331, 0
    %4349 = vmatprep.subr.bf16.mxu0 0
    %4350 = vmatpush1.bf16.msra.mxu0 %v4342
    %4351 = vmatprep.subr.bf16.mxu0 0
    %4352 = vmatpush1.bf16.msra.mxu0 %v4343
    %4353 = vmatprep.subr.bf16.mxu0 0
    %4354 = vmatpush1.bf16.msra.mxu0 0
    %4355 = vmatprep.subr.bf16.mxu0 0
    %4356 = vmatpush1.bf16.msra.mxu0 0
    %4357 = vmatprep.subr.bf16.mxu0 0
    %4358 = vmatpush1.bf16.msra.mxu0 0
    %4359 = vmatprep.subr.bf16.mxu0 0
    %4360 = vmatpush1.bf16.msra.mxu0 0
    %4361 = vmatprep.subr.bf16.mxu0 0
    %4362 = vmatpush1.bf16.msra.mxu0 0
    %4363 = vmatprep.subr.bf16.mxu0 0
    %4364 = vmatpush1.bf16.msra.mxu0 0
    %4365 = vmatprep.subr.bf16.mxu0 0
    %4366 = vmatpush1.bf16.msra.mxu0 0
    %4367 = vmatprep.subr.bf16.mxu0 0
    %4368 = vmatpush1.bf16.msra.mxu0 0
    %4369 = vmatprep.subr.bf16.mxu0 0
    %4370 = vmatpush1.bf16.msra.mxu0 0
    %4371 = vmatprep.subr.bf16.mxu0 0
    %4372 = vmatpush1.bf16.msra.mxu0 0
    %4373 = vmatprep.subr.bf16.mxu0 0
    %4374 = vmatpush1.bf16.msra.mxu0 0
    %4375 = vmatprep.subr.bf16.mxu0 0
    %4376 = vmatpush1.bf16.msra.mxu0 0
    %4377 = vmatprep.subr.bf16.mxu0 0
    %4378 = vmatpush1.bf16.msra.mxu0 0
    %4379 = vmatprep.subr.bf16.mxu0 0
    %4380 = vmatpush1.bf16.msra.mxu0 0
    %4381 = vmatprep.mubr.bf16.mxu0 0
    %4382 = vmatmul.mubr.bf16.gmra.mrb[0].mxu0 %v4347
    %v4383 = vpop.f32.mrb[0].mxu0
    %v4384 = vadd.f32 %v4333, %v4383
    %v4385 = vpop.f32.mrb[0].mxu0
    %v4386 = vpop.f32.mrb[0].mxu0
    %v4387 = vpop.f32.mrb[0].mxu0
    %4388 = vdwg.mxu0
    %v4390 = vsel %vm1265, %v4332, 0
    %4392 = vmatprep.subr.bf16.mxu0 0
    %4393 = vmatpush1.bf16.msra.mxu0 %v4342
    %4394 = vmatprep.subr.bf16.mxu0 0
    %4395 = vmatpush1.bf16.msra.mxu0 %v4343
    %4396 = vmatprep.subr.bf16.mxu0 0
    %4397 = vmatpush1.bf16.msra.mxu0 0
    %4398 = vmatprep.subr.bf16.mxu0 0
    %4399 = vmatpush1.bf16.msra.mxu0 0
    %4400 = vmatprep.subr.bf16.mxu0 0
    %4401 = vmatpush1.bf16.msra.mxu0 0
    %4402 = vmatprep.subr.bf16.mxu0 0
    %4403 = vmatpush1.bf16.msra.mxu0 0
    %4404 = vmatprep.subr.bf16.mxu0 0
    %4405 = vmatpush1.bf16.msra.mxu0 0
    %4406 = vmatprep.subr.bf16.mxu0 0
    %4407 = vmatpush1.bf16.msra.mxu0 0
    %4408 = vmatprep.subr.bf16.mxu0 0
    %4409 = vmatpush1.bf16.msra.mxu0 0
    %4410 = vmatprep.subr.bf16.mxu0 0
    %4411 = vmatpush1.bf16.msra.mxu0 0
    %4412 = vmatprep.subr.bf16.mxu0 0
    %4413 = vmatpush1.bf16.msra.mxu0 0
    %4414 = vmatprep.subr.bf16.mxu0 0
    %4415 = vmatpush1.bf16.msra.mxu0 0
    %4416 = vmatprep.subr.bf16.mxu0 0
    %4417 = vmatpush1.bf16.msra.mxu0 0
    %4418 = vmatprep.subr.bf16.mxu0 0
    %4419 = vmatpush1.bf16.msra.mxu0 0
    %4420 = vmatprep.subr.bf16.mxu0 0
    %4421 = vmatpush1.bf16.msra.mxu0 0
    %4422 = vmatprep.subr.bf16.mxu0 0
    %4423 = vmatpush1.bf16.msra.mxu0 0
    %4424 = vmatprep.mubr.bf16.mxu0 0
    %4425 = vmatmul.mubr.bf16.gmra.mrb[0].mxu0 %v4390
    %v4426 = vpop.f32.mrb[0].mxu0
    %v4427 = vadd.f32 %v4333, %v4426
    %v4428 = vpop.f32.mrb[0].mxu0
    %v4429 = vpop.f32.mrb[0].mxu0
    %v4430 = vpop.f32.mrb[0].mxu0
    %4431 = vdwg.mxu0
    %v4432 = vmul.f32 %v4384, 0.35355338
    %v4433 = vmul.f32 %v4427, 0.35355338
    %v4434 = vld [vmem:[%s63] sm:$0xf]
    %v4435 = vld [vmem:[%s63 + $0x4] sm:$0xf]
    %v4436 = vld [vmem:[%s63 + $0x8] sm:$0xf]
    %v4437 = vld [vmem:[%s63 + $0xc] sm:$0xf]
    %v4438 = vpack.c.bf16 %v4067, %v4066
    %v4439 = vld [vmem:[%s65] sm:$0x1]
    %v4440 = vlaneseq
    %v4441 = vshrl.u32 %v4440, 7
    %v4442 = vsub.s32 0, %v4441
    %v4443 = vrot.slane %v4439, %v4442
    %v4448 = vunpack.c.l.b16 %v4434
    %v4449 = vunpack.c.l.b16 %v4435
    %v4450 = vunpack.c.l.b16 %v4436
    %v4451 = vunpack.c.l.b16 %v4437
    %v4452 = vpack.c.b16 %v4449, %v4448
    %v4453 = vpack.c.b16 %v4451, %v4450
    %v4457 = vsel %vm1265, %v4438, 0
    %4459 = vmatprep.subr.bf16.mxu0 0
    %4460 = vmatpush1.bf16.msra.mxu0 %v4452
    %4461 = vmatprep.subr.bf16.mxu0 0
    %4462 = vmatpush1.bf16.msra.mxu0 %v4453
    %4463 = vmatprep.subr.bf16.mxu0 0
    %4464 = vmatpush1.bf16.msra.mxu0 0
    %4465 = vmatprep.subr.bf16.mxu0 0
    %4466 = vmatpush1.bf16.msra.mxu0 0
    %4467 = vmatprep.subr.bf16.mxu0 0
    %4468 = vmatpush1.bf16.msra.mxu0 0
    %4469 = vmatprep.subr.bf16.mxu0 0
    %4470 = vmatpush1.bf16.msra.mxu0 0
    %4471 = vmatprep.subr.bf16.mxu0 0
    %4472 = vmatpush1.bf16.msra.mxu0 0
    %4473 = vmatprep.subr.bf16.mxu0 0
    %4474 = vmatpush1.bf16.msra.mxu0 0
    %4475 = vmatprep.subr.bf16.mxu0 0
    %4476 = vmatpush1.bf16.msra.mxu0 0
    %4477 = vmatprep.subr.bf16.mxu0 0
    %4478 = vmatpush1.bf16.msra.mxu0 0
    %4479 = vmatprep.subr.bf16.mxu0 0
    %4480 = vmatpush1.bf16.msra.mxu0 0
    %4481 = vmatprep.subr.bf16.mxu0 0
    %4482 = vmatpush1.bf16.msra.mxu0 0
    %4483 = vmatprep.subr.bf16.mxu0 0
    %4484 = vmatpush1.bf16.msra.mxu0 0
    %4485 = vmatprep.subr.bf16.mxu0 0
    %4486 = vmatpush1.bf16.msra.mxu0 0
    %4487 = vmatprep.subr.bf16.mxu0 0
    %4488 = vmatpush1.bf16.msra.mxu0 0
    %4489 = vmatprep.subr.bf16.mxu0 0
    %4490 = vmatpush1.bf16.msra.mxu0 0
    %4491 = vmatprep.mubr.bf16.mxu0 0
    %4492 = vmatmul.mubr.bf16.gmra.mrb[0].mxu0 %v4457
    %v4493 = vpop.f32.mrb[0].mxu0
    %v4494 = vadd.f32 %v4443, %v4493
    %v4495 = vpop.f32.mrb[0].mxu0
    %v4496 = vpop.f32.mrb[0].mxu0
    %v4497 = vadd.f32 %v4443, %v4496
    %v4498 = vpop.f32.mrb[0].mxu0
    %4499 = vdwg.mxu0
    %v4500 = vpack.c.bf16 %v4432, %v4432
    %v4501 = vpack.c.bf16 %v4433, %v4433
    %v4502 = vpack.c.bf16 %v4494, %v4494
    %v4503 = vpack.c.bf16 %v4497, %v4497
    %v4505 = vsel %vm1496, %v4500, 0
    %v4508 = vsel %vm1496, %v4502, 0
    %4510 = vmatprep.subr.bf16.mxu0 0
    %4511 = vmatpush1.bf16.xpose.msra.mxu0 %v4508
    %4512 = vmatprep.subr.bf16.mxu0 0
    %4513 = vmatpush1.bf16.xpose.msra.mxu0 0
    %4514 = vmatprep.subr.bf16.mxu0 0
    %4515 = vmatpush1.bf16.xpose.msra.mxu0 0
    %4516 = vmatprep.subr.bf16.mxu0 0
    %4517 = vmatpush1.bf16.xpose.msra.mxu0 0
    %4518 = vmatprep.subr.bf16.mxu0 0
    %4519 = vmatpush1.bf16.xpose.msra.mxu0 0
    %4520 = vmatprep.subr.bf16.mxu0 0
    %4521 = vmatpush1.bf16.xpose.msra.mxu0 0
    %4522 = vmatprep.subr.bf16.mxu0 0
    %4523 = vmatpush1.bf16.xpose.msra.mxu0 0
    %4524 = vmatprep.subr.bf16.mxu0 0
    %4525 = vmatpush1.bf16.xpose.msra.mxu0 0
    %4526 = vmatprep.subr.bf16.mxu0 0
    %4527 = vmatpush1.bf16.xpose.msra.mxu0 0
    %4528 = vmatprep.subr.bf16.mxu0 0
    %4529 = vmatpush1.bf16.xpose.msra.mxu0 0
    %4530 = vmatprep.subr.bf16.mxu0 0
    %4531 = vmatpush1.bf16.xpose.msra.mxu0 0
    %4532 = vmatprep.subr.bf16.mxu0 0
    %4533 = vmatpush1.bf16.xpose.msra.mxu0 0
    %4534 = vmatprep.subr.bf16.mxu0 0
    %4535 = vmatpush1.bf16.xpose.msra.mxu0 0
    %4536 = vmatprep.subr.bf16.mxu0 0
    %4537 = vmatpush1.bf16.xpose.msra.mxu0 0
    %4538 = vmatprep.subr.bf16.mxu0 0
    %4539 = vmatpush1.bf16.xpose.msra.mxu0 0
    %4540 = vmatprep.subr.bf16.mxu0 0
    %4541 = vmatpush1.bf16.xpose.msra.mxu0 0
    %4542 = vmatprep.mubr.bf16.mxu0 0
    %4543 = vmatmul.mubr.bf16.gmra.mrb[0].mxu0 %v4505
    %v4544 = vpop.f32.mrb[0].mxu0
    %v4545 = vadd.f32 0.0, %v4544
    %v4546 = vpop.f32.mrb[0].mxu0
    %v4547 = vpop.f32.mrb[0].mxu0
    %v4548 = vpop.f32.mrb[0].mxu0
    %4549 = vdwg.mxu0
    %v4551 = vsel %vm1496, %v4501, 0
    %v4554 = vsel %vm1496, %v4503, 0
    %4556 = vmatprep.subr.bf16.mxu0 0
    %4557 = vmatpush1.bf16.xpose.msra.mxu0 %v4554
    %4558 = vmatprep.subr.bf16.mxu0 0
    %4559 = vmatpush1.bf16.xpose.msra.mxu0 0
    %4560 = vmatprep.subr.bf16.mxu0 0
    %4561 = vmatpush1.bf16.xpose.msra.mxu0 0
    %4562 = vmatprep.subr.bf16.mxu0 0
    %4563 = vmatpush1.bf16.xpose.msra.mxu0 0
    %4564 = vmatprep.subr.bf16.mxu0 0
    %4565 = vmatpush1.bf16.xpose.msra.mxu0 0
    %4566 = vmatprep.subr.bf16.mxu0 0
    %4567 = vmatpush1.bf16.xpose.msra.mxu0 0
    %4568 = vmatprep.subr.bf16.mxu0 0
    %4569 = vmatpush1.bf16.xpose.msra.mxu0 0
    %4570 = vmatprep.subr.bf16.mxu0 0
    %4571 = vmatpush1.bf16.xpose.msra.mxu0 0
    %4572 = vmatprep.subr.bf16.mxu0 0
    %4573 = vmatpush1.bf16.xpose.msra.mxu0 0
    %4574 = vmatprep.subr.bf16.mxu0 0
    %4575 = vmatpush1.bf16.xpose.msra.mxu0 0
    %4576 = vmatprep.subr.bf16.mxu0 0
    %4577 = vmatpush1.bf16.xpose.msra.mxu0 0
    %4578 = vmatprep.subr.bf16.mxu0 0
    %4579 = vmatpush1.bf16.xpose.msra.mxu0 0
    %4580 = vmatprep.subr.bf16.mxu0 0
    %4581 = vmatpush1.bf16.xpose.msra.mxu0 0
    %4582 = vmatprep.subr.bf16.mxu0 0
    %4583 = vmatpush1.bf16.xpose.msra.mxu0 0
    %4584 = vmatprep.subr.bf16.mxu0 0
    %4585 = vmatpush1.bf16.xpose.msra.mxu0 0
    %4586 = vmatprep.subr.bf16.mxu0 0
    %4587 = vmatpush1.bf16.xpose.msra.mxu0 0
    %4588 = vmatprep.mubr.bf16.mxu0 0
    %4589 = vmatmul.mubr.bf16.gmra.mrb[0].mxu0 %v4551
    %v4590 = vpop.f32.mrb[0].mxu0
    %v4591 = vadd.f32 0.0, %v4590
    %v4592 = vpop.f32.mrb[0].mxu0
    %v4593 = vpop.f32.mrb[0].mxu0
    %v4594 = vpop.f32.mrb[0].mxu0
    %4595 = vdwg.mxu0
    %v4596 = vsel %vm1592, -1e+09, %v4545
    %v4597 = vsel %vm1593, -1e+09, %v4591
    %vm4598 = vcmask 57344
    %v4599 = vsel %vm4598, %v4596, -inf
    %4600 = vmax.xlane.f32.xlu0 %v4599
    %v4601 = vpop.xlane.xlu0 %4600
    %v4602 = vsel %vm4598, %v4597, -inf
    %4603 = vmax.xlane.f32.xlu0 %v4602
    %v4604 = vpop.xlane.xlu0 %4603
    %v4605 = vsub.f32 %v4596, %v4601
    %v4606 = vsub.f32 %v4597, %v4604
    %v4607 = vmul.f32 %v4605, 1.442695
    %v4608 = vpow.pop %v4607
    %v4609 = vmul.f32 %v4606, 1.442695
    %v4610 = vpow.pop %v4609
    %v4611 = vsel %vm4598, %v4608, 0.0
    %4612 = vadd.xlane.f32.xlu0 %v4611
    %v4613 = vpop.xlane.xlu0 %4612
    %v4614 = vsel %vm4598, %v4610, 0.0
    %4615 = vadd.xlane.f32.xlu0 %v4614
    %v4616 = vpop.xlane.xlu0 %4615
    %v4617 = vrcp.pop %v4613
    %v4618 = vrcp.pop %v4616
    %v4619 = vmul.f32 %v4608, %v4617
    %v4620 = vmul.f32 %v4610, %v4618
    %v4621 = vpack.c.bf16 %v4619, %v4619
    %v4622 = vpack.c.bf16 %v4620, %v4620
    %4624 = vrot.lane.b32.xlu0 %v4502, 96
    %v4625 = vpop.permute.xlu0 %4624
    %v4627 = vsel %vm1496, %v4621, 0
    %v4630 = vsel %vm1625, %v4625, 0
    %4632 = vmatprep.subr.bf16.mxu0 0
    %4633 = vmatpush1.bf16.msra.mxu0 %v4630
    %4634 = vmatprep.subr.bf16.mxu0 0
    %4635 = vmatpush1.bf16.msra.mxu0 0
    %4636 = vmatprep.subr.bf16.mxu0 0
    %4637 = vmatpush1.bf16.msra.mxu0 0
    %4638 = vmatprep.subr.bf16.mxu0 0
    %4639 = vmatpush1.bf16.msra.mxu0 0
    %4640 = vmatprep.subr.bf16.mxu0 0
    %4641 = vmatpush1.bf16.msra.mxu0 0
    %4642 = vmatprep.subr.bf16.mxu0 0
    %4643 = vmatpush1.bf16.msra.mxu0 0
    %4644 = vmatprep.subr.bf16.mxu0 0
    %4645 = vmatpush1.bf16.msra.mxu0 0
    %4646 = vmatprep.subr.bf16.mxu0 0
    %4647 = vmatpush1.bf16.msra.mxu0 0
    %4648 = vmatprep.subr.bf16.mxu0 0
    %4649 = vmatpush1.bf16.msra.mxu0 0
    %4650 = vmatprep.subr.bf16.mxu0 0
    %4651 = vmatpush1.bf16.msra.mxu0 0
    %4652 = vmatprep.subr.bf16.mxu0 0
    %4653 = vmatpush1.bf16.msra.mxu0 0
    %4654 = vmatprep.subr.bf16.mxu0 0
    %4655 = vmatpush1.bf16.msra.mxu0 0
    %4656 = vmatprep.subr.bf16.mxu0 0
    %4657 = vmatpush1.bf16.msra.mxu0 0
    %4658 = vmatprep.subr.bf16.mxu0 0
    %4659 = vmatpush1.bf16.msra.mxu0 0
    %4660 = vmatprep.subr.bf16.mxu0 0
    %4661 = vmatpush1.bf16.msra.mxu0 0
    %4662 = vmatprep.subr.bf16.mxu0 0
    %4663 = vmatpush1.bf16.msra.mxu0 0
    %4664 = vmatprep.mubr.bf16.mxu0 0
    %4665 = vmatmul.mubr.bf16.gmra.mrb[0].mxu0 %v4627
    %v4666 = vpop.f32.mrb[0].mxu0
    %v4667 = vadd.f32 0.0, %v4666
    %v4668 = vpop.f32.mrb[0].mxu0
    %v4669 = vpop.f32.mrb[0].mxu0
    %v4670 = vpop.f32.mrb[0].mxu0
    %4671 = vdwg.mxu0
    %4673 = vrot.lane.b32.xlu0 %v4503, 96
    %v4674 = vpop.permute.xlu0 %4673
    %v4676 = vsel %vm1496, %v4622, 0
    %v4679 = vsel %vm1625, %v4674, 0
    %4681 = vmatprep.subr.bf16.mxu0 0
    %4682 = vmatpush1.bf16.msra.mxu0 %v4679
    %4683 = vmatprep.subr.bf16.mxu0 0
    %4684 = vmatpush1.bf16.msra.mxu0 0
    %4685 = vmatprep.subr.bf16.mxu0 0
    %4686 = vmatpush1.bf16.msra.mxu0 0
    %4687 = vmatprep.subr.bf16.mxu0 0
    %4688 = vmatpush1.bf16.msra.mxu0 0
    %4689 = vmatprep.subr.bf16.mxu0 0
    %4690 = vmatpush1.bf16.msra.mxu0 0
    %4691 = vmatprep.subr.bf16.mxu0 0
    %4692 = vmatpush1.bf16.msra.mxu0 0
    %4693 = vmatprep.subr.bf16.mxu0 0
    %4694 = vmatpush1.bf16.msra.mxu0 0
    %4695 = vmatprep.subr.bf16.mxu0 0
    %4696 = vmatpush1.bf16.msra.mxu0 0
    %4697 = vmatprep.subr.bf16.mxu0 0
    %4698 = vmatpush1.bf16.msra.mxu0 0
    %4699 = vmatprep.subr.bf16.mxu0 0
    %4700 = vmatpush1.bf16.msra.mxu0 0
    %4701 = vmatprep.subr.bf16.mxu0 0
    %4702 = vmatpush1.bf16.msra.mxu0 0
    %4703 = vmatprep.subr.bf16.mxu0 0
    %4704 = vmatpush1.bf16.msra.mxu0 0
    %4705 = vmatprep.subr.bf16.mxu0 0
    %4706 = vmatpush1.bf16.msra.mxu0 0
    %4707 = vmatprep.subr.bf16.mxu0 0
    %4708 = vmatpush1.bf16.msra.mxu0 0
    %4709 = vmatprep.subr.bf16.mxu0 0
    %4710 = vmatpush1.bf16.msra.mxu0 0
    %4711 = vmatprep.subr.bf16.mxu0 0
    %4712 = vmatpush1.bf16.msra.mxu0 0
    %4713 = vmatprep.mubr.bf16.mxu0 0
    %4714 = vmatmul.mubr.bf16.gmra.mrb[0].mxu0 %v4676
    %v4715 = vpop.f32.mrb[0].mxu0
    %v4716 = vadd.f32 0.0, %v4715
    %v4717 = vpop.f32.mrb[0].mxu0
    %v4718 = vpop.f32.mrb[0].mxu0
    %v4719 = vpop.f32.mrb[0].mxu0
    %4720 = vdwg.mxu0
    %4722 = vrot.lane.b32.xlu0 %v4500, 120
    %v4723 = vpop.permute.xlu0 %4722
    %4724 = vrot.lane.b32.xlu0 %v4502, 120
    %v4725 = vpop.permute.xlu0 %4724
    %v4727 = vsel %vm1496, %v4723, 0
    %v4730 = vsel %vm1496, %v4725, 0
    %4732 = vmatprep.subr.bf16.mxu0 0
    %4733 = vmatpush1.bf16.xpose.msra.mxu0 %v4730
    %4734 = vmatprep.subr.bf16.mxu0 0
    %4735 = vmatpush1.bf16.xpose.msra.mxu0 0
    %4736 = vmatprep.subr.bf16.mxu0 0
    %4737 = vmatpush1.bf16.xpose.msra.mxu0 0
    %4738 = vmatprep.subr.bf16.mxu0 0
    %4739 = vmatpush1.bf16.xpose.msra.mxu0 0
    %4740 = vmatprep.subr.bf16.mxu0 0
    %4741 = vmatpush1.bf16.xpose.msra.mxu0 0
    %4742 = vmatprep.subr.bf16.mxu0 0
    %4743 = vmatpush1.bf16.xpose.msra.mxu0 0
    %4744 = vmatprep.subr.bf16.mxu0 0
    %4745 = vmatpush1.bf16.xpose.msra.mxu0 0
    %4746 = vmatprep.subr.bf16.mxu0 0
    %4747 = vmatpush1.bf16.xpose.msra.mxu0 0
    %4748 = vmatprep.subr.bf16.mxu0 0
    %4749 = vmatpush1.bf16.xpose.msra.mxu0 0
    %4750 = vmatprep.subr.bf16.mxu0 0
    %4751 = vmatpush1.bf16.xpose.msra.mxu0 0
    %4752 = vmatprep.subr.bf16.mxu0 0
    %4753 = vmatpush1.bf16.xpose.msra.mxu0 0
    %4754 = vmatprep.subr.bf16.mxu0 0
    %4755 = vmatpush1.bf16.xpose.msra.mxu0 0
    %4756 = vmatprep.subr.bf16.mxu0 0
    %4757 = vmatpush1.bf16.xpose.msra.mxu0 0
    %4758 = vmatprep.subr.bf16.mxu0 0
    %4759 = vmatpush1.bf16.xpose.msra.mxu0 0
    %4760 = vmatprep.subr.bf16.mxu0 0
    %4761 = vmatpush1.bf16.xpose.msra.mxu0 0
    %4762 = vmatprep.subr.bf16.mxu0 0
    %4763 = vmatpush1.bf16.xpose.msra.mxu0 0
    %4764 = vmatprep.mubr.bf16.mxu0 0
    %4765 = vmatmul.mubr.bf16.gmra.mrb[0].mxu0 %v4727
    %v4766 = vpop.f32.mrb[0].mxu0
    %v4767 = vadd.f32 0.0, %v4766
    %v4768 = vpop.f32.mrb[0].mxu0
    %v4769 = vpop.f32.mrb[0].mxu0
    %v4770 = vpop.f32.mrb[0].mxu0
    %4771 = vdwg.mxu0
    %4773 = vrot.lane.b32.xlu0 %v4501, 120
    %v4774 = vpop.permute.xlu0 %4773
    %4775 = vrot.lane.b32.xlu0 %v4503, 120
    %v4776 = vpop.permute.xlu0 %4775
    %v4778 = vsel %vm1496, %v4774, 0
    %v4781 = vsel %vm1496, %v4776, 0
    %4783 = vmatprep.subr.bf16.mxu0 0
    %4784 = vmatpush1.bf16.xpose.msra.mxu0 %v4781
    %4785 = vmatprep.subr.bf16.mxu0 0
    %4786 = vmatpush1.bf16.xpose.msra.mxu0 0
    %4787 = vmatprep.subr.bf16.mxu0 0
    %4788 = vmatpush1.bf16.xpose.msra.mxu0 0
    %4789 = vmatprep.subr.bf16.mxu0 0
    %4790 = vmatpush1.bf16.xpose.msra.mxu0 0
    %4791 = vmatprep.subr.bf16.mxu0 0
    %4792 = vmatpush1.bf16.xpose.msra.mxu0 0
    %4793 = vmatprep.subr.bf16.mxu0 0
    %4794 = vmatpush1.bf16.xpose.msra.mxu0 0
    %4795 = vmatprep.subr.bf16.mxu0 0
    %4796 = vmatpush1.bf16.xpose.msra.mxu0 0
    %4797 = vmatprep.subr.bf16.mxu0 0
    %4798 = vmatpush1.bf16.xpose.msra.mxu0 0
    %4799 = vmatprep.subr.bf16.mxu0 0
    %4800 = vmatpush1.bf16.xpose.msra.mxu0 0
    %4801 = vmatprep.subr.bf16.mxu0 0
    %4802 = vmatpush1.bf16.xpose.msra.mxu0 0
    %4803 = vmatprep.subr.bf16.mxu0 0
    %4804 = vmatpush1.bf16.xpose.msra.mxu0 0
    %4805 = vmatprep.subr.bf16.mxu0 0
    %4806 = vmatpush1.bf16.xpose.msra.mxu0 0
    %4807 = vmatprep.subr.bf16.mxu0 0
    %4808 = vmatpush1.bf16.xpose.msra.mxu0 0
    %4809 = vmatprep.subr.bf16.mxu0 0
    %4810 = vmatpush1.bf16.xpose.msra.mxu0 0
    %4811 = vmatprep.subr.bf16.mxu0 0
    %4812 = vmatpush1.bf16.xpose.msra.mxu0 0
    %4813 = vmatprep.subr.bf16.mxu0 0
    %4814 = vmatpush1.bf16.xpose.msra.mxu0 0
    %4815 = vmatprep.mubr.bf16.mxu0 0
    %4816 = vmatmul.mubr.bf16.gmra.mrb[0].mxu0 %v4778
    %v4817 = vpop.f32.mrb[0].mxu0
    %v4818 = vadd.f32 0.0, %v4817
    %v4819 = vpop.f32.mrb[0].mxu0
    %v4820 = vpop.f32.mrb[0].mxu0
    %v4821 = vpop.f32.mrb[0].mxu0
    %4822 = vdwg.mxu0
    %v4823 = vsel %vm1592, -1e+09, %v4767
    %v4824 = vsel %vm1593, -1e+09, %v4818
    %v4825 = vsel %vm4598, %v4823, -inf
    %4826 = vmax.xlane.f32.xlu0 %v4825
    %v4827 = vpop.xlane.xlu0 %4826
    %v4828 = vsel %vm4598, %v4824, -inf
    %4829 = vmax.xlane.f32.xlu0 %v4828
    %v4830 = vpop.xlane.xlu0 %4829
    %v4831 = vsub.f32 %v4823, %v4827
    %v4832 = vsub.f32 %v4824, %v4830
    %v4833 = vmul.f32 %v4831, 1.442695
    %v4834 = vpow.pop %v4833
    %v4835 = vmul.f32 %v4832, 1.442695
    %v4836 = vpow.pop %v4835
    %v4837 = vsel %vm4598, %v4834, 0.0
    %4838 = vadd.xlane.f32.xlu0 %v4837
    %v4839 = vpop.xlane.xlu0 %4838
    %v4840 = vsel %vm4598, %v4836, 0.0
    %4841 = vadd.xlane.f32.xlu0 %v4840
    %v4842 = vpop.xlane.xlu0 %4841
    %v4843 = vrcp.pop %v4839
    %v4844 = vrcp.pop %v4842
    %v4845 = vmul.f32 %v4834, %v4843
    %v4846 = vmul.f32 %v4836, %v4844
    %v4847 = vpack.c.bf16 %v4845, %v4845
    %v4848 = vpack.c.bf16 %v4846, %v4846
    %4849 = vrot.lane.b32.xlu0 %v4502, 88
    %v4850 = vpop.permute.xlu0 %4849
    %v4852 = vsel %vm1496, %v4847, 0
    %v4855 = vsel %vm1625, %v4850, 0
    %4857 = vmatprep.subr.bf16.mxu0 0
    %4858 = vmatpush1.bf16.msra.mxu0 %v4855
    %4859 = vmatprep.subr.bf16.mxu0 0
    %4860 = vmatpush1.bf16.msra.mxu0 0
    %4861 = vmatprep.subr.bf16.mxu0 0
    %4862 = vmatpush1.bf16.msra.mxu0 0
    %4863 = vmatprep.subr.bf16.mxu0 0
    %4864 = vmatpush1.bf16.msra.mxu0 0
    %4865 = vmatprep.subr.bf16.mxu0 0
    %4866 = vmatpush1.bf16.msra.mxu0 0
    %4867 = vmatprep.subr.bf16.mxu0 0
    %4868 = vmatpush1.bf16.msra.mxu0 0
    %4869 = vmatprep.subr.bf16.mxu0 0
    %4870 = vmatpush1.bf16.msra.mxu0 0
    %4871 = vmatprep.subr.bf16.mxu0 0
    %4872 = vmatpush1.bf16.msra.mxu0 0
    %4873 = vmatprep.subr.bf16.mxu0 0
    %4874 = vmatpush1.bf16.msra.mxu0 0
    %4875 = vmatprep.subr.bf16.mxu0 0
    %4876 = vmatpush1.bf16.msra.mxu0 0
    %4877 = vmatprep.subr.bf16.mxu0 0
    %4878 = vmatpush1.bf16.msra.mxu0 0
    %4879 = vmatprep.subr.bf16.mxu0 0
    %4880 = vmatpush1.bf16.msra.mxu0 0
    %4881 = vmatprep.subr.bf16.mxu0 0
    %4882 = vmatpush1.bf16.msra.mxu0 0
    %4883 = vmatprep.subr.bf16.mxu0 0
    %4884 = vmatpush1.bf16.msra.mxu0 0
    %4885 = vmatprep.subr.bf16.mxu0 0
    %4886 = vmatpush1.bf16.msra.mxu0 0
    %4887 = vmatprep.subr.bf16.mxu0 0
    %4888 = vmatpush1.bf16.msra.mxu0 0
    %4889 = vmatprep.mubr.bf16.mxu0 0
    %4890 = vmatmul.mubr.bf16.gmra.mrb[0].mxu0 %v4852
    %v4891 = vpop.f32.mrb[0].mxu0
    %v4892 = vadd.f32 0.0, %v4891
    %v4893 = vpop.f32.mrb[0].mxu0
    %v4894 = vpop.f32.mrb[0].mxu0
    %v4895 = vpop.f32.mrb[0].mxu0
    %4896 = vdwg.mxu0
    %4897 = vrot.lane.b32.xlu0 %v4503, 88
    %v4898 = vpop.permute.xlu0 %4897
    %v4900 = vsel %vm1496, %v4848, 0
    %v4903 = vsel %vm1625, %v4898, 0
    %4905 = vmatprep.subr.bf16.mxu0 0
    %4906 = vmatpush1.bf16.msra.mxu0 %v4903
    %4907 = vmatprep.subr.bf16.mxu0 0
    %4908 = vmatpush1.bf16.msra.mxu0 0
    %4909 = vmatprep.subr.bf16.mxu0 0
    %4910 = vmatpush1.bf16.msra.mxu0 0
    %4911 = vmatprep.subr.bf16.mxu0 0
    %4912 = vmatpush1.bf16.msra.mxu0 0
    %4913 = vmatprep.subr.bf16.mxu0 0
    %4914 = vmatpush1.bf16.msra.mxu0 0
    %4915 = vmatprep.subr.bf16.mxu0 0
    %4916 = vmatpush1.bf16.msra.mxu0 0
    %4917 = vmatprep.subr.bf16.mxu0 0
    %4918 = vmatpush1.bf16.msra.mxu0 0
    %4919 = vmatprep.subr.bf16.mxu0 0
    %4920 = vmatpush1.bf16.msra.mxu0 0
    %4921 = vmatprep.subr.bf16.mxu0 0
    %4922 = vmatpush1.bf16.msra.mxu0 0
    %4923 = vmatprep.subr.bf16.mxu0 0
    %4924 = vmatpush1.bf16.msra.mxu0 0
    %4925 = vmatprep.subr.bf16.mxu0 0
    %4926 = vmatpush1.bf16.msra.mxu0 0
    %4927 = vmatprep.subr.bf16.mxu0 0
    %4928 = vmatpush1.bf16.msra.mxu0 0
    %4929 = vmatprep.subr.bf16.mxu0 0
    %4930 = vmatpush1.bf16.msra.mxu0 0
    %4931 = vmatprep.subr.bf16.mxu0 0
    %4932 = vmatpush1.bf16.msra.mxu0 0
    %4933 = vmatprep.subr.bf16.mxu0 0
    %4934 = vmatpush1.bf16.msra.mxu0 0
    %4935 = vmatprep.subr.bf16.mxu0 0
    %4936 = vmatpush1.bf16.msra.mxu0 0
    %4937 = vmatprep.mubr.bf16.mxu0 0
    %4938 = vmatmul.mubr.bf16.gmra.mrb[0].mxu0 %v4900
    %v4939 = vpop.f32.mrb[0].mxu0
    %v4940 = vadd.f32 0.0, %v4939
    %v4941 = vpop.f32.mrb[0].mxu0
    %v4942 = vpop.f32.mrb[0].mxu0
    %v4943 = vpop.f32.mrb[0].mxu0
    %4944 = vdwg.mxu0
    %4945 = vrot.lane.b32.xlu0 %v4500, 112
    %v4946 = vpop.permute.xlu0 %4945
    %4947 = vrot.lane.b32.xlu0 %v4502, 112
    %v4948 = vpop.permute.xlu0 %4947
    %v4950 = vsel %vm1496, %v4946, 0
    %v4953 = vsel %vm1496, %v4948, 0
    %4955 = vmatprep.subr.bf16.mxu0 0
    %4956 = vmatpush1.bf16.xpose.msra.mxu0 %v4953
    %4957 = vmatprep.subr.bf16.mxu0 0
    %4958 = vmatpush1.bf16.xpose.msra.mxu0 0
    %4959 = vmatprep.subr.bf16.mxu0 0
    %4960 = vmatpush1.bf16.xpose.msra.mxu0 0
    %4961 = vmatprep.subr.bf16.mxu0 0
    %4962 = vmatpush1.bf16.xpose.msra.mxu0 0
    %4963 = vmatprep.subr.bf16.mxu0 0
    %4964 = vmatpush1.bf16.xpose.msra.mxu0 0
    %4965 = vmatprep.subr.bf16.mxu0 0
    %4966 = vmatpush1.bf16.xpose.msra.mxu0 0
    %4967 = vmatprep.subr.bf16.mxu0 0
    %4968 = vmatpush1.bf16.xpose.msra.mxu0 0
    %4969 = vmatprep.subr.bf16.mxu0 0
    %4970 = vmatpush1.bf16.xpose.msra.mxu0 0
    %4971 = vmatprep.subr.bf16.mxu0 0
    %4972 = vmatpush1.bf16.xpose.msra.mxu0 0
    %4973 = vmatprep.subr.bf16.mxu0 0
    %4974 = vmatpush1.bf16.xpose.msra.mxu0 0
    %4975 = vmatprep.subr.bf16.mxu0 0
    %4976 = vmatpush1.bf16.xpose.msra.mxu0 0
    %4977 = vmatprep.subr.bf16.mxu0 0
    %4978 = vmatpush1.bf16.xpose.msra.mxu0 0
    %4979 = vmatprep.subr.bf16.mxu0 0
    %4980 = vmatpush1.bf16.xpose.msra.mxu0 0
    %4981 = vmatprep.subr.bf16.mxu0 0
    %4982 = vmatpush1.bf16.xpose.msra.mxu0 0
    %4983 = vmatprep.subr.bf16.mxu0 0
    %4984 = vmatpush1.bf16.xpose.msra.mxu0 0
    %4985 = vmatprep.subr.bf16.mxu0 0
    %4986 = vmatpush1.bf16.xpose.msra.mxu0 0
    %4987 = vmatprep.mubr.bf16.mxu0 0
    %4988 = vmatmul.mubr.bf16.gmra.mrb[0].mxu0 %v4950
    %v4989 = vpop.f32.mrb[0].mxu0
    %v4990 = vadd.f32 0.0, %v4989
    %v4991 = vpop.f32.mrb[0].mxu0
    %v4992 = vpop.f32.mrb[0].mxu0
    %v4993 = vpop.f32.mrb[0].mxu0
    %4994 = vdwg.mxu0
    %4995 = vrot.lane.b32.xlu0 %v4501, 112
    %v4996 = vpop.permute.xlu0 %4995
    %4997 = vrot.lane.b32.xlu0 %v4503, 112
    %v4998 = vpop.permute.xlu0 %4997
    %v5000 = vsel %vm1496, %v4996, 0
    %v5003 = vsel %vm1496, %v4998, 0
    %5005 = vmatprep.subr.bf16.mxu0 0
    %5006 = vmatpush1.bf16.xpose.msra.mxu0 %v5003
    %5007 = vmatprep.subr.bf16.mxu0 0
    %5008 = vmatpush1.bf16.xpose.msra.mxu0 0
    %5009 = vmatprep.subr.bf16.mxu0 0
    %5010 = vmatpush1.bf16.xpose.msra.mxu0 0
    %5011 = vmatprep.subr.bf16.mxu0 0
    %5012 = vmatpush1.bf16.xpose.msra.mxu0 0
    %5013 = vmatprep.subr.bf16.mxu0 0
    %5014 = vmatpush1.bf16.xpose.msra.mxu0 0
    %5015 = vmatprep.subr.bf16.mxu0 0
    %5016 = vmatpush1.bf16.xpose.msra.mxu0 0
    %5017 = vmatprep.subr.bf16.mxu0 0
    %5018 = vmatpush1.bf16.xpose.msra.mxu0 0
    %5019 = vmatprep.subr.bf16.mxu0 0
    %5020 = vmatpush1.bf16.xpose.msra.mxu0 0
    %5021 = vmatprep.subr.bf16.mxu0 0
    %5022 = vmatpush1.bf16.xpose.msra.mxu0 0
    %5023 = vmatprep.subr.bf16.mxu0 0
    %5024 = vmatpush1.bf16.xpose.msra.mxu0 0
    %5025 = vmatprep.subr.bf16.mxu0 0
    %5026 = vmatpush1.bf16.xpose.msra.mxu0 0
    %5027 = vmatprep.subr.bf16.mxu0 0
    %5028 = vmatpush1.bf16.xpose.msra.mxu0 0
    %5029 = vmatprep.subr.bf16.mxu0 0
    %5030 = vmatpush1.bf16.xpose.msra.mxu0 0
    %5031 = vmatprep.subr.bf16.mxu0 0
    %5032 = vmatpush1.bf16.xpose.msra.mxu0 0
    %5033 = vmatprep.subr.bf16.mxu0 0
    %5034 = vmatpush1.bf16.xpose.msra.mxu0 0
    %5035 = vmatprep.subr.bf16.mxu0 0
    %5036 = vmatpush1.bf16.xpose.msra.mxu0 0
    %5037 = vmatprep.mubr.bf16.mxu0 0
    %5038 = vmatmul.mubr.bf16.gmra.mrb[0].mxu0 %v5000
    %v5039 = vpop.f32.mrb[0].mxu0
    %v5040 = vadd.f32 0.0, %v5039
    %v5041 = vpop.f32.mrb[0].mxu0
    %v5042 = vpop.f32.mrb[0].mxu0
    %v5043 = vpop.f32.mrb[0].mxu0
    %5044 = vdwg.mxu0
    %v5045 = vsel %vm1592, -1e+09, %v4990
    %v5046 = vsel %vm1593, -1e+09, %v5040
    %v5047 = vsel %vm4598, %v5045, -inf
    %5048 = vmax.xlane.f32.xlu0 %v5047
    %v5049 = vpop.xlane.xlu0 %5048
    %v5050 = vsel %vm4598, %v5046, -inf
    %5051 = vmax.xlane.f32.xlu0 %v5050
    %v5052 = vpop.xlane.xlu0 %5051
    %v5053 = vsub.f32 %v5045, %v5049
    %v5054 = vsub.f32 %v5046, %v5052
    %v5055 = vmul.f32 %v5053, 1.442695
    %v5056 = vpow.pop %v5055
    %v5057 = vmul.f32 %v5054, 1.442695
    %v5058 = vpow.pop %v5057
    %v5059 = vsel %vm4598, %v5056, 0.0
    %5060 = vadd.xlane.f32.xlu0 %v5059
    %v5061 = vpop.xlane.xlu0 %5060
    %v5062 = vsel %vm4598, %v5058, 0.0
    %5063 = vadd.xlane.f32.xlu0 %v5062
    %v5064 = vpop.xlane.xlu0 %5063
    %v5065 = vrcp.pop %v5061
    %v5066 = vrcp.pop %v5064
    %v5067 = vmul.f32 %v5056, %v5065
    %v5068 = vmul.f32 %v5058, %v5066
    %v5069 = vpack.c.bf16 %v5067, %v5067
    %v5070 = vpack.c.bf16 %v5068, %v5068
    %5071 = vrot.lane.b32.xlu0 %v4502, 80
    %v5072 = vpop.permute.xlu0 %5071
    %v5074 = vsel %vm1496, %v5069, 0
    %v5077 = vsel %vm1625, %v5072, 0
    %5079 = vmatprep.subr.bf16.mxu0 0
    %5080 = vmatpush1.bf16.msra.mxu0 %v5077
    %5081 = vmatprep.subr.bf16.mxu0 0
    %5082 = vmatpush1.bf16.msra.mxu0 0
    %5083 = vmatprep.subr.bf16.mxu0 0
    %5084 = vmatpush1.bf16.msra.mxu0 0
    %5085 = vmatprep.subr.bf16.mxu0 0
    %5086 = vmatpush1.bf16.msra.mxu0 0
    %5087 = vmatprep.subr.bf16.mxu0 0
    %5088 = vmatpush1.bf16.msra.mxu0 0
    %5089 = vmatprep.subr.bf16.mxu0 0
    %5090 = vmatpush1.bf16.msra.mxu0 0
    %5091 = vmatprep.subr.bf16.mxu0 0
    %5092 = vmatpush1.bf16.msra.mxu0 0
    %5093 = vmatprep.subr.bf16.mxu0 0
    %5094 = vmatpush1.bf16.msra.mxu0 0
    %5095 = vmatprep.subr.bf16.mxu0 0
    %5096 = vmatpush1.bf16.msra.mxu0 0
    %5097 = vmatprep.subr.bf16.mxu0 0
    %5098 = vmatpush1.bf16.msra.mxu0 0
    %5099 = vmatprep.subr.bf16.mxu0 0
    %5100 = vmatpush1.bf16.msra.mxu0 0
    %5101 = vmatprep.subr.bf16.mxu0 0
    %5102 = vmatpush1.bf16.msra.mxu0 0
    %5103 = vmatprep.subr.bf16.mxu0 0
    %5104 = vmatpush1.bf16.msra.mxu0 0
    %5105 = vmatprep.subr.bf16.mxu0 0
    %5106 = vmatpush1.bf16.msra.mxu0 0
    %5107 = vmatprep.subr.bf16.mxu0 0
    %5108 = vmatpush1.bf16.msra.mxu0 0
    %5109 = vmatprep.subr.bf16.mxu0 0
    %5110 = vmatpush1.bf16.msra.mxu0 0
    %5111 = vmatprep.mubr.bf16.mxu0 0
    %5112 = vmatmul.mubr.bf16.gmra.mrb[0].mxu0 %v5074
    %v5113 = vpop.f32.mrb[0].mxu0
    %v5114 = vadd.f32 0.0, %v5113
    %v5115 = vpop.f32.mrb[0].mxu0
    %v5116 = vpop.f32.mrb[0].mxu0
    %v5117 = vpop.f32.mrb[0].mxu0
    %5118 = vdwg.mxu0
    %5119 = vrot.lane.b32.xlu0 %v4503, 80
    %v5120 = vpop.permute.xlu0 %5119
    %v5122 = vsel %vm1496, %v5070, 0
    %v5125 = vsel %vm1625, %v5120, 0
    %5127 = vmatprep.subr.bf16.mxu0 0
    %5128 = vmatpush1.bf16.msra.mxu0 %v5125
    %5129 = vmatprep.subr.bf16.mxu0 0
    %5130 = vmatpush1.bf16.msra.mxu0 0
    %5131 = vmatprep.subr.bf16.mxu0 0
    %5132 = vmatpush1.bf16.msra.mxu0 0
    %5133 = vmatprep.subr.bf16.mxu0 0
    %5134 = vmatpush1.bf16.msra.mxu0 0
    %5135 = vmatprep.subr.bf16.mxu0 0
    %5136 = vmatpush1.bf16.msra.mxu0 0
    %5137 = vmatprep.subr.bf16.mxu0 0
    %5138 = vmatpush1.bf16.msra.mxu0 0
    %5139 = vmatprep.subr.bf16.mxu0 0
    %5140 = vmatpush1.bf16.msra.mxu0 0
    %5141 = vmatprep.subr.bf16.mxu0 0
    %5142 = vmatpush1.bf16.msra.mxu0 0
    %5143 = vmatprep.subr.bf16.mxu0 0
    %5144 = vmatpush1.bf16.msra.mxu0 0
    %5145 = vmatprep.subr.bf16.mxu0 0
    %5146 = vmatpush1.bf16.msra.mxu0 0
    %5147 = vmatprep.subr.bf16.mxu0 0
    %5148 = vmatpush1.bf16.msra.mxu0 0
    %5149 = vmatprep.subr.bf16.mxu0 0
    %5150 = vmatpush1.bf16.msra.mxu0 0
    %5151 = vmatprep.subr.bf16.mxu0 0
    %5152 = vmatpush1.bf16.msra.mxu0 0
    %5153 = vmatprep.subr.bf16.mxu0 0
    %5154 = vmatpush1.bf16.msra.mxu0 0
    %5155 = vmatprep.subr.bf16.mxu0 0
    %5156 = vmatpush1.bf16.msra.mxu0 0
    %5157 = vmatprep.subr.bf16.mxu0 0
    %5158 = vmatpush1.bf16.msra.mxu0 0
    %5159 = vmatprep.mubr.bf16.mxu0 0
    %5160 = vmatmul.mubr.bf16.gmra.mrb[0].mxu0 %v5122
    %v5161 = vpop.f32.mrb[0].mxu0
    %v5162 = vadd.f32 0.0, %v5161
    %v5163 = vpop.f32.mrb[0].mxu0
    %v5164 = vpop.f32.mrb[0].mxu0
    %v5165 = vpop.f32.mrb[0].mxu0
    %5166 = vdwg.mxu0
    %5167 = vrot.lane.b32.xlu0 %v4500, 104
    %v5168 = vpop.permute.xlu0 %5167
    %5169 = vrot.lane.b32.xlu0 %v4502, 104
    %v5170 = vpop.permute.xlu0 %5169
    %v5172 = vsel %vm1496, %v5168, 0
    %v5175 = vsel %vm1496, %v5170, 0
    %5177 = vmatprep.subr.bf16.mxu0 0
    %5178 = vmatpush1.bf16.xpose.msra.mxu0 %v5175
    %5179 = vmatprep.subr.bf16.mxu0 0
    %5180 = vmatpush1.bf16.xpose.msra.mxu0 0
    %5181 = vmatprep.subr.bf16.mxu0 0
    %5182 = vmatpush1.bf16.xpose.msra.mxu0 0
    %5183 = vmatprep.subr.bf16.mxu0 0
    %5184 = vmatpush1.bf16.xpose.msra.mxu0 0
    %5185 = vmatprep.subr.bf16.mxu0 0
    %5186 = vmatpush1.bf16.xpose.msra.mxu0 0
    %5187 = vmatprep.subr.bf16.mxu0 0
    %5188 = vmatpush1.bf16.xpose.msra.mxu0 0
    %5189 = vmatprep.subr.bf16.mxu0 0
    %5190 = vmatpush1.bf16.xpose.msra.mxu0 0
    %5191 = vmatprep.subr.bf16.mxu0 0
    %5192 = vmatpush1.bf16.xpose.msra.mxu0 0
    %5193 = vmatprep.subr.bf16.mxu0 0
    %5194 = vmatpush1.bf16.xpose.msra.mxu0 0
    %5195 = vmatprep.subr.bf16.mxu0 0
    %5196 = vmatpush1.bf16.xpose.msra.mxu0 0
    %5197 = vmatprep.subr.bf16.mxu0 0
    %5198 = vmatpush1.bf16.xpose.msra.mxu0 0
    %5199 = vmatprep.subr.bf16.mxu0 0
    %5200 = vmatpush1.bf16.xpose.msra.mxu0 0
    %5201 = vmatprep.subr.bf16.mxu0 0
    %5202 = vmatpush1.bf16.xpose.msra.mxu0 0
    %5203 = vmatprep.subr.bf16.mxu0 0
    %5204 = vmatpush1.bf16.xpose.msra.mxu0 0
    %5205 = vmatprep.subr.bf16.mxu0 0
    %5206 = vmatpush1.bf16.xpose.msra.mxu0 0
    %5207 = vmatprep.subr.bf16.mxu0 0
    %5208 = vmatpush1.bf16.xpose.msra.mxu0 0
    %5209 = vmatprep.mubr.bf16.mxu0 0
    %5210 = vmatmul.mubr.bf16.gmra.mrb[0].mxu0 %v5172
    %v5211 = vpop.f32.mrb[0].mxu0
    %v5212 = vadd.f32 0.0, %v5211
    %v5213 = vpop.f32.mrb[0].mxu0
    %v5214 = vpop.f32.mrb[0].mxu0
    %v5215 = vpop.f32.mrb[0].mxu0
    %5216 = vdwg.mxu0
    %5217 = vrot.lane.b32.xlu0 %v4501, 104
    %v5218 = vpop.permute.xlu0 %5217
    %5219 = vrot.lane.b32.xlu0 %v4503, 104
    %v5220 = vpop.permute.xlu0 %5219
    %v5222 = vsel %vm1496, %v5218, 0
    %v5225 = vsel %vm1496, %v5220, 0
    %5227 = vmatprep.subr.bf16.mxu0 0
    %5228 = vmatpush1.bf16.xpose.msra.mxu0 %v5225
    %5229 = vmatprep.subr.bf16.mxu0 0
    %5230 = vmatpush1.bf16.xpose.msra.mxu0 0
    %5231 = vmatprep.subr.bf16.mxu0 0
    %5232 = vmatpush1.bf16.xpose.msra.mxu0 0
    %5233 = vmatprep.subr.bf16.mxu0 0
    %5234 = vmatpush1.bf16.xpose.msra.mxu0 0
    %5235 = vmatprep.subr.bf16.mxu0 0
    %5236 = vmatpush1.bf16.xpose.msra.mxu0 0
    %5237 = vmatprep.subr.bf16.mxu0 0
    %5238 = vmatpush1.bf16.xpose.msra.mxu0 0
    %5239 = vmatprep.subr.bf16.mxu0 0
    %5240 = vmatpush1.bf16.xpose.msra.mxu0 0
    %5241 = vmatprep.subr.bf16.mxu0 0
    %5242 = vmatpush1.bf16.xpose.msra.mxu0 0
    %5243 = vmatprep.subr.bf16.mxu0 0
    %5244 = vmatpush1.bf16.xpose.msra.mxu0 0
    %5245 = vmatprep.subr.bf16.mxu0 0
    %5246 = vmatpush1.bf16.xpose.msra.mxu0 0
    %5247 = vmatprep.subr.bf16.mxu0 0
    %5248 = vmatpush1.bf16.xpose.msra.mxu0 0
    %5249 = vmatprep.subr.bf16.mxu0 0
    %5250 = vmatpush1.bf16.xpose.msra.mxu0 0
    %5251 = vmatprep.subr.bf16.mxu0 0
    %5252 = vmatpush1.bf16.xpose.msra.mxu0 0
    %5253 = vmatprep.subr.bf16.mxu0 0
    %5254 = vmatpush1.bf16.xpose.msra.mxu0 0
    %5255 = vmatprep.subr.bf16.mxu0 0
    %5256 = vmatpush1.bf16.xpose.msra.mxu0 0
    %5257 = vmatprep.subr.bf16.mxu0 0
    %5258 = vmatpush1.bf16.xpose.msra.mxu0 0
    %5259 = vmatprep.mubr.bf16.mxu0 0
    %5260 = vmatmul.mubr.bf16.gmra.mrb[0].mxu0 %v5222
    %v5261 = vpop.f32.mrb[0].mxu0
    %v5262 = vadd.f32 0.0, %v5261
    %v5263 = vpop.f32.mrb[0].mxu0
    %v5264 = vpop.f32.mrb[0].mxu0
    %v5265 = vpop.f32.mrb[0].mxu0
    %5266 = vdwg.mxu0
    %v5267 = vsel %vm1592, -1e+09, %v5212
    %v5268 = vsel %vm1593, -1e+09, %v5262
    %v5269 = vsel %vm4598, %v5267, -inf
    %5270 = vmax.xlane.f32.xlu0 %v5269
    %v5271 = vpop.xlane.xlu0 %5270
    %v5272 = vsel %vm4598, %v5268, -inf
    %5273 = vmax.xlane.f32.xlu0 %v5272
    %v5274 = vpop.xlane.xlu0 %5273
    %v5275 = vsub.f32 %v5267, %v5271
    %v5276 = vsub.f32 %v5268, %v5274
    %v5277 = vmul.f32 %v5275, 1.442695
    %v5278 = vpow.pop %v5277
    %v5279 = vmul.f32 %v5276, 1.442695
    %v5280 = vpow.pop %v5279
    %v5281 = vsel %vm4598, %v5278, 0.0
    %5282 = vadd.xlane.f32.xlu0 %v5281
    %v5283 = vpop.xlane.xlu0 %5282
    %v5284 = vsel %vm4598, %v5280, 0.0
    %5285 = vadd.xlane.f32.xlu0 %v5284
    %v5286 = vpop.xlane.xlu0 %5285
    %v5287 = vrcp.pop %v5283
    %v5288 = vrcp.pop %v5286
    %v5289 = vmul.f32 %v5278, %v5287
    %v5290 = vmul.f32 %v5280, %v5288
    %v5291 = vpack.c.bf16 %v5289, %v5289
    %v5292 = vpack.c.bf16 %v5290, %v5290
    %5293 = vrot.lane.b32.xlu0 %v4502, 72
    %v5294 = vpop.permute.xlu0 %5293
    %v5296 = vsel %vm1496, %v5291, 0
    %v5299 = vsel %vm1625, %v5294, 0
    %5301 = vmatprep.subr.bf16.mxu0 0
    %5302 = vmatpush1.bf16.msra.mxu0 %v5299
    %5303 = vmatprep.subr.bf16.mxu0 0
    %5304 = vmatpush1.bf16.msra.mxu0 0
    %5305 = vmatprep.subr.bf16.mxu0 0
    %5306 = vmatpush1.bf16.msra.mxu0 0
    %5307 = vmatprep.subr.bf16.mxu0 0
    %5308 = vmatpush1.bf16.msra.mxu0 0
    %5309 = vmatprep.subr.bf16.mxu0 0
    %5310 = vmatpush1.bf16.msra.mxu0 0
    %5311 = vmatprep.subr.bf16.mxu0 0
    %5312 = vmatpush1.bf16.msra.mxu0 0
    %5313 = vmatprep.subr.bf16.mxu0 0
    %5314 = vmatpush1.bf16.msra.mxu0 0
    %5315 = vmatprep.subr.bf16.mxu0 0
    %5316 = vmatpush1.bf16.msra.mxu0 0
    %5317 = vmatprep.subr.bf16.mxu0 0
    %5318 = vmatpush1.bf16.msra.mxu0 0
    %5319 = vmatprep.subr.bf16.mxu0 0
    %5320 = vmatpush1.bf16.msra.mxu0 0
    %5321 = vmatprep.subr.bf16.mxu0 0
    %5322 = vmatpush1.bf16.msra.mxu0 0
    %5323 = vmatprep.subr.bf16.mxu0 0
    %5324 = vmatpush1.bf16.msra.mxu0 0
    %5325 = vmatprep.subr.bf16.mxu0 0
    %5326 = vmatpush1.bf16.msra.mxu0 0
    %5327 = vmatprep.subr.bf16.mxu0 0
    %5328 = vmatpush1.bf16.msra.mxu0 0
    %5329 = vmatprep.subr.bf16.mxu0 0
    %5330 = vmatpush1.bf16.msra.mxu0 0
    %5331 = vmatprep.subr.bf16.mxu0 0
    %5332 = vmatpush1.bf16.msra.mxu0 0
    %5333 = vmatprep.mubr.bf16.mxu0 0
    %5334 = vmatmul.mubr.bf16.gmra.mrb[0].mxu0 %v5296
    %v5335 = vpop.f32.mrb[0].mxu0
    %v5336 = vadd.f32 0.0, %v5335
    %v5337 = vpop.f32.mrb[0].mxu0
    %v5338 = vpop.f32.mrb[0].mxu0
    %v5339 = vpop.f32.mrb[0].mxu0
    %5340 = vdwg.mxu0
    %5341 = vrot.lane.b32.xlu0 %v4503, 72
    %v5342 = vpop.permute.xlu0 %5341
    %v5344 = vsel %vm1496, %v5292, 0
    %v5347 = vsel %vm1625, %v5342, 0
    %5349 = vmatprep.subr.bf16.mxu0 0
    %5350 = vmatpush1.bf16.msra.mxu0 %v5347
    %5351 = vmatprep.subr.bf16.mxu0 0
    %5352 = vmatpush1.bf16.msra.mxu0 0
    %5353 = vmatprep.subr.bf16.mxu0 0
    %5354 = vmatpush1.bf16.msra.mxu0 0
    %5355 = vmatprep.subr.bf16.mxu0 0
    %5356 = vmatpush1.bf16.msra.mxu0 0
    %5357 = vmatprep.subr.bf16.mxu0 0
    %5358 = vmatpush1.bf16.msra.mxu0 0
    %5359 = vmatprep.subr.bf16.mxu0 0
    %5360 = vmatpush1.bf16.msra.mxu0 0
    %5361 = vmatprep.subr.bf16.mxu0 0
    %5362 = vmatpush1.bf16.msra.mxu0 0
    %5363 = vmatprep.subr.bf16.mxu0 0
    %5364 = vmatpush1.bf16.msra.mxu0 0
    %5365 = vmatprep.subr.bf16.mxu0 0
    %5366 = vmatpush1.bf16.msra.mxu0 0
    %5367 = vmatprep.subr.bf16.mxu0 0
    %5368 = vmatpush1.bf16.msra.mxu0 0
    %5369 = vmatprep.subr.bf16.mxu0 0
    %5370 = vmatpush1.bf16.msra.mxu0 0
    %5371 = vmatprep.subr.bf16.mxu0 0
    %5372 = vmatpush1.bf16.msra.mxu0 0
    %5373 = vmatprep.subr.bf16.mxu0 0
    %5374 = vmatpush1.bf16.msra.mxu0 0
    %5375 = vmatprep.subr.bf16.mxu0 0
    %5376 = vmatpush1.bf16.msra.mxu0 0
    %5377 = vmatprep.subr.bf16.mxu0 0
    %5378 = vmatpush1.bf16.msra.mxu0 0
    %5379 = vmatprep.subr.bf16.mxu0 0
    %5380 = vmatpush1.bf16.msra.mxu0 0
    %5381 = vmatprep.mubr.bf16.mxu0 0
    %5382 = vmatmul.mubr.bf16.gmra.mrb[0].mxu0 %v5344
    %v5383 = vpop.f32.mrb[0].mxu0
    %v5384 = vadd.f32 0.0, %v5383
    %v5385 = vpop.f32.mrb[0].mxu0
    %v5386 = vpop.f32.mrb[0].mxu0
    %v5387 = vpop.f32.mrb[0].mxu0
    %5388 = vdwg.mxu0
    %5391 = vrot.lane.b32.xlu0 %v4892, 8
    %v5392 = vpop.permute.xlu0 %5391
    %5393 = vrot.lane.b32.xlu0 %v4940, 8
    %v5394 = vpop.permute.xlu0 %5393
    %5399 = vrot.lane.b32.xlu0 %v5114, 16
    %v5400 = vpop.permute.xlu0 %5399
    %5401 = vrot.lane.b32.xlu0 %v5162, 16
    %v5402 = vpop.permute.xlu0 %5401
    %5407 = vrot.lane.b32.xlu0 %v5336, 24
    %v5408 = vpop.permute.xlu0 %5407
    %5409 = vrot.lane.b32.xlu0 %v5384, 24
    %v5410 = vpop.permute.xlu0 %5409
    %v5413 = vsel %vm1496, %v4667, %v5392
    %v5414 = vsel %vm1496, %v4716, %v5394
    %v5415 = vsel %vm2411, %v5413, %v5400
    %v5416 = vsel %vm2411, %v5414, %v5402
    %v5417 = vsel %vm2414, %v5415, %v5408
    %v5418 = vsel %vm2414, %v5416, %v5410
    %v5419 = vld [vmem:[%s67] sm:$0xf]
    %v5420 = vld [vmem:[%s67 + $0x4] sm:$0xf]
    %v5421 = vld [vmem:[%s67 + $0x8] sm:$0xf]
    %v5422 = vld [vmem:[%s67 + $0xc] sm:$0xf]
    %v5423 = vpack.c.bf16 %v5417, %v5417
    %v5424 = vpack.c.bf16 %v5418, %v5418
    %v5425 = vld [vmem:[%s69] sm:$0x1]
    %v5430 = vunpack.c.l.b16 %v5419
    %v5431 = vunpack.c.l.b16 %v5420
    %v5432 = vunpack.c.l.b16 %v5421
    %v5433 = vunpack.c.l.b16 %v5422
    %v5434 = vpack.c.b16 %v5431, %v5430
    %v5435 = vpack.c.b16 %v5433, %v5432
    %v5439 = vsel %vm1265, %v5423, 0
    %5441 = vmatprep.subr.bf16.mxu0 0
    %5442 = vmatpush1.bf16.msra.mxu0 %v5434
    %5443 = vmatprep.subr.bf16.mxu0 0
    %5444 = vmatpush1.bf16.msra.mxu0 %v5435
    %5445 = vmatprep.subr.bf16.mxu0 0
    %5446 = vmatpush1.bf16.msra.mxu0 0
    %5447 = vmatprep.subr.bf16.mxu0 0
    %5448 = vmatpush1.bf16.msra.mxu0 0
    %5449 = vmatprep.subr.bf16.mxu0 0
    %5450 = vmatpush1.bf16.msra.mxu0 0
    %5451 = vmatprep.subr.bf16.mxu0 0
    %5452 = vmatpush1.bf16.msra.mxu0 0
    %5453 = vmatprep.subr.bf16.mxu0 0
    %5454 = vmatpush1.bf16.msra.mxu0 0
    %5455 = vmatprep.subr.bf16.mxu0 0
    %5456 = vmatpush1.bf16.msra.mxu0 0
    %5457 = vmatprep.subr.bf16.mxu0 0
    %5458 = vmatpush1.bf16.msra.mxu0 0
    %5459 = vmatprep.subr.bf16.mxu0 0
    %5460 = vmatpush1.bf16.msra.mxu0 0
    %5461 = vmatprep.subr.bf16.mxu0 0
    %5462 = vmatpush1.bf16.msra.mxu0 0
    %5463 = vmatprep.subr.bf16.mxu0 0
    %5464 = vmatpush1.bf16.msra.mxu0 0
    %5465 = vmatprep.subr.bf16.mxu0 0
    %5466 = vmatpush1.bf16.msra.mxu0 0
    %5467 = vmatprep.subr.bf16.mxu0 0
    %5468 = vmatpush1.bf16.msra.mxu0 0
    %5469 = vmatprep.subr.bf16.mxu0 0
    %5470 = vmatpush1.bf16.msra.mxu0 0
    %5471 = vmatprep.subr.bf16.mxu0 0
    %5472 = vmatpush1.bf16.msra.mxu0 0
    %5473 = vmatprep.mubr.bf16.mxu0 0
    %5474 = vmatmul.mubr.bf16.gmra.mrb[0].mxu0 %v5439
    %v5475 = vpop.f32.mrb[0].mxu0
    %v5476 = vadd.f32 %v5425, %v5475
    %v5477 = vpop.f32.mrb[0].mxu0
    %v5478 = vpop.f32.mrb[0].mxu0
    %v5479 = vpop.f32.mrb[0].mxu0
    %5480 = vdwg.mxu0
    %v5482 = vsel %vm1265, %v5424, 0
    %5484 = vmatprep.subr.bf16.mxu0 0
    %5485 = vmatpush1.bf16.msra.mxu0 %v5434
    %5486 = vmatprep.subr.bf16.mxu0 0
    %5487 = vmatpush1.bf16.msra.mxu0 %v5435
    %5488 = vmatprep.subr.bf16.mxu0 0
    %5489 = vmatpush1.bf16.msra.mxu0 0
    %5490 = vmatprep.subr.bf16.mxu0 0
    %5491 = vmatpush1.bf16.msra.mxu0 0
    %5492 = vmatprep.subr.bf16.mxu0 0
    %5493 = vmatpush1.bf16.msra.mxu0 0
    %5494 = vmatprep.subr.bf16.mxu0 0
    %5495 = vmatpush1.bf16.msra.mxu0 0
    %5496 = vmatprep.subr.bf16.mxu0 0
    %5497 = vmatpush1.bf16.msra.mxu0 0
    %5498 = vmatprep.subr.bf16.mxu0 0
    %5499 = vmatpush1.bf16.msra.mxu0 0
    %5500 = vmatprep.subr.bf16.mxu0 0
    %5501 = vmatpush1.bf16.msra.mxu0 0
    %5502 = vmatprep.subr.bf16.mxu0 0
    %5503 = vmatpush1.bf16.msra.mxu0 0
    %5504 = vmatprep.subr.bf16.mxu0 0
    %5505 = vmatpush1.bf16.msra.mxu0 0
    %5506 = vmatprep.subr.bf16.mxu0 0
    %5507 = vmatpush1.bf16.msra.mxu0 0
    %5508 = vmatprep.subr.bf16.mxu0 0
    %5509 = vmatpush1.bf16.msra.mxu0 0
    %5510 = vmatprep.subr.bf16.mxu0 0
    %5511 = vmatpush1.bf16.msra.mxu0 0
    %5512 = vmatprep.subr.bf16.mxu0 0
    %5513 = vmatpush1.bf16.msra.mxu0 0
    %5514 = vmatprep.subr.bf16.mxu0 0
    %5515 = vmatpush1.bf16.msra.mxu0 0
    %5516 = vmatprep.mubr.bf16.mxu0 0
    %5517 = vmatmul.mubr.bf16.gmra.mrb[0].mxu0 %v5482
    %v5518 = vpop.f32.mrb[0].mxu0
    %v5519 = vadd.f32 %v5425, %v5518
    %v5520 = vpop.f32.mrb[0].mxu0
    %v5521 = vpop.f32.mrb[0].mxu0
    %v5522 = vpop.f32.mrb[0].mxu0
    %5523 = vdwg.mxu0
    %v5524 = vadd.f32 %v4325, %v5476
    %v5525 = vadd.f32 %v4326, %v5519
    %v5526 = vld [vmem:[%s71] sm:$0x1]
    %v5527 = vld [vmem:[%s73] sm:$0x1]
    %v5528 = vsel %vm4282, %v5524, 0.0
    %5529 = vadd.xlane.f32.xlu0 %v5528
    %v5530 = vpop.xlane.xlu0 %5529
    %v5531 = vsel %vm4282, %v5525, 0.0
    %5532 = vadd.xlane.f32.xlu0 %v5531
    %v5533 = vpop.xlane.xlu0 %5532
    %v5534 = vmul.f32 %v5530, %v2493
    %v5535 = vmul.f32 %v5533, %v2493
    %v5536 = vsub.f32 %v5524, %v5534
    %v5537 = vsub.f32 %v5525, %v5535
    %v5538 = vmul.f32 %v5536, %v5536
    %v5539 = vmul.f32 %v5537, %v5537
    %v5540 = vsel %vm4282, %v5538, 0.0
    %5541 = vadd.xlane.f32.xlu0 %v5540
    %v5542 = vpop.xlane.xlu0 %5541
    %v5543 = vsel %vm4282, %v5539, 0.0
    %5544 = vadd.xlane.f32.xlu0 %v5543
    %v5545 = vpop.xlane.xlu0 %5544
    %v5546 = vmul.f32 %v5542, 0.032258064
    %v5547 = vmul.f32 %v5545, 0.032258064
    %v5548 = vmul.f32 %v5526, %v5536
    %v5549 = vmul.f32 %v5526, %v5537
    %v5550 = vrsqrt.pop %v5546
    %v5551 = vmul.f32 %v5546, %v5550
    %vm5552 = vcmp.eq.f32.partialorder %v5546, inf
    %v5553 = vsel %vm5552, %v5546, %v5551
    %vm5554 = vcmp.eq.f32.partialorder %v5546, 0.0
    %v5555 = vand.u32 %v5546, 2147483648
    %v5556 = vsel %vm5554, %v5555, %v5553
    %v5557 = vrsqrt.pop %v5547
    %v5558 = vmul.f32 %v5547, %v5557
    %vm5559 = vcmp.eq.f32.partialorder %v5547, inf
    %v5560 = vsel %vm5559, %v5547, %v5558
    %vm5561 = vcmp.eq.f32.partialorder %v5547, 0.0
    %v5562 = vand.u32 %v5547, 2147483648
    %v5563 = vsel %vm5561, %v5562, %v5560
    %v5564 = vadd.f32 %v5556, 1e-06
    %v5565 = vadd.f32 %v5563, 1e-06
    %v5566 = vrcp.pop %v5564
    %v5567 = vmul.f32 %v5548, %v5566
    %v5568 = vrcp.pop %v5565
    %v5569 = vmul.f32 %v5549, %v5568
    %v5570 = vadd.f32 %v5567, %v5527
    %v5571 = vadd.f32 %v5569, %v5527
    %v5572 = vld [vmem:[%s75] sm:$0xf]
    %v5573 = vld [vmem:[%s75 + $0x4] sm:$0xf]
    %v5574 = vld [vmem:[%s75 + $0x8] sm:$0xf]
    %v5575 = vld [vmem:[%s75 + $0xc] sm:$0xf]
    %v5576 = vpack.c.bf16 %v5570, %v5570
    %v5577 = vpack.c.bf16 %v5571, %v5571
    %v5578 = vld [vmem:[%s77] sm:$0x1]
    %v5583 = vunpack.c.l.b16 %v5572
    %v5584 = vunpack.c.l.b16 %v5573
    %v5585 = vunpack.c.l.b16 %v5574
    %v5586 = vunpack.c.l.b16 %v5575
    %v5587 = vpack.c.b16 %v5584, %v5583
    %v5588 = vpack.c.b16 %v5586, %v5585
    %v5592 = vsel %vm1265, %v5576, 0
    %5594 = vmatprep.subr.bf16.mxu0 0
    %5595 = vmatpush1.bf16.msra.mxu0 %v5587
    %5596 = vmatprep.subr.bf16.mxu0 0
    %5597 = vmatpush1.bf16.msra.mxu0 %v5588
    %5598 = vmatprep.subr.bf16.mxu0 0
    %5599 = vmatpush1.bf16.msra.mxu0 0
    %5600 = vmatprep.subr.bf16.mxu0 0
    %5601 = vmatpush1.bf16.msra.mxu0 0
    %5602 = vmatprep.subr.bf16.mxu0 0
    %5603 = vmatpush1.bf16.msra.mxu0 0
    %5604 = vmatprep.subr.bf16.mxu0 0
    %5605 = vmatpush1.bf16.msra.mxu0 0
    %5606 = vmatprep.subr.bf16.mxu0 0
    %5607 = vmatpush1.bf16.msra.mxu0 0
    %5608 = vmatprep.subr.bf16.mxu0 0
    %5609 = vmatpush1.bf16.msra.mxu0 0
    %5610 = vmatprep.subr.bf16.mxu0 0
    %5611 = vmatpush1.bf16.msra.mxu0 0
    %5612 = vmatprep.subr.bf16.mxu0 0
    %5613 = vmatpush1.bf16.msra.mxu0 0
    %5614 = vmatprep.subr.bf16.mxu0 0
    %5615 = vmatpush1.bf16.msra.mxu0 0
    %5616 = vmatprep.subr.bf16.mxu0 0
    %5617 = vmatpush1.bf16.msra.mxu0 0
    %5618 = vmatprep.subr.bf16.mxu0 0
    %5619 = vmatpush1.bf16.msra.mxu0 0
    %5620 = vmatprep.subr.bf16.mxu0 0
    %5621 = vmatpush1.bf16.msra.mxu0 0
    %5622 = vmatprep.subr.bf16.mxu0 0
    %5623 = vmatpush1.bf16.msra.mxu0 0
    %5624 = vmatprep.subr.bf16.mxu0 0
    %5625 = vmatpush1.bf16.msra.mxu0 0
    %5626 = vmatprep.mubr.bf16.mxu0 0
    %5627 = vmatmul.mubr.bf16.gmra.mrb[0].mxu0 %v5592
    %v5628 = vpop.f32.mrb[0].mxu0
    %v5629 = vadd.f32 %v5578, %v5628
    %v5630 = vpop.f32.mrb[0].mxu0
    %v5631 = vpop.f32.mrb[0].mxu0
    %v5632 = vpop.f32.mrb[0].mxu0
    %5633 = vdwg.mxu0
    %v5635 = vsel %vm1265, %v5577, 0
    %5637 = vmatprep.subr.bf16.mxu0 0
    %5638 = vmatpush1.bf16.msra.mxu0 %v5587
    %5639 = vmatprep.subr.bf16.mxu0 0
    %5640 = vmatpush1.bf16.msra.mxu0 %v5588
    %5641 = vmatprep.subr.bf16.mxu0 0
    %5642 = vmatpush1.bf16.msra.mxu0 0
    %5643 = vmatprep.subr.bf16.mxu0 0
    %5644 = vmatpush1.bf16.msra.mxu0 0
    %5645 = vmatprep.subr.bf16.mxu0 0
    %5646 = vmatpush1.bf16.msra.mxu0 0
    %5647 = vmatprep.subr.bf16.mxu0 0
    %5648 = vmatpush1.bf16.msra.mxu0 0
    %5649 = vmatprep.subr.bf16.mxu0 0
    %5650 = vmatpush1.bf16.msra.mxu0 0
    %5651 = vmatprep.subr.bf16.mxu0 0
    %5652 = vmatpush1.bf16.msra.mxu0 0
    %5653 = vmatprep.subr.bf16.mxu0 0
    %5654 = vmatpush1.bf16.msra.mxu0 0
    %5655 = vmatprep.subr.bf16.mxu0 0
    %5656 = vmatpush1.bf16.msra.mxu0 0
    %5657 = vmatprep.subr.bf16.mxu0 0
    %5658 = vmatpush1.bf16.msra.mxu0 0
    %5659 = vmatprep.subr.bf16.mxu0 0
    %5660 = vmatpush1.bf16.msra.mxu0 0
    %5661 = vmatprep.subr.bf16.mxu0 0
    %5662 = vmatpush1.bf16.msra.mxu0 0
    %5663 = vmatprep.subr.bf16.mxu0 0
    %5664 = vmatpush1.bf16.msra.mxu0 0
    %5665 = vmatprep.subr.bf16.mxu0 0
    %5666 = vmatpush1.bf16.msra.mxu0 0
    %5667 = vmatprep.subr.bf16.mxu0 0
    %5668 = vmatpush1.bf16.msra.mxu0 0
    %5669 = vmatprep.mubr.bf16.mxu0 0
    %5670 = vmatmul.mubr.bf16.gmra.mrb[0].mxu0 %v5635
    %v5671 = vpop.f32.mrb[0].mxu0
    %v5672 = vadd.f32 %v5578, %v5671
    %v5673 = vpop.f32.mrb[0].mxu0
    %v5674 = vpop.f32.mrb[0].mxu0
    %v5675 = vpop.f32.mrb[0].mxu0
    %5676 = vdwg.mxu0
    %v5677 = vmax.f32 %v5629, 0.0
    %v5678 = vmax.f32 %v5672, 0.0
    %v5679 = vld [vmem:[%s79] sm:$0xf]
    %v5680 = vld [vmem:[%s79 + $0x4] sm:$0xf]
    %v5681 = vld [vmem:[%s79 + $0x8] sm:$0xf]
    %v5682 = vld [vmem:[%s79 + $0xc] sm:$0xf]
    %v5683 = vld [vmem:[%s79 + $0x10] sm:$0xf]
    %v5684 = vld [vmem:[%s79 + $0x14] sm:$0xf]
    %v5685 = vld [vmem:[%s79 + $0x18] sm:$0xf]
    %v5686 = vld [vmem:[%s79 + $0x1c] sm:$0xf]
    %v5687 = vpack.c.bf16 %v5677, %v5677
    %v5688 = vpack.c.bf16 %v5678, %v5678
    %v5689 = vld [vmem:[%s81] sm:$0x1]
    %v5698 = vunpack.c.l.b16 %v5679
    %v5699 = vunpack.c.l.b16 %v5680
    %v5700 = vunpack.c.l.b16 %v5681
    %v5701 = vunpack.c.l.b16 %v5682
    %v5702 = vunpack.c.l.b16 %v5683
    %v5703 = vunpack.c.l.b16 %v5684
    %v5704 = vunpack.c.l.b16 %v5685
    %v5705 = vunpack.c.l.b16 %v5686
    %v5706 = vpack.c.b16 %v5699, %v5698
    %v5707 = vpack.c.b16 %v5701, %v5700
    %v5708 = vpack.c.b16 %v5703, %v5702
    %v5709 = vpack.c.b16 %v5705, %v5704
    %v5715 = vsel %vm932, %v5687, 0
    %5717 = vmatprep.subr.bf16.mxu0 0
    %5718 = vmatpush1.bf16.msra.mxu0 %v5706
    %5719 = vmatprep.subr.bf16.mxu0 0
    %5720 = vmatpush1.bf16.msra.mxu0 %v5707
    %5721 = vmatprep.subr.bf16.mxu0 0
    %5722 = vmatpush1.bf16.msra.mxu0 %v5708
    %5723 = vmatprep.subr.bf16.mxu0 0
    %5724 = vmatpush1.bf16.msra.mxu0 %v5709
    %5725 = vmatprep.subr.bf16.mxu0 0
    %5726 = vmatpush1.bf16.msra.mxu0 0
    %5727 = vmatprep.subr.bf16.mxu0 0
    %5728 = vmatpush1.bf16.msra.mxu0 0
    %5729 = vmatprep.subr.bf16.mxu0 0
    %5730 = vmatpush1.bf16.msra.mxu0 0
    %5731 = vmatprep.subr.bf16.mxu0 0
    %5732 = vmatpush1.bf16.msra.mxu0 0
    %5733 = vmatprep.subr.bf16.mxu0 0
    %5734 = vmatpush1.bf16.msra.mxu0 0
    %5735 = vmatprep.subr.bf16.mxu0 0
    %5736 = vmatpush1.bf16.msra.mxu0 0
    %5737 = vmatprep.subr.bf16.mxu0 0
    %5738 = vmatpush1.bf16.msra.mxu0 0
    %5739 = vmatprep.subr.bf16.mxu0 0
    %5740 = vmatpush1.bf16.msra.mxu0 0
    %5741 = vmatprep.subr.bf16.mxu0 0
    %5742 = vmatpush1.bf16.msra.mxu0 0
    %5743 = vmatprep.subr.bf16.mxu0 0
    %5744 = vmatpush1.bf16.msra.mxu0 0
    %5745 = vmatprep.subr.bf16.mxu0 0
    %5746 = vmatpush1.bf16.msra.mxu0 0
    %5747 = vmatprep.subr.bf16.mxu0 0
    %5748 = vmatpush1.bf16.msra.mxu0 0
    %5749 = vmatprep.mubr.bf16.mxu0 0
    %5750 = vmatmul.mubr.bf16.gmra.mrb[0].mxu0 %v5715
    %v5751 = vpop.f32.mrb[0].mxu0
    %v5752 = vadd.f32 %v5689, %v5751
    %v5753 = vpop.f32.mrb[0].mxu0
    %v5754 = vpop.f32.mrb[0].mxu0
    %v5755 = vpop.f32.mrb[0].mxu0
    %5756 = vdwg.mxu0
    %v5758 = vsel %vm932, %v5688, 0
    %5760 = vmatprep.subr.bf16.mxu0 0
    %5761 = vmatpush1.bf16.msra.mxu0 %v5706
    %5762 = vmatprep.subr.bf16.mxu0 0
    %5763 = vmatpush1.bf16.msra.mxu0 %v5707
    %5764 = vmatprep.subr.bf16.mxu0 0
    %5765 = vmatpush1.bf16.msra.mxu0 %v5708
    %5766 = vmatprep.subr.bf16.mxu0 0
    %5767 = vmatpush1.bf16.msra.mxu0 %v5709
    %5768 = vmatprep.subr.bf16.mxu0 0
    %5769 = vmatpush1.bf16.msra.mxu0 0
    %5770 = vmatprep.subr.bf16.mxu0 0
    %5771 = vmatpush1.bf16.msra.mxu0 0
    %5772 = vmatprep.subr.bf16.mxu0 0
    %5773 = vmatpush1.bf16.msra.mxu0 0
    %5774 = vmatprep.subr.bf16.mxu0 0
    %5775 = vmatpush1.bf16.msra.mxu0 0
    %5776 = vmatprep.subr.bf16.mxu0 0
    %5777 = vmatpush1.bf16.msra.mxu0 0
    %5778 = vmatprep.subr.bf16.mxu0 0
    %5779 = vmatpush1.bf16.msra.mxu0 0
    %5780 = vmatprep.subr.bf16.mxu0 0
    %5781 = vmatpush1.bf16.msra.mxu0 0
    %5782 = vmatprep.subr.bf16.mxu0 0
    %5783 = vmatpush1.bf16.msra.mxu0 0
    %5784 = vmatprep.subr.bf16.mxu0 0
    %5785 = vmatpush1.bf16.msra.mxu0 0
    %5786 = vmatprep.subr.bf16.mxu0 0
    %5787 = vmatpush1.bf16.msra.mxu0 0
    %5788 = vmatprep.subr.bf16.mxu0 0
    %5789 = vmatpush1.bf16.msra.mxu0 0
    %5790 = vmatprep.subr.bf16.mxu0 0
    %5791 = vmatpush1.bf16.msra.mxu0 0
    %5792 = vmatprep.mubr.bf16.mxu0 0
    %5793 = vmatmul.mubr.bf16.gmra.mrb[0].mxu0 %v5758
    %v5794 = vpop.f32.mrb[0].mxu0
    %v5795 = vadd.f32 %v5689, %v5794
    %v5796 = vpop.f32.mrb[0].mxu0
    %v5797 = vpop.f32.mrb[0].mxu0
    %v5798 = vpop.f32.mrb[0].mxu0
    %5799 = vdwg.mxu0
    %v5800 = vadd.f32 %v5570, %v5752
    %v5801 = vadd.f32 %v5571, %v5795
    %v5802 = vld [vmem:[%s83] sm:$0x1]
    %v5803 = vld [vmem:[#allocation12] sm:$0x1]
    %v5804 = vsel %vm4282, %v5800, 0.0
    %5805 = vadd.xlane.f32.xlu0 %v5804
    %v5806 = vpop.xlane.xlu0 %5805
    %v5807 = vsel %vm4282, %v5801, 0.0
    %5808 = vadd.xlane.f32.xlu0 %v5807
    %v5809 = vpop.xlane.xlu0 %5808
    %v5810 = vmul.f32 %v5806, %v2493
    %v5811 = vmul.f32 %v5809, %v2493
    %v5812 = vsub.f32 %v5800, %v5810
    %v5813 = vsub.f32 %v5801, %v5811
    %v5814 = vmul.f32 %v5812, %v5812
    %v5815 = vmul.f32 %v5813, %v5813
    %v5816 = vsel %vm4282, %v5814, 0.0
    %5817 = vadd.xlane.f32.xlu0 %v5816
    %v5818 = vpop.xlane.xlu0 %5817
    %v5819 = vsel %vm4282, %v5815, 0.0
    %5820 = vadd.xlane.f32.xlu0 %v5819
    %v5821 = vpop.xlane.xlu0 %5820
    %v5822 = vmul.f32 %v5818, 0.032258064
    %v5823 = vmul.f32 %v5821, 0.032258064
    %v5824 = vmul.f32 %v5802, %v5812
    %v5825 = vmul.f32 %v5802, %v5813
    %v5826 = vrsqrt.pop %v5822
    %v5827 = vmul.f32 %v5822, %v5826
    %vm5828 = vcmp.eq.f32.partialorder %v5822, inf
    %v5829 = vsel %vm5828, %v5822, %v5827
    %vm5830 = vcmp.eq.f32.partialorder %v5822, 0.0
    %v5831 = vand.u32 %v5822, 2147483648
    %v5832 = vsel %vm5830, %v5831, %v5829
    %v5833 = vrsqrt.pop %v5823
    %v5834 = vmul.f32 %v5823, %v5833
    %vm5835 = vcmp.eq.f32.partialorder %v5823, inf
    %v5836 = vsel %vm5835, %v5823, %v5834
    %vm5837 = vcmp.eq.f32.partialorder %v5823, 0.0
    %v5838 = vand.u32 %v5823, 2147483648
    %v5839 = vsel %vm5837, %v5838, %v5836
    %v5840 = vadd.f32 %v5832, 1e-06
    %v5841 = vadd.f32 %v5839, 1e-06
    %v5842 = vrcp.pop %v5840
    %v5843 = vmul.f32 %v5824, %v5842
    %v5844 = vrcp.pop %v5841
    %v5845 = vmul.f32 %v5825, %v5844
    %v5846 = vadd.f32 %v5843, %v5803
    %v5847 = vadd.f32 %v5845, %v5803
    %s5848 = scalar_lea.vmem %s47, 16
    %v5849 = vld [vmem:[%s5848] sm:$0xf]
    %v5850 = vld [vmem:[%s5848 + $0x4] sm:$0xf]
    %v5851 = vld [vmem:[%s5848 + $0x8] sm:$0xf]
    %v5852 = vld [vmem:[%s5848 + $0xc] sm:$0xf]
    %v5853 = vpack.c.bf16 %v5846, %v5846
    %v5854 = vpack.c.bf16 %v5847, %v5847
    %v5855 = vld [vmem:[%s49 + $0x1] sm:$0x1]
    %v5860 = vunpack.c.l.b16 %v5849
    %v5861 = vunpack.c.l.b16 %v5850
    %v5862 = vunpack.c.l.b16 %v5851
    %v5863 = vunpack.c.l.b16 %v5852
    %v5864 = vpack.c.b16 %v5861, %v5860
    %v5865 = vpack.c.b16 %v5863, %v5862
    %v5869 = vsel %vm1265, %v5853, 0
    %5871 = vmatprep.subr.bf16.mxu0 0
    %5872 = vmatpush1.bf16.msra.mxu0 %v5864
    %5873 = vmatprep.subr.bf16.mxu0 0
    %5874 = vmatpush1.bf16.msra.mxu0 %v5865
    %5875 = vmatprep.subr.bf16.mxu0 0
    %5876 = vmatpush1.bf16.msra.mxu0 0
    %5877 = vmatprep.subr.bf16.mxu0 0
    %5878 = vmatpush1.bf16.msra.mxu0 0
    %5879 = vmatprep.subr.bf16.mxu0 0
    %5880 = vmatpush1.bf16.msra.mxu0 0
    %5881 = vmatprep.subr.bf16.mxu0 0
    %5882 = vmatpush1.bf16.msra.mxu0 0
    %5883 = vmatprep.subr.bf16.mxu0 0
    %5884 = vmatpush1.bf16.msra.mxu0 0
    %5885 = vmatprep.subr.bf16.mxu0 0
    %5886 = vmatpush1.bf16.msra.mxu0 0
    %5887 = vmatprep.subr.bf16.mxu0 0
    %5888 = vmatpush1.bf16.msra.mxu0 0
    %5889 = vmatprep.subr.bf16.mxu0 0
    %5890 = vmatpush1.bf16.msra.mxu0 0
    %5891 = vmatprep.subr.bf16.mxu0 0
    %5892 = vmatpush1.bf16.msra.mxu0 0
    %5893 = vmatprep.subr.bf16.mxu0 0
    %5894 = vmatpush1.bf16.msra.mxu0 0
    %5895 = vmatprep.subr.bf16.mxu0 0
    %5896 = vmatpush1.bf16.msra.mxu0 0
    %5897 = vmatprep.subr.bf16.mxu0 0
    %5898 = vmatpush1.bf16.msra.mxu0 0
    %5899 = vmatprep.subr.bf16.mxu0 0
    %5900 = vmatpush1.bf16.msra.mxu0 0
    %5901 = vmatprep.subr.bf16.mxu0 0
    %5902 = vmatpush1.bf16.msra.mxu0 0
    %5903 = vmatprep.mubr.bf16.mxu0 0
    %5904 = vmatmul.mubr.bf16.gmra.mrb[0].mxu0 %v5869
    %v5905 = vpop.f32.mrb[0].mxu0
    %v5906 = vadd.f32 %v5855, %v5905
    %v5907 = vpop.f32.mrb[0].mxu0
    %v5908 = vpop.f32.mrb[0].mxu0
    %v5909 = vpop.f32.mrb[0].mxu0
    %5910 = vdwg.mxu0
    %v5912 = vsel %vm1265, %v5854, 0
    %5914 = vmatprep.subr.bf16.mxu0 0
    %5915 = vmatpush1.bf16.msra.mxu0 %v5864
    %5916 = vmatprep.subr.bf16.mxu0 0
    %5917 = vmatpush1.bf16.msra.mxu0 %v5865
    %5918 = vmatprep.subr.bf16.mxu0 0
    %5919 = vmatpush1.bf16.msra.mxu0 0
    %5920 = vmatprep.subr.bf16.mxu0 0
    %5921 = vmatpush1.bf16.msra.mxu0 0
    %5922 = vmatprep.subr.bf16.mxu0 0
    %5923 = vmatpush1.bf16.msra.mxu0 0
    %5924 = vmatprep.subr.bf16.mxu0 0
    %5925 = vmatpush1.bf16.msra.mxu0 0
    %5926 = vmatprep.subr.bf16.mxu0 0
    %5927 = vmatpush1.bf16.msra.mxu0 0
    %5928 = vmatprep.subr.bf16.mxu0 0
    %5929 = vmatpush1.bf16.msra.mxu0 0
    %5930 = vmatprep.subr.bf16.mxu0 0
    %5931 = vmatpush1.bf16.msra.mxu0 0
    %5932 = vmatprep.subr.bf16.mxu0 0
    %5933 = vmatpush1.bf16.msra.mxu0 0
    %5934 = vmatprep.subr.bf16.mxu0 0
    %5935 = vmatpush1.bf16.msra.mxu0 0
    %5936 = vmatprep.subr.bf16.mxu0 0
    %5937 = vmatpush1.bf16.msra.mxu0 0
    %5938 = vmatprep.subr.bf16.mxu0 0
    %5939 = vmatpush1.bf16.msra.mxu0 0
    %5940 = vmatprep.subr.bf16.mxu0 0
    %5941 = vmatpush1.bf16.msra.mxu0 0
    %5942 = vmatprep.subr.bf16.mxu0 0
    %5943 = vmatpush1.bf16.msra.mxu0 0
    %5944 = vmatprep.subr.bf16.mxu0 0
    %5945 = vmatpush1.bf16.msra.mxu0 0
    %5946 = vmatprep.mubr.bf16.mxu0 0
    %5947 = vmatmul.mubr.bf16.gmra.mrb[0].mxu0 %v5912
    %v5948 = vpop.f32.mrb[0].mxu0
    %v5949 = vadd.f32 %v5855, %v5948
    %v5950 = vpop.f32.mrb[0].mxu0
    %v5951 = vpop.f32.mrb[0].mxu0
    %v5952 = vpop.f32.mrb[0].mxu0
    %5953 = vdwg.mxu0
    %s5954 = scalar_lea.vmem %s51, 16
    %v5955 = vld [vmem:[%s5954] sm:$0xf]
    %v5956 = vld [vmem:[%s5954 + $0x4] sm:$0xf]
    %v5957 = vld [vmem:[%s5954 + $0x8] sm:$0xf]
    %v5958 = vld [vmem:[%s5954 + $0xc] sm:$0xf]
    %v5959 = vpack.c.bf16 %v5906, %v5906
    %v5960 = vpack.c.bf16 %v5949, %v5949
    %v5961 = vld [vmem:[%s53 + $0x1] sm:$0x1]
    %v5966 = vunpack.c.l.b16 %v5955
    %v5967 = vunpack.c.l.b16 %v5956
    %v5968 = vunpack.c.l.b16 %v5957
    %v5969 = vunpack.c.l.b16 %v5958
    %v5970 = vpack.c.b16 %v5967, %v5966
    %v5971 = vpack.c.b16 %v5969, %v5968
    %v5975 = vsel %vm1265, %v5959, 0
    %5977 = vmatprep.subr.bf16.mxu0 0
    %5978 = vmatpush1.bf16.msra.mxu0 %v5970
    %5979 = vmatprep.subr.bf16.mxu0 0
    %5980 = vmatpush1.bf16.msra.mxu0 %v5971
    %5981 = vmatprep.subr.bf16.mxu0 0
    %5982 = vmatpush1.bf16.msra.mxu0 0
    %5983 = vmatprep.subr.bf16.mxu0 0
    %5984 = vmatpush1.bf16.msra.mxu0 0
    %5985 = vmatprep.subr.bf16.mxu0 0
    %5986 = vmatpush1.bf16.msra.mxu0 0
    %5987 = vmatprep.subr.bf16.mxu0 0
    %5988 = vmatpush1.bf16.msra.mxu0 0
    %5989 = vmatprep.subr.bf16.mxu0 0
    %5990 = vmatpush1.bf16.msra.mxu0 0
    %5991 = vmatprep.subr.bf16.mxu0 0
    %5992 = vmatpush1.bf16.msra.mxu0 0
    %5993 = vmatprep.subr.bf16.mxu0 0
    %5994 = vmatpush1.bf16.msra.mxu0 0
    %5995 = vmatprep.subr.bf16.mxu0 0
    %5996 = vmatpush1.bf16.msra.mxu0 0
    %5997 = vmatprep.subr.bf16.mxu0 0
    %5998 = vmatpush1.bf16.msra.mxu0 0
    %5999 = vmatprep.subr.bf16.mxu0 0
    %6000 = vmatpush1.bf16.msra.mxu0 0
    %6001 = vmatprep.subr.bf16.mxu0 0
    %6002 = vmatpush1.bf16.msra.mxu0 0
    %6003 = vmatprep.subr.bf16.mxu0 0
    %6004 = vmatpush1.bf16.msra.mxu0 0
    %6005 = vmatprep.subr.bf16.mxu0 0
    %6006 = vmatpush1.bf16.msra.mxu0 0
    %6007 = vmatprep.subr.bf16.mxu0 0
    %6008 = vmatpush1.bf16.msra.mxu0 0
    %6009 = vmatprep.mubr.bf16.mxu0 0
    %6010 = vmatmul.mubr.bf16.gmra.mrb[0].mxu0 %v5975
    %v6011 = vpop.f32.mrb[0].mxu0
    %v6012 = vadd.f32 %v5961, %v6011
    %v6013 = vpop.f32.mrb[0].mxu0
    %v6014 = vpop.f32.mrb[0].mxu0
    %v6015 = vpop.f32.mrb[0].mxu0
    %6016 = vdwg.mxu0
    %v6018 = vsel %vm1265, %v5960, 0
    %6020 = vmatprep.subr.bf16.mxu0 0
    %6021 = vmatpush1.bf16.msra.mxu0 %v5970
    %6022 = vmatprep.subr.bf16.mxu0 0
    %6023 = vmatpush1.bf16.msra.mxu0 %v5971
    %6024 = vmatprep.subr.bf16.mxu0 0
    %6025 = vmatpush1.bf16.msra.mxu0 0
    %6026 = vmatprep.subr.bf16.mxu0 0
    %6027 = vmatpush1.bf16.msra.mxu0 0
    %6028 = vmatprep.subr.bf16.mxu0 0
    %6029 = vmatpush1.bf16.msra.mxu0 0
    %6030 = vmatprep.subr.bf16.mxu0 0
    %6031 = vmatpush1.bf16.msra.mxu0 0
    %6032 = vmatprep.subr.bf16.mxu0 0
    %6033 = vmatpush1.bf16.msra.mxu0 0
    %6034 = vmatprep.subr.bf16.mxu0 0
    %6035 = vmatpush1.bf16.msra.mxu0 0
    %6036 = vmatprep.subr.bf16.mxu0 0
    %6037 = vmatpush1.bf16.msra.mxu0 0
    %6038 = vmatprep.subr.bf16.mxu0 0
    %6039 = vmatpush1.bf16.msra.mxu0 0
    %6040 = vmatprep.subr.bf16.mxu0 0
    %6041 = vmatpush1.bf16.msra.mxu0 0
    %6042 = vmatprep.subr.bf16.mxu0 0
    %6043 = vmatpush1.bf16.msra.mxu0 0
    %6044 = vmatprep.subr.bf16.mxu0 0
    %6045 = vmatpush1.bf16.msra.mxu0 0
    %6046 = vmatprep.subr.bf16.mxu0 0
    %6047 = vmatpush1.bf16.msra.mxu0 0
    %6048 = vmatprep.subr.bf16.mxu0 0
    %6049 = vmatpush1.bf16.msra.mxu0 0
    %6050 = vmatprep.subr.bf16.mxu0 0
    %6051 = vmatpush1.bf16.msra.mxu0 0
    %6052 = vmatprep.mubr.bf16.mxu0 0
    %6053 = vmatmul.mubr.bf16.gmra.mrb[0].mxu0 %v6018
    %v6054 = vpop.f32.mrb[0].mxu0
    %v6055 = vadd.f32 %v5961, %v6054
    %v6056 = vpop.f32.mrb[0].mxu0
    %v6057 = vpop.f32.mrb[0].mxu0
    %v6058 = vpop.f32.mrb[0].mxu0
    %6059 = vdwg.mxu0
    %v6060 = vadd.f32 %v5846, %v6012
    %v6061 = vadd.f32 %v5847, %v6055
    %v6062 = vld [vmem:[%s55 + $0x1] sm:$0x1]
    %v6063 = vld [vmem:[%s57 + $0x1] sm:$0x1]
    %v6064 = vsel %vm4282, %v6060, 0.0
    %6065 = vadd.xlane.f32.xlu0 %v6064
    %v6066 = vpop.xlane.xlu0 %6065
    %v6067 = vsel %vm4282, %v6061, 0.0
    %6068 = vadd.xlane.f32.xlu0 %v6067
    %v6069 = vpop.xlane.xlu0 %6068
    %v6070 = vmul.f32 %v6066, %v2493
    %v6071 = vmul.f32 %v6069, %v2493
    %v6072 = vsub.f32 %v6060, %v6070
    %v6073 = vsub.f32 %v6061, %v6071
    %v6074 = vmul.f32 %v6072, %v6072
    %v6075 = vmul.f32 %v6073, %v6073
    %v6076 = vsel %vm4282, %v6074, 0.0
    %6077 = vadd.xlane.f32.xlu0 %v6076
    %v6078 = vpop.xlane.xlu0 %6077
    %v6079 = vsel %vm4282, %v6075, 0.0
    %6080 = vadd.xlane.f32.xlu0 %v6079
    %v6081 = vpop.xlane.xlu0 %6080
    %v6082 = vmul.f32 %v6078, 0.032258064
    %v6083 = vmul.f32 %v6081, 0.032258064
    %v6084 = vmul.f32 %v6062, %v6072
    %v6085 = vmul.f32 %v6062, %v6073
    %v6086 = vrsqrt.pop %v6082
    %v6087 = vmul.f32 %v6082, %v6086
    %vm6088 = vcmp.eq.f32.partialorder %v6082, inf
    %v6089 = vsel %vm6088, %v6082, %v6087
    %vm6090 = vcmp.eq.f32.partialorder %v6082, 0.0
    %v6091 = vand.u32 %v6082, 2147483648
    %v6092 = vsel %vm6090, %v6091, %v6089
    %v6093 = vrsqrt.pop %v6083
    %v6094 = vmul.f32 %v6083, %v6093
    %vm6095 = vcmp.eq.f32.partialorder %v6083, inf
    %v6096 = vsel %vm6095, %v6083, %v6094
    %vm6097 = vcmp.eq.f32.partialorder %v6083, 0.0
    %v6098 = vand.u32 %v6083, 2147483648
    %v6099 = vsel %vm6097, %v6098, %v6096
    %v6100 = vadd.f32 %v6092, 1e-06
    %v6101 = vadd.f32 %v6099, 1e-06
    %v6102 = vrcp.pop %v6100
    %v6103 = vmul.f32 %v6084, %v6102
    %v6104 = vrcp.pop %v6101
    %v6105 = vmul.f32 %v6085, %v6104
    %v6106 = vadd.f32 %v6103, %v6063
    %v6107 = vadd.f32 %v6105, %v6063
    %s6108 = scalar_lea.vmem %s59, 16
    %v6109 = vld [vmem:[%s6108] sm:$0xf]
    %v6110 = vld [vmem:[%s6108 + $0x4] sm:$0xf]
    %v6111 = vld [vmem:[%s6108 + $0x8] sm:$0xf]
    %v6112 = vld [vmem:[%s6108 + $0xc] sm:$0xf]
    %v6113 = vpack.c.bf16 %v6106, %v6106
    %v6114 = vpack.c.bf16 %v6107, %v6107
    %v6115 = vld [vmem:[%s61 + $0x1] sm:$0x1]
    %v6120 = vunpack.c.l.b16 %v6109
    %v6121 = vunpack.c.l.b16 %v6110
    %v6122 = vunpack.c.l.b16 %v6111
    %v6123 = vunpack.c.l.b16 %v6112
    %v6124 = vpack.c.b16 %v6121, %v6120
    %v6125 = vpack.c.b16 %v6123, %v6122
    %v6129 = vsel %vm1265, %v6113, 0
    %6131 = vmatprep.subr.bf16.mxu0 0
    %6132 = vmatpush1.bf16.msra.mxu0 %v6124
    %6133 = vmatprep.subr.bf16.mxu0 0
    %6134 = vmatpush1.bf16.msra.mxu0 %v6125
    %6135 = vmatprep.subr.bf16.mxu0 0
    %6136 = vmatpush1.bf16.msra.mxu0 0
    %6137 = vmatprep.subr.bf16.mxu0 0
    %6138 = vmatpush1.bf16.msra.mxu0 0
    %6139 = vmatprep.subr.bf16.mxu0 0
    %6140 = vmatpush1.bf16.msra.mxu0 0
    %6141 = vmatprep.subr.bf16.mxu0 0
    %6142 = vmatpush1.bf16.msra.mxu0 0
    %6143 = vmatprep.subr.bf16.mxu0 0
    %6144 = vmatpush1.bf16.msra.mxu0 0
    %6145 = vmatprep.subr.bf16.mxu0 0
    %6146 = vmatpush1.bf16.msra.mxu0 0
    %6147 = vmatprep.subr.bf16.mxu0 0
    %6148 = vmatpush1.bf16.msra.mxu0 0
    %6149 = vmatprep.subr.bf16.mxu0 0
    %6150 = vmatpush1.bf16.msra.mxu0 0
    %6151 = vmatprep.subr.bf16.mxu0 0
    %6152 = vmatpush1.bf16.msra.mxu0 0
    %6153 = vmatprep.subr.bf16.mxu0 0
    %6154 = vmatpush1.bf16.msra.mxu0 0
    %6155 = vmatprep.subr.bf16.mxu0 0
    %6156 = vmatpush1.bf16.msra.mxu0 0
    %6157 = vmatprep.subr.bf16.mxu0 0
    %6158 = vmatpush1.bf16.msra.mxu0 0
    %6159 = vmatprep.subr.bf16.mxu0 0
    %6160 = vmatpush1.bf16.msra.mxu0 0
    %6161 = vmatprep.subr.bf16.mxu0 0
    %6162 = vmatpush1.bf16.msra.mxu0 0
    %6163 = vmatprep.mubr.bf16.mxu0 0
    %6164 = vmatmul.mubr.bf16.gmra.mrb[0].mxu0 %v6129
    %v6165 = vpop.f32.mrb[0].mxu0
    %v6166 = vadd.f32 %v6115, %v6165
    %v6167 = vpop.f32.mrb[0].mxu0
    %v6168 = vpop.f32.mrb[0].mxu0
    %v6169 = vpop.f32.mrb[0].mxu0
    %6170 = vdwg.mxu0
    %v6172 = vsel %vm1265, %v6114, 0
    %6174 = vmatprep.subr.bf16.mxu0 0
    %6175 = vmatpush1.bf16.msra.mxu0 %v6124
    %6176 = vmatprep.subr.bf16.mxu0 0
    %6177 = vmatpush1.bf16.msra.mxu0 %v6125
    %6178 = vmatprep.subr.bf16.mxu0 0
    %6179 = vmatpush1.bf16.msra.mxu0 0
    %6180 = vmatprep.subr.bf16.mxu0 0
    %6181 = vmatpush1.bf16.msra.mxu0 0
    %6182 = vmatprep.subr.bf16.mxu0 0
    %6183 = vmatpush1.bf16.msra.mxu0 0
    %6184 = vmatprep.subr.bf16.mxu0 0
    %6185 = vmatpush1.bf16.msra.mxu0 0
    %6186 = vmatprep.subr.bf16.mxu0 0
    %6187 = vmatpush1.bf16.msra.mxu0 0
    %6188 = vmatprep.subr.bf16.mxu0 0
    %6189 = vmatpush1.bf16.msra.mxu0 0
    %6190 = vmatprep.subr.bf16.mxu0 0
    %6191 = vmatpush1.bf16.msra.mxu0 0
    %6192 = vmatprep.subr.bf16.mxu0 0
    %6193 = vmatpush1.bf16.msra.mxu0 0
    %6194 = vmatprep.subr.bf16.mxu0 0
    %6195 = vmatpush1.bf16.msra.mxu0 0
    %6196 = vmatprep.subr.bf16.mxu0 0
    %6197 = vmatpush1.bf16.msra.mxu0 0
    %6198 = vmatprep.subr.bf16.mxu0 0
    %6199 = vmatpush1.bf16.msra.mxu0 0
    %6200 = vmatprep.subr.bf16.mxu0 0
    %6201 = vmatpush1.bf16.msra.mxu0 0
    %6202 = vmatprep.subr.bf16.mxu0 0
    %6203 = vmatpush1.bf16.msra.mxu0 0
    %6204 = vmatprep.subr.bf16.mxu0 0
    %6205 = vmatpush1.bf16.msra.mxu0 0
    %6206 = vmatprep.mubr.bf16.mxu0 0
    %6207 = vmatmul.mubr.bf16.gmra.mrb[0].mxu0 %v6172
    %v6208 = vpop.f32.mrb[0].mxu0
    %v6209 = vadd.f32 %v6115, %v6208
    %v6210 = vpop.f32.mrb[0].mxu0
    %v6211 = vpop.f32.mrb[0].mxu0
    %v6212 = vpop.f32.mrb[0].mxu0
    %6213 = vdwg.mxu0
    %v6214 = vmul.f32 %v6166, 0.35355338
    %v6215 = vmul.f32 %v6209, 0.35355338
    %s6216 = scalar_lea.vmem %s63, 16
    %v6217 = vld [vmem:[%s6216] sm:$0xf]
    %v6218 = vld [vmem:[%s6216 + $0x4] sm:$0xf]
    %v6219 = vld [vmem:[%s6216 + $0x8] sm:$0xf]
    %v6220 = vld [vmem:[%s6216 + $0xc] sm:$0xf]
    %v6221 = vld [vmem:[%s65 + $0x1] sm:$0x1]
    %v6222 = vlaneseq
    %v6223 = vshrl.u32 %v6222, 7
    %v6224 = vsub.s32 0, %v6223
    %v6225 = vrot.slane %v6221, %v6224
    %v6230 = vunpack.c.l.b16 %v6217
    %v6231 = vunpack.c.l.b16 %v6218
    %v6232 = vunpack.c.l.b16 %v6219
    %v6233 = vunpack.c.l.b16 %v6220
    %v6234 = vpack.c.b16 %v6231, %v6230
    %v6235 = vpack.c.b16 %v6233, %v6232
    %6238 = vmatprep.subr.bf16.mxu0 0
    %6239 = vmatpush1.bf16.msra.mxu0 %v6234
    %6240 = vmatprep.subr.bf16.mxu0 0
    %6241 = vmatpush1.bf16.msra.mxu0 %v6235
    %6242 = vmatprep.subr.bf16.mxu0 0
    %6243 = vmatpush1.bf16.msra.mxu0 0
    %6244 = vmatprep.subr.bf16.mxu0 0
    %6245 = vmatpush1.bf16.msra.mxu0 0
    %6246 = vmatprep.subr.bf16.mxu0 0
    %6247 = vmatpush1.bf16.msra.mxu0 0
    %6248 = vmatprep.subr.bf16.mxu0 0
    %6249 = vmatpush1.bf16.msra.mxu0 0
    %6250 = vmatprep.subr.bf16.mxu0 0
    %6251 = vmatpush1.bf16.msra.mxu0 0
    %6252 = vmatprep.subr.bf16.mxu0 0
    %6253 = vmatpush1.bf16.msra.mxu0 0
    %6254 = vmatprep.subr.bf16.mxu0 0
    %6255 = vmatpush1.bf16.msra.mxu0 0
    %6256 = vmatprep.subr.bf16.mxu0 0
    %6257 = vmatpush1.bf16.msra.mxu0 0
    %6258 = vmatprep.subr.bf16.mxu0 0
    %6259 = vmatpush1.bf16.msra.mxu0 0
    %6260 = vmatprep.subr.bf16.mxu0 0
    %6261 = vmatpush1.bf16.msra.mxu0 0
    %6262 = vmatprep.subr.bf16.mxu0 0
    %6263 = vmatpush1.bf16.msra.mxu0 0
    %6264 = vmatprep.subr.bf16.mxu0 0
    %6265 = vmatpush1.bf16.msra.mxu0 0
    %6266 = vmatprep.subr.bf16.mxu0 0
    %6267 = vmatpush1.bf16.msra.mxu0 0
    %6268 = vmatprep.subr.bf16.mxu0 0
    %6269 = vmatpush1.bf16.msra.mxu0 0
    %6270 = vmatprep.mubr.bf16.mxu0 0
    %6271 = vmatmul.mubr.bf16.gmra.mrb[0].mxu0 %v4457
    %v6272 = vpop.f32.mrb[0].mxu0
    %v6273 = vadd.f32 %v6225, %v6272
    %v6274 = vpop.f32.mrb[0].mxu0
    %v6275 = vpop.f32.mrb[0].mxu0
    %v6276 = vadd.f32 %v6225, %v6275
    %v6277 = vpop.f32.mrb[0].mxu0
    %6278 = vdwg.mxu0
    %v6279 = vpack.c.bf16 %v6214, %v6214
    %v6280 = vpack.c.bf16 %v6215, %v6215
    %v6281 = vpack.c.bf16 %v6273, %v6273
    %v6282 = vpack.c.bf16 %v6276, %v6276
    %v6284 = vsel %vm1496, %v6279, 0
    %v6287 = vsel %vm1496, %v6281, 0
    %6289 = vmatprep.subr.bf16.mxu0 0
    %6290 = vmatpush1.bf16.xpose.msra.mxu0 %v6287
    %6291 = vmatprep.subr.bf16.mxu0 0
    %6292 = vmatpush1.bf16.xpose.msra.mxu0 0
    %6293 = vmatprep.subr.bf16.mxu0 0
    %6294 = vmatpush1.bf16.xpose.msra.mxu0 0
    %6295 = vmatprep.subr.bf16.mxu0 0
    %6296 = vmatpush1.bf16.xpose.msra.mxu0 0
    %6297 = vmatprep.subr.bf16.mxu0 0
    %6298 = vmatpush1.bf16.xpose.msra.mxu0 0
    %6299 = vmatprep.subr.bf16.mxu0 0
    %6300 = vmatpush1.bf16.xpose.msra.mxu0 0
    %6301 = vmatprep.subr.bf16.mxu0 0
    %6302 = vmatpush1.bf16.xpose.msra.mxu0 0
    %6303 = vmatprep.subr.bf16.mxu0 0
    %6304 = vmatpush1.bf16.xpose.msra.mxu0 0
    %6305 = vmatprep.subr.bf16.mxu0 0
    %6306 = vmatpush1.bf16.xpose.msra.mxu0 0
    %6307 = vmatprep.subr.bf16.mxu0 0
    %6308 = vmatpush1.bf16.xpose.msra.mxu0 0
    %6309 = vmatprep.subr.bf16.mxu0 0
    %6310 = vmatpush1.bf16.xpose.msra.mxu0 0
    %6311 = vmatprep.subr.bf16.mxu0 0
    %6312 = vmatpush1.bf16.xpose.msra.mxu0 0
    %6313 = vmatprep.subr.bf16.mxu0 0
    %6314 = vmatpush1.bf16.xpose.msra.mxu0 0
    %6315 = vmatprep.subr.bf16.mxu0 0
    %6316 = vmatpush1.bf16.xpose.msra.mxu0 0
    %6317 = vmatprep.subr.bf16.mxu0 0
    %6318 = vmatpush1.bf16.xpose.msra.mxu0 0
    %6319 = vmatprep.subr.bf16.mxu0 0
    %6320 = vmatpush1.bf16.xpose.msra.mxu0 0
    %6321 = vmatprep.mubr.bf16.mxu0 0
    %6322 = vmatmul.mubr.bf16.gmra.mrb[0].mxu0 %v6284
    %v6323 = vpop.f32.mrb[0].mxu0
    %v6324 = vadd.f32 0.0, %v6323
    %v6325 = vpop.f32.mrb[0].mxu0
    %v6326 = vpop.f32.mrb[0].mxu0
    %v6327 = vpop.f32.mrb[0].mxu0
    %6328 = vdwg.mxu0
    %v6330 = vsel %vm1496, %v6280, 0
    %v6333 = vsel %vm1496, %v6282, 0
    %6335 = vmatprep.subr.bf16.mxu0 0
    %6336 = vmatpush1.bf16.xpose.msra.mxu0 %v6333
    %6337 = vmatprep.subr.bf16.mxu0 0
    %6338 = vmatpush1.bf16.xpose.msra.mxu0 0
    %6339 = vmatprep.subr.bf16.mxu0 0
    %6340 = vmatpush1.bf16.xpose.msra.mxu0 0
    %6341 = vmatprep.subr.bf16.mxu0 0
    %6342 = vmatpush1.bf16.xpose.msra.mxu0 0
    %6343 = vmatprep.subr.bf16.mxu0 0
    %6344 = vmatpush1.bf16.xpose.msra.mxu0 0
    %6345 = vmatprep.subr.bf16.mxu0 0
    %6346 = vmatpush1.bf16.xpose.msra.mxu0 0
    %6347 = vmatprep.subr.bf16.mxu0 0
    %6348 = vmatpush1.bf16.xpose.msra.mxu0 0
    %6349 = vmatprep.subr.bf16.mxu0 0
    %6350 = vmatpush1.bf16.xpose.msra.mxu0 0
    %6351 = vmatprep.subr.bf16.mxu0 0
    %6352 = vmatpush1.bf16.xpose.msra.mxu0 0
    %6353 = vmatprep.subr.bf16.mxu0 0
    %6354 = vmatpush1.bf16.xpose.msra.mxu0 0
    %6355 = vmatprep.subr.bf16.mxu0 0
    %6356 = vmatpush1.bf16.xpose.msra.mxu0 0
    %6357 = vmatprep.subr.bf16.mxu0 0
    %6358 = vmatpush1.bf16.xpose.msra.mxu0 0
    %6359 = vmatprep.subr.bf16.mxu0 0
    %6360 = vmatpush1.bf16.xpose.msra.mxu0 0
    %6361 = vmatprep.subr.bf16.mxu0 0
    %6362 = vmatpush1.bf16.xpose.msra.mxu0 0
    %6363 = vmatprep.subr.bf16.mxu0 0
    %6364 = vmatpush1.bf16.xpose.msra.mxu0 0
    %6365 = vmatprep.subr.bf16.mxu0 0
    %6366 = vmatpush1.bf16.xpose.msra.mxu0 0
    %6367 = vmatprep.mubr.bf16.mxu0 0
    %6368 = vmatmul.mubr.bf16.gmra.mrb[0].mxu0 %v6330
    %v6369 = vpop.f32.mrb[0].mxu0
    %v6370 = vadd.f32 0.0, %v6369
    %v6371 = vpop.f32.mrb[0].mxu0
    %v6372 = vpop.f32.mrb[0].mxu0
    %v6373 = vpop.f32.mrb[0].mxu0
    %6374 = vdwg.mxu0
    %v6375 = vsel %vm1592, -1e+09, %v6324
    %v6376 = vsel %vm1593, -1e+09, %v6370
    %v6377 = vsel %vm4598, %v6375, -inf
    %6378 = vmax.xlane.f32.xlu0 %v6377
    %v6379 = vpop.xlane.xlu0 %6378
    %v6380 = vsel %vm4598, %v6376, -inf
    %6381 = vmax.xlane.f32.xlu0 %v6380
    %v6382 = vpop.xlane.xlu0 %6381
    %v6383 = vsub.f32 %v6375, %v6379
    %v6384 = vsub.f32 %v6376, %v6382
    %v6385 = vmul.f32 %v6383, 1.442695
    %v6386 = vpow.pop %v6385
    %v6387 = vmul.f32 %v6384, 1.442695
    %v6388 = vpow.pop %v6387
    %v6389 = vsel %vm4598, %v6386, 0.0
    %6390 = vadd.xlane.f32.xlu0 %v6389
    %v6391 = vpop.xlane.xlu0 %6390
    %v6392 = vsel %vm4598, %v6388, 0.0
    %6393 = vadd.xlane.f32.xlu0 %v6392
    %v6394 = vpop.xlane.xlu0 %6393
    %v6395 = vrcp.pop %v6391
    %v6396 = vrcp.pop %v6394
    %v6397 = vmul.f32 %v6386, %v6395
    %v6398 = vmul.f32 %v6388, %v6396
    %v6399 = vpack.c.bf16 %v6397, %v6397
    %v6400 = vpack.c.bf16 %v6398, %v6398
    %6402 = vrot.lane.b32.xlu0 %v6281, 96
    %v6403 = vpop.permute.xlu0 %6402
    %v6405 = vsel %vm1496, %v6399, 0
    %v6408 = vsel %vm1625, %v6403, 0
    %6410 = vmatprep.subr.bf16.mxu0 0
    %6411 = vmatpush1.bf16.msra.mxu0 %v6408
    %6412 = vmatprep.subr.bf16.mxu0 0
    %6413 = vmatpush1.bf16.msra.mxu0 0
    %6414 = vmatprep.subr.bf16.mxu0 0
    %6415 = vmatpush1.bf16.msra.mxu0 0
    %6416 = vmatprep.subr.bf16.mxu0 0
    %6417 = vmatpush1.bf16.msra.mxu0 0
    %6418 = vmatprep.subr.bf16.mxu0 0
    %6419 = vmatpush1.bf16.msra.mxu0 0
    %6420 = vmatprep.subr.bf16.mxu0 0
    %6421 = vmatpush1.bf16.msra.mxu0 0
    %6422 = vmatprep.subr.bf16.mxu0 0
    %6423 = vmatpush1.bf16.msra.mxu0 0
    %6424 = vmatprep.subr.bf16.mxu0 0
    %6425 = vmatpush1.bf16.msra.mxu0 0
    %6426 = vmatprep.subr.bf16.mxu0 0
    %6427 = vmatpush1.bf16.msra.mxu0 0
    %6428 = vmatprep.subr.bf16.mxu0 0
    %6429 = vmatpush1.bf16.msra.mxu0 0
    %6430 = vmatprep.subr.bf16.mxu0 0
    %6431 = vmatpush1.bf16.msra.mxu0 0
    %6432 = vmatprep.subr.bf16.mxu0 0
    %6433 = vmatpush1.bf16.msra.mxu0 0
    %6434 = vmatprep.subr.bf16.mxu0 0
    %6435 = vmatpush1.bf16.msra.mxu0 0
    %6436 = vmatprep.subr.bf16.mxu0 0
    %6437 = vmatpush1.bf16.msra.mxu0 0
    %6438 = vmatprep.subr.bf16.mxu0 0
    %6439 = vmatpush1.bf16.msra.mxu0 0
    %6440 = vmatprep.subr.bf16.mxu0 0
    %6441 = vmatpush1.bf16.msra.mxu0 0
    %6442 = vmatprep.mubr.bf16.mxu0 0
    %6443 = vmatmul.mubr.bf16.gmra.mrb[0].mxu0 %v6405
    %v6444 = vpop.f32.mrb[0].mxu0
    %v6445 = vadd.f32 0.0, %v6444
    %v6446 = vpop.f32.mrb[0].mxu0
    %v6447 = vpop.f32.mrb[0].mxu0
    %v6448 = vpop.f32.mrb[0].mxu0
    %6449 = vdwg.mxu0
    %6451 = vrot.lane.b32.xlu0 %v6282, 96
    %v6452 = vpop.permute.xlu0 %6451
    %v6454 = vsel %vm1496, %v6400, 0
    %v6457 = vsel %vm1625, %v6452, 0
    %6459 = vmatprep.subr.bf16.mxu0 0
    %6460 = vmatpush1.bf16.msra.mxu0 %v6457
    %6461 = vmatprep.subr.bf16.mxu0 0
    %6462 = vmatpush1.bf16.msra.mxu0 0
    %6463 = vmatprep.subr.bf16.mxu0 0
    %6464 = vmatpush1.bf16.msra.mxu0 0
    %6465 = vmatprep.subr.bf16.mxu0 0
    %6466 = vmatpush1.bf16.msra.mxu0 0
    %6467 = vmatprep.subr.bf16.mxu0 0
    %6468 = vmatpush1.bf16.msra.mxu0 0
    %6469 = vmatprep.subr.bf16.mxu0 0
    %6470 = vmatpush1.bf16.msra.mxu0 0
    %6471 = vmatprep.subr.bf16.mxu0 0
    %6472 = vmatpush1.bf16.msra.mxu0 0
    %6473 = vmatprep.subr.bf16.mxu0 0
    %6474 = vmatpush1.bf16.msra.mxu0 0
    %6475 = vmatprep.subr.bf16.mxu0 0
    %6476 = vmatpush1.bf16.msra.mxu0 0
    %6477 = vmatprep.subr.bf16.mxu0 0
    %6478 = vmatpush1.bf16.msra.mxu0 0
    %6479 = vmatprep.subr.bf16.mxu0 0
    %6480 = vmatpush1.bf16.msra.mxu0 0
    %6481 = vmatprep.subr.bf16.mxu0 0
    %6482 = vmatpush1.bf16.msra.mxu0 0
    %6483 = vmatprep.subr.bf16.mxu0 0
    %6484 = vmatpush1.bf16.msra.mxu0 0
    %6485 = vmatprep.subr.bf16.mxu0 0
    %6486 = vmatpush1.bf16.msra.mxu0 0
    %6487 = vmatprep.subr.bf16.mxu0 0
    %6488 = vmatpush1.bf16.msra.mxu0 0
    %6489 = vmatprep.subr.bf16.mxu0 0
    %6490 = vmatpush1.bf16.msra.mxu0 0
    %6491 = vmatprep.mubr.bf16.mxu0 0
    %6492 = vmatmul.mubr.bf16.gmra.mrb[0].mxu0 %v6454
    %v6493 = vpop.f32.mrb[0].mxu0
    %v6494 = vadd.f32 0.0, %v6493
    %v6495 = vpop.f32.mrb[0].mxu0
    %v6496 = vpop.f32.mrb[0].mxu0
    %v6497 = vpop.f32.mrb[0].mxu0
    %6498 = vdwg.mxu0
    %6500 = vrot.lane.b32.xlu0 %v6279, 120
    %v6501 = vpop.permute.xlu0 %6500
    %6502 = vrot.lane.b32.xlu0 %v6281, 120
    %v6503 = vpop.permute.xlu0 %6502
    %v6505 = vsel %vm1496, %v6501, 0
    %v6508 = vsel %vm1496, %v6503, 0
    %6510 = vmatprep.subr.bf16.mxu0 0
    %6511 = vmatpush1.bf16.xpose.msra.mxu0 %v6508
    %6512 = vmatprep.subr.bf16.mxu0 0
    %6513 = vmatpush1.bf16.xpose.msra.mxu0 0
    %6514 = vmatprep.subr.bf16.mxu0 0
    %6515 = vmatpush1.bf16.xpose.msra.mxu0 0
    %6516 = vmatprep.subr.bf16.mxu0 0
    %6517 = vmatpush1.bf16.xpose.msra.mxu0 0
    %6518 = vmatprep.subr.bf16.mxu0 0
    %6519 = vmatpush1.bf16.xpose.msra.mxu0 0
    %6520 = vmatprep.subr.bf16.mxu0 0
    %6521 = vmatpush1.bf16.xpose.msra.mxu0 0
    %6522 = vmatprep.subr.bf16.mxu0 0
    %6523 = vmatpush1.bf16.xpose.msra.mxu0 0
    %6524 = vmatprep.subr.bf16.mxu0 0
    %6525 = vmatpush1.bf16.xpose.msra.mxu0 0
    %6526 = vmatprep.subr.bf16.mxu0 0
    %6527 = vmatpush1.bf16.xpose.msra.mxu0 0
    %6528 = vmatprep.subr.bf16.mxu0 0
    %6529 = vmatpush1.bf16.xpose.msra.mxu0 0
    %6530 = vmatprep.subr.bf16.mxu0 0
    %6531 = vmatpush1.bf16.xpose.msra.mxu0 0
    %6532 = vmatprep.subr.bf16.mxu0 0
    %6533 = vmatpush1.bf16.xpose.msra.mxu0 0
    %6534 = vmatprep.subr.bf16.mxu0 0
    %6535 = vmatpush1.bf16.xpose.msra.mxu0 0
    %6536 = vmatprep.subr.bf16.mxu0 0
    %6537 = vmatpush1.bf16.xpose.msra.mxu0 0
    %6538 = vmatprep.subr.bf16.mxu0 0
    %6539 = vmatpush1.bf16.xpose.msra.mxu0 0
    %6540 = vmatprep.subr.bf16.mxu0 0
    %6541 = vmatpush1.bf16.xpose.msra.mxu0 0
    %6542 = vmatprep.mubr.bf16.mxu0 0
    %6543 = vmatmul.mubr.bf16.gmra.mrb[0].mxu0 %v6505
    %v6544 = vpop.f32.mrb[0].mxu0
    %v6545 = vadd.f32 0.0, %v6544
    %v6546 = vpop.f32.mrb[0].mxu0
    %v6547 = vpop.f32.mrb[0].mxu0
    %v6548 = vpop.f32.mrb[0].mxu0
    %6549 = vdwg.mxu0
    %6551 = vrot.lane.b32.xlu0 %v6280, 120
    %v6552 = vpop.permute.xlu0 %6551
    %6553 = vrot.lane.b32.xlu0 %v6282, 120
    %v6554 = vpop.permute.xlu0 %6553
    %v6556 = vsel %vm1496, %v6552, 0
    %v6559 = vsel %vm1496, %v6554, 0
    %6561 = vmatprep.subr.bf16.mxu0 0
    %6562 = vmatpush1.bf16.xpose.msra.mxu0 %v6559
    %6563 = vmatprep.subr.bf16.mxu0 0
    %6564 = vmatpush1.bf16.xpose.msra.mxu0 0
    %6565 = vmatprep.subr.bf16.mxu0 0
    %6566 = vmatpush1.bf16.xpose.msra.mxu0 0
    %6567 = vmatprep.subr.bf16.mxu0 0
    %6568 = vmatpush1.bf16.xpose.msra.mxu0 0
    %6569 = vmatprep.subr.bf16.mxu0 0
    %6570 = vmatpush1.bf16.xpose.msra.mxu0 0
    %6571 = vmatprep.subr.bf16.mxu0 0
    %6572 = vmatpush1.bf16.xpose.msra.mxu0 0
    %6573 = vmatprep.subr.bf16.mxu0 0
    %6574 = vmatpush1.bf16.xpose.msra.mxu0 0
    %6575 = vmatprep.subr.bf16.mxu0 0
    %6576 = vmatpush1.bf16.xpose.msra.mxu0 0
    %6577 = vmatprep.subr.bf16.mxu0 0
    %6578 = vmatpush1.bf16.xpose.msra.mxu0 0
    %6579 = vmatprep.subr.bf16.mxu0 0
    %6580 = vmatpush1.bf16.xpose.msra.mxu0 0
    %6581 = vmatprep.subr.bf16.mxu0 0
    %6582 = vmatpush1.bf16.xpose.msra.mxu0 0
    %6583 = vmatprep.subr.bf16.mxu0 0
    %6584 = vmatpush1.bf16.xpose.msra.mxu0 0
    %6585 = vmatprep.subr.bf16.mxu0 0
    %6586 = vmatpush1.bf16.xpose.msra.mxu0 0
    %6587 = vmatprep.subr.bf16.mxu0 0
    %6588 = vmatpush1.bf16.xpose.msra.mxu0 0
    %6589 = vmatprep.subr.bf16.mxu0 0
    %6590 = vmatpush1.bf16.xpose.msra.mxu0 0
    %6591 = vmatprep.subr.bf16.mxu0 0
    %6592 = vmatpush1.bf16.xpose.msra.mxu0 0
    %6593 = vmatprep.mubr.bf16.mxu0 0
    %6594 = vmatmul.mubr.bf16.gmra.mrb[0].mxu0 %v6556
    %v6595 = vpop.f32.mrb[0].mxu0
    %v6596 = vadd.f32 0.0, %v6595
    %v6597 = vpop.f32.mrb[0].mxu0
    %v6598 = vpop.f32.mrb[0].mxu0
    %v6599 = vpop.f32.mrb[0].mxu0
    %6600 = vdwg.mxu0
    %v6601 = vsel %vm1592, -1e+09, %v6545
    %v6602 = vsel %vm1593, -1e+09, %v6596
    %v6603 = vsel %vm4598, %v6601, -inf
    %6604 = vmax.xlane.f32.xlu0 %v6603
    %v6605 = vpop.xlane.xlu0 %6604
    %v6606 = vsel %vm4598, %v6602, -inf
    %6607 = vmax.xlane.f32.xlu0 %v6606
    %v6608 = vpop.xlane.xlu0 %6607
    %v6609 = vsub.f32 %v6601, %v6605
    %v6610 = vsub.f32 %v6602, %v6608
    %v6611 = vmul.f32 %v6609, 1.442695
    %v6612 = vpow.pop %v6611
    %v6613 = vmul.f32 %v6610, 1.442695
    %v6614 = vpow.pop %v6613
    %v6615 = vsel %vm4598, %v6612, 0.0
    %6616 = vadd.xlane.f32.xlu0 %v6615
    %v6617 = vpop.xlane.xlu0 %6616
    %v6618 = vsel %vm4598, %v6614, 0.0
    %6619 = vadd.xlane.f32.xlu0 %v6618
    %v6620 = vpop.xlane.xlu0 %6619
    %v6621 = vrcp.pop %v6617
    %v6622 = vrcp.pop %v6620
    %v6623 = vmul.f32 %v6612, %v6621
    %v6624 = vmul.f32 %v6614, %v6622
    %v6625 = vpack.c.bf16 %v6623, %v6623
    %v6626 = vpack.c.bf16 %v6624, %v6624
    %6627 = vrot.lane.b32.xlu0 %v6281, 88
    %v6628 = vpop.permute.xlu0 %6627
    %v6630 = vsel %vm1496, %v6625, 0
    %v6633 = vsel %vm1625, %v6628, 0
    %6635 = vmatprep.subr.bf16.mxu0 0
    %6636 = vmatpush1.bf16.msra.mxu0 %v6633
    %6637 = vmatprep.subr.bf16.mxu0 0
    %6638 = vmatpush1.bf16.msra.mxu0 0
    %6639 = vmatprep.subr.bf16.mxu0 0
    %6640 = vmatpush1.bf16.msra.mxu0 0
    %6641 = vmatprep.subr.bf16.mxu0 0
    %6642 = vmatpush1.bf16.msra.mxu0 0
    %6643 = vmatprep.subr.bf16.mxu0 0
    %6644 = vmatpush1.bf16.msra.mxu0 0
    %6645 = vmatprep.subr.bf16.mxu0 0
    %6646 = vmatpush1.bf16.msra.mxu0 0
    %6647 = vmatprep.subr.bf16.mxu0 0
    %6648 = vmatpush1.bf16.msra.mxu0 0
    %6649 = vmatprep.subr.bf16.mxu0 0
    %6650 = vmatpush1.bf16.msra.mxu0 0
    %6651 = vmatprep.subr.bf16.mxu0 0
    %6652 = vmatpush1.bf16.msra.mxu0 0
    %6653 = vmatprep.subr.bf16.mxu0 0
    %6654 = vmatpush1.bf16.msra.mxu0 0
    %6655 = vmatprep.subr.bf16.mxu0 0
    %6656 = vmatpush1.bf16.msra.mxu0 0
    %6657 = vmatprep.subr.bf16.mxu0 0
    %6658 = vmatpush1.bf16.msra.mxu0 0
    %6659 = vmatprep.subr.bf16.mxu0 0
    %6660 = vmatpush1.bf16.msra.mxu0 0
    %6661 = vmatprep.subr.bf16.mxu0 0
    %6662 = vmatpush1.bf16.msra.mxu0 0
    %6663 = vmatprep.subr.bf16.mxu0 0
    %6664 = vmatpush1.bf16.msra.mxu0 0
    %6665 = vmatprep.subr.bf16.mxu0 0
    %6666 = vmatpush1.bf16.msra.mxu0 0
    %6667 = vmatprep.mubr.bf16.mxu0 0
    %6668 = vmatmul.mubr.bf16.gmra.mrb[0].mxu0 %v6630
    %v6669 = vpop.f32.mrb[0].mxu0
    %v6670 = vadd.f32 0.0, %v6669
    %v6671 = vpop.f32.mrb[0].mxu0
    %v6672 = vpop.f32.mrb[0].mxu0
    %v6673 = vpop.f32.mrb[0].mxu0
    %6674 = vdwg.mxu0
    %6675 = vrot.lane.b32.xlu0 %v6282, 88
    %v6676 = vpop.permute.xlu0 %6675
    %v6678 = vsel %vm1496, %v6626, 0
    %v6681 = vsel %vm1625, %v6676, 0
    %6683 = vmatprep.subr.bf16.mxu0 0
    %6684 = vmatpush1.bf16.msra.mxu0 %v6681
    %6685 = vmatprep.subr.bf16.mxu0 0
    %6686 = vmatpush1.bf16.msra.mxu0 0
    %6687 = vmatprep.subr.bf16.mxu0 0
    %6688 = vmatpush1.bf16.msra.mxu0 0
    %6689 = vmatprep.subr.bf16.mxu0 0
    %6690 = vmatpush1.bf16.msra.mxu0 0
    %6691 = vmatprep.subr.bf16.mxu0 0
    %6692 = vmatpush1.bf16.msra.mxu0 0
    %6693 = vmatprep.subr.bf16.mxu0 0
    %6694 = vmatpush1.bf16.msra.mxu0 0
    %6695 = vmatprep.subr.bf16.mxu0 0
    %6696 = vmatpush1.bf16.msra.mxu0 0
    %6697 = vmatprep.subr.bf16.mxu0 0
    %6698 = vmatpush1.bf16.msra.mxu0 0
    %6699 = vmatprep.subr.bf16.mxu0 0
    %6700 = vmatpush1.bf16.msra.mxu0 0
    %6701 = vmatprep.subr.bf16.mxu0 0
    %6702 = vmatpush1.bf16.msra.mxu0 0
    %6703 = vmatprep.subr.bf16.mxu0 0
    %6704 = vmatpush1.bf16.msra.mxu0 0
    %6705 = vmatprep.subr.bf16.mxu0 0
    %6706 = vmatpush1.bf16.msra.mxu0 0
    %6707 = vmatprep.subr.bf16.mxu0 0
    %6708 = vmatpush1.bf16.msra.mxu0 0
    %6709 = vmatprep.subr.bf16.mxu0 0
    %6710 = vmatpush1.bf16.msra.mxu0 0
    %6711 = vmatprep.subr.bf16.mxu0 0
    %6712 = vmatpush1.bf16.msra.mxu0 0
    %6713 = vmatprep.subr.bf16.mxu0 0
    %6714 = vmatpush1.bf16.msra.mxu0 0
    %6715 = vmatprep.mubr.bf16.mxu0 0
    %6716 = vmatmul.mubr.bf16.gmra.mrb[0].mxu0 %v6678
    %v6717 = vpop.f32.mrb[0].mxu0
    %v6718 = vadd.f32 0.0, %v6717
    %v6719 = vpop.f32.mrb[0].mxu0
    %v6720 = vpop.f32.mrb[0].mxu0
    %v6721 = vpop.f32.mrb[0].mxu0
    %6722 = vdwg.mxu0
    %6723 = vrot.lane.b32.xlu0 %v6279, 112
    %v6724 = vpop.permute.xlu0 %6723
    %6725 = vrot.lane.b32.xlu0 %v6281, 112
    %v6726 = vpop.permute.xlu0 %6725
    %v6728 = vsel %vm1496, %v6724, 0
    %v6731 = vsel %vm1496, %v6726, 0
    %6733 = vmatprep.subr.bf16.mxu0 0
    %6734 = vmatpush1.bf16.xpose.msra.mxu0 %v6731
    %6735 = vmatprep.subr.bf16.mxu0 0
    %6736 = vmatpush1.bf16.xpose.msra.mxu0 0
    %6737 = vmatprep.subr.bf16.mxu0 0
    %6738 = vmatpush1.bf16.xpose.msra.mxu0 0
    %6739 = vmatprep.subr.bf16.mxu0 0
    %6740 = vmatpush1.bf16.xpose.msra.mxu0 0
    %6741 = vmatprep.subr.bf16.mxu0 0
    %6742 = vmatpush1.bf16.xpose.msra.mxu0 0
    %6743 = vmatprep.subr.bf16.mxu0 0
    %6744 = vmatpush1.bf16.xpose.msra.mxu0 0
    %6745 = vmatprep.subr.bf16.mxu0 0
    %6746 = vmatpush1.bf16.xpose.msra.mxu0 0
    %6747 = vmatprep.subr.bf16.mxu0 0
    %6748 = vmatpush1.bf16.xpose.msra.mxu0 0
    %6749 = vmatprep.subr.bf16.mxu0 0
    %6750 = vmatpush1.bf16.xpose.msra.mxu0 0
    %6751 = vmatprep.subr.bf16.mxu0 0
    %6752 = vmatpush1.bf16.xpose.msra.mxu0 0
    %6753 = vmatprep.subr.bf16.mxu0 0
    %6754 = vmatpush1.bf16.xpose.msra.mxu0 0
    %6755 = vmatprep.subr.bf16.mxu0 0
    %6756 = vmatpush1.bf16.xpose.msra.mxu0 0
    %6757 = vmatprep.subr.bf16.mxu0 0
    %6758 = vmatpush1.bf16.xpose.msra.mxu0 0
    %6759 = vmatprep.subr.bf16.mxu0 0
    %6760 = vmatpush1.bf16.xpose.msra.mxu0 0
    %6761 = vmatprep.subr.bf16.mxu0 0
    %6762 = vmatpush1.bf16.xpose.msra.mxu0 0
    %6763 = vmatprep.subr.bf16.mxu0 0
    %6764 = vmatpush1.bf16.xpose.msra.mxu0 0
    %6765 = vmatprep.mubr.bf16.mxu0 0
    %6766 = vmatmul.mubr.bf16.gmra.mrb[0].mxu0 %v6728
    %v6767 = vpop.f32.mrb[0].mxu0
    %v6768 = vadd.f32 0.0, %v6767
    %v6769 = vpop.f32.mrb[0].mxu0
    %v6770 = vpop.f32.mrb[0].mxu0
    %v6771 = vpop.f32.mrb[0].mxu0
    %6772 = vdwg.mxu0
    %6773 = vrot.lane.b32.xlu0 %v6280, 112
    %v6774 = vpop.permute.xlu0 %6773
    %6775 = vrot.lane.b32.xlu0 %v6282, 112
    %v6776 = vpop.permute.xlu0 %6775
    %v6778 = vsel %vm1496, %v6774, 0
    %v6781 = vsel %vm1496, %v6776, 0
    %6783 = vmatprep.subr.bf16.mxu0 0
    %6784 = vmatpush1.bf16.xpose.msra.mxu0 %v6781
    %6785 = vmatprep.subr.bf16.mxu0 0
    %6786 = vmatpush1.bf16.xpose.msra.mxu0 0
    %6787 = vmatprep.subr.bf16.mxu0 0
    %6788 = vmatpush1.bf16.xpose.msra.mxu0 0
    %6789 = vmatprep.subr.bf16.mxu0 0
    %6790 = vmatpush1.bf16.xpose.msra.mxu0 0
    %6791 = vmatprep.subr.bf16.mxu0 0
    %6792 = vmatpush1.bf16.xpose.msra.mxu0 0
    %6793 = vmatprep.subr.bf16.mxu0 0
    %6794 = vmatpush1.bf16.xpose.msra.mxu0 0
    %6795 = vmatprep.subr.bf16.mxu0 0
    %6796 = vmatpush1.bf16.xpose.msra.mxu0 0
    %6797 = vmatprep.subr.bf16.mxu0 0
    %6798 = vmatpush1.bf16.xpose.msra.mxu0 0
    %6799 = vmatprep.subr.bf16.mxu0 0
    %6800 = vmatpush1.bf16.xpose.msra.mxu0 0
    %6801 = vmatprep.subr.bf16.mxu0 0
    %6802 = vmatpush1.bf16.xpose.msra.mxu0 0
    %6803 = vmatprep.subr.bf16.mxu0 0
    %6804 = vmatpush1.bf16.xpose.msra.mxu0 0
    %6805 = vmatprep.subr.bf16.mxu0 0
    %6806 = vmatpush1.bf16.xpose.msra.mxu0 0
    %6807 = vmatprep.subr.bf16.mxu0 0
    %6808 = vmatpush1.bf16.xpose.msra.mxu0 0
    %6809 = vmatprep.subr.bf16.mxu0 0
    %6810 = vmatpush1.bf16.xpose.msra.mxu0 0
    %6811 = vmatprep.subr.bf16.mxu0 0
    %6812 = vmatpush1.bf16.xpose.msra.mxu0 0
    %6813 = vmatprep.subr.bf16.mxu0 0
    %6814 = vmatpush1.bf16.xpose.msra.mxu0 0
    %6815 = vmatprep.mubr.bf16.mxu0 0
    %6816 = vmatmul.mubr.bf16.gmra.mrb[0].mxu0 %v6778
    %v6817 = vpop.f32.mrb[0].mxu0
    %v6818 = vadd.f32 0.0, %v6817
    %v6819 = vpop.f32.mrb[0].mxu0
    %v6820 = vpop.f32.mrb[0].mxu0
    %v6821 = vpop.f32.mrb[0].mxu0
    %6822 = vdwg.mxu0
    %v6823 = vsel %vm1592, -1e+09, %v6768
    %v6824 = vsel %vm1593, -1e+09, %v6818
    %v6825 = vsel %vm4598, %v6823, -inf
    %6826 = vmax.xlane.f32.xlu0 %v6825
    %v6827 = vpop.xlane.xlu0 %6826
    %v6828 = vsel %vm4598, %v6824, -inf
    %6829 = vmax.xlane.f32.xlu0 %v6828
    %v6830 = vpop.xlane.xlu0 %6829
    %v6831 = vsub.f32 %v6823, %v6827
    %v6832 = vsub.f32 %v6824, %v6830
    %v6833 = vmul.f32 %v6831, 1.442695
    %v6834 = vpow.pop %v6833
    %v6835 = vmul.f32 %v6832, 1.442695
    %v6836 = vpow.pop %v6835
    %v6837 = vsel %vm4598, %v6834, 0.0
    %6838 = vadd.xlane.f32.xlu0 %v6837
    %v6839 = vpop.xlane.xlu0 %6838
    %v6840 = vsel %vm4598, %v6836, 0.0
    %6841 = vadd.xlane.f32.xlu0 %v6840
    %v6842 = vpop.xlane.xlu0 %6841
    %v6843 = vrcp.pop %v6839
    %v6844 = vrcp.pop %v6842
    %v6845 = vmul.f32 %v6834, %v6843
    %v6846 = vmul.f32 %v6836, %v6844
    %v6847 = vpack.c.bf16 %v6845, %v6845
    %v6848 = vpack.c.bf16 %v6846, %v6846
    %6849 = vrot.lane.b32.xlu0 %v6281, 80
    %v6850 = vpop.permute.xlu0 %6849
    %v6852 = vsel %vm1496, %v6847, 0
    %v6855 = vsel %vm1625, %v6850, 0
    %6857 = vmatprep.subr.bf16.mxu0 0
    %6858 = vmatpush1.bf16.msra.mxu0 %v6855
    %6859 = vmatprep.subr.bf16.mxu0 0
    %6860 = vmatpush1.bf16.msra.mxu0 0
    %6861 = vmatprep.subr.bf16.mxu0 0
    %6862 = vmatpush1.bf16.msra.mxu0 0
    %6863 = vmatprep.subr.bf16.mxu0 0
    %6864 = vmatpush1.bf16.msra.mxu0 0
    %6865 = vmatprep.subr.bf16.mxu0 0
    %6866 = vmatpush1.bf16.msra.mxu0 0
    %6867 = vmatprep.subr.bf16.mxu0 0
    %6868 = vmatpush1.bf16.msra.mxu0 0
    %6869 = vmatprep.subr.bf16.mxu0 0
    %6870 = vmatpush1.bf16.msra.mxu0 0
    %6871 = vmatprep.subr.bf16.mxu0 0
    %6872 = vmatpush1.bf16.msra.mxu0 0
    %6873 = vmatprep.subr.bf16.mxu0 0
    %6874 = vmatpush1.bf16.msra.mxu0 0
    %6875 = vmatprep.subr.bf16.mxu0 0
    %6876 = vmatpush1.bf16.msra.mxu0 0
    %6877 = vmatprep.subr.bf16.mxu0 0
    %6878 = vmatpush1.bf16.msra.mxu0 0
    %6879 = vmatprep.subr.bf16.mxu0 0
    %6880 = vmatpush1.bf16.msra.mxu0 0
    %6881 = vmatprep.subr.bf16.mxu0 0
    %6882 = vmatpush1.bf16.msra.mxu0 0
    %6883 = vmatprep.subr.bf16.mxu0 0
    %6884 = vmatpush1.bf16.msra.mxu0 0
    %6885 = vmatprep.subr.bf16.mxu0 0
    %6886 = vmatpush1.bf16.msra.mxu0 0
    %6887 = vmatprep.subr.bf16.mxu0 0
    %6888 = vmatpush1.bf16.msra.mxu0 0
    %6889 = vmatprep.mubr.bf16.mxu0 0
    %6890 = vmatmul.mubr.bf16.gmra.mrb[0].mxu0 %v6852
    %v6891 = vpop.f32.mrb[0].mxu0
    %v6892 = vadd.f32 0.0, %v6891
    %v6893 = vpop.f32.mrb[0].mxu0
    %v6894 = vpop.f32.mrb[0].mxu0
    %v6895 = vpop.f32.mrb[0].mxu0
    %6896 = vdwg.mxu0
    %6897 = vrot.lane.b32.xlu0 %v6282, 80
    %v6898 = vpop.permute.xlu0 %6897
    %v6900 = vsel %vm1496, %v6848, 0
    %v6903 = vsel %vm1625, %v6898, 0
    %6905 = vmatprep.subr.bf16.mxu0 0
    %6906 = vmatpush1.bf16.msra.mxu0 %v6903
    %6907 = vmatprep.subr.bf16.mxu0 0
    %6908 = vmatpush1.bf16.msra.mxu0 0
    %6909 = vmatprep.subr.bf16.mxu0 0
    %6910 = vmatpush1.bf16.msra.mxu0 0
    %6911 = vmatprep.subr.bf16.mxu0 0
    %6912 = vmatpush1.bf16.msra.mxu0 0
    %6913 = vmatprep.subr.bf16.mxu0 0
    %6914 = vmatpush1.bf16.msra.mxu0 0
    %6915 = vmatprep.subr.bf16.mxu0 0
    %6916 = vmatpush1.bf16.msra.mxu0 0
    %6917 = vmatprep.subr.bf16.mxu0 0
    %6918 = vmatpush1.bf16.msra.mxu0 0
    %6919 = vmatprep.subr.bf16.mxu0 0
    %6920 = vmatpush1.bf16.msra.mxu0 0
    %6921 = vmatprep.subr.bf16.mxu0 0
    %6922 = vmatpush1.bf16.msra.mxu0 0
    %6923 = vmatprep.subr.bf16.mxu0 0
    %6924 = vmatpush1.bf16.msra.mxu0 0
    %6925 = vmatprep.subr.bf16.mxu0 0
    %6926 = vmatpush1.bf16.msra.mxu0 0
    %6927 = vmatprep.subr.bf16.mxu0 0
    %6928 = vmatpush1.bf16.msra.mxu0 0
    %6929 = vmatprep.subr.bf16.mxu0 0
    %6930 = vmatpush1.bf16.msra.mxu0 0
    %6931 = vmatprep.subr.bf16.mxu0 0
    %6932 = vmatpush1.bf16.msra.mxu0 0
    %6933 = vmatprep.subr.bf16.mxu0 0
    %6934 = vmatpush1.bf16.msra.mxu0 0
    %6935 = vmatprep.subr.bf16.mxu0 0
    %6936 = vmatpush1.bf16.msra.mxu0 0
    %6937 = vmatprep.mubr.bf16.mxu0 0
    %6938 = vmatmul.mubr.bf16.gmra.mrb[0].mxu0 %v6900
    %v6939 = vpop.f32.mrb[0].mxu0
    %v6940 = vadd.f32 0.0, %v6939
    %v6941 = vpop.f32.mrb[0].mxu0
    %v6942 = vpop.f32.mrb[0].mxu0
    %v6943 = vpop.f32.mrb[0].mxu0
    %6944 = vdwg.mxu0
    %6945 = vrot.lane.b32.xlu0 %v6279, 104
    %v6946 = vpop.permute.xlu0 %6945
    %6947 = vrot.lane.b32.xlu0 %v6281, 104
    %v6948 = vpop.permute.xlu0 %6947
    %v6950 = vsel %vm1496, %v6946, 0
    %v6953 = vsel %vm1496, %v6948, 0
    %6955 = vmatprep.subr.bf16.mxu0 0
    %6956 = vmatpush1.bf16.xpose.msra.mxu0 %v6953
    %6957 = vmatprep.subr.bf16.mxu0 0
    %6958 = vmatpush1.bf16.xpose.msra.mxu0 0
    %6959 = vmatprep.subr.bf16.mxu0 0
    %6960 = vmatpush1.bf16.xpose.msra.mxu0 0
    %6961 = vmatprep.subr.bf16.mxu0 0
    %6962 = vmatpush1.bf16.xpose.msra.mxu0 0
    %6963 = vmatprep.subr.bf16.mxu0 0
    %6964 = vmatpush1.bf16.xpose.msra.mxu0 0
    %6965 = vmatprep.subr.bf16.mxu0 0
    %6966 = vmatpush1.bf16.xpose.msra.mxu0 0
    %6967 = vmatprep.subr.bf16.mxu0 0
    %6968 = vmatpush1.bf16.xpose.msra.mxu0 0
    %6969 = vmatprep.subr.bf16.mxu0 0
    %6970 = vmatpush1.bf16.xpose.msra.mxu0 0
    %6971 = vmatprep.subr.bf16.mxu0 0
    %6972 = vmatpush1.bf16.xpose.msra.mxu0 0
    %6973 = vmatprep.subr.bf16.mxu0 0
    %6974 = vmatpush1.bf16.xpose.msra.mxu0 0
    %6975 = vmatprep.subr.bf16.mxu0 0
    %6976 = vmatpush1.bf16.xpose.msra.mxu0 0
    %6977 = vmatprep.subr.bf16.mxu0 0
    %6978 = vmatpush1.bf16.xpose.msra.mxu0 0
    %6979 = vmatprep.subr.bf16.mxu0 0
    %6980 = vmatpush1.bf16.xpose.msra.mxu0 0
    %6981 = vmatprep.subr.bf16.mxu0 0
    %6982 = vmatpush1.bf16.xpose.msra.mxu0 0
    %6983 = vmatprep.subr.bf16.mxu0 0
    %6984 = vmatpush1.bf16.xpose.msra.mxu0 0
    %6985 = vmatprep.subr.bf16.mxu0 0
    %6986 = vmatpush1.bf16.xpose.msra.mxu0 0
    %6987 = vmatprep.mubr.bf16.mxu0 0
    %6988 = vmatmul.mubr.bf16.gmra.mrb[0].mxu0 %v6950
    %v6989 = vpop.f32.mrb[0].mxu0
    %v6990 = vadd.f32 0.0, %v6989
    %v6991 = vpop.f32.mrb[0].mxu0
    %v6992 = vpop.f32.mrb[0].mxu0
    %v6993 = vpop.f32.mrb[0].mxu0
    %6994 = vdwg.mxu0
    %6995 = vrot.lane.b32.xlu0 %v6280, 104
    %v6996 = vpop.permute.xlu0 %6995
    %6997 = vrot.lane.b32.xlu0 %v6282, 104
    %v6998 = vpop.permute.xlu0 %6997
    %v7000 = vsel %vm1496, %v6996, 0
    %v7003 = vsel %vm1496, %v6998, 0
    %7005 = vmatprep.subr.bf16.mxu0 0
    %7006 = vmatpush1.bf16.xpose.msra.mxu0 %v7003
    %7007 = vmatprep.subr.bf16.mxu0 0
    %7008 = vmatpush1.bf16.xpose.msra.mxu0 0
    %7009 = vmatprep.subr.bf16.mxu0 0
    %7010 = vmatpush1.bf16.xpose.msra.mxu0 0
    %7011 = vmatprep.subr.bf16.mxu0 0
    %7012 = vmatpush1.bf16.xpose.msra.mxu0 0
    %7013 = vmatprep.subr.bf16.mxu0 0
    %7014 = vmatpush1.bf16.xpose.msra.mxu0 0
    %7015 = vmatprep.subr.bf16.mxu0 0
    %7016 = vmatpush1.bf16.xpose.msra.mxu0 0
    %7017 = vmatprep.subr.bf16.mxu0 0
    %7018 = vmatpush1.bf16.xpose.msra.mxu0 0
    %7019 = vmatprep.subr.bf16.mxu0 0
    %7020 = vmatpush1.bf16.xpose.msra.mxu0 0
    %7021 = vmatprep.subr.bf16.mxu0 0
    %7022 = vmatpush1.bf16.xpose.msra.mxu0 0
    %7023 = vmatprep.subr.bf16.mxu0 0
    %7024 = vmatpush1.bf16.xpose.msra.mxu0 0
    %7025 = vmatprep.subr.bf16.mxu0 0
    %7026 = vmatpush1.bf16.xpose.msra.mxu0 0
    %7027 = vmatprep.subr.bf16.mxu0 0
    %7028 = vmatpush1.bf16.xpose.msra.mxu0 0
    %7029 = vmatprep.subr.bf16.mxu0 0
    %7030 = vmatpush1.bf16.xpose.msra.mxu0 0
    %7031 = vmatprep.subr.bf16.mxu0 0
    %7032 = vmatpush1.bf16.xpose.msra.mxu0 0
    %7033 = vmatprep.subr.bf16.mxu0 0
    %7034 = vmatpush1.bf16.xpose.msra.mxu0 0
    %7035 = vmatprep.subr.bf16.mxu0 0
    %7036 = vmatpush1.bf16.xpose.msra.mxu0 0
    %7037 = vmatprep.mubr.bf16.mxu0 0
    %7038 = vmatmul.mubr.bf16.gmra.mrb[0].mxu0 %v7000
    %v7039 = vpop.f32.mrb[0].mxu0
    %v7040 = vadd.f32 0.0, %v7039
    %v7041 = vpop.f32.mrb[0].mxu0
    %v7042 = vpop.f32.mrb[0].mxu0
    %v7043 = vpop.f32.mrb[0].mxu0
    %7044 = vdwg.mxu0
    %v7045 = vsel %vm1592, -1e+09, %v6990
    %v7046 = vsel %vm1593, -1e+09, %v7040
    %v7047 = vsel %vm4598, %v7045, -inf
    %7048 = vmax.xlane.f32.xlu0 %v7047
    %v7049 = vpop.xlane.xlu0 %7048
    %v7050 = vsel %vm4598, %v7046, -inf
    %7051 = vmax.xlane.f32.xlu0 %v7050
    %v7052 = vpop.xlane.xlu0 %7051
    %v7053 = vsub.f32 %v7045, %v7049
    %v7054 = vsub.f32 %v7046, %v7052
    %v7055 = vmul.f32 %v7053, 1.442695
    %v7056 = vpow.pop %v7055
    %v7057 = vmul.f32 %v7054, 1.442695
    %v7058 = vpow.pop %v7057
    %v7059 = vsel %vm4598, %v7056, 0.0
    %7060 = vadd.xlane.f32.xlu0 %v7059
    %v7061 = vpop.xlane.xlu0 %7060
    %v7062 = vsel %vm4598, %v7058, 0.0
    %7063 = vadd.xlane.f32.xlu0 %v7062
    %v7064 = vpop.xlane.xlu0 %7063
    %v7065 = vrcp.pop %v7061
    %v7066 = vrcp.pop %v7064
    %v7067 = vmul.f32 %v7056, %v7065
    %v7068 = vmul.f32 %v7058, %v7066
    %v7069 = vpack.c.bf16 %v7067, %v7067
    %v7070 = vpack.c.bf16 %v7068, %v7068
    %7071 = vrot.lane.b32.xlu0 %v6281, 72
    %v7072 = vpop.permute.xlu0 %7071
    %v7074 = vsel %vm1496, %v7069, 0
    %v7077 = vsel %vm1625, %v7072, 0
    %7079 = vmatprep.subr.bf16.mxu0 0
    %7080 = vmatpush1.bf16.msra.mxu0 %v7077
    %7081 = vmatprep.subr.bf16.mxu0 0
    %7082 = vmatpush1.bf16.msra.mxu0 0
    %7083 = vmatprep.subr.bf16.mxu0 0
    %7084 = vmatpush1.bf16.msra.mxu0 0
    %7085 = vmatprep.subr.bf16.mxu0 0
    %7086 = vmatpush1.bf16.msra.mxu0 0
    %7087 = vmatprep.subr.bf16.mxu0 0
    %7088 = vmatpush1.bf16.msra.mxu0 0
    %7089 = vmatprep.subr.bf16.mxu0 0
    %7090 = vmatpush1.bf16.msra.mxu0 0
    %7091 = vmatprep.subr.bf16.mxu0 0
    %7092 = vmatpush1.bf16.msra.mxu0 0
    %7093 = vmatprep.subr.bf16.mxu0 0
    %7094 = vmatpush1.bf16.msra.mxu0 0
    %7095 = vmatprep.subr.bf16.mxu0 0
    %7096 = vmatpush1.bf16.msra.mxu0 0
    %7097 = vmatprep.subr.bf16.mxu0 0
    %7098 = vmatpush1.bf16.msra.mxu0 0
    %7099 = vmatprep.subr.bf16.mxu0 0
    %7100 = vmatpush1.bf16.msra.mxu0 0
    %7101 = vmatprep.subr.bf16.mxu0 0
    %7102 = vmatpush1.bf16.msra.mxu0 0
    %7103 = vmatprep.subr.bf16.mxu0 0
    %7104 = vmatpush1.bf16.msra.mxu0 0
    %7105 = vmatprep.subr.bf16.mxu0 0
    %7106 = vmatpush1.bf16.msra.mxu0 0
    %7107 = vmatprep.subr.bf16.mxu0 0
    %7108 = vmatpush1.bf16.msra.mxu0 0
    %7109 = vmatprep.subr.bf16.mxu0 0
    %7110 = vmatpush1.bf16.msra.mxu0 0
    %7111 = vmatprep.mubr.bf16.mxu0 0
    %7112 = vmatmul.mubr.bf16.gmra.mrb[0].mxu0 %v7074
    %v7113 = vpop.f32.mrb[0].mxu0
    %v7114 = vadd.f32 0.0, %v7113
    %v7115 = vpop.f32.mrb[0].mxu0
    %v7116 = vpop.f32.mrb[0].mxu0
    %v7117 = vpop.f32.mrb[0].mxu0
    %7118 = vdwg.mxu0
    %7119 = vrot.lane.b32.xlu0 %v6282, 72
    %v7120 = vpop.permute.xlu0 %7119
    %v7122 = vsel %vm1496, %v7070, 0
    %v7125 = vsel %vm1625, %v7120, 0
    %7127 = vmatprep.subr.bf16.mxu0 0
    %7128 = vmatpush1.bf16.msra.mxu0 %v7125
    %7129 = vmatprep.subr.bf16.mxu0 0
    %7130 = vmatpush1.bf16.msra.mxu0 0
    %7131 = vmatprep.subr.bf16.mxu0 0
    %7132 = vmatpush1.bf16.msra.mxu0 0
    %7133 = vmatprep.subr.bf16.mxu0 0
    %7134 = vmatpush1.bf16.msra.mxu0 0
    %7135 = vmatprep.subr.bf16.mxu0 0
    %7136 = vmatpush1.bf16.msra.mxu0 0
    %7137 = vmatprep.subr.bf16.mxu0 0
    %7138 = vmatpush1.bf16.msra.mxu0 0
    %7139 = vmatprep.subr.bf16.mxu0 0
    %7140 = vmatpush1.bf16.msra.mxu0 0
    %7141 = vmatprep.subr.bf16.mxu0 0
    %7142 = vmatpush1.bf16.msra.mxu0 0
    %7143 = vmatprep.subr.bf16.mxu0 0
    %7144 = vmatpush1.bf16.msra.mxu0 0
    %7145 = vmatprep.subr.bf16.mxu0 0
    %7146 = vmatpush1.bf16.msra.mxu0 0
    %7147 = vmatprep.subr.bf16.mxu0 0
    %7148 = vmatpush1.bf16.msra.mxu0 0
    %7149 = vmatprep.subr.bf16.mxu0 0
    %7150 = vmatpush1.bf16.msra.mxu0 0
    %7151 = vmatprep.subr.bf16.mxu0 0
    %7152 = vmatpush1.bf16.msra.mxu0 0
    %7153 = vmatprep.subr.bf16.mxu0 0
    %7154 = vmatpush1.bf16.msra.mxu0 0
    %7155 = vmatprep.subr.bf16.mxu0 0
    %7156 = vmatpush1.bf16.msra.mxu0 0
    %7157 = vmatprep.subr.bf16.mxu0 0
    %7158 = vmatpush1.bf16.msra.mxu0 0
    %7159 = vmatprep.mubr.bf16.mxu0 0
    %7160 = vmatmul.mubr.bf16.gmra.mrb[0].mxu0 %v7122
    %v7161 = vpop.f32.mrb[0].mxu0
    %v7162 = vadd.f32 0.0, %v7161
    %v7163 = vpop.f32.mrb[0].mxu0
    %v7164 = vpop.f32.mrb[0].mxu0
    %v7165 = vpop.f32.mrb[0].mxu0
    %7166 = vdwg.mxu0
    %7169 = vrot.lane.b32.xlu0 %v6670, 8
    %v7170 = vpop.permute.xlu0 %7169
    %7171 = vrot.lane.b32.xlu0 %v6718, 8
    %v7172 = vpop.permute.xlu0 %7171
    %7177 = vrot.lane.b32.xlu0 %v6892, 16
    %v7178 = vpop.permute.xlu0 %7177
    %7179 = vrot.lane.b32.xlu0 %v6940, 16
    %v7180 = vpop.permute.xlu0 %7179
    %7185 = vrot.lane.b32.xlu0 %v7114, 24
    %v7186 = vpop.permute.xlu0 %7185
    %7187 = vrot.lane.b32.xlu0 %v7162, 24
    %v7188 = vpop.permute.xlu0 %7187
    %v7191 = vsel %vm1496, %v6445, %v7170
    %v7192 = vsel %vm1496, %v6494, %v7172
    %v7193 = vsel %vm2411, %v7191, %v7178
    %v7194 = vsel %vm2411, %v7192, %v7180
    %v7195 = vsel %vm2414, %v7193, %v7186
    %v7196 = vsel %vm2414, %v7194, %v7188
    %s7197 = scalar_lea.vmem %s67, 16
    %v7198 = vld [vmem:[%s7197] sm:$0xf]
    %v7199 = vld [vmem:[%s7197 + $0x4] sm:$0xf]
    %v7200 = vld [vmem:[%s7197 + $0x8] sm:$0xf]
    %v7201 = vld [vmem:[%s7197 + $0xc] sm:$0xf]
    %v7202 = vpack.c.bf16 %v7195, %v7195
    %v7203 = vpack.c.bf16 %v7196, %v7196
    %v7204 = vld [vmem:[%s69 + $0x1] sm:$0x1]
    %v7209 = vunpack.c.l.b16 %v7198
    %v7210 = vunpack.c.l.b16 %v7199
    %v7211 = vunpack.c.l.b16 %v7200
    %v7212 = vunpack.c.l.b16 %v7201
    %v7213 = vpack.c.b16 %v7210, %v7209
    %v7214 = vpack.c.b16 %v7212, %v7211
    %v7218 = vsel %vm1265, %v7202, 0
    %7220 = vmatprep.subr.bf16.mxu0 0
    %7221 = vmatpush1.bf16.msra.mxu0 %v7213
    %7222 = vmatprep.subr.bf16.mxu0 0
    %7223 = vmatpush1.bf16.msra.mxu0 %v7214
    %7224 = vmatprep.subr.bf16.mxu0 0
    %7225 = vmatpush1.bf16.msra.mxu0 0
    %7226 = vmatprep.subr.bf16.mxu0 0
    %7227 = vmatpush1.bf16.msra.mxu0 0
    %7228 = vmatprep.subr.bf16.mxu0 0
    %7229 = vmatpush1.bf16.msra.mxu0 0
    %7230 = vmatprep.subr.bf16.mxu0 0
    %7231 = vmatpush1.bf16.msra.mxu0 0
    %7232 = vmatprep.subr.bf16.mxu0 0
    %7233 = vmatpush1.bf16.msra.mxu0 0
    %7234 = vmatprep.subr.bf16.mxu0 0
    %7235 = vmatpush1.bf16.msra.mxu0 0
    %7236 = vmatprep.subr.bf16.mxu0 0
    %7237 = vmatpush1.bf16.msra.mxu0 0
    %7238 = vmatprep.subr.bf16.mxu0 0
    %7239 = vmatpush1.bf16.msra.mxu0 0
    %7240 = vmatprep.subr.bf16.mxu0 0
    %7241 = vmatpush1.bf16.msra.mxu0 0
    %7242 = vmatprep.subr.bf16.mxu0 0
    %7243 = vmatpush1.bf16.msra.mxu0 0
    %7244 = vmatprep.subr.bf16.mxu0 0
    %7245 = vmatpush1.bf16.msra.mxu0 0
    %7246 = vmatprep.subr.bf16.mxu0 0
    %7247 = vmatpush1.bf16.msra.mxu0 0
    %7248 = vmatprep.subr.bf16.mxu0 0
    %7249 = vmatpush1.bf16.msra.mxu0 0
    %7250 = vmatprep.subr.bf16.mxu0 0
    %7251 = vmatpush1.bf16.msra.mxu0 0
    %7252 = vmatprep.mubr.bf16.mxu0 0
    %7253 = vmatmul.mubr.bf16.gmra.mrb[0].mxu0 %v7218
    %v7254 = vpop.f32.mrb[0].mxu0
    %v7255 = vadd.f32 %v7204, %v7254
    %v7256 = vpop.f32.mrb[0].mxu0
    %v7257 = vpop.f32.mrb[0].mxu0
    %v7258 = vpop.f32.mrb[0].mxu0
    %7259 = vdwg.mxu0
    %v7261 = vsel %vm1265, %v7203, 0
    %7263 = vmatprep.subr.bf16.mxu0 0
    %7264 = vmatpush1.bf16.msra.mxu0 %v7213
    %7265 = vmatprep.subr.bf16.mxu0 0
    %7266 = vmatpush1.bf16.msra.mxu0 %v7214
    %7267 = vmatprep.subr.bf16.mxu0 0
    %7268 = vmatpush1.bf16.msra.mxu0 0
    %7269 = vmatprep.subr.bf16.mxu0 0
    %7270 = vmatpush1.bf16.msra.mxu0 0
    %7271 = vmatprep.subr.bf16.mxu0 0
    %7272 = vmatpush1.bf16.msra.mxu0 0
    %7273 = vmatprep.subr.bf16.mxu0 0
    %7274 = vmatpush1.bf16.msra.mxu0 0
    %7275 = vmatprep.subr.bf16.mxu0 0
    %7276 = vmatpush1.bf16.msra.mxu0 0
    %7277 = vmatprep.subr.bf16.mxu0 0
    %7278 = vmatpush1.bf16.msra.mxu0 0
    %7279 = vmatprep.subr.bf16.mxu0 0
    %7280 = vmatpush1.bf16.msra.mxu0 0
    %7281 = vmatprep.subr.bf16.mxu0 0
    %7282 = vmatpush1.bf16.msra.mxu0 0
    %7283 = vmatprep.subr.bf16.mxu0 0
    %7284 = vmatpush1.bf16.msra.mxu0 0
    %7285 = vmatprep.subr.bf16.mxu0 0
    %7286 = vmatpush1.bf16.msra.mxu0 0
    %7287 = vmatprep.subr.bf16.mxu0 0
    %7288 = vmatpush1.bf16.msra.mxu0 0
    %7289 = vmatprep.subr.bf16.mxu0 0
    %7290 = vmatpush1.bf16.msra.mxu0 0
    %7291 = vmatprep.subr.bf16.mxu0 0
    %7292 = vmatpush1.bf16.msra.mxu0 0
    %7293 = vmatprep.subr.bf16.mxu0 0
    %7294 = vmatpush1.bf16.msra.mxu0 0
    %7295 = vmatprep.mubr.bf16.mxu0 0
    %7296 = vmatmul.mubr.bf16.gmra.mrb[0].mxu0 %v7261
    %v7297 = vpop.f32.mrb[0].mxu0
    %v7298 = vadd.f32 %v7204, %v7297
    %v7299 = vpop.f32.mrb[0].mxu0
    %v7300 = vpop.f32.mrb[0].mxu0
    %v7301 = vpop.f32.mrb[0].mxu0
    %7302 = vdwg.mxu0
    %v7303 = vadd.f32 %v6106, %v7255
    %v7304 = vadd.f32 %v6107, %v7298
    %v7305 = vld [vmem:[%s71 + $0x1] sm:$0x1]
    %v7306 = vld [vmem:[%s73 + $0x1] sm:$0x1]
    %v7307 = vsel %vm4282, %v7303, 0.0
    %7308 = vadd.xlane.f32.xlu0 %v7307
    %v7309 = vpop.xlane.xlu0 %7308
    %v7310 = vsel %vm4282, %v7304, 0.0
    %7311 = vadd.xlane.f32.xlu0 %v7310
    %v7312 = vpop.xlane.xlu0 %7311
    %v7313 = vmul.f32 %v7309, %v2493
    %v7314 = vmul.f32 %v7312, %v2493
    %v7315 = vsub.f32 %v7303, %v7313
    %v7316 = vsub.f32 %v7304, %v7314
    %v7317 = vmul.f32 %v7315, %v7315
    %v7318 = vmul.f32 %v7316, %v7316
    %v7319 = vsel %vm4282, %v7317, 0.0
    %7320 = vadd.xlane.f32.xlu0 %v7319
    %v7321 = vpop.xlane.xlu0 %7320
    %v7322 = vsel %vm4282, %v7318, 0.0
    %7323 = vadd.xlane.f32.xlu0 %v7322
    %v7324 = vpop.xlane.xlu0 %7323
    %v7325 = vmul.f32 %v7321, 0.032258064
    %v7326 = vmul.f32 %v7324, 0.032258064
    %v7327 = vmul.f32 %v7305, %v7315
    %v7328 = vmul.f32 %v7305, %v7316
    %v7329 = vrsqrt.pop %v7325
    %v7330 = vmul.f32 %v7325, %v7329
    %vm7331 = vcmp.eq.f32.partialorder %v7325, inf
    %v7332 = vsel %vm7331, %v7325, %v7330
    %vm7333 = vcmp.eq.f32.partialorder %v7325, 0.0
    %v7334 = vand.u32 %v7325, 2147483648
    %v7335 = vsel %vm7333, %v7334, %v7332
    %v7336 = vrsqrt.pop %v7326
    %v7337 = vmul.f32 %v7326, %v7336
    %vm7338 = vcmp.eq.f32.partialorder %v7326, inf
    %v7339 = vsel %vm7338, %v7326, %v7337
    %vm7340 = vcmp.eq.f32.partialorder %v7326, 0.0
    %v7341 = vand.u32 %v7326, 2147483648
    %v7342 = vsel %vm7340, %v7341, %v7339
    %v7343 = vadd.f32 %v7335, 1e-06
    %v7344 = vadd.f32 %v7342, 1e-06
    %v7345 = vrcp.pop %v7343
    %v7346 = vmul.f32 %v7327, %v7345
    %v7347 = vrcp.pop %v7344
    %v7348 = vmul.f32 %v7328, %v7347
    %v7349 = vadd.f32 %v7346, %v7306
    %v7350 = vadd.f32 %v7348, %v7306
    %s7351 = scalar_lea.vmem %s75, 16
    %v7352 = vld [vmem:[%s7351] sm:$0xf]
    %v7353 = vld [vmem:[%s7351 + $0x4] sm:$0xf]
    %v7354 = vld [vmem:[%s7351 + $0x8] sm:$0xf]
    %v7355 = vld [vmem:[%s7351 + $0xc] sm:$0xf]
    %v7356 = vpack.c.bf16 %v7349, %v7349
    %v7357 = vpack.c.bf16 %v7350, %v7350
    %v7358 = vld [vmem:[%s77 + $0x1] sm:$0x1]
    %v7363 = vunpack.c.l.b16 %v7352
    %v7364 = vunpack.c.l.b16 %v7353
    %v7365 = vunpack.c.l.b16 %v7354
    %v7366 = vunpack.c.l.b16 %v7355
    %v7367 = vpack.c.b16 %v7364, %v7363
    %v7368 = vpack.c.b16 %v7366, %v7365
    %v7372 = vsel %vm1265, %v7356, 0
    %7374 = vmatprep.subr.bf16.mxu0 0
    %7375 = vmatpush1.bf16.msra.mxu0 %v7367
    %7376 = vmatprep.subr.bf16.mxu0 0
    %7377 = vmatpush1.bf16.msra.mxu0 %v7368
    %7378 = vmatprep.subr.bf16.mxu0 0
    %7379 = vmatpush1.bf16.msra.mxu0 0
    %7380 = vmatprep.subr.bf16.mxu0 0
    %7381 = vmatpush1.bf16.msra.mxu0 0
    %7382 = vmatprep.subr.bf16.mxu0 0
    %7383 = vmatpush1.bf16.msra.mxu0 0
    %7384 = vmatprep.subr.bf16.mxu0 0
    %7385 = vmatpush1.bf16.msra.mxu0 0
    %7386 = vmatprep.subr.bf16.mxu0 0
    %7387 = vmatpush1.bf16.msra.mxu0 0
    %7388 = vmatprep.subr.bf16.mxu0 0
    %7389 = vmatpush1.bf16.msra.mxu0 0
    %7390 = vmatprep.subr.bf16.mxu0 0
    %7391 = vmatpush1.bf16.msra.mxu0 0
    %7392 = vmatprep.subr.bf16.mxu0 0
    %7393 = vmatpush1.bf16.msra.mxu0 0
    %7394 = vmatprep.subr.bf16.mxu0 0
    %7395 = vmatpush1.bf16.msra.mxu0 0
    %7396 = vmatprep.subr.bf16.mxu0 0
    %7397 = vmatpush1.bf16.msra.mxu0 0
    %7398 = vmatprep.subr.bf16.mxu0 0
    %7399 = vmatpush1.bf16.msra.mxu0 0
    %7400 = vmatprep.subr.bf16.mxu0 0
    %7401 = vmatpush1.bf16.msra.mxu0 0
    %7402 = vmatprep.subr.bf16.mxu0 0
    %7403 = vmatpush1.bf16.msra.mxu0 0
    %7404 = vmatprep.subr.bf16.mxu0 0
    %7405 = vmatpush1.bf16.msra.mxu0 0
    %7406 = vmatprep.mubr.bf16.mxu0 0
    %7407 = vmatmul.mubr.bf16.gmra.mrb[0].mxu0 %v7372
    %v7408 = vpop.f32.mrb[0].mxu0
    %v7409 = vadd.f32 %v7358, %v7408
    %v7410 = vpop.f32.mrb[0].mxu0
    %v7411 = vpop.f32.mrb[0].mxu0
    %v7412 = vpop.f32.mrb[0].mxu0
    %7413 = vdwg.mxu0
    %v7415 = vsel %vm1265, %v7357, 0
    %7417 = vmatprep.subr.bf16.mxu0 0
    %7418 = vmatpush1.bf16.msra.mxu0 %v7367
    %7419 = vmatprep.subr.bf16.mxu0 0
    %7420 = vmatpush1.bf16.msra.mxu0 %v7368
    %7421 = vmatprep.subr.bf16.mxu0 0
    %7422 = vmatpush1.bf16.msra.mxu0 0
    %7423 = vmatprep.subr.bf16.mxu0 0
    %7424 = vmatpush1.bf16.msra.mxu0 0
    %7425 = vmatprep.subr.bf16.mxu0 0
    %7426 = vmatpush1.bf16.msra.mxu0 0
    %7427 = vmatprep.subr.bf16.mxu0 0
    %7428 = vmatpush1.bf16.msra.mxu0 0
    %7429 = vmatprep.subr.bf16.mxu0 0
    %7430 = vmatpush1.bf16.msra.mxu0 0
    %7431 = vmatprep.subr.bf16.mxu0 0
    %7432 = vmatpush1.bf16.msra.mxu0 0
    %7433 = vmatprep.subr.bf16.mxu0 0
    %7434 = vmatpush1.bf16.msra.mxu0 0
    %7435 = vmatprep.subr.bf16.mxu0 0
    %7436 = vmatpush1.bf16.msra.mxu0 0
    %7437 = vmatprep.subr.bf16.mxu0 0
    %7438 = vmatpush1.bf16.msra.mxu0 0
    %7439 = vmatprep.subr.bf16.mxu0 0
    %7440 = vmatpush1.bf16.msra.mxu0 0
    %7441 = vmatprep.subr.bf16.mxu0 0
    %7442 = vmatpush1.bf16.msra.mxu0 0
    %7443 = vmatprep.subr.bf16.mxu0 0
    %7444 = vmatpush1.bf16.msra.mxu0 0
    %7445 = vmatprep.subr.bf16.mxu0 0
    %7446 = vmatpush1.bf16.msra.mxu0 0
    %7447 = vmatprep.subr.bf16.mxu0 0
    %7448 = vmatpush1.bf16.msra.mxu0 0
    %7449 = vmatprep.mubr.bf16.mxu0 0
    %7450 = vmatmul.mubr.bf16.gmra.mrb[0].mxu0 %v7415
    %v7451 = vpop.f32.mrb[0].mxu0
    %v7452 = vadd.f32 %v7358, %v7451
    %v7453 = vpop.f32.mrb[0].mxu0
    %v7454 = vpop.f32.mrb[0].mxu0
    %v7455 = vpop.f32.mrb[0].mxu0
    %7456 = vdwg.mxu0
    %v7457 = vmax.f32 %v7409, 0.0
    %v7458 = vmax.f32 %v7452, 0.0
    %s7459 = scalar_lea.vmem %s79, 32
    %v7460 = vld [vmem:[%s7459] sm:$0xf]
    %v7461 = vld [vmem:[%s7459 + $0x4] sm:$0xf]
    %v7462 = vld [vmem:[%s7459 + $0x8] sm:$0xf]
    %v7463 = vld [vmem:[%s7459 + $0xc] sm:$0xf]
    %v7464 = vld [vmem:[%s7459 + $0x10] sm:$0xf]
    %v7465 = vld [vmem:[%s7459 + $0x14] sm:$0xf]
    %v7466 = vld [vmem:[%s7459 + $0x18] sm:$0xf]
    %v7467 = vld [vmem:[%s7459 + $0x1c] sm:$0xf]
    %v7468 = vpack.c.bf16 %v7457, %v7457
    %v7469 = vpack.c.bf16 %v7458, %v7458
    %v7470 = vld [vmem:[%s81 + $0x1] sm:$0x1]
    %v7479 = vunpack.c.l.b16 %v7460
    %v7480 = vunpack.c.l.b16 %v7461
    %v7481 = vunpack.c.l.b16 %v7462
    %v7482 = vunpack.c.l.b16 %v7463
    %v7483 = vunpack.c.l.b16 %v7464
    %v7484 = vunpack.c.l.b16 %v7465
    %v7485 = vunpack.c.l.b16 %v7466
    %v7486 = vunpack.c.l.b16 %v7467
    %v7487 = vpack.c.b16 %v7480, %v7479
    %v7488 = vpack.c.b16 %v7482, %v7481
    %v7489 = vpack.c.b16 %v7484, %v7483
    %v7490 = vpack.c.b16 %v7486, %v7485
    %v7496 = vsel %vm932, %v7468, 0
    %7498 = vmatprep.subr.bf16.mxu0 0
    %7499 = vmatpush1.bf16.msra.mxu0 %v7487
    %7500 = vmatprep.subr.bf16.mxu0 0
    %7501 = vmatpush1.bf16.msra.mxu0 %v7488
    %7502 = vmatprep.subr.bf16.mxu0 0
    %7503 = vmatpush1.bf16.msra.mxu0 %v7489
    %7504 = vmatprep.subr.bf16.mxu0 0
    %7505 = vmatpush1.bf16.msra.mxu0 %v7490
    %7506 = vmatprep.subr.bf16.mxu0 0
    %7507 = vmatpush1.bf16.msra.mxu0 0
    %7508 = vmatprep.subr.bf16.mxu0 0
    %7509 = vmatpush1.bf16.msra.mxu0 0
    %7510 = vmatprep.subr.bf16.mxu0 0
    %7511 = vmatpush1.bf16.msra.mxu0 0
    %7512 = vmatprep.subr.bf16.mxu0 0
    %7513 = vmatpush1.bf16.msra.mxu0 0
    %7514 = vmatprep.subr.bf16.mxu0 0
    %7515 = vmatpush1.bf16.msra.mxu0 0
    %7516 = vmatprep.subr.bf16.mxu0 0
    %7517 = vmatpush1.bf16.msra.mxu0 0
    %7518 = vmatprep.subr.bf16.mxu0 0
    %7519 = vmatpush1.bf16.msra.mxu0 0
    %7520 = vmatprep.subr.bf16.mxu0 0
    %7521 = vmatpush1.bf16.msra.mxu0 0
    %7522 = vmatprep.subr.bf16.mxu0 0
    %7523 = vmatpush1.bf16.msra.mxu0 0
    %7524 = vmatprep.subr.bf16.mxu0 0
    %7525 = vmatpush1.bf16.msra.mxu0 0
    %7526 = vmatprep.subr.bf16.mxu0 0
    %7527 = vmatpush1.bf16.msra.mxu0 0
    %7528 = vmatprep.subr.bf16.mxu0 0
    %7529 = vmatpush1.bf16.msra.mxu0 0
    %7530 = vmatprep.mubr.bf16.mxu0 0
    %7531 = vmatmul.mubr.bf16.gmra.mrb[0].mxu0 %v7496
    %v7532 = vpop.f32.mrb[0].mxu0
    %v7533 = vadd.f32 %v7470, %v7532
    %v7534 = vpop.f32.mrb[0].mxu0
    %v7535 = vpop.f32.mrb[0].mxu0
    %v7536 = vpop.f32.mrb[0].mxu0
    %7537 = vdwg.mxu0
    %v7539 = vsel %vm932, %v7469, 0
    %7541 = vmatprep.subr.bf16.mxu0 0
    %7542 = vmatpush1.bf16.msra.mxu0 %v7487
    %7543 = vmatprep.subr.bf16.mxu0 0
    %7544 = vmatpush1.bf16.msra.mxu0 %v7488
    %7545 = vmatprep.subr.bf16.mxu0 0
    %7546 = vmatpush1.bf16.msra.mxu0 %v7489
    %7547 = vmatprep.subr.bf16.mxu0 0
    %7548 = vmatpush1.bf16.msra.mxu0 %v7490
    %7549 = vmatprep.subr.bf16.mxu0 0
    %7550 = vmatpush1.bf16.msra.mxu0 0
    %7551 = vmatprep.subr.bf16.mxu0 0
    %7552 = vmatpush1.bf16.msra.mxu0 0
    %7553 = vmatprep.subr.bf16.mxu0 0
    %7554 = vmatpush1.bf16.msra.mxu0 0
    %7555 = vmatprep.subr.bf16.mxu0 0
    %7556 = vmatpush1.bf16.msra.mxu0 0
    %7557 = vmatprep.subr.bf16.mxu0 0
    %7558 = vmatpush1.bf16.msra.mxu0 0
    %7559 = vmatprep.subr.bf16.mxu0 0
    %7560 = vmatpush1.bf16.msra.mxu0 0
    %7561 = vmatprep.subr.bf16.mxu0 0
    %7562 = vmatpush1.bf16.msra.mxu0 0
    %7563 = vmatprep.subr.bf16.mxu0 0
    %7564 = vmatpush1.bf16.msra.mxu0 0
    %7565 = vmatprep.subr.bf16.mxu0 0
    %7566 = vmatpush1.bf16.msra.mxu0 0
    %7567 = vmatprep.subr.bf16.mxu0 0
    %7568 = vmatpush1.bf16.msra.mxu0 0
    %7569 = vmatprep.subr.bf16.mxu0 0
    %7570 = vmatpush1.bf16.msra.mxu0 0
    %7571 = vmatprep.subr.bf16.mxu0 0
    %7572 = vmatpush1.bf16.msra.mxu0 0
    %7573 = vmatprep.mubr.bf16.mxu0 0
    %7574 = vmatmul.mubr.bf16.gmra.mrb[0].mxu0 %v7539
    %v7575 = vpop.f32.mrb[0].mxu0
    %v7576 = vadd.f32 %v7470, %v7575
    %v7577 = vpop.f32.mrb[0].mxu0
    %v7578 = vpop.f32.mrb[0].mxu0
    %v7579 = vpop.f32.mrb[0].mxu0
    %7580 = vdwg.mxu0
    %v7581 = vadd.f32 %v7349, %v7533
    %v7582 = vadd.f32 %v7350, %v7576
    %v7583 = vld [vmem:[%s83 + $0x1] sm:$0x1]
    %v7584 = vld [vmem:[#allocation12 + $0x1] sm:$0x1]
    %v7585 = vsel %vm4282, %v7581, 0.0
    %7586 = vadd.xlane.f32.xlu0 %v7585
    %v7587 = vpop.xlane.xlu0 %7586
    %v7588 = vsel %vm4282, %v7582, 0.0
    %7589 = vadd.xlane.f32.xlu0 %v7588
    %v7590 = vpop.xlane.xlu0 %7589
    %v7591 = vmul.f32 %v7587, %v2493
    %v7592 = vmul.f32 %v7590, %v2493
    %v7593 = vsub.f32 %v7581, %v7591
    %v7594 = vsub.f32 %v7582, %v7592
    %v7595 = vmul.f32 %v7593, %v7593
    %v7596 = vmul.f32 %v7594, %v7594
    %v7597 = vsel %vm4282, %v7595, 0.0
    %7598 = vadd.xlane.f32.xlu0 %v7597
    %v7599 = vpop.xlane.xlu0 %7598
    %v7600 = vsel %vm4282, %v7596, 0.0
    %7601 = vadd.xlane.f32.xlu0 %v7600
    %v7602 = vpop.xlane.xlu0 %7601
    %v7603 = vmul.f32 %v7599, 0.032258064
    %v7604 = vmul.f32 %v7602, 0.032258064
    %v7605 = vmul.f32 %v7583, %v7593
    %v7606 = vmul.f32 %v7583, %v7594
    %v7607 = vrsqrt.pop %v7603
    %v7608 = vmul.f32 %v7603, %v7607
    %vm7609 = vcmp.eq.f32.partialorder %v7603, inf
    %v7610 = vsel %vm7609, %v7603, %v7608
    %vm7611 = vcmp.eq.f32.partialorder %v7603, 0.0
    %v7612 = vand.u32 %v7603, 2147483648
    %v7613 = vsel %vm7611, %v7612, %v7610
    %v7614 = vrsqrt.pop %v7604
    %v7615 = vmul.f32 %v7604, %v7614
    %vm7616 = vcmp.eq.f32.partialorder %v7604, inf
    %v7617 = vsel %vm7616, %v7604, %v7615
    %vm7618 = vcmp.eq.f32.partialorder %v7604, 0.0
    %v7619 = vand.u32 %v7604, 2147483648
    %v7620 = vsel %vm7618, %v7619, %v7617
    %v7621 = vadd.f32 %v7613, 1e-06
    %v7622 = vadd.f32 %v7620, 1e-06
    %v7623 = vrcp.pop %v7621
    %v7624 = vmul.f32 %v7605, %v7623
    %v7625 = vrcp.pop %v7622
    %v7626 = vmul.f32 %v7606, %v7625
    %v7627 = vadd.f32 %v7624, %v7584
    %v7628 = vadd.f32 %v7626, %v7584
    %v7629 = vld [vmem:[%s87] sm:$0xf]
    %v7630 = vld [vmem:[%s87 + $0x4] sm:$0xf]
    %v7631 = vld [vmem:[%s87 + $0x8] sm:$0xf]
    %v7632 = vld [vmem:[%s87 + $0xc] sm:$0xf]
    %v7633 = vld [vmem:[#allocation13] sm:$0x1]
    %v7635 = vlaneseq
    %v7636 = vshrl.u32 %v7635, 7
    %v7637 = vsub.s32 0, %v7636
    %v7638 = vrot.slane %v7633, %v7637
    %v7644 = vunpack.c.l.b16 %v7629
    %v7645 = vunpack.c.l.b16 %v7630
    %v7646 = vunpack.c.l.b16 %v7631
    %v7647 = vunpack.c.l.b16 %v7632
    %v7648 = vpack.c.b16 %v7645, %v7644
    %v7649 = vpack.c.b16 %v7647, %v7646
    %7652 = vmatprep.subr.bf16.mxu0 0
    %7653 = vmatpush1.bf16.msra.mxu0 %v7648
    %7654 = vmatprep.subr.bf16.mxu0 0
    %7655 = vmatpush1.bf16.msra.mxu0 %v7649
    %7656 = vmatprep.subr.bf16.mxu0 0
    %7657 = vmatpush1.bf16.msra.mxu0 0
    %7658 = vmatprep.subr.bf16.mxu0 0
    %7659 = vmatpush1.bf16.msra.mxu0 0
    %7660 = vmatprep.subr.bf16.mxu0 0
    %7661 = vmatpush1.bf16.msra.mxu0 0
    %7662 = vmatprep.subr.bf16.mxu0 0
    %7663 = vmatpush1.bf16.msra.mxu0 0
    %7664 = vmatprep.subr.bf16.mxu0 0
    %7665 = vmatpush1.bf16.msra.mxu0 0
    %7666 = vmatprep.subr.bf16.mxu0 0
    %7667 = vmatpush1.bf16.msra.mxu0 0
    %7668 = vmatprep.subr.bf16.mxu0 0
    %7669 = vmatpush1.bf16.msra.mxu0 0
    %7670 = vmatprep.subr.bf16.mxu0 0
    %7671 = vmatpush1.bf16.msra.mxu0 0
    %7672 = vmatprep.subr.bf16.mxu0 0
    %7673 = vmatpush1.bf16.msra.mxu0 0
    %7674 = vmatprep.subr.bf16.mxu0 0
    %7675 = vmatpush1.bf16.msra.mxu0 0
    %7676 = vmatprep.subr.bf16.mxu0 0
    %7677 = vmatpush1.bf16.msra.mxu0 0
    %7678 = vmatprep.subr.bf16.mxu0 0
    %7679 = vmatpush1.bf16.msra.mxu0 0
    %7680 = vmatprep.subr.bf16.mxu0 0
    %7681 = vmatpush1.bf16.msra.mxu0 0
    %7682 = vmatprep.subr.bf16.mxu0 0
    %7683 = vmatpush1.bf16.msra.mxu0 0
    %7684 = vmatprep.mubr.bf16.mxu0 0
    %7685 = vmatmul.mubr.bf16.gmra.mrb[0].mxu0 %v4457
    %v7686 = vpop.f32.mrb[0].mxu0
    %v7687 = vadd.f32 %v7638, %v7686
    %v7688 = vpop.f32.mrb[0].mxu0
    %v7689 = vpop.f32.mrb[0].mxu0
    %v7690 = vadd.f32 %v7638, %v7689
    %v7691 = vpop.f32.mrb[0].mxu0
    %7692 = vdwg.mxu0
    %v7693 = vmax.f32 %v7687, 0.0
    %v7694 = vmax.f32 %v7690, 0.0
    %v7695 = vld [vmem:[%s91] sm:$0xf]
    %v7696 = vld [vmem:[%s91 + $0x4] sm:$0xf]
    %v7697 = vld [vmem:[%s91 + $0x8] sm:$0xf]
    %v7698 = vld [vmem:[%s91 + $0xc] sm:$0xf]
    %v7699 = vld [vmem:[%s91 + $0x10] sm:$0xf]
    %v7700 = vld [vmem:[%s91 + $0x14] sm:$0xf]
    %v7701 = vld [vmem:[%s91 + $0x18] sm:$0xf]
    %v7702 = vld [vmem:[%s91 + $0x1c] sm:$0xf]
    %v7703 = vpack.c.bf16 %v7694, %v7693
    %v7704 = vld [vmem:[#allocation2] sm:$0x1]
    %v7706 = vlaneseq
    %v7707 = vshrl.u32 %v7706, 7
    %v7708 = vsub.s32 0, %v7707
    %v7709 = vrot.slane %v7704, %v7708
    %v7719 = vunpack.c.l.b16 %v7695
    %v7720 = vunpack.c.l.b16 %v7696
    %v7721 = vunpack.c.l.b16 %v7697
    %v7722 = vunpack.c.l.b16 %v7698
    %v7723 = vunpack.c.l.b16 %v7699
    %v7724 = vunpack.c.l.b16 %v7700
    %v7725 = vunpack.c.l.b16 %v7701
    %v7726 = vunpack.c.l.b16 %v7702
    %v7727 = vpack.c.b16 %v7720, %v7719
    %v7728 = vpack.c.b16 %v7722, %v7721
    %v7729 = vpack.c.b16 %v7724, %v7723
    %v7730 = vpack.c.b16 %v7726, %v7725
    %v7736 = vsel %vm932, %v7703, 0
    %7738 = vmatprep.subr.bf16.mxu0 0
    %7739 = vmatpush1.bf16.msra.mxu0 %v7727
    %7740 = vmatprep.subr.bf16.mxu0 0
    %7741 = vmatpush1.bf16.msra.mxu0 %v7728
    %7742 = vmatprep.subr.bf16.mxu0 0
    %7743 = vmatpush1.bf16.msra.mxu0 %v7729
    %7744 = vmatprep.subr.bf16.mxu0 0
    %7745 = vmatpush1.bf16.msra.mxu0 %v7730
    %7746 = vmatprep.subr.bf16.mxu0 0
    %7747 = vmatpush1.bf16.msra.mxu0 0
    %7748 = vmatprep.subr.bf16.mxu0 0
    %7749 = vmatpush1.bf16.msra.mxu0 0
    %7750 = vmatprep.subr.bf16.mxu0 0
    %7751 = vmatpush1.bf16.msra.mxu0 0
    %7752 = vmatprep.subr.bf16.mxu0 0
    %7753 = vmatpush1.bf16.msra.mxu0 0
    %7754 = vmatprep.subr.bf16.mxu0 0
    %7755 = vmatpush1.bf16.msra.mxu0 0
    %7756 = vmatprep.subr.bf16.mxu0 0
    %7757 = vmatpush1.bf16.msra.mxu0 0
    %7758 = vmatprep.subr.bf16.mxu0 0
    %7759 = vmatpush1.bf16.msra.mxu0 0
    %7760 = vmatprep.subr.bf16.mxu0 0
    %7761 = vmatpush1.bf16.msra.mxu0 0
    %7762 = vmatprep.subr.bf16.mxu0 0
    %7763 = vmatpush1.bf16.msra.mxu0 0
    %7764 = vmatprep.subr.bf16.mxu0 0
    %7765 = vmatpush1.bf16.msra.mxu0 0
    %7766 = vmatprep.subr.bf16.mxu0 0
    %7767 = vmatpush1.bf16.msra.mxu0 0
    %7768 = vmatprep.subr.bf16.mxu0 0
    %7769 = vmatpush1.bf16.msra.mxu0 0
    %7770 = vmatprep.mubr.bf16.mxu0 0
    %7771 = vmatmul.mubr.bf16.gmra.mrb[0].mxu0 %v7736
    %v7772 = vpop.f32.mrb[0].mxu0
    %v7773 = vadd.f32 %v7709, %v7772
    %v7774 = vpop.f32.mrb[0].mxu0
    %v7775 = vpop.f32.mrb[0].mxu0
    %v7776 = vadd.f32 %v7709, %v7775
    %v7777 = vpop.f32.mrb[0].mxu0
    %7778 = vdwg.mxu0
    %vm7779 = vcmp.eq.f32.partialorder %v1268, 0.0
    %vm7780 = vcmp.eq.f32.partialorder %v1271, 0.0
    %v7781 = vsel %vm7779, -1e+09, %v7773
    %v7782 = vsel %vm7780, -1e+09, %v7776
    %vm7783 = vcmask 7168
    %v7784 = vsel %vm7783, %v7781, -inf
    %v7785 = vrot.slane %v7784, 4
    %v7786 = vmax.f32 %v7784, %v7785
    %v7787 = vrot.slane %v7786, 2
    %v7788 = vmax.f32 %v7786, %v7787
    %v7789 = vrot.slane %v7788, 1
    %v7790 = vmax.f32 %v7788, %v7789
    %v7791 = vsel %vm7783, %v7782, -inf
    %v7792 = vrot.slane %v7791, 4
    %v7793 = vmax.f32 %v7791, %v7792
    %v7794 = vrot.slane %v7793, 2
    %v7795 = vmax.f32 %v7793, %v7794
    %v7796 = vrot.slane %v7795, 1
    %v7797 = vmax.f32 %v7795, %v7796
    %v7798 = vsub.f32 %v7781, %v7790
    %v7799 = vsub.f32 %v7782, %v7797
    %v7800 = vmul.f32 %v7798, 1.442695
    %v7801 = vpow.pop %v7800
    %v7802 = vmul.f32 %v7799, 1.442695
    %v7803 = vpow.pop %v7802
    %v7804 = vsel %vm7783, %v7801, 0.0
    %v7805 = vrot.slane %v7804, 4
    %v7806 = vadd.f32 %v7804, %v7805
    %v7807 = vrot.slane %v7806, 2
    %v7808 = vadd.f32 %v7806, %v7807
    %v7809 = vrot.slane %v7808, 1
    %v7810 = vadd.f32 %v7808, %v7809
    %v7811 = vsel %vm7783, %v7803, 0.0
    %v7812 = vrot.slane %v7811, 4
    %v7813 = vadd.f32 %v7811, %v7812
    %v7814 = vrot.slane %v7813, 2
    %v7815 = vadd.f32 %v7813, %v7814
    %v7816 = vrot.slane %v7815, 1
    %v7817 = vadd.f32 %v7815, %v7816
    %v7818 = vrcp.pop %v7810
    %v7819 = vrcp.pop %v7817
    %v7820 = vmul.f32 %v7801, %v7818
    %v7821 = vmul.f32 %v7803, %v7819
    %7823 = vset.pattern.permute.xlu0 0
    %7824 = vperm.xlu0 %7823, %v7820
    %v7825 = vpop.permute.xlu0 %7824
    %7828 = vset.pattern.permute.xlu0 0
    %7829 = vperm.xlu0 %7828, %v7821
    %v7830 = vpop.permute.xlu0 %7829
    %v7832 = vmul.f32 %v7825, %v4066
    %v7833 = vmul.f32 %v7830, %v4067
    %v7834 = vsel %vm1265, %v7832, 0.0
    %v7835 = vrot.slane %v7834, 4
    %v7836 = vadd.f32 %v7834, %v7835
    %v7837 = vrot.slane %v7836, 2
    %v7838 = vadd.f32 %v7836, %v7837
    %v7839 = vrot.slane %v7838, 1
    %v7840 = vadd.f32 %v7838, %v7839
    %v7841 = vsel %vm1265, %v7833, 0.0
    %v7842 = vrot.slane %v7841, 4
    %v7843 = vadd.f32 %v7841, %v7842
    %v7844 = vrot.slane %v7843, 2
    %v7845 = vadd.f32 %v7843, %v7844
    %v7846 = vrot.slane %v7845, 1
    %v7847 = vadd.f32 %v7845, %v7846
    %v7848 = vld [vmem:[%s95] sm:$0xf]
    %v7849 = vld [vmem:[%s95 + $0x4] sm:$0xf]
    %v7850 = vld [vmem:[%s95 + $0x8] sm:$0xf]
    %v7851 = vld [vmem:[%s95 + $0xc] sm:$0xf]
    %v7852 = vpack.c.bf16 %v7840, %v7840
    %v7853 = vpack.c.bf16 %v7847, %v7847
    %v7854 = vld [vmem:[#allocation15] sm:$0x1]
    %v7856 = vlaneseq
    %v7857 = vshrl.u32 %v7856, 7
    %v7858 = vsub.s32 0, %v7857
    %v7859 = vrot.slane %v7854, %v7858
    %v7863 = vunpack.c.l.b16 %v7852
    %v7864 = vunpack.c.l.b16 %v7853
    %vm7865 = vcmask 1041409
    %v7866 = vsel %vm7865, %v7864, %v7863
    %v7867 = vpack.c.b16 %v7866, %v7866
    %v7872 = vunpack.c.l.b16 %v7848
    %v7873 = vunpack.c.l.b16 %v7849
    %v7874 = vunpack.c.l.b16 %v7850
    %v7875 = vunpack.c.l.b16 %v7851
    %v7876 = vpack.c.b16 %v7873, %v7872
    %v7877 = vpack.c.b16 %v7875, %v7874
    %v7881 = vsel %vm1265, %v7867, 0
    %7883 = vmatprep.subr.bf16.mxu0 0
    %7884 = vmatpush1.bf16.msra.mxu0 %v7876
    %7885 = vmatprep.subr.bf16.mxu0 0
    %7886 = vmatpush1.bf16.msra.mxu0 %v7877
    %7887 = vmatprep.subr.bf16.mxu0 0
    %7888 = vmatpush1.bf16.msra.mxu0 0
    %7889 = vmatprep.subr.bf16.mxu0 0
    %7890 = vmatpush1.bf16.msra.mxu0 0
    %7891 = vmatprep.subr.bf16.mxu0 0
    %7892 = vmatpush1.bf16.msra.mxu0 0
    %7893 = vmatprep.subr.bf16.mxu0 0
    %7894 = vmatpush1.bf16.msra.mxu0 0
    %7895 = vmatprep.subr.bf16.mxu0 0
    %7896 = vmatpush1.bf16.msra.mxu0 0
    %7897 = vmatprep.subr.bf16.mxu0 0
    %7898 = vmatpush1.bf16.msra.mxu0 0
    %7899 = vmatprep.subr.bf16.mxu0 0
    %7900 = vmatpush1.bf16.msra.mxu0 0
    %7901 = vmatprep.subr.bf16.mxu0 0
    %7902 = vmatpush1.bf16.msra.mxu0 0
    %7903 = vmatprep.subr.bf16.mxu0 0
    %7904 = vmatpush1.bf16.msra.mxu0 0
    %7905 = vmatprep.subr.bf16.mxu0 0
    %7906 = vmatpush1.bf16.msra.mxu0 0
    %7907 = vmatprep.subr.bf16.mxu0 0
    %7908 = vmatpush1.bf16.msra.mxu0 0
    %7909 = vmatprep.subr.bf16.mxu0 0
    %7910 = vmatpush1.bf16.msra.mxu0 0
    %7911 = vmatprep.subr.bf16.mxu0 0
    %7912 = vmatpush1.bf16.msra.mxu0 0
    %7913 = vmatprep.subr.bf16.mxu0 0
    %7914 = vmatpush1.bf16.msra.mxu0 0
    %7915 = vmatprep.mubr.bf16.mxu0 0
    %7916 = vmatmul.mubr.bf16.gmra.mrb[0].mxu0 %v7881
    %v7917 = vpop.f32.mrb[0].mxu0
    %v7918 = vadd.f32 %v7859, %v7917
    %v7919 = vpop.f32.mrb[0].mxu0
    %v7920 = vpop.f32.mrb[0].mxu0
    %v7921 = vpop.f32.mrb[0].mxu0
    %7922 = vdwg.mxu0
    %v7923 = vadd.f32 %v7627, 0.0
    %v7924 = vadd.f32 %v7628, 0.0
    %v7925 = vld [vmem:[%s99] sm:$0xf]
    %v7926 = vld [vmem:[%s99 + $0x4] sm:$0xf]
    %v7927 = vld [vmem:[%s99 + $0x8] sm:$0xf]
    %v7928 = vld [vmem:[%s99 + $0xc] sm:$0xf]
    %v7929 = vpack.c.bf16 %v7923, %v7923
    %v7930 = vpack.c.bf16 %v7924, %v7924
    %v7931 = vld [vmem:[#allocation16] sm:$0x1]
    %v7933 = vlaneseq
    %v7934 = vshrl.u32 %v7933, 7
    %v7935 = vsub.s32 0, %v7934
    %v7936 = vrot.slane %v7931, %v7935
    %v7940 = vunpack.c.l.b16 %v7929
    %v7941 = vunpack.c.l.b16 %v7930
    %v7942 = vrot.slane %v7941, 7
    %v7943 = vsel %vm7865, %v7942, %v7940
    %v7944 = vpack.c.b16 %v7943, %v7943
    %v7949 = vunpack.c.l.b16 %v7925
    %v7950 = vunpack.c.l.b16 %v7926
    %v7951 = vunpack.c.l.b16 %v7927
    %v7952 = vunpack.c.l.b16 %v7928
    %v7953 = vpack.c.b16 %v7950, %v7949
    %v7954 = vpack.c.b16 %v7952, %v7951
    %v7958 = vsel %vm1265, %v7944, 0
    %7960 = vmatprep.subr.bf16.mxu0 0
    %7961 = vmatpush1.bf16.msra.mxu0 %v7953
    %7962 = vmatprep.subr.bf16.mxu0 0
    %7963 = vmatpush1.bf16.msra.mxu0 %v7954
    %7964 = vmatprep.subr.bf16.mxu0 0
    %7965 = vmatpush1.bf16.msra.mxu0 0
    %7966 = vmatprep.subr.bf16.mxu0 0
    %7967 = vmatpush1.bf16.msra.mxu0 0
    %7968 = vmatprep.subr.bf16.mxu0 0
    %7969 = vmatpush1.bf16.msra.mxu0 0
    %7970 = vmatprep.subr.bf16.mxu0 0
    %7971 = vmatpush1.bf16.msra.mxu0 0
    %7972 = vmatprep.subr.bf16.mxu0 0
    %7973 = vmatpush1.bf16.msra.mxu0 0
    %7974 = vmatprep.subr.bf16.mxu0 0
    %7975 = vmatpush1.bf16.msra.mxu0 0
    %7976 = vmatprep.subr.bf16.mxu0 0
    %7977 = vmatpush1.bf16.msra.mxu0 0
    %7978 = vmatprep.subr.bf16.mxu0 0
    %7979 = vmatpush1.bf16.msra.mxu0 0
    %7980 = vmatprep.subr.bf16.mxu0 0
    %7981 = vmatpush1.bf16.msra.mxu0 0
    %7982 = vmatprep.subr.bf16.mxu0 0
    %7983 = vmatpush1.bf16.msra.mxu0 0
    %7984 = vmatprep.subr.bf16.mxu0 0
    %7985 = vmatpush1.bf16.msra.mxu0 0
    %7986 = vmatprep.subr.bf16.mxu0 0
    %7987 = vmatpush1.bf16.msra.mxu0 0
    %7988 = vmatprep.subr.bf16.mxu0 0
    %7989 = vmatpush1.bf16.msra.mxu0 0
    %7990 = vmatprep.subr.bf16.mxu0 0
    %7991 = vmatpush1.bf16.msra.mxu0 0
    %7992 = vmatprep.mubr.bf16.mxu0 0
    %7993 = vmatmul.mubr.bf16.gmra.mrb[0].mxu0 %v7958
    %v7994 = vpop.f32.mrb[0].mxu0
    %v7995 = vadd.f32 %v7936, %v7994
    %v7996 = vpop.f32.mrb[0].mxu0
    %v7997 = vpop.f32.mrb[0].mxu0
    %v7998 = vpop.f32.mrb[0].mxu0
    %7999 = vdwg.mxu0
    %v8000 = vadd.f32 %v7918, %v7995
    %v8001 = vld [vmem:[#allocation18] sm:$0x1]
    %v8002 = vld [vmem:[#allocation19] sm:$0x1]
    %vm8003 = vcmask 517120
    %v8004 = vsel %vm8003, %v8000, 0.0
    %8005 = vadd.xlane.f32.xlu0 %v8004
    %v8006 = vpop.xlane.xlu0 %8005
    %v8007 = vrcp.pop 64.0
    %v8008 = vmul.f32 %v8006, %v8007
    %v8009 = vsub.f32 %v8000, %v8008
    %v8010 = vmul.f32 %v8009, %v8009
    %v8011 = vsel %vm8003, %v8010, 0.0
    %8012 = vadd.xlane.f32.xlu0 %v8011
    %v8013 = vpop.xlane.xlu0 %8012
    %v8014 = vmul.f32 %v8013, 0.015873017
    %v8016 = vlaneseq
    %v8017 = vshrl.u32 %v8016, 7
    %v8018 = vsub.s32 0, %v8017
    %v8019 = vrot.slane %v8001, %v8018
    %v8021 = vmul.f32 %v8019, %v8009
    %v8022 = vrsqrt.pop %v8014
    %v8023 = vmul.f32 %v8014, %v8022
    %vm8024 = vcmp.eq.f32.partialorder %v8014, inf
    %v8025 = vsel %vm8024, %v8014, %v8023
    %vm8026 = vcmp.eq.f32.partialorder %v8014, 0.0
    %v8027 = vand.u32 %v8014, 2147483648
    %v8028 = vsel %vm8026, %v8027, %v8025
    %v8029 = vadd.f32 %v8028, 1e-06
    %v8030 = vrcp.pop %v8029
    %v8031 = vmul.f32 %v8021, %v8030
    %v8033 = vlaneseq
    %v8034 = vshrl.u32 %v8033, 7
    %v8035 = vsub.s32 0, %v8034
    %v8036 = vrot.slane %v8002, %v8035
    %v8038 = vadd.f32 %v8031, %v8036
    %v8039 = vld [vmem:[#allocation21] sm:$0x1]
    %v8041 = vlaneseq
    %v8042 = vshrl.u32 %v8041, 7
    %v8043 = vsub.s32 0, %v8042
    %v8044 = vrot.slane %v8039, %v8043
    %v8046 = vmul.f32 %v8038, %v8044
    %v8047 = vsel %vm8003, %v8046, 0.0
    %8048 = vadd.xlane.f32.xlu0 %v8047
    %v8049 = vpop.xlane.xlu0 %8048
    %v8050 = vld [vmem:[%s5] sm:$0xff]
    %v8051 = vld [vmem:[%s5 + $0x8] sm:$0xff]
    %v8052 = vld [vmem:[%s5 + $0x10] sm:$0xff]
    %v8053 = vld [vmem:[%s5 + $0x18] sm:$0xff]
    %v8054 = vld [vmem:[%s5 + $0x20] sm:$0xff]
    %v8055 = vld [vmem:[%s5 + $0x28] sm:$0xff]
    %v8056 = vld [vmem:[%s109] sm:$0x3f]
    %v8058 = vlaneseq
    %v8059 = vshrl.u32 %v8058, 7
    %v8060 = vsub.s32 0, %v8059
    %v8061 = vrot.slane %v8056, %v8060
    %v8062 = vlaneseq
    %v8063 = vshrl.u32 %v8062, 7
    %v8064 = vsub.s32 1, %v8063
    %v8065 = vrot.slane %v8056, %v8064
    %v8066 = vlaneseq
    %v8067 = vshrl.u32 %v8066, 7
    %v8068 = vsub.s32 2, %v8067
    %v8069 = vrot.slane %v8056, %v8068
    %v8070 = vlaneseq
    %v8071 = vshrl.u32 %v8070, 7
    %v8072 = vsub.s32 3, %v8071
    %v8073 = vrot.slane %v8056, %v8072
    %v8074 = vlaneseq
    %v8075 = vshrl.u32 %v8074, 7
    %v8076 = vsub.s32 4, %v8075
    %v8077 = vrot.slane %v8056, %v8076
    %v8078 = vlaneseq
    %v8079 = vshrl.u32 %v8078, 7
    %v8080 = vsub.s32 5, %v8079
    %v8081 = vrot.slane %v8056, %v8080
    %v8082 = vcombine.low %v8061, %v8065
    %v8083 = vcombine.low %v8069, %v8073
    %v8084 = vcombine.low %v8077, %v8081
    %v8088 = vmul.f32 %v8050, %v8082
    %v8089 = vmul.f32 %v8051, %v8083
    %v8090 = vmul.f32 %v8052, %v8084
    %v8091 = vmul.f32 %v8053, %v8082
    %v8092 = vmul.f32 %v8054, %v8083
    %v8093 = vmul.f32 %v8055, %v8084
    %v8100 = vcombine.high %v8088, %v8088
    %v8101 = vcombine.high %v8089, %v8089
    %v8102 = vcombine.high %v8090, %v8090
    %v8103 = vcombine.high %v8091, %v8091
    %v8104 = vcombine.high %v8092, %v8092
    %v8105 = vcombine.high %v8093, %v8093
    %v8112 = vsel %vm1625, %v8088, 0.0
    %v8113 = vsel %vm1625, %v8100, 0.0
    %v8114 = vadd.f32 %v8112, %v8113
    %v8115 = vsel %vm1625, %v8089, 0.0
    %v8116 = vadd.f32 %v8114, %v8115
    %v8117 = vsel %vm1625, %v8101, 0.0
    %v8118 = vadd.f32 %v8116, %v8117
    %v8119 = vsel %vm1625, %v8090, 0.0
    %v8120 = vadd.f32 %v8118, %v8119
    %v8121 = vsel %vm1625, %v8102, 0.0
    %v8122 = vadd.f32 %v8120, %v8121
    %8123 = vadd.xlane.f32.xlu0 %v8122
    %v8124 = vpop.xlane.xlu0 %8123
    %v8125 = vsel %vm1625, %v8091, 0.0
    %v8126 = vsel %vm1625, %v8103, 0.0
    %v8127 = vadd.f32 %v8125, %v8126
    %v8128 = vsel %vm1625, %v8092, 0.0
    %v8129 = vadd.f32 %v8127, %v8128
    %v8130 = vsel %vm1625, %v8104, 0.0
    %v8131 = vadd.f32 %v8129, %v8130
    %v8132 = vsel %vm1625, %v8093, 0.0
    %v8133 = vadd.f32 %v8131, %v8132
    %v8134 = vsel %vm1625, %v8105, 0.0
    %v8135 = vadd.f32 %v8133, %v8134
    %8136 = vadd.xlane.f32.xlu0 %v8135
    %v8137 = vpop.xlane.xlu0 %8136
    %v8139 = vlaneseq
    %v8140 = vshrl.u32 %v8139, 7
    %v8141 = vsub.s32 0, %v8140
    %v8142 = vrot.slane %v8049, %v8141
    %v8143 = vlaneseq
    %v8144 = vshrl.u32 %v8143, 7
    %v8145 = vsub.s32 1, %v8144
    %v8146 = vrot.slane %v8049, %v8145
    %v8149 = vadd.f32 %v8124, %v8142
    %v8150 = vadd.f32 %v8137, %v8146
    %v8151 = vld [vmem:[#allocation3] sm:$0x1]
    %v8153 = vlaneseq
    %v8154 = vshrl.u32 %v8153, 7
    %v8155 = vsub.s32 0, %v8154
    %v8156 = vrot.slane %v8151, %v8155
    %8157 = vset.pattern.permute.xlu0 0
    %8158 = vperm.xlu0 %8157, %v8156
    %v8159 = vpop.permute.xlu0 %8158
    %v8161 = vadd.f32 %v8149, %v8159
    %v8162 = vadd.f32 %v8150, %v8159
    %8165 = vset.pattern.permute.xlu0 0
    %8166 = vperm.xlu0 %8165, %v8161
    %v8167 = vpop.permute.xlu0 %8166
    %8168 = vset.pattern.permute.xlu0 0
    %8169 = vperm.xlu0 %8168, %v8162
    %v8170 = vpop.permute.xlu0 %8169
    %v8171 = vlaneseq
    %v8172 = vand.u32 %v8171, 127
    %v8173 = vlaneseq
    %v8174 = vshrl.u32 %v8173, 7
    %v8175 = vsub.s32 %v8172, %v8174
    %v8176 = vrot.slane %v8167, %v8175
    %v8177 = vlaneseq
    %v8178 = vshrl.u32 %v8177, 7
    %v8179 = vsub.s32 %v8172, %v8178
    %v8180 = vrot.slane %v8170, %v8179
    %v8181 = vsel %vm7865, %v8180, %v8176
    %vm8183 = vcmask 25600
    %8184 = vst.msk [vmem:[#allocation22] sm:$0x3] %vm8183, %v8181
    // Predicated region
    $region270: #{net_forward.1} parent=1 // pred_check
      _
    $region271: #{net_forward.1} parent=1 // pred_check_branch
      %8186 = sbr.rel (0) target = $region273
    $region272: #{net_forward.1} parent=1 // pred_region
      %s8188 = ssub.s32 32, 32
      %8189 = vsyncadd [#allocation6], %s8188
      %s8191 = sshll.u32 [#allocation22], 4
      %s8192 = int_to_ptr.vmem [resolvable:$true] %s8191
      %8194 = dma.vmem_to_hbm [thread:$0]  %s8192, 32, %s113, [#allocation6]
    $region273: #{net_forward.1} parent=1 // pred_fallthru
      _
    // Predicated region
    $region274: #{net_forward.1} parent=1 // pred_check
      _
    $region275: #{net_forward.1} parent=1 // pred_check_branch
      %8196 = sbr.rel (0) target = $region277
    $region276: #{net_forward.1} parent=1 // pred_region
      %8197 = dma.done [#allocation6], 32
    $region277: #{net_forward.1} parent=1 // pred_fallthru
      _
    %8198 = vsyncpa [#allocation5], 1
    %8199 = vsyncpa [#allocation8], 1
    %8200 = vsyncpa [#allocation11], 1
    %8201 = vsyncpa [#allocation14], 1
    %8202 = vsyncpa [#allocation17], 1
    %8203 = vsyncpa [#allocation20], 1
    %8204 = vsyncpa [#allocation6], 1

</llo_original>
